<compile_context>
chip_gen: v6e
topology: v6e:2x2x1
jax: 0.10.0
libtpu: 0.0.40
codegen_flags: <defaults>
</compile_context>

<pallas_src>
import jax
import jax.numpy as jnp
from jax.experimental import pallas as pl
from jax.experimental.pallas import tpu as pltpu

NEG_SLOPE = 0.2
BN_EPS = 1e-5

# --- per-generation tuning knobs ---------------------------------------------------
# Sized for v7x (64 MiB VMEM): worst case (head, K=4608) stays ~<24 MiB per grid step
# including the fused-BN f32 temporaries and double-buffered patch DMA.  On v5e/v6e
# (128 MiB VMEM) TILE_M can be raised to 1024-2048 and VMEM_LIMIT to ~96-112 MiB.
TILE_M = 512
_STEP_BYTES = 24 * 1024 * 1024
VMEM_LIMIT = 48 * 1024 * 1024

# Resident (grid-invariant) operand blocks are single-buffered to save VMEM; the
# __main__ fallback flips this off if the jax build rejects pipeline_mode.
_SINGLE_BUFFER_RESIDENT = True


def _round_up(a, b):
    return (a + b - 1) // b * b


def _tiling(m, k):
    """Return (tile_rows, padded_rows, num_tiles).

    Rows are padded only to a multiple of 8 (never a whole wasted tile), the
    per-step working set is capped (~20 B/elem of the (tm, K) patch tile), and
    the grid gets >=2 steps whenever there are enough rows (v7x megacore)."""
    cap = min(TILE_M, max(8, _STEP_BYTES // (20 * k)))
    cap = max(8, cap - cap % 8)
    mp8 = _round_up(m, 8)
    if mp8 <= cap:
        t = 2 if mp8 >= 16 else 1
    else:
        t = pl.cdiv(mp8, cap)
    tm = _round_up(pl.cdiv(mp8, t), 8)
    return tm, tm * t, t


def _const_spec(shape):
    """Resident block: constant index_map (fetched once), single-buffered."""
    index_map = lambda i: (0,) * len(shape)
    if _SINGLE_BUFFER_RESIDENT:
        return pl.BlockSpec(shape, index_map, pipeline_mode=pl.Buffered(1))
    return pl.BlockSpec(shape, index_map)


def _compiler_params():
    return pltpu.CompilerParams(dimension_semantics=("parallel",),
                                vmem_limit_bytes=VMEM_LIMIT)


# ------------------------------------------------------------------------- kernels
def _apply_prev_bn_lrelu(xb, scale, shift):
    """Previous layer's BatchNorm + LeakyReLU(0.2) on a bf16 patch tile.

    NaN entries mark the conv's spatial zero-padding (and M row padding); they
    map to an exact 0, i.e. padding applied after the activation."""
    y = xb.astype(jnp.float32) * scale + shift
    y = jnp.where(y > 0, y, NEG_SLOPE * y)
    return jnp.where(jnp.isnan(xb), 0.0, y).astype(jnp.bfloat16)


def _mm_stats_kernel(p_ref, w_ref, o_ref, stats_ref):
    """Layer-1 conv-as-matmul: bf16 in, f32 acc, bf16 out; stats from the f32 acc."""
    acc = jnp.dot(p_ref[...], w_ref[...], preferred_element_type=jnp.float32)
    o_ref[...] = acc.astype(o_ref.dtype)
    stats_ref[0, 0:1, :] = jnp.sum(acc, axis=0, keepdims=True)
    stats_ref[0, 1:2, :] = jnp.sum(acc * acc, axis=0, keepdims=True)


def _bn_mm_stats_kernel(p_ref, scale_ref, shift_ref, w_ref, o_ref, stats_ref):
    """Fused: previous-layer BN + LeakyReLU on the loaded patch tile, then
    conv-as-matmul + per-tile channel stats for this layer's BatchNorm."""
    y = _apply_prev_bn_lrelu(p_ref[...], scale_ref[...], shift_ref[...])
    acc = jnp.dot(y, w_ref[...], preferred_element_type=jnp.float32)
    o_ref[...] = acc.astype(o_ref.dtype)
    stats_ref[0, 0:1, :] = jnp.sum(acc, axis=0, keepdims=True)
    stats_ref[0, 1:2, :] = jnp.sum(acc * acc, axis=0, keepdims=True)


def _bn_mm_bias_kernel(p_ref, scale_ref, shift_ref, w_ref, b_ref, o_ref):
    """Final head: fused BN + LeakyReLU on the input patches, matmul, + bias."""
    y = _apply_prev_bn_lrelu(p_ref[...], scale_ref[...], shift_ref[...])
    o_ref[...] = jnp.dot(y, w_ref[...],
                         preferred_element_type=jnp.float32) + b_ref[...]


# --------------------------------------------------------------------------- calls
def _conv_layer1(patches, w_mat):
    """Layer-1 conv (no input BN). Returns (raw conv bf16 (m, Cp), stats (2, Cp))."""
    m, k = patches.shape
    kp, cp = w_mat.shape
    tm, mp, t = _tiling(m, kp)
    p = jnp.pad(patches, ((0, mp - m), (0, kp - k)))        # zero pad: inert for matmul & stats
    conv, partial = pl.pallas_call(
        _mm_stats_kernel,
        out_shape=(jax.ShapeDtypeStruct((mp, cp), jnp.bfloat16),
                   jax.ShapeDtypeStruct((t, 2, cp), jnp.float32)),
        grid=(t,),
        in_specs=[pl.BlockSpec((tm, kp), lambda i: (i, 0)),
                  _const_spec((kp, cp))],
        out_specs=(pl.BlockSpec((tm, cp), lambda i: (i, 0)),
                   pl.BlockSpec((1, 2, cp), lambda i: (i, 0, 0))),
        compiler_params=_compiler_params(),
    )(p, w_mat)
    return conv[:m], jnp.sum(partial, axis=0)


def _conv_fused_bn(patches, scale_k, shift_k, w_mat):
    """Layers 2-4: (prev BN + LeakyReLU) -> conv matmul -> this layer's stats."""
    m, kp = patches.shape
    cp = w_mat.shape[1]
    tm, mp, t = _tiling(m, kp)
    # NaN rows -> exact 0 after the in-kernel mask, so padded rows stay inert.
    p = jnp.pad(patches, ((0, mp - m), (0, 0)), constant_values=jnp.nan)
    conv, partial = pl.pallas_call(
        _bn_mm_stats_kernel,
        out_shape=(jax.ShapeDtypeStruct((mp, cp), jnp.bfloat16),
                   jax.ShapeDtypeStruct((t, 2, cp), jnp.float32)),
        grid=(t,),
        in_specs=[pl.BlockSpec((tm, kp), lambda i: (i, 0)),
                  _const_spec((1, kp)),
                  _const_spec((1, kp)),
                  _const_spec((kp, cp))],
        out_specs=(pl.BlockSpec((tm, cp), lambda i: (i, 0)),
                   pl.BlockSpec((1, 2, cp), lambda i: (i, 0, 0))),
        compiler_params=_compiler_params(),
    )(p, scale_k, shift_k, w_mat)
    return conv[:m], jnp.sum(partial, axis=0)


def _conv_head_fused_bn(patches, scale_k, shift_k, w_mat, bias_row):
    """Head: (layer-4 BN + LeakyReLU) -> conv 3x3 stride 1 + bias, f32 out."""
    m, kp = patches.shape
    cp = w_mat.shape[1]
    tm, mp, t = _tiling(m, kp)
    p = jnp.pad(patches, ((0, mp - m), (0, 0)), constant_values=jnp.nan)
    out = pl.pallas_call(
        _bn_mm_bias_kernel,
        out_shape=jax.ShapeDtypeStruct((mp, cp), jnp.float32),
        grid=(t,),
        in_specs=[pl.BlockSpec((tm, kp), lambda i: (i, 0)),
                  _const_spec((1, kp)),
                  _const_spec((1, kp)),
                  _const_spec((kp, cp)),
                  _const_spec((1, cp))],
        out_specs=pl.BlockSpec((tm, cp), lambda i: (i, 0)),
        compiler_params=_compiler_params(),
    )(p, scale_k, shift_k, w_mat, bias_row)
    return out[:m]


# ---------------------------------------------------------------------------- glue
def _im2col(x, *, stride, pad_value):
    """x: (N,H,W,C) bf16 -> ((N*Ho*Wo, 9*C) bf16 patches, Ho, Wo); 3x3 window, pad=1.

    pad_value marks the conv's spatial padding: 0 for the network input (layer 1),
    NaN for raw (pre-BN) activations so the consumer kernel's fused BN+LeakyReLU
    can map those positions to an exact 0."""
    n, h, w, c = x.shape
    xp = jnp.pad(x, ((0, 0), (1, 1), (1, 1), (0, 0)), constant_values=pad_value)
    ho = (h + 2 - 3) // stride + 1
    wo = (w + 2 - 3) // stride + 1
    taps = [xp[:, i:i + stride * ho:stride, j:j + stride * wo:stride, :]
            for i in range(3) for j in range(3)]
    patches = jnp.concatenate(taps, axis=-1)                # (N, Ho, Wo, 9*C)
    return patches.reshape(n * ho * wo, 9 * c), ho, wo


def _weight_matrix(w, cin_p, cout_p):
    """(Cout,Cin,3,3) -> (9*cin_p, cout_p) bf16, tap-major / channel-minor K order."""
    cout, cin = w.shape[0], w.shape[1]
    wt = jnp.transpose(w, (2, 3, 1, 0))                     # (3, 3, Cin, Cout)
    wt = jnp.pad(wt, ((0, 0), (0, 0), (0, cin_p - cin), (0, cout_p - cout)))
    return wt.reshape(9 * cin_p, cout_p).astype(jnp.bfloat16)


def _bn_scale_shift(sums, m_true, gamma, beta, cp):
    """Fold channel sum / sum-of-squares into BN scale/shift (training-mode stats)."""
    mean = sums[0] / m_true
    var = jnp.maximum(sums[1] / m_true - mean * mean, 0.0)  # clamp cancellation of E[x^2]-E[x]^2
    gamma_p = jnp.pad(gamma, (0, cp - gamma.shape[0]), constant_values=1.0)
    beta_p = jnp.pad(beta, (0, cp - beta.shape[0]))
    scale = gamma_p * jax.lax.rsqrt(var + BN_EPS)
    shift = beta_p - mean * scale
    return scale.astype(jnp.float32), shift.astype(jnp.float32)


def _tile_k(v, taps=9):
    """Per-channel vector -> (1, taps*C) row matching the tap-major patch K order."""
    return jnp.tile(v, taps).reshape(1, taps * v.shape[0])


# --------------------------------------------------------------------------- model
def init_discriminator_params(key):
    """Deterministic synthetic init matching the module's parameter shapes."""
    chans = [(6, 64), (64, 128), (128, 256), (256, 512)]
    params = {}
    keys = jax.random.split(key, 10)
    k_idx = 0
    for i, (cin, cout) in enumerate(chans, start=1):
        w = jax.random.normal(keys[k_idx], (cout, cin, 3, 3), jnp.float32) * 0.05
        b = jax.random.normal(keys[k_idx + 1], (cout,), jnp.float32) * 0.01
        k_idx += 2
        gamma = jnp.ones((cout,), jnp.float32)               # BatchNorm2d default init
        beta = jnp.zeros((cout,), jnp.float32)
        params[f"down_{i}"] = (w, b, gamma, beta)
    w5 = jax.random.normal(keys[k_idx], (1, 512, 3, 3), jnp.float32) * 0.05
    b5 = jax.random.normal(keys[k_idx + 1], (1,), jnp.float32) * 0.01
    params["down_5"] = (w5, b5)
    return params


def discriminator_forward(params, x, y):
    """x, y: (N,3,H,W) NCHW f32 (PyTorch convention). Returns (N,1,Ho,Wo) f32."""
    h = jnp.concatenate([x, y], axis=1)                      # (N, 6, H, W)
    h = jnp.transpose(h, (0, 2, 3, 1)).astype(jnp.bfloat16)  # one-time NCHW->NHWC + bf16
    n = h.shape[0]

    # ---- down_1: conv (stride 2) + stats; its BN+LReLU is applied by down_2's kernel.
    w1, _b1, g1, be1 = params["down_1"]                      # conv bias cancelled by BN
    patches, ho, wo = _im2col(h, stride=2, pad_value=0.0)
    cp = _round_up(w1.shape[0], 128)
    w_mat = _weight_matrix(w1, w1.shape[1], cp)
    w_mat = jnp.pad(w_mat, ((0, _round_up(w_mat.shape[0], 128) - w_mat.shape[0]), (0, 0)))
    m_true = n * ho * wo
    conv, sums = _conv_layer1(patches, w_mat)
    scale, shift = _bn_scale_shift(sums, m_true, g1, be1, cp)
    act_raw = conv.reshape(n, ho, wo, cp)                    # raw (pre-BN) conv output, bf16

    # ---- down_2 .. down_4: fused (prev BN + LReLU) -> conv -> stats
    for idx in range(2, 5):
        w, _b, g, be = params[f"down_{idx}"]
        cin_p = act_raw.shape[-1]
        cp = _round_up(w.shape[0], 128)
        patches, ho, wo = _im2col(act_raw, stride=2, pad_value=jnp.nan)
        m_true = n * ho * wo
        conv, sums = _conv_fused_bn(patches, _tile_k(scale), _tile_k(shift),
                                    _weight_matrix(w, cin_p, cp))
        scale, shift = _bn_scale_shift(sums, m_true, g, be, cp)
        act_raw = conv.reshape(n, ho, wo, cp)

    # ---- down_5 head: fused (down_4 BN + LReLU) -> Conv2d(512->1, 3x3, stride 1, pad 1)
    w5, b5 = params["down_5"]
    cin_p = act_raw.shape[-1]
    cout_p = 128                                              # lane-dense head output
    patches, ho, wo = _im2col(act_raw, stride=1, pad_value=jnp.nan)
    w_mat = _weight_matrix(w5, cin_p, cout_p)
    bias_row = jnp.pad(b5, (0, cout_p - b5.shape[0])).reshape(1, cout_p).astype(jnp.float32)
    out = _conv_head_fused_bn(patches, _tile_k(scale), _tile_k(shift), w_mat, bias_row)
    out = out[:n * ho * wo, :1].reshape(n, ho, wo, 1)
    return jnp.transpose(out, (0, 3, 1, 2))                   # back to NCHW


# ---------------------------------------------------------------------------- main
if __name__ == "__main__":
    key = jax.random.PRNGKey(0)
    k_params, kx, ky = jax.random.split(key, 3)
    params = init_discriminator_params(k_params)

    # Small example: x, y each (N=2, C=3, H=W=16); cat -> 6 input channels.
    x = jax.random.normal(kx, (2, 3, 16, 16), jnp.float32)
    y = jax.random.normal(ky, (2, 3, 16, 16), jnp.float32)

    try:
        out = jax.block_until_ready(jax.jit(discriminator_forward)(params, x, y))
    except Exception:
        # Fallback: disable single-buffered resident blocks in case this jax build
        # rejects BlockSpec(pipeline_mode=pl.Buffered(1)); numerics are identical.
        _SINGLE_BUFFER_RESIDENT = False
        out = jax.block_until_ready(jax.jit(discriminator_forward)(params, x, y))

    assert out.shape == (2, 1, 1, 1), out.shape               # 16 -> 8 -> 4 -> 2 -> 1 -> 1
    assert out.dtype == jnp.float32
    print("KERNEL_OK")
</pallas_src>

<mosaic_0001>
module attributes {stable_mosaic.version = 11 : i64} {
  func.func @_mm_stats_kernel(%arg0: i32, %arg1: memref<64x128xbf16, #tpu.memory_space<vmem>>, %arg2: memref<128x128xbf16, #tpu.memory_space<vmem>>, %arg3: memref<64x128xbf16, #tpu.memory_space<vmem>>, %arg4: memref<1x2x128xf32, #tpu.memory_space<vmem>>) attributes {dimension_semantics = [#tpu.dimension_semantics<parallel>], iteration_bounds = array<i64: 2>, scalar_prefetch = 0 : i64, scratch_operands = 0 : i64, tpu.core_type = #tpu.core_type<tc>, window_params = [{transform_indices = @transform_0, window_bounds = array<i64: 64, 128>}, {pipeline_mode = #tpu.pipeline_mode<synchronous>, transform_indices = @transform_1, window_bounds = array<i64: 128, 128>}, {transform_indices = @transform_2, window_bounds = array<i64: 64, 128>}, {transform_indices = @transform_3, window_bounds = array<i64: 1, 2, 128>}]} {
    %c0 = arith.constant 0 : index
    %c0_0 = arith.constant 0 : index
    %0 = vector.load %arg1[%c0, %c0_0] : memref<64x128xbf16, #tpu.memory_space<vmem>>, vector<64x128xbf16>
    %c0_1 = arith.constant 0 : index
    %c0_2 = arith.constant 0 : index
    %1 = vector.load %arg2[%c0_1, %c0_2] : memref<128x128xbf16, #tpu.memory_space<vmem>>, vector<128x128xbf16>
    %cst = arith.constant dense<0.000000e+00> : vector<64x128xf32>
    %2 = tpu.matmul %0, %1, %cst {dimension_numbers = #tpu.dot_dimension_numbers<[1], [0], [0], [1], [0, 0, 1, 1], [], []>} : vector<64x128xbf16>, vector<128x128xbf16>, vector<64x128xf32> -> vector<64x128xf32>
    %3 = arith.truncf %2 : vector<64x128xf32> to vector<64x128xbf16>
    %c0_3 = arith.constant 0 : index
    %c0_4 = arith.constant 0 : index
    %4 = vector.load %arg3[%c0_3, %c0_4] : memref<64x128xbf16, #tpu.memory_space<vmem>>, vector<64x128xbf16>
    tpu.vector_store %arg3[%c0_3, %c0_4], %3 {strides = array<i32>} : memref<64x128xbf16, #tpu.memory_space<vmem>>, vector<64x128xbf16>,
    %cst_5 = arith.constant dense<0.000000e+00> : vector<128xf32>
    %5 = vector.multi_reduction <add>, %2, %cst_5 [0] : vector<64x128xf32> to vector<128xf32>
    %6 = vector.shape_cast %5 : vector<128xf32> to vector<1x128xf32>
    %c0_6 = arith.constant 0 : index
    %c0_7 = arith.constant 0 : index
    %c0_8 = arith.constant 0 : index
    %7 = vector.load %arg4[%c0_6, %c0_7, %c0_8] : memref<1x2x128xf32, #tpu.memory_space<vmem>>, vector<1x1x128xf32>
    %8 = vector.shape_cast %7 : vector<1x1x128xf32> to vector<1x128xf32>
    %9 = vector.shape_cast %6 : vector<1x128xf32> to vector<1x1x128xf32>
    tpu.vector_store %arg4[%c0_6, %c0_7, %c0_8], %9 {strides = array<i32>} : memref<1x2x128xf32, #tpu.memory_space<vmem>>, vector<1x1x128xf32>,
    %10 = arith.mulf %2, %2 : vector<64x128xf32>
    %cst_9 = arith.constant dense<0.000000e+00> : vector<128xf32>
    %11 = vector.multi_reduction <add>, %10, %cst_9 [0] : vector<64x128xf32> to vector<128xf32>
    %12 = vector.shape_cast %11 : vector<128xf32> to vector<1x128xf32>
    %c0_10 = arith.constant 0 : index
    %c1 = arith.constant 1 : index
    %c0_11 = arith.constant 0 : index
    %13 = vector.load %arg4[%c0_10, %c1, %c0_11] : memref<1x2x128xf32, #tpu.memory_space<vmem>>, vector<1x1x128xf32>
    %14 = vector.shape_cast %13 : vector<1x1x128xf32> to vector<1x128xf32>
    %15 = vector.shape_cast %12 : vector<1x128xf32> to vector<1x1x128xf32>
    tpu.vector_store %arg4[%c0_10, %c1, %c0_11], %15 {strides = array<i32>} : memref<1x2x128xf32, #tpu.memory_space<vmem>>, vector<1x1x128xf32>,
    return
  }
  func.func @transform_0(%arg0: i32) -> (i32, i32) {
    %c0_i32 = arith.constant 0 : i32
    %c0_i32_0 = arith.constant 0 : i32
    return %arg0, %c0_i32 : i32, i32
  }
  func.func @transform_1(%arg0: i32) -> (i32, i32) {
    %c0_i32 = arith.constant 0 : i32
    %c0_i32_0 = arith.constant 0 : i32
    %c0_i32_1 = arith.constant 0 : i32
    return %c0_i32, %c0_i32_0 : i32, i32
  }
  func.func @transform_2(%arg0: i32) -> (i32, i32) {
    %c0_i32 = arith.constant 0 : i32
    %c0_i32_0 = arith.constant 0 : i32
    return %arg0, %c0_i32 : i32, i32
  }
  func.func @transform_3(%arg0: i32) -> (i32, i32, i32) {
    %c0_i32 = arith.constant 0 : i32
    %c0_i32_0 = arith.constant 0 : i32
    %c0_i32_1 = arith.constant 0 : i32
    return %arg0, %c0_i32, %c0_i32_0 : i32, i32, i32
  }
}

module attributes {stable_mosaic.version = 11 : i64} {
  func.func @_bn_mm_stats_kernel(%arg0: i32, %arg1: memref<16x1152xbf16, #tpu.memory_space<vmem>>, %arg2: memref<1x1152xf32, #tpu.memory_space<vmem>>, %arg3: memref<1x1152xf32, #tpu.memory_space<vmem>>, %arg4: memref<1152x128xbf16, #tpu.memory_space<vmem>>, %arg5: memref<16x128xbf16, #tpu.memory_space<vmem>>, %arg6: memref<1x2x128xf32, #tpu.memory_space<vmem>>) attributes {dimension_semantics = [#tpu.dimension_semantics<parallel>], iteration_bounds = array<i64: 2>, scalar_prefetch = 0 : i64, scratch_operands = 0 : i64, tpu.core_type = #tpu.core_type<tc>, window_params = [{transform_indices = @transform_0, window_bounds = array<i64: 16, 1152>}, {pipeline_mode = #tpu.pipeline_mode<synchronous>, transform_indices = @transform_1, window_bounds = array<i64: 1, 1152>}, {pipeline_mode = #tpu.pipeline_mode<synchronous>, transform_indices = @transform_2, window_bounds = array<i64: 1, 1152>}, {pipeline_mode = #tpu.pipeline_mode<synchronous>, transform_indices = @transform_3, window_bounds = array<i64: 1152, 128>}, {transform_indices = @transform_4, window_bounds = array<i64: 16, 128>}, {transform_indices = @transform_5, window_bounds = array<i64: 1, 2, 128>}]} {
    %c0 = arith.constant 0 : index
    %c0_0 = arith.constant 0 : index
    %0 = vector.load %arg1[%c0, %c0_0] : memref<16x1152xbf16, #tpu.memory_space<vmem>>, vector<16x1152xbf16>
    %c0_1 = arith.constant 0 : index
    %c0_2 = arith.constant 0 : index
    %1 = vector.load %arg2[%c0_1, %c0_2] : memref<1x1152xf32, #tpu.memory_space<vmem>>, vector<1x1152xf32>
    %c0_3 = arith.constant 0 : index
    %c0_4 = arith.constant 0 : index
    %2 = vector.load %arg3[%c0_3, %c0_4] : memref<1x1152xf32, #tpu.memory_space<vmem>>, vector<1x1152xf32>
    %3 = arith.extf %0 : vector<16x1152xbf16> to vector<16x1152xf32>
    %4 = vector.broadcast %1 : vector<1x1152xf32> to vector<16x1152xf32>
    %5 = arith.mulf %3, %4 : vector<16x1152xf32>
    %6 = vector.broadcast %2 : vector<1x1152xf32> to vector<16x1152xf32>
    %7 = arith.addf %5, %6 : vector<16x1152xf32>
    %cst = arith.constant 0.000000e+00 : f32
    %8 = vector.broadcast %cst : f32 to vector<16x1152xf32>
    %9 = arith.cmpf ogt, %7, %8 : vector<16x1152xf32>
    %cst_5 = arith.constant 2.000000e-01 : f32
    %10 = vector.broadcast %cst_5 : f32 to vector<16x1152xf32>
    %11 = arith.mulf %10, %7 : vector<16x1152xf32>
    %12 = arith.select %9, %7, %11 : vector<16x1152xi1>, vector<16x1152xf32>
    %13 = arith.cmpf one, %0, %0 : vector<16x1152xbf16>
    %cst_6 = arith.constant 0.000000e+00 : f32
    %14 = vector.broadcast %cst_6 : f32 to vector<16x1152xf32>
    %15 = arith.select %13, %14, %12 : vector<16x1152xi1>, vector<16x1152xf32>
    %16 = arith.truncf %15 : vector<16x1152xf32> to vector<16x1152xbf16>
    %c0_7 = arith.constant 0 : index
    %c0_8 = arith.constant 0 : index
    %17 = vector.load %arg4[%c0_7, %c0_8] : memref<1152x128xbf16, #tpu.memory_space<vmem>>, vector<1152x128xbf16>
    %cst_9 = arith.constant dense<0.000000e+00> : vector<16x128xf32>
    %18 = tpu.matmul %16, %17, %cst_9 {dimension_numbers = #tpu.dot_dimension_numbers<[1], [0], [0], [1], [0, 0, 1, 1], [], []>} : vector<16x1152xbf16>, vector<1152x128xbf16>, vector<16x128xf32> -> vector<16x128xf32>
    %19 = arith.truncf %18 : vector<16x128xf32> to vector<16x128xbf16>
    %c0_10 = arith.constant 0 : index
    %c0_11 = arith.constant 0 : index
    %20 = vector.load %arg5[%c0_10, %c0_11] : memref<16x128xbf16, #tpu.memory_space<vmem>>, vector<16x128xbf16>
    tpu.vector_store %arg5[%c0_10, %c0_11], %19 {strides = array<i32>} : memref<16x128xbf16, #tpu.memory_space<vmem>>, vector<16x128xbf16>,
    %cst_12 = arith.constant dense<0.000000e+00> : vector<128xf32>
    %21 = vector.multi_reduction <add>, %18, %cst_12 [0] : vector<16x128xf32> to vector<128xf32>
    %22 = vector.shape_cast %21 : vector<128xf32> to vector<1x128xf32>
    %c0_13 = arith.constant 0 : index
    %c0_14 = arith.constant 0 : index
    %c0_15 = arith.constant 0 : index
    %23 = vector.load %arg6[%c0_13, %c0_14, %c0_15] : memref<1x2x128xf32, #tpu.memory_space<vmem>>, vector<1x1x128xf32>
    %24 = vector.shape_cast %23 : vector<1x1x128xf32> to vector<1x128xf32>
    %25 = vector.shape_cast %22 : vector<1x128xf32> to vector<1x1x128xf32>
    tpu.vector_store %arg6[%c0_13, %c0_14, %c0_15], %25 {strides = array<i32>} : memref<1x2x128xf32, #tpu.memory_space<vmem>>, vector<1x1x128xf32>,
    %26 = arith.mulf %18, %18 : vector<16x128xf32>
    %cst_16 = arith.constant dense<0.000000e+00> : vector<128xf32>
    %27 = vector.multi_reduction <add>, %26, %cst_16 [0] : vector<16x128xf32> to vector<128xf32>
    %28 = vector.shape_cast %27 : vector<128xf32> to vector<1x128xf32>
    %c0_17 = arith.constant 0 : index
    %c1 = arith.constant 1 : index
    %c0_18 = arith.constant 0 : index
    %29 = vector.load %arg6[%c0_17, %c1, %c0_18] : memref<1x2x128xf32, #tpu.memory_space<vmem>>, vector<1x1x128xf32>
    %30 = vector.shape_cast %29 : vector<1x1x128xf32> to vector<1x128xf32>
    %31 = vector.shape_cast %28 : vector<1x128xf32> to vector<1x1x128xf32>
    tpu.vector_store %arg6[%c0_17, %c1, %c0_18], %31 {strides = array<i32>} : memref<1x2x128xf32, #tpu.memory_space<vmem>>, vector<1x1x128xf32>,
    return
  }
  func.func @transform_0(%arg0: i32) -> (i32, i32) {
    %c0_i32 = arith.constant 0 : i32
    %c0_i32_0 = arith.constant 0 : i32
    return %arg0, %c0_i32 : i32, i32
  }
  func.func @transform_1(%arg0: i32) -> (i32, i32) {
    %c0_i32 = arith.constant 0 : i32
    %c0_i32_0 = arith.constant 0 : i32
    %c0_i32_1 = arith.constant 0 : i32
    return %c0_i32, %c0_i32_0 : i32, i32
  }
  func.func @transform_2(%arg0: i32) -> (i32, i32) {
    %c0_i32 = arith.constant 0 : i32
    %c0_i32_0 = arith.constant 0 : i32
    %c0_i32_1 = arith.constant 0 : i32
    return %c0_i32, %c0_i32_0 : i32, i32
  }
  func.func @transform_3(%arg0: i32) -> (i32, i32) {
    %c0_i32 = arith.constant 0 : i32
    %c0_i32_0 = arith.constant 0 : i32
    %c0_i32_1 = arith.constant 0 : i32
    return %c0_i32, %c0_i32_0 : i32, i32
  }
  func.func @transform_4(%arg0: i32) -> (i32, i32) {
    %c0_i32 = arith.constant 0 : i32
    %c0_i32_0 = arith.constant 0 : i32
    return %arg0, %c0_i32 : i32, i32
  }
  func.func @transform_5(%arg0: i32) -> (i32, i32, i32) {
    %c0_i32 = arith.constant 0 : i32
    %c0_i32_0 = arith.constant 0 : i32
    %c0_i32_1 = arith.constant 0 : i32
    return %arg0, %c0_i32, %c0_i32_0 : i32, i32, i32
  }
}

module attributes {stable_mosaic.version = 11 : i64} {
  func.func @_bn_mm_stats_kernel(%arg0: i32, %arg1: memref<8x1152xbf16, #tpu.memory_space<vmem>>, %arg2: memref<1x1152xf32, #tpu.memory_space<vmem>>, %arg3: memref<1x1152xf32, #tpu.memory_space<vmem>>, %arg4: memref<1152x256xbf16, #tpu.memory_space<vmem>>, %arg5: memref<8x256xbf16, #tpu.memory_space<vmem>>, %arg6: memref<1x2x256xf32, #tpu.memory_space<vmem>>) attributes {dimension_semantics = [#tpu.dimension_semantics<parallel>], iteration_bounds = array<i64: 1>, scalar_prefetch = 0 : i64, scratch_operands = 0 : i64, tpu.core_type = #tpu.core_type<tc>, window_params = [{transform_indices = @transform_0, window_bounds = array<i64: 8, 1152>}, {pipeline_mode = #tpu.pipeline_mode<synchronous>, transform_indices = @transform_1, window_bounds = array<i64: 1, 1152>}, {pipeline_mode = #tpu.pipeline_mode<synchronous>, transform_indices = @transform_2, window_bounds = array<i64: 1, 1152>}, {pipeline_mode = #tpu.pipeline_mode<synchronous>, transform_indices = @transform_3, window_bounds = array<i64: 1152, 256>}, {transform_indices = @transform_4, window_bounds = array<i64: 8, 256>}, {transform_indices = @transform_5, window_bounds = array<i64: 1, 2, 256>}]} {
    %c0 = arith.constant 0 : index
    %c0_0 = arith.constant 0 : index
    %0 = vector.load %arg1[%c0, %c0_0] : memref<8x1152xbf16, #tpu.memory_space<vmem>>, vector<8x1152xbf16>
    %c0_1 = arith.constant 0 : index
    %c0_2 = arith.constant 0 : index
    %1 = vector.load %arg2[%c0_1, %c0_2] : memref<1x1152xf32, #tpu.memory_space<vmem>>, vector<1x1152xf32>
    %c0_3 = arith.constant 0 : index
    %c0_4 = arith.constant 0 : index
    %2 = vector.load %arg3[%c0_3, %c0_4] : memref<1x1152xf32, #tpu.memory_space<vmem>>, vector<1x1152xf32>
    %3 = arith.extf %0 : vector<8x1152xbf16> to vector<8x1152xf32>
    %4 = vector.broadcast %1 : vector<1x1152xf32> to vector<8x1152xf32>
    %5 = arith.mulf %3, %4 : vector<8x1152xf32>
    %6 = vector.broadcast %2 : vector<1x1152xf32> to vector<8x1152xf32>
    %7 = arith.addf %5, %6 : vector<8x1152xf32>
    %cst = arith.constant 0.000000e+00 : f32
    %8 = vector.broadcast %cst : f32 to vector<8x1152xf32>
    %9 = arith.cmpf ogt, %7, %8 : vector<8x1152xf32>
    %cst_5 = arith.constant 2.000000e-01 : f32
    %10 = vector.broadcast %cst_5 : f32 to vector<8x1152xf32>
    %11 = arith.mulf %10, %7 : vector<8x1152xf32>
    %12 = arith.select %9, %7, %11 : vector<8x1152xi1>, vector<8x1152xf32>
    %13 = arith.cmpf one, %0, %0 : vector<8x1152xbf16>
    %cst_6 = arith.constant 0.000000e+00 : f32
    %14 = vector.broadcast %cst_6 : f32 to vector<8x1152xf32>
    %15 = arith.select %13, %14, %12 : vector<8x1152xi1>, vector<8x1152xf32>
    %16 = arith.truncf %15 : vector<8x1152xf32> to vector<8x1152xbf16>
    %c0_7 = arith.constant 0 : index
    %c0_8 = arith.constant 0 : index
    %17 = vector.load %arg4[%c0_7, %c0_8] : memref<1152x256xbf16, #tpu.memory_space<vmem>>, vector<1152x256xbf16>
    %cst_9 = arith.constant dense<0.000000e+00> : vector<8x256xf32>
    %18 = tpu.matmul %16, %17, %cst_9 {dimension_numbers = #tpu.dot_dimension_numbers<[1], [0], [0], [1], [0, 0, 1, 1], [], []>} : vector<8x1152xbf16>, vector<1152x256xbf16>, vector<8x256xf32> -> vector<8x256xf32>
    %19 = arith.truncf %18 : vector<8x256xf32> to vector<8x256xbf16>
    %c0_10 = arith.constant 0 : index
    %c0_11 = arith.constant 0 : index
    %20 = vector.load %arg5[%c0_10, %c0_11] : memref<8x256xbf16, #tpu.memory_space<vmem>>, vector<8x256xbf16>
    tpu.vector_store %arg5[%c0_10, %c0_11], %19 {strides = array<i32>} : memref<8x256xbf16, #tpu.memory_space<vmem>>, vector<8x256xbf16>,
    %cst_12 = arith.constant dense<0.000000e+00> : vector<256xf32>
    %21 = vector.multi_reduction <add>, %18, %cst_12 [0] : vector<8x256xf32> to vector<256xf32>
    %22 = vector.shape_cast %21 : vector<256xf32> to vector<1x256xf32>
    %c0_13 = arith.constant 0 : index
    %c0_14 = arith.constant 0 : index
    %c0_15 = arith.constant 0 : index
    %23 = vector.load %arg6[%c0_13, %c0_14, %c0_15] : memref<1x2x256xf32, #tpu.memory_space<vmem>>, vector<1x1x256xf32>
    %24 = vector.shape_cast %23 : vector<1x1x256xf32> to vector<1x256xf32>
    %25 = vector.shape_cast %22 : vector<1x256xf32> to vector<1x1x256xf32>
    tpu.vector_store %arg6[%c0_13, %c0_14, %c0_15], %25 {strides = array<i32>} : memref<1x2x256xf32, #tpu.memory_space<vmem>>, vector<1x1x256xf32>,
    %26 = arith.mulf %18, %18 : vector<8x256xf32>
    %cst_16 = arith.constant dense<0.000000e+00> : vector<256xf32>
    %27 = vector.multi_reduction <add>, %26, %cst_16 [0] : vector<8x256xf32> to vector<256xf32>
    %28 = vector.shape_cast %27 : vector<256xf32> to vector<1x256xf32>
    %c0_17 = arith.constant 0 : index
    %c1 = arith.constant 1 : index
    %c0_18 = arith.constant 0 : index
    %29 = vector.load %arg6[%c0_17, %c1, %c0_18] : memref<1x2x256xf32, #tpu.memory_space<vmem>>, vector<1x1x256xf32>
    %30 = vector.shape_cast %29 : vector<1x1x256xf32> to vector<1x256xf32>
    %31 = vector.shape_cast %28 : vector<1x256xf32> to vector<1x1x256xf32>
    tpu.vector_store %arg6[%c0_17, %c1, %c0_18], %31 {strides = array<i32>} : memref<1x2x256xf32, #tpu.memory_space<vmem>>, vector<1x1x256xf32>,
    return
  }
  func.func @transform_0(%arg0: i32) -> (i32, i32) {
    %c0_i32 = arith.constant 0 : i32
    %c0_i32_0 = arith.constant 0 : i32
    return %arg0, %c0_i32 : i32, i32
  }
  func.func @transform_1(%arg0: i32) -> (i32, i32) {
    %c0_i32 = arith.constant 0 : i32
    %c0_i32_0 = arith.constant 0 : i32
    %c0_i32_1 = arith.constant 0 : i32
    return %c0_i32, %c0_i32_0 : i32, i32
  }
  func.func @transform_2(%arg0: i32) -> (i32, i32) {
    %c0_i32 = arith.constant 0 : i32
    %c0_i32_0 = arith.constant 0 : i32
    %c0_i32_1 = arith.constant 0 : i32
    return %c0_i32, %c0_i32_0 : i32, i32
  }
  func.func @transform_3(%arg0: i32) -> (i32, i32) {
    %c0_i32 = arith.constant 0 : i32
    %c0_i32_0 = arith.constant 0 : i32
    %c0_i32_1 = arith.constant 0 : i32
    return %c0_i32, %c0_i32_0 : i32, i32
  }
  func.func @transform_4(%arg0: i32) -> (i32, i32) {
    %c0_i32 = arith.constant 0 : i32
    %c0_i32_0 = arith.constant 0 : i32
    return %arg0, %c0_i32 : i32, i32
  }
  func.func @transform_5(%arg0: i32) -> (i32, i32, i32) {
    %c0_i32 = arith.constant 0 : i32
    %c0_i32_0 = arith.constant 0 : i32
    %c0_i32_1 = arith.constant 0 : i32
    return %arg0, %c0_i32, %c0_i32_0 : i32, i32, i32
  }
}

module attributes {stable_mosaic.version = 11 : i64} {
  func.func @_bn_mm_stats_kernel(%arg0: i32, %arg1: memref<8x2304xbf16, #tpu.memory_space<vmem>>, %arg2: memref<1x2304xf32, #tpu.memory_space<vmem>>, %arg3: memref<1x2304xf32, #tpu.memory_space<vmem>>, %arg4: memref<2304x512xbf16, #tpu.memory_space<vmem>>, %arg5: memref<8x512xbf16, #tpu.memory_space<vmem>>, %arg6: memref<1x2x512xf32, #tpu.memory_space<vmem>>) attributes {dimension_semantics = [#tpu.dimension_semantics<parallel>], iteration_bounds = array<i64: 1>, scalar_prefetch = 0 : i64, scratch_operands = 0 : i64, tpu.core_type = #tpu.core_type<tc>, window_params = [{transform_indices = @transform_0, window_bounds = array<i64: 8, 2304>}, {pipeline_mode = #tpu.pipeline_mode<synchronous>, transform_indices = @transform_1, window_bounds = array<i64: 1, 2304>}, {pipeline_mode = #tpu.pipeline_mode<synchronous>, transform_indices = @transform_2, window_bounds = array<i64: 1, 2304>}, {pipeline_mode = #tpu.pipeline_mode<synchronous>, transform_indices = @transform_3, window_bounds = array<i64: 2304, 512>}, {transform_indices = @transform_4, window_bounds = array<i64: 8, 512>}, {transform_indices = @transform_5, window_bounds = array<i64: 1, 2, 512>}]} {
    %c0 = arith.constant 0 : index
    %c0_0 = arith.constant 0 : index
    %0 = vector.load %arg1[%c0, %c0_0] : memref<8x2304xbf16, #tpu.memory_space<vmem>>, vector<8x2304xbf16>
    %c0_1 = arith.constant 0 : index
    %c0_2 = arith.constant 0 : index
    %1 = vector.load %arg2[%c0_1, %c0_2] : memref<1x2304xf32, #tpu.memory_space<vmem>>, vector<1x2304xf32>
    %c0_3 = arith.constant 0 : index
    %c0_4 = arith.constant 0 : index
    %2 = vector.load %arg3[%c0_3, %c0_4] : memref<1x2304xf32, #tpu.memory_space<vmem>>, vector<1x2304xf32>
    %3 = arith.extf %0 : vector<8x2304xbf16> to vector<8x2304xf32>
    %4 = vector.broadcast %1 : vector<1x2304xf32> to vector<8x2304xf32>
    %5 = arith.mulf %3, %4 : vector<8x2304xf32>
    %6 = vector.broadcast %2 : vector<1x2304xf32> to vector<8x2304xf32>
    %7 = arith.addf %5, %6 : vector<8x2304xf32>
    %cst = arith.constant 0.000000e+00 : f32
    %8 = vector.broadcast %cst : f32 to vector<8x2304xf32>
    %9 = arith.cmpf ogt, %7, %8 : vector<8x2304xf32>
    %cst_5 = arith.constant 2.000000e-01 : f32
    %10 = vector.broadcast %cst_5 : f32 to vector<8x2304xf32>
    %11 = arith.mulf %10, %7 : vector<8x2304xf32>
    %12 = arith.select %9, %7, %11 : vector<8x2304xi1>, vector<8x2304xf32>
    %13 = arith.cmpf one, %0, %0 : vector<8x2304xbf16>
    %cst_6 = arith.constant 0.000000e+00 : f32
    %14 = vector.broadcast %cst_6 : f32 to vector<8x2304xf32>
    %15 = arith.select %13, %14, %12 : vector<8x2304xi1>, vector<8x2304xf32>
    %16 = arith.truncf %15 : vector<8x2304xf32> to vector<8x2304xbf16>
    %c0_7 = arith.constant 0 : index
    %c0_8 = arith.constant 0 : index
    %17 = vector.load %arg4[%c0_7, %c0_8] : memref<2304x512xbf16, #tpu.memory_space<vmem>>, vector<2304x512xbf16>
    %cst_9 = arith.constant dense<0.000000e+00> : vector<8x512xf32>
    %18 = tpu.matmul %16, %17, %cst_9 {dimension_numbers = #tpu.dot_dimension_numbers<[1], [0], [0], [1], [0, 0, 1, 1], [], []>} : vector<8x2304xbf16>, vector<2304x512xbf16>, vector<8x512xf32> -> vector<8x512xf32>
    %19 = arith.truncf %18 : vector<8x512xf32> to vector<8x512xbf16>
    %c0_10 = arith.constant 0 : index
    %c0_11 = arith.constant 0 : index
    %20 = vector.load %arg5[%c0_10, %c0_11] : memref<8x512xbf16, #tpu.memory_space<vmem>>, vector<8x512xbf16>
    tpu.vector_store %arg5[%c0_10, %c0_11], %19 {strides = array<i32>} : memref<8x512xbf16, #tpu.memory_space<vmem>>, vector<8x512xbf16>,
    %cst_12 = arith.constant dense<0.000000e+00> : vector<512xf32>
    %21 = vector.multi_reduction <add>, %18, %cst_12 [0] : vector<8x512xf32> to vector<512xf32>
    %22 = vector.shape_cast %21 : vector<512xf32> to vector<1x512xf32>
    %c0_13 = arith.constant 0 : index
    %c0_14 = arith.constant 0 : index
    %c0_15 = arith.constant 0 : index
    %23 = vector.load %arg6[%c0_13, %c0_14, %c0_15] : memref<1x2x512xf32, #tpu.memory_space<vmem>>, vector<1x1x512xf32>
    %24 = vector.shape_cast %23 : vector<1x1x512xf32> to vector<1x512xf32>
    %25 = vector.shape_cast %22 : vector<1x512xf32> to vector<1x1x512xf32>
    tpu.vector_store %arg6[%c0_13, %c0_14, %c0_15], %25 {strides = array<i32>} : memref<1x2x512xf32, #tpu.memory_space<vmem>>, vector<1x1x512xf32>,
    %26 = arith.mulf %18, %18 : vector<8x512xf32>
    %cst_16 = arith.constant dense<0.000000e+00> : vector<512xf32>
    %27 = vector.multi_reduction <add>, %26, %cst_16 [0] : vector<8x512xf32> to vector<512xf32>
    %28 = vector.shape_cast %27 : vector<512xf32> to vector<1x512xf32>
    %c0_17 = arith.constant 0 : index
    %c1 = arith.constant 1 : index
    %c0_18 = arith.constant 0 : index
    %29 = vector.load %arg6[%c0_17, %c1, %c0_18] : memref<1x2x512xf32, #tpu.memory_space<vmem>>, vector<1x1x512xf32>
    %30 = vector.shape_cast %29 : vector<1x1x512xf32> to vector<1x512xf32>
    %31 = vector.shape_cast %28 : vector<1x512xf32> to vector<1x1x512xf32>
    tpu.vector_store %arg6[%c0_17, %c1, %c0_18], %31 {strides = array<i32>} : memref<1x2x512xf32, #tpu.memory_space<vmem>>, vector<1x1x512xf32>,
    return
  }
  func.func @transform_0(%arg0: i32) -> (i32, i32) {
    %c0_i32 = arith.constant 0 : i32
    %c0_i32_0 = arith.constant 0 : i32
    return %arg0, %c0_i32 : i32, i32
  }
  func.func @transform_1(%arg0: i32) -> (i32, i32) {
    %c0_i32 = arith.constant 0 : i32
    %c0_i32_0 = arith.constant 0 : i32
    %c0_i32_1 = arith.constant 0 : i32
    return %c0_i32, %c0_i32_0 : i32, i32
  }
  func.func @transform_2(%arg0: i32) -> (i32, i32) {
    %c0_i32 = arith.constant 0 : i32
    %c0_i32_0 = arith.constant 0 : i32
    %c0_i32_1 = arith.constant 0 : i32
    return %c0_i32, %c0_i32_0 : i32, i32
  }
  func.func @transform_3(%arg0: i32) -> (i32, i32) {
    %c0_i32 = arith.constant 0 : i32
    %c0_i32_0 = arith.constant 0 : i32
    %c0_i32_1 = arith.constant 0 : i32
    return %c0_i32, %c0_i32_0 : i32, i32
  }
  func.func @transform_4(%arg0: i32) -> (i32, i32) {
    %c0_i32 = arith.constant 0 : i32
    %c0_i32_0 = arith.constant 0 : i32
    return %arg0, %c0_i32 : i32, i32
  }
  func.func @transform_5(%arg0: i32) -> (i32, i32, i32) {
    %c0_i32 = arith.constant 0 : i32
    %c0_i32_0 = arith.constant 0 : i32
    %c0_i32_1 = arith.constant 0 : i32
    return %arg0, %c0_i32, %c0_i32_0 : i32, i32, i32
  }
}

module attributes {stable_mosaic.version = 11 : i64} {
  func.func @_bn_mm_bias_kernel(%arg0: i32, %arg1: memref<8x4608xbf16, #tpu.memory_space<vmem>>, %arg2: memref<1x4608xf32, #tpu.memory_space<vmem>>, %arg3: memref<1x4608xf32, #tpu.memory_space<vmem>>, %arg4: memref<4608x128xbf16, #tpu.memory_space<vmem>>, %arg5: memref<1x128xf32, #tpu.memory_space<vmem>>, %arg6: memref<8x128xf32, #tpu.memory_space<vmem>>) attributes {dimension_semantics = [#tpu.dimension_semantics<parallel>], iteration_bounds = array<i64: 1>, scalar_prefetch = 0 : i64, scratch_operands = 0 : i64, tpu.core_type = #tpu.core_type<tc>, window_params = [{transform_indices = @transform_0, window_bounds = array<i64: 8, 4608>}, {pipeline_mode = #tpu.pipeline_mode<synchronous>, transform_indices = @transform_1, window_bounds = array<i64: 1, 4608>}, {pipeline_mode = #tpu.pipeline_mode<synchronous>, transform_indices = @transform_2, window_bounds = array<i64: 1, 4608>}, {pipeline_mode = #tpu.pipeline_mode<synchronous>, transform_indices = @transform_3, window_bounds = array<i64: 4608, 128>}, {pipeline_mode = #tpu.pipeline_mode<synchronous>, transform_indices = @transform_4, window_bounds = array<i64: 1, 128>}, {transform_indices = @transform_5, window_bounds = array<i64: 8, 128>}]} {
    %c0 = arith.constant 0 : index
    %c0_0 = arith.constant 0 : index
    %0 = vector.load %arg1[%c0, %c0_0] : memref<8x4608xbf16, #tpu.memory_space<vmem>>, vector<8x4608xbf16>
    %c0_1 = arith.constant 0 : index
    %c0_2 = arith.constant 0 : index
    %1 = vector.load %arg2[%c0_1, %c0_2] : memref<1x4608xf32, #tpu.memory_space<vmem>>, vector<1x4608xf32>
    %c0_3 = arith.constant 0 : index
    %c0_4 = arith.constant 0 : index
    %2 = vector.load %arg3[%c0_3, %c0_4] : memref<1x4608xf32, #tpu.memory_space<vmem>>, vector<1x4608xf32>
    %3 = arith.extf %0 : vector<8x4608xbf16> to vector<8x4608xf32>
    %4 = vector.broadcast %1 : vector<1x4608xf32> to vector<8x4608xf32>
    %5 = arith.mulf %3, %4 : vector<8x4608xf32>
    %6 = vector.broadcast %2 : vector<1x4608xf32> to vector<8x4608xf32>
    %7 = arith.addf %5, %6 : vector<8x4608xf32>
    %cst = arith.constant 0.000000e+00 : f32
    %8 = vector.broadcast %cst : f32 to vector<8x4608xf32>
    %9 = arith.cmpf ogt, %7, %8 : vector<8x4608xf32>
    %cst_5 = arith.constant 2.000000e-01 : f32
    %10 = vector.broadcast %cst_5 : f32 to vector<8x4608xf32>
    %11 = arith.mulf %10, %7 : vector<8x4608xf32>
    %12 = arith.select %9, %7, %11 : vector<8x4608xi1>, vector<8x4608xf32>
    %13 = arith.cmpf one, %0, %0 : vector<8x4608xbf16>
    %cst_6 = arith.constant 0.000000e+00 : f32
    %14 = vector.broadcast %cst_6 : f32 to vector<8x4608xf32>
    %15 = arith.select %13, %14, %12 : vector<8x4608xi1>, vector<8x4608xf32>
    %16 = arith.truncf %15 : vector<8x4608xf32> to vector<8x4608xbf16>
    %c0_7 = arith.constant 0 : index
    %c0_8 = arith.constant 0 : index
    %17 = vector.load %arg4[%c0_7, %c0_8] : memref<4608x128xbf16, #tpu.memory_space<vmem>>, vector<4608x128xbf16>
    %cst_9 = arith.constant dense<0.000000e+00> : vector<8x128xf32>
    %18 = tpu.matmul %16, %17, %cst_9 {dimension_numbers = #tpu.dot_dimension_numbers<[1], [0], [0], [1], [0, 0, 1, 1], [], []>} : vector<8x4608xbf16>, vector<4608x128xbf16>, vector<8x128xf32> -> vector<8x128xf32>
    %c0_10 = arith.constant 0 : index
    %c0_11 = arith.constant 0 : index
    %19 = vector.load %arg5[%c0_10, %c0_11] : memref<1x128xf32, #tpu.memory_space<vmem>>, vector<1x128xf32>
    %20 = vector.broadcast %19 : vector<1x128xf32> to vector<8x128xf32>
    %21 = arith.addf %18, %20 : vector<8x128xf32>
    %c0_12 = arith.constant 0 : index
    %c0_13 = arith.constant 0 : index
    %22 = vector.load %arg6[%c0_12, %c0_13] : memref<8x128xf32, #tpu.memory_space<vmem>>, vector<8x128xf32>
    tpu.vector_store %arg6[%c0_12, %c0_13], %21 {strides = array<i32>} : memref<8x128xf32, #tpu.memory_space<vmem>>, vector<8x128xf32>,
    return
  }
  func.func @transform_0(%arg0: i32) -> (i32, i32) {
    %c0_i32 = arith.constant 0 : i32
    %c0_i32_0 = arith.constant 0 : i32
    return %arg0, %c0_i32 : i32, i32
  }
  func.func @transform_1(%arg0: i32) -> (i32, i32) {
    %c0_i32 = arith.constant 0 : i32
    %c0_i32_0 = arith.constant 0 : i32
    %c0_i32_1 = arith.constant 0 : i32
    return %c0_i32, %c0_i32_0 : i32, i32
  }
  func.func @transform_2(%arg0: i32) -> (i32, i32) {
    %c0_i32 = arith.constant 0 : i32
    %c0_i32_0 = arith.constant 0 : i32
    %c0_i32_1 = arith.constant 0 : i32
    return %c0_i32, %c0_i32_0 : i32, i32
  }
  func.func @transform_3(%arg0: i32) -> (i32, i32) {
    %c0_i32 = arith.constant 0 : i32
    %c0_i32_0 = arith.constant 0 : i32
    %c0_i32_1 = arith.constant 0 : i32
    return %c0_i32, %c0_i32_0 : i32, i32
  }
  func.func @transform_4(%arg0: i32) -> (i32, i32) {
    %c0_i32 = arith.constant 0 : i32
    %c0_i32_0 = arith.constant 0 : i32
    %c0_i32_1 = arith.constant 0 : i32
    return %c0_i32, %c0_i32_0 : i32, i32
  }
  func.func @transform_5(%arg0: i32) -> (i32, i32) {
    %c0_i32 = arith.constant 0 : i32
    %c0_i32_0 = arith.constant 0 : i32
    return %arg0, %c0_i32 : i32, i32
  }
}

</mosaic_0001>

<llo_original>
// kernel: discriminator_forward.5
$region0: #{discriminator_forward.5}
  #allocation0 [shape = 'u32[]', space=smem, size = 0x4, offset = 0x4, fixed_abs, tag = 'smem constant byte address 0x4 - core index']
  #allocation1 [shape = 'u32[144,128]{1,0:T(1,128)}', space=vmem, size = 0x12000, scoped, tag = 'internal scratch']
  %s0 = inlined_call_operand.vmem [shape: bf16[128,128], index: 0, kind: input, shape index: {}]
  %s1 = inlined_call_operand.vmem [shape: bf16[128,128], index: 1, kind: input, shape index: {}]
  %s2 = inlined_call_operand.vmem [shape: bf16[128,128], index: 2, kind: output, shape index: {0}]
  %s3 = inlined_call_operand.vmem [shape: f32[2,2,128], index: 3, kind: output, shape index: {1}]
  %4 = xla_tuple %s2, %s3
  %s5 = sld [smem:[#allocation0]]
  $region49: #{discriminator_forward.5} parent=0
    _
  %s7 = ssub.s32 1, %s5
  %s8 = scalar_select 0, %s7, %s5
  loop: start=0, step=1, limit=4
  $region2: #{discriminator_forward.5} parent=0 // loop_pre_header
    _
  $region3: #{discriminator_forward.5} parent=0 // loop_header
    %s10 = sphi 0, %s14
    %p11 = scmp.ge.s32.totalorder %s10, 4
    %s20 = sphi 0, %s22
    %s23 = sphi 0, %s20
    %s24 = sphi 0, %s23
    %s40 = sphi 0, %s24
    %s44 = sphi 0, %s44
    %s46 = sphi 0, %s44
    %s47 = sphi 0, %s46
    %s61 = sphi 0, %s47
    %s67 = sphi 0, %s69
    %s70 = sphi 0, %s67
    %s71 = sphi 0, %s70
    %s87 = sphi 0, %s71
    %s93 = sphi 0, %s95
    %s96 = sphi 0, %s93
    %s97 = sphi 0, %s96
    %s113 = sphi 0, %s97
  $region4: #{discriminator_forward.5} parent=0 // loop_header_branch
    %13 = sbr.rel (%p11) target = $region8
  $region5: #{discriminator_forward.5} parent=0 // loop_body
    %s15 = ssub.s32 %s10, 1
    %s16 = ssub.s32 %s10, 2
    %s17 = sadd.s32 %s10, 1
    %s18 = ssub.s32 %s10, %s17
    %p19 = scmp.eq.s32.totalorder %s18, 0
    %s21 = sadd.s32 %s20, 1
    %s22 = scalar_select %p19, %s20, %s21
    %p25 = pneg %p19
    %p26 = scmp.eq.s32.totalorder %s10, 1
    %p27 = por %p25, %p26
    %p28 = scmp.ne.s32.totalorder %s20, %s23
    %p29 = scmp.eq.s32.totalorder %s10, 0
    %p30 = por %p28, %p29
    %p31 = scmp.ne.s32.totalorder %s20, %s23
    %p32 = scmp.eq.s32.totalorder %s15, 1
    %p33 = por %p31, %p32
    %p34 = scmp.ne.s32.totalorder %s23, %s24
    %p35 = scmp.eq.s32.totalorder %s15, 0
    %p36 = por %p34, %p35
    %p37 = scmp.ne.s32.totalorder %s23, %s24
    %p38 = scmp.eq.s32.totalorder %s16, 1
    %p39 = por %p37, %p38
    %p41 = scmp.ne.s32.totalorder %s24, %s40
    %p42 = scmp.eq.s32.totalorder %s16, 0
    %p43 = por %p41, %p42
    %s45 = sadd.s32 %s44, 1
    %p48 = scmp.eq.s32.totalorder %s10, 1
    %p49 = scmp.ne.s32.totalorder %s44, %s46
    %p50 = scmp.eq.s32.totalorder %s10, 0
    %p51 = por %p49, %p50
    %p52 = scmp.ne.s32.totalorder %s44, %s46
    %p53 = scmp.eq.s32.totalorder %s15, 1
    %p54 = por %p52, %p53
    %p55 = scmp.ne.s32.totalorder %s46, %s47
    %p56 = scmp.eq.s32.totalorder %s15, 0
    %p57 = por %p55, %p56
    %p58 = scmp.ne.s32.totalorder %s46, %s47
    %p59 = scmp.eq.s32.totalorder %s16, 1
    %p60 = por %p58, %p59
    %p62 = scmp.ne.s32.totalorder %s47, %s61
    %p63 = scmp.eq.s32.totalorder %s16, 0
    %p64 = por %p62, %p63
    %s65 = ssub.s32 %s10, %s17
    %p66 = scmp.eq.s32.totalorder %s65, 0
    %s68 = sadd.s32 %s67, 1
    %s69 = scalar_select %p66, %s67, %s68
    %p72 = pneg %p66
    %p73 = scmp.eq.s32.totalorder %s10, 1
    %p74 = por %p72, %p73
    %p75 = scmp.ne.s32.totalorder %s67, %s70
    %p76 = scmp.eq.s32.totalorder %s10, 0
    %p77 = por %p75, %p76
    %p78 = scmp.ne.s32.totalorder %s67, %s70
    %p79 = scmp.eq.s32.totalorder %s15, 1
    %p80 = por %p78, %p79
    %p81 = scmp.ne.s32.totalorder %s70, %s71
    %p82 = scmp.eq.s32.totalorder %s15, 0
    %p83 = por %p81, %p82
    %p84 = scmp.ne.s32.totalorder %s70, %s71
    %p85 = scmp.eq.s32.totalorder %s16, 1
    %p86 = por %p84, %p85
    %p88 = scmp.ne.s32.totalorder %s71, %s87
    %p89 = scmp.eq.s32.totalorder %s16, 0
    %p90 = por %p88, %p89
    %s91 = ssub.s32 %s10, %s17
    %p92 = scmp.eq.s32.totalorder %s91, 0
    %s94 = sadd.s32 %s93, 1
    %s95 = scalar_select %p92, %s93, %s94
    %p98 = pneg %p92
    %p99 = scmp.eq.s32.totalorder %s10, 1
    %p100 = por %p98, %p99
    %p101 = scmp.ne.s32.totalorder %s93, %s96
    %p102 = scmp.eq.s32.totalorder %s10, 0
    %p103 = por %p101, %p102
    %p104 = scmp.ne.s32.totalorder %s93, %s96
    %p105 = scmp.eq.s32.totalorder %s15, 1
    %p106 = por %p104, %p105
    %p107 = scmp.ne.s32.totalorder %s96, %s97
    %p108 = scmp.eq.s32.totalorder %s15, 0
    %p109 = por %p107, %p108
    %p110 = scmp.ne.s32.totalorder %s96, %s97
    %p111 = scmp.eq.s32.totalorder %s16, 1
    %p112 = por %p110, %p111
    %p114 = scmp.ne.s32.totalorder %s97, %s113
    %p115 = scmp.eq.s32.totalorder %s16, 0
    %p116 = por %p114, %p115
    %p117 = scmp.le.s32.totalorder 1, %s10
    %p118 = scmp.lt.s32.totalorder %s10, 3
    %p119 = pnand %p117, %p118
    %p120 = pneg %p119
    // Predicated region
    $region9: #{discriminator_forward.5} parent=5 // pred_check
      _
    $region10: #{discriminator_forward.5} parent=5 // pred_check_branch
      %122 = sbr.rel (%p119) target = $region12
    $region11: #{discriminator_forward.5} parent=5 // pred_region
      %s123 = ssub.s32 %s10, 1
      // Predicated region
      $region13: #{discriminator_forward.5} parent=11 // pred_check
        %p124 = pneg %p57
      $region14: #{discriminator_forward.5} parent=11 // pred_check_branch
        %126 = sbr.rel (%p124) target = $region16
      $region15: #{discriminator_forward.5} parent=11 // pred_region
        _
      $region16: #{discriminator_forward.5} parent=11 // pred_fallthru
        _
    $region12: #{discriminator_forward.5} parent=5 // pred_fallthru
      _
    %p127 = scmp.lt.s32.totalorder %s10, 2
    // Predicated region
    $region17: #{discriminator_forward.5} parent=5 // pred_check
      %p128 = pneg %p127
    $region18: #{discriminator_forward.5} parent=5 // pred_check_branch
      %130 = sbr.rel (%p128) target = $region20
    $region19: #{discriminator_forward.5} parent=5 // pred_region
      // Predicated region
      $region21: #{discriminator_forward.5} parent=19 // pred_check
        %p131 = pneg %p30
      $region22: #{discriminator_forward.5} parent=19 // pred_check_branch
        %133 = sbr.rel (%p131) target = $region24
      $region23: #{discriminator_forward.5} parent=19 // pred_region
        %s134 = smul.u32 8, %s10
        %p135 = scmp.lt.s32.totalorder %s134, 15
        %s136 = scalar_select %p135, %s134, 15
        %s137 = smul.addr %s136, 4
        %s138 = scalar_lea.vmem %s0, %s137
        %s139 = smul.u32 8, %s10
      $region24: #{discriminator_forward.5} parent=19 // pred_fallthru
        _
    $region20: #{discriminator_forward.5} parent=5 // pred_fallthru
      _
    %p140 = scmp.le.s32.totalorder 1, %s10
    %p141 = scmp.lt.s32.totalorder %s10, 3
    %p142 = pnand %p140, %p141
    %p143 = pneg %p142
    // Predicated region
    $region25: #{discriminator_forward.5} parent=5 // pred_check
      _
    $region26: #{discriminator_forward.5} parent=5 // pred_check_branch
      %145 = sbr.rel (%p142) target = $region28
    $region27: #{discriminator_forward.5} parent=5 // pred_region
      %s146 = ssub.s32 %s10, 1
      %s147 = smul.u32 8, %s15
      %p148 = scmp.lt.s32.totalorder %s147, 15
      %s149 = scalar_select %p148, %s147, 15
      %s150 = smul.addr %s149, 4
      %s151 = scalar_lea.vmem %s0, %s150
      %p152 = pneg %p36
      %p153 = pneg %p33
      %p154 = pneg %p57
      %p155 = pneg %p54
      %p156 = pneg %p83
      %p157 = pneg %p80
      %s158 = smul.u32 8, %s15
      %p159 = scmp.lt.s32.totalorder %s158, 15
      %s160 = scalar_select %p159, %s158, 15
      %s161 = smul.addr %s160, 4
      %s162 = scalar_lea.vmem %s2, %s161
      %p163 = pneg %p109
      %p164 = pneg %p106
      %p165 = scmp.lt.s32.totalorder %s15, 1
      %s166 = scalar_select %p165, %s15, 1
      %s167 = smul.addr %s166, 2
      %s168 = scalar_lea.vmem %s3, %s167
      %s169 = smul.u32 8, %s15
      %p170 = scmp.lt.s32.totalorder %s169, 15
      %s171 = scalar_select %p170, %s169, 15
      %s172 = smul.addr %s171, 4
      %s173 = scalar_lea.vmem %s0, %s172
      %s174 = smul.u32 8, %s15
      %s175 = smul.u32 8, %s15
      %p176 = scmp.lt.s32.totalorder %s175, 15
      %s177 = scalar_select %p176, %s175, 15
      %s178 = smul.addr %s177, 4
      %s179 = scalar_lea.vmem %s2, %s178
      %s180 = smul.u32 8, %s15
      %p181 = scmp.lt.s32.totalorder %s15, 1
      %s182 = scalar_select %p181, %s15, 1
      %s183 = smul.addr %s182, 2
      %s184 = scalar_lea.vmem %s3, %s183
      %v186 = vld [vmem:[%s173] sm:$0xf]
      %v187 = vld [vmem:[%s173 + $0x4] sm:$0xf]
      %v188 = vld [vmem:[%s173 + $0x8] sm:$0xf]
      %v189 = vld [vmem:[%s173 + $0xc] sm:$0xf]
      %v190 = vld [vmem:[%s173 + $0x10] sm:$0xf]
      %v191 = vld [vmem:[%s173 + $0x14] sm:$0xf]
      %v192 = vld [vmem:[%s173 + $0x18] sm:$0xf]
      %v193 = vld [vmem:[%s173 + $0x1c] sm:$0xf]
      %v194 = vld [vmem:[%s1] sm:$0xf]
      %v195 = vld [vmem:[%s1 + $0x4] sm:$0xf]
      %v196 = vld [vmem:[%s1 + $0x8] sm:$0xf]
      %v197 = vld [vmem:[%s1 + $0xc] sm:$0xf]
      %v198 = vld [vmem:[%s1 + $0x10] sm:$0xf]
      %v199 = vld [vmem:[%s1 + $0x14] sm:$0xf]
      %v200 = vld [vmem:[%s1 + $0x18] sm:$0xf]
      %v201 = vld [vmem:[%s1 + $0x1c] sm:$0xf]
      %v202 = vld [vmem:[%s1 + $0x20] sm:$0xf]
      %v203 = vld [vmem:[%s1 + $0x24] sm:$0xf]
      %v204 = vld [vmem:[%s1 + $0x28] sm:$0xf]
      %v205 = vld [vmem:[%s1 + $0x2c] sm:$0xf]
      %v206 = vld [vmem:[%s1 + $0x30] sm:$0xf]
      %v207 = vld [vmem:[%s1 + $0x34] sm:$0xf]
      %v208 = vld [vmem:[%s1 + $0x38] sm:$0xf]
      %v209 = vld [vmem:[%s1 + $0x3c] sm:$0xf]
      %v218 = vunpack.c.l.b16 %v186
      %v219 = vunpack.c.l.b16 %v187
      %v220 = vunpack.c.l.b16 %v188
      %v221 = vunpack.c.l.b16 %v189
      %v222 = vunpack.c.l.b16 %v190
      %v223 = vunpack.c.l.b16 %v191
      %v224 = vunpack.c.l.b16 %v192
      %v225 = vunpack.c.l.b16 %v193
      %v226 = vpack.c.b16 %v219, %v218
      %v227 = vpack.c.b16 %v221, %v220
      %v228 = vpack.c.b16 %v223, %v222
      %v229 = vpack.c.b16 %v225, %v224
      %v250 = vunpack.c.l.b16 %v194
      %v251 = vunpack.c.l.b16 %v195
      %v252 = vunpack.c.l.b16 %v196
      %v253 = vunpack.c.l.b16 %v197
      %v254 = vunpack.c.l.b16 %v198
      %v255 = vunpack.c.l.b16 %v199
      %v256 = vunpack.c.l.b16 %v200
      %v257 = vunpack.c.l.b16 %v201
      %v258 = vunpack.c.l.b16 %v202
      %v259 = vunpack.c.l.b16 %v203
      %v260 = vunpack.c.l.b16 %v204
      %v261 = vunpack.c.l.b16 %v205
      %v262 = vunpack.c.l.b16 %v206
      %v263 = vunpack.c.l.b16 %v207
      %v264 = vunpack.c.l.b16 %v208
      %v265 = vunpack.c.l.b16 %v209
      %v266 = vpack.c.b16 %v251, %v250
      %v267 = vpack.c.b16 %v253, %v252
      %v268 = vpack.c.b16 %v255, %v254
      %v269 = vpack.c.b16 %v257, %v256
      %v270 = vpack.c.b16 %v259, %v258
      %v271 = vpack.c.b16 %v261, %v260
      %v272 = vpack.c.b16 %v263, %v262
      %v273 = vpack.c.b16 %v265, %v264
      %282 = vmatprep.subr.bf16.mxu0 0
      %283 = vmatpush1.bf16.msra.mxu0 %v273
      %284 = vmatprep.subr.bf16.mxu0 0
      %285 = vmatpush1.bf16.msra.mxu0 %v272
      %286 = vmatprep.subr.bf16.mxu0 0
      %287 = vmatpush1.bf16.msra.mxu0 %v271
      %288 = vmatprep.subr.bf16.mxu0 0
      %289 = vmatpush1.bf16.msra.mxu0 %v270
      %290 = vmatprep.subr.bf16.mxu0 0
      %291 = vmatpush1.bf16.msra.mxu0 %v269
      %292 = vmatprep.subr.bf16.mxu0 0
      %293 = vmatpush1.bf16.msra.mxu0 %v268
      %294 = vmatprep.subr.bf16.mxu0 0
      %295 = vmatpush1.bf16.msra.mxu0 %v267
      %296 = vmatprep.subr.bf16.mxu0 0
      %297 = vmatpush1.bf16.msra.mxu0 %v266
      %298 = vmatprep.subr.bf16.mxu0 0
      %299 = vmatpush2.bf16.msra.mxu0 0
      %300 = vmatprep.subr.bf16.mxu0 0
      %301 = vmatpush2.bf16.msra.mxu0 0
      %302 = vmatprep.subr.bf16.mxu0 0
      %303 = vmatpush2.bf16.msra.mxu0 0
      %304 = vmatprep.subr.bf16.mxu0 0
      %305 = vmatpush2.bf16.msra.mxu0 0
      %306 = vmatprep.subr.bf16.mxu0 0
      %307 = vmatpush2.bf16.msra.mxu0 0
      %308 = vmatprep.subr.bf16.mxu0 0
      %309 = vmatpush2.bf16.msra.mxu0 0
      %310 = vmatprep.subr.bf16.mxu0 0
      %311 = vmatpush2.bf16.msra.mxu0 0
      %312 = vmatprep.subr.bf16.mxu0 0
      %313 = vmatpush2.bf16.msra.mxu0 0
      %314 = vmatprep.mubr.bf16.mxu0 0
      %315 = vmatmul.mubr.bf16.gmra.mxu0 %v226
      %v316 = vpop.f32.mrf.mxu0
      %v317 = vadd.f32 0.0, %v316
      %v318 = vpop.f32.mrf.mxu0
      %v319 = vpop.f32.mrf.mxu0
      %v320 = vadd.f32 0.0, %v319
      %v321 = vpop.f32.mrf.mxu0
      %322 = vmatprep.mubr.bf16.mxu0 0
      %323 = vmatmul.mubr.bf16.gmra.mxu0 %v227
      %v324 = vpop.f32.mrf.mxu0
      %v325 = vadd.f32 0.0, %v324
      %v326 = vpop.f32.mrf.mxu0
      %v327 = vpop.f32.mrf.mxu0
      %v328 = vadd.f32 0.0, %v327
      %v329 = vpop.f32.mrf.mxu0
      %330 = vmatprep.mubr.bf16.mxu0 0
      %331 = vmatmul.mubr.bf16.gmra.mxu0 %v228
      %v332 = vpop.f32.mrf.mxu0
      %v333 = vadd.f32 0.0, %v332
      %v334 = vpop.f32.mrf.mxu0
      %v335 = vpop.f32.mrf.mxu0
      %v336 = vadd.f32 0.0, %v335
      %v337 = vpop.f32.mrf.mxu0
      %338 = vmatprep.mubr.bf16.mxu0 0
      %339 = vmatmul.mubr.bf16.gmra.mxu0 %v229
      %v340 = vpop.f32.mrf.mxu0
      %v341 = vadd.f32 0.0, %v340
      %v342 = vpop.f32.mrf.mxu0
      %v343 = vpop.f32.mrf.mxu0
      %v344 = vadd.f32 0.0, %v343
      %v345 = vpop.f32.mrf.mxu0
      %346 = vdwg.mxu0
      %v347 = vpack.c.bf16 %v320, %v317
      %v348 = vpack.c.bf16 %v328, %v325
      %v349 = vpack.c.bf16 %v336, %v333
      %v350 = vpack.c.bf16 %v344, %v341
      %v355 = vunpack.c.l.b16 %v347
      %v356 = vunpack.c.h.b16 %v347
      %v357 = vunpack.c.l.b16 %v348
      %v358 = vunpack.c.h.b16 %v348
      %v359 = vunpack.c.l.b16 %v349
      %v360 = vunpack.c.h.b16 %v349
      %v361 = vunpack.c.l.b16 %v350
      %v362 = vunpack.c.h.b16 %v350
      %v363 = vpack.c.b16 %v355, %v355
      %v364 = vpack.c.b16 %v356, %v356
      %v365 = vpack.c.b16 %v357, %v357
      %v366 = vpack.c.b16 %v358, %v358
      %v367 = vpack.c.b16 %v359, %v359
      %v368 = vpack.c.b16 %v360, %v360
      %v369 = vpack.c.b16 %v361, %v361
      %v370 = vpack.c.b16 %v362, %v362
      %379 = vst [vmem:[%s179] sm:$0xf] %v363
      %380 = vst [vmem:[%s179 + $0x4] sm:$0xf] %v364
      %381 = vst [vmem:[%s179 + $0x8] sm:$0xf] %v365
      %382 = vst [vmem:[%s179 + $0xc] sm:$0xf] %v366
      %383 = vst [vmem:[%s179 + $0x10] sm:$0xf] %v367
      %384 = vst [vmem:[%s179 + $0x14] sm:$0xf] %v368
      %385 = vst [vmem:[%s179 + $0x18] sm:$0xf] %v369
      %386 = vst [vmem:[%s179 + $0x1c] sm:$0xf] %v370
      %v387 = vadd.f32 %v317, %v320
      %v388 = vadd.f32 %v387, %v325
      %v389 = vadd.f32 %v388, %v328
      %v390 = vadd.f32 %v389, %v333
      %v391 = vadd.f32 %v390, %v336
      %v392 = vadd.f32 %v391, %v341
      %v393 = vadd.f32 %v392, %v344
      %v394 = vrot.slane %v393, 4
      %v395 = vadd.f32 %v393, %v394
      %v396 = vrot.slane %v395, 2
      %v397 = vadd.f32 %v395, %v396
      %v398 = vrot.slane %v397, 1
      %v399 = vadd.f32 %v397, %v398
      %400 = vst [vmem:[%s184] sm:$0x1] %v399
      %v401 = vmul.f32 %v317, %v317
      %v402 = vmul.f32 %v320, %v320
      %v403 = vmul.f32 %v325, %v325
      %v404 = vmul.f32 %v328, %v328
      %v405 = vmul.f32 %v333, %v333
      %v406 = vmul.f32 %v336, %v336
      %v407 = vmul.f32 %v341, %v341
      %v408 = vmul.f32 %v344, %v344
      %v409 = vadd.f32 %v401, %v402
      %v410 = vadd.f32 %v409, %v403
      %v411 = vadd.f32 %v410, %v404
      %v412 = vadd.f32 %v411, %v405
      %v413 = vadd.f32 %v412, %v406
      %v414 = vadd.f32 %v413, %v407
      %v415 = vadd.f32 %v414, %v408
      %v416 = vrot.slane %v415, 4
      %v417 = vadd.f32 %v415, %v416
      %v418 = vrot.slane %v417, 2
      %v419 = vadd.f32 %v417, %v418
      %v420 = vrot.slane %v419, 1
      %v421 = vadd.f32 %v419, %v420
      %422 = vst [vmem:[%s184 + $0x1] sm:$0x1] %v421
      %s423 = smul.u32 8, %s15
      %p424 = scmp.lt.s32.totalorder %s423, 15
      %s425 = scalar_select %p424, %s423, 15
      %s426 = smul.addr %s425, 4
      %s427 = scalar_lea.vmem %s2, %s426
      %p428 = scmp.lt.s32.totalorder %s15, 1
      %s429 = scalar_select %p428, %s15, 1
      %s430 = smul.addr %s429, 2
      %s431 = scalar_lea.vmem %s3, %s430
      // Predicated region
      $region29: #{discriminator_forward.5} parent=27 // pred_check
        %p432 = pneg %p80
      $region30: #{discriminator_forward.5} parent=27 // pred_check_branch
        %434 = sbr.rel (%p432) target = $region32
      $region31: #{discriminator_forward.5} parent=27 // pred_region
        %s435 = smul.u32 8, %s15
      $region32: #{discriminator_forward.5} parent=27 // pred_fallthru
        _
      // Predicated region
      $region33: #{discriminator_forward.5} parent=27 // pred_check
        %p436 = pneg %p106
      $region34: #{discriminator_forward.5} parent=27 // pred_check_branch
        %438 = sbr.rel (%p436) target = $region36
      $region35: #{discriminator_forward.5} parent=27 // pred_region
        _
      $region36: #{discriminator_forward.5} parent=27 // pred_fallthru
        _
    $region28: #{discriminator_forward.5} parent=5 // pred_fallthru
      _
    %p439 = scmp.le.s32.totalorder 2, %s10
    // Predicated region
    $region37: #{discriminator_forward.5} parent=5 // pred_check
      %p440 = pneg %p439
    $region38: #{discriminator_forward.5} parent=5 // pred_check_branch
      %442 = sbr.rel (%p440) target = $region40
    $region39: #{discriminator_forward.5} parent=5 // pred_region
      %s443 = ssub.s32 %s10, 2
      // Predicated region
      $region41: #{discriminator_forward.5} parent=39 // pred_check
        %p444 = pneg %p86
      $region42: #{discriminator_forward.5} parent=39 // pred_check_branch
        %446 = sbr.rel (%p444) target = $region44
      $region43: #{discriminator_forward.5} parent=39 // pred_region
        %s447 = smul.u32 8, %s16
        %p448 = scmp.lt.s32.totalorder %s447, 15
        %s449 = scalar_select %p448, %s447, 15
        %s450 = smul.addr %s449, 4
        %s451 = scalar_lea.vmem %s2, %s450
      $region44: #{discriminator_forward.5} parent=39 // pred_fallthru
        _
      // Predicated region
      $region45: #{discriminator_forward.5} parent=39 // pred_check
        %p452 = pneg %p112
      $region46: #{discriminator_forward.5} parent=39 // pred_check_branch
        %454 = sbr.rel (%p452) target = $region48
      $region47: #{discriminator_forward.5} parent=39 // pred_region
        %p455 = scmp.lt.s32.totalorder %s16, 1
        %s456 = scalar_select %p455, %s16, 1
        %s457 = smul.addr %s456, 2
        %s458 = scalar_lea.vmem %s3, %s457
      $region48: #{discriminator_forward.5} parent=39 // pred_fallthru
        _
    $region40: #{discriminator_forward.5} parent=5 // pred_fallthru
      _
  $region6: #{discriminator_forward.5} parent=0 // loop_footer
    %s14 = sadd.s32 1, %s10
  $region7: #{discriminator_forward.5} parent=0 // loop_footer_branch
    %9 = sbr.rel target = $region3
  $region8: #{discriminator_forward.5} parent=0 // loop_exit
    _

// kernel: discriminator_forward.6
$region0: #{discriminator_forward.6}
  #allocation0 [shape = 'u32[]', space=smem, size = 0x4, offset = 0x4, fixed_abs, tag = 'smem constant byte address 0x4 - core index']
  #allocation1 [shape = 'u32[144,128]{1,0:T(1,128)}', space=vmem, size = 0x12000, scoped, tag = 'internal scratch']
  %s0 = inlined_call_operand.vmem [shape: bf16[32,1152], index: 0, kind: input, shape index: {}]
  %s1 = inlined_call_operand.vmem [shape: f32[1,1152], index: 1, kind: input, shape index: {}]
  %s2 = inlined_call_operand.vmem [shape: f32[1,1152], index: 2, kind: input, shape index: {}]
  %s3 = inlined_call_operand.vmem [shape: bf16[1152,128], index: 3, kind: input, shape index: {}]
  %s4 = inlined_call_operand.vmem [shape: bf16[32,128], index: 4, kind: output, shape index: {0}]
  %s5 = inlined_call_operand.vmem [shape: f32[2,2,128], index: 5, kind: output, shape index: {1}]
  %6 = xla_tuple %s4, %s5
  %s7 = sld [smem:[#allocation0]]
  $region57: #{discriminator_forward.6} parent=0
    _
  %s9 = ssub.s32 1, %s7
  %s10 = scalar_select 0, %s9, %s7
  loop: start=0, step=1, limit=4
  $region2: #{discriminator_forward.6} parent=0 // loop_pre_header
    _
  $region3: #{discriminator_forward.6} parent=0 // loop_header
    %s12 = sphi 0, %s16
    %p13 = scmp.ge.s32.totalorder %s12, 4
    %s22 = sphi 0, %s24
    %s25 = sphi 0, %s22
    %s26 = sphi 0, %s25
    %s42 = sphi 0, %s26
    %s46 = sphi 0, %s46
    %s48 = sphi 0, %s46
    %s49 = sphi 0, %s48
    %s63 = sphi 0, %s49
    %s67 = sphi 0, %s67
    %s69 = sphi 0, %s67
    %s70 = sphi 0, %s69
    %s84 = sphi 0, %s70
    %s88 = sphi 0, %s88
    %s90 = sphi 0, %s88
    %s91 = sphi 0, %s90
    %s105 = sphi 0, %s91
    %s111 = sphi 0, %s113
    %s114 = sphi 0, %s111
    %s115 = sphi 0, %s114
    %s131 = sphi 0, %s115
    %s137 = sphi 0, %s139
    %s140 = sphi 0, %s137
    %s141 = sphi 0, %s140
    %s157 = sphi 0, %s141
  $region4: #{discriminator_forward.6} parent=0 // loop_header_branch
    %15 = sbr.rel (%p13) target = $region8
  $region5: #{discriminator_forward.6} parent=0 // loop_body
    %s17 = ssub.s32 %s12, 1
    %s18 = ssub.s32 %s12, 2
    %s19 = sadd.s32 %s12, 1
    %s20 = ssub.s32 %s12, %s19
    %p21 = scmp.eq.s32.totalorder %s20, 0
    %s23 = sadd.s32 %s22, 1
    %s24 = scalar_select %p21, %s22, %s23
    %p27 = pneg %p21
    %p28 = scmp.eq.s32.totalorder %s12, 1
    %p29 = por %p27, %p28
    %p30 = scmp.ne.s32.totalorder %s22, %s25
    %p31 = scmp.eq.s32.totalorder %s12, 0
    %p32 = por %p30, %p31
    %p33 = scmp.ne.s32.totalorder %s22, %s25
    %p34 = scmp.eq.s32.totalorder %s17, 1
    %p35 = por %p33, %p34
    %p36 = scmp.ne.s32.totalorder %s25, %s26
    %p37 = scmp.eq.s32.totalorder %s17, 0
    %p38 = por %p36, %p37
    %p39 = scmp.ne.s32.totalorder %s25, %s26
    %p40 = scmp.eq.s32.totalorder %s18, 1
    %p41 = por %p39, %p40
    %p43 = scmp.ne.s32.totalorder %s26, %s42
    %p44 = scmp.eq.s32.totalorder %s18, 0
    %p45 = por %p43, %p44
    %s47 = sadd.s32 %s46, 1
    %p50 = scmp.eq.s32.totalorder %s12, 1
    %p51 = scmp.ne.s32.totalorder %s46, %s48
    %p52 = scmp.eq.s32.totalorder %s12, 0
    %p53 = por %p51, %p52
    %p54 = scmp.ne.s32.totalorder %s46, %s48
    %p55 = scmp.eq.s32.totalorder %s17, 1
    %p56 = por %p54, %p55
    %p57 = scmp.ne.s32.totalorder %s48, %s49
    %p58 = scmp.eq.s32.totalorder %s17, 0
    %p59 = por %p57, %p58
    %p60 = scmp.ne.s32.totalorder %s48, %s49
    %p61 = scmp.eq.s32.totalorder %s18, 1
    %p62 = por %p60, %p61
    %p64 = scmp.ne.s32.totalorder %s49, %s63
    %p65 = scmp.eq.s32.totalorder %s18, 0
    %p66 = por %p64, %p65
    %s68 = sadd.s32 %s67, 1
    %p71 = scmp.eq.s32.totalorder %s12, 1
    %p72 = scmp.ne.s32.totalorder %s67, %s69
    %p73 = scmp.eq.s32.totalorder %s12, 0
    %p74 = por %p72, %p73
    %p75 = scmp.ne.s32.totalorder %s67, %s69
    %p76 = scmp.eq.s32.totalorder %s17, 1
    %p77 = por %p75, %p76
    %p78 = scmp.ne.s32.totalorder %s69, %s70
    %p79 = scmp.eq.s32.totalorder %s17, 0
    %p80 = por %p78, %p79
    %p81 = scmp.ne.s32.totalorder %s69, %s70
    %p82 = scmp.eq.s32.totalorder %s18, 1
    %p83 = por %p81, %p82
    %p85 = scmp.ne.s32.totalorder %s70, %s84
    %p86 = scmp.eq.s32.totalorder %s18, 0
    %p87 = por %p85, %p86
    %s89 = sadd.s32 %s88, 1
    %p92 = scmp.eq.s32.totalorder %s12, 1
    %p93 = scmp.ne.s32.totalorder %s88, %s90
    %p94 = scmp.eq.s32.totalorder %s12, 0
    %p95 = por %p93, %p94
    %p96 = scmp.ne.s32.totalorder %s88, %s90
    %p97 = scmp.eq.s32.totalorder %s17, 1
    %p98 = por %p96, %p97
    %p99 = scmp.ne.s32.totalorder %s90, %s91
    %p100 = scmp.eq.s32.totalorder %s17, 0
    %p101 = por %p99, %p100
    %p102 = scmp.ne.s32.totalorder %s90, %s91
    %p103 = scmp.eq.s32.totalorder %s18, 1
    %p104 = por %p102, %p103
    %p106 = scmp.ne.s32.totalorder %s91, %s105
    %p107 = scmp.eq.s32.totalorder %s18, 0
    %p108 = por %p106, %p107
    %s109 = ssub.s32 %s12, %s19
    %p110 = scmp.eq.s32.totalorder %s109, 0
    %s112 = sadd.s32 %s111, 1
    %s113 = scalar_select %p110, %s111, %s112
    %p116 = pneg %p110
    %p117 = scmp.eq.s32.totalorder %s12, 1
    %p118 = por %p116, %p117
    %p119 = scmp.ne.s32.totalorder %s111, %s114
    %p120 = scmp.eq.s32.totalorder %s12, 0
    %p121 = por %p119, %p120
    %p122 = scmp.ne.s32.totalorder %s111, %s114
    %p123 = scmp.eq.s32.totalorder %s17, 1
    %p124 = por %p122, %p123
    %p125 = scmp.ne.s32.totalorder %s114, %s115
    %p126 = scmp.eq.s32.totalorder %s17, 0
    %p127 = por %p125, %p126
    %p128 = scmp.ne.s32.totalorder %s114, %s115
    %p129 = scmp.eq.s32.totalorder %s18, 1
    %p130 = por %p128, %p129
    %p132 = scmp.ne.s32.totalorder %s115, %s131
    %p133 = scmp.eq.s32.totalorder %s18, 0
    %p134 = por %p132, %p133
    %s135 = ssub.s32 %s12, %s19
    %p136 = scmp.eq.s32.totalorder %s135, 0
    %s138 = sadd.s32 %s137, 1
    %s139 = scalar_select %p136, %s137, %s138
    %p142 = pneg %p136
    %p143 = scmp.eq.s32.totalorder %s12, 1
    %p144 = por %p142, %p143
    %p145 = scmp.ne.s32.totalorder %s137, %s140
    %p146 = scmp.eq.s32.totalorder %s12, 0
    %p147 = por %p145, %p146
    %p148 = scmp.ne.s32.totalorder %s137, %s140
    %p149 = scmp.eq.s32.totalorder %s17, 1
    %p150 = por %p148, %p149
    %p151 = scmp.ne.s32.totalorder %s140, %s141
    %p152 = scmp.eq.s32.totalorder %s17, 0
    %p153 = por %p151, %p152
    %p154 = scmp.ne.s32.totalorder %s140, %s141
    %p155 = scmp.eq.s32.totalorder %s18, 1
    %p156 = por %p154, %p155
    %p158 = scmp.ne.s32.totalorder %s141, %s157
    %p159 = scmp.eq.s32.totalorder %s18, 0
    %p160 = por %p158, %p159
    %p161 = scmp.le.s32.totalorder 1, %s12
    %p162 = scmp.lt.s32.totalorder %s12, 3
    %p163 = pnand %p161, %p162
    %p164 = pneg %p163
    // Predicated region
    $region9: #{discriminator_forward.6} parent=5 // pred_check
      _
    $region10: #{discriminator_forward.6} parent=5 // pred_check_branch
      %166 = sbr.rel (%p163) target = $region12
    $region11: #{discriminator_forward.6} parent=5 // pred_region
      %s167 = ssub.s32 %s12, 1
      // Predicated region
      $region13: #{discriminator_forward.6} parent=11 // pred_check
        %p168 = pneg %p59
      $region14: #{discriminator_forward.6} parent=11 // pred_check_branch
        %170 = sbr.rel (%p168) target = $region16
      $region15: #{discriminator_forward.6} parent=11 // pred_region
        _
      $region16: #{discriminator_forward.6} parent=11 // pred_fallthru
        _
      // Predicated region
      $region17: #{discriminator_forward.6} parent=11 // pred_check
        %p171 = pneg %p80
      $region18: #{discriminator_forward.6} parent=11 // pred_check_branch
        %173 = sbr.rel (%p171) target = $region20
      $region19: #{discriminator_forward.6} parent=11 // pred_region
        _
      $region20: #{discriminator_forward.6} parent=11 // pred_fallthru
        _
      // Predicated region
      $region21: #{discriminator_forward.6} parent=11 // pred_check
        %p174 = pneg %p101
      $region22: #{discriminator_forward.6} parent=11 // pred_check_branch
        %176 = sbr.rel (%p174) target = $region24
      $region23: #{discriminator_forward.6} parent=11 // pred_region
        _
      $region24: #{discriminator_forward.6} parent=11 // pred_fallthru
        _
    $region12: #{discriminator_forward.6} parent=5 // pred_fallthru
      _
    %p177 = scmp.lt.s32.totalorder %s12, 2
    // Predicated region
    $region25: #{discriminator_forward.6} parent=5 // pred_check
      %p178 = pneg %p177
    $region26: #{discriminator_forward.6} parent=5 // pred_check_branch
      %180 = sbr.rel (%p178) target = $region28
    $region27: #{discriminator_forward.6} parent=5 // pred_region
      // Predicated region
      $region29: #{discriminator_forward.6} parent=27 // pred_check
        %p181 = pneg %p32
      $region30: #{discriminator_forward.6} parent=27 // pred_check_branch
        %183 = sbr.rel (%p181) target = $region32
      $region31: #{discriminator_forward.6} parent=27 // pred_region
        %s184 = smul.u32 2, %s12
        %p185 = scmp.lt.s32.totalorder %s184, 3
        %s186 = scalar_select %p185, %s184, 3
        %s187 = smul.addr %s186, 9
        %s188 = smul.addr %s187, 4
        %s189 = scalar_lea.vmem %s0, %s188
        %s190 = smul.u32 2, %s12
      $region32: #{discriminator_forward.6} parent=27 // pred_fallthru
        _
    $region28: #{discriminator_forward.6} parent=5 // pred_fallthru
      _
    %p191 = scmp.le.s32.totalorder 1, %s12
    %p192 = scmp.lt.s32.totalorder %s12, 3
    %p193 = pnand %p191, %p192
    %p194 = pneg %p193
    // Predicated region
    $region33: #{discriminator_forward.6} parent=5 // pred_check
      _
    $region34: #{discriminator_forward.6} parent=5 // pred_check_branch
      %196 = sbr.rel (%p193) target = $region36
    $region35: #{discriminator_forward.6} parent=5 // pred_region
      %s197 = ssub.s32 %s12, 1
      %s198 = smul.u32 2, %s17
      %p199 = scmp.lt.s32.totalorder %s198, 3
      %s200 = scalar_select %p199, %s198, 3
      %s201 = smul.addr %s200, 9
      %s202 = smul.addr %s201, 4
      %s203 = scalar_lea.vmem %s0, %s202
      %p204 = pneg %p38
      %p205 = pneg %p35
      %p206 = pneg %p59
      %p207 = pneg %p56
      %p208 = pneg %p80
      %p209 = pneg %p77
      %p210 = pneg %p101
      %p211 = pneg %p98
      %p212 = pneg %p127
      %p213 = pneg %p124
      %s214 = smul.u32 2, %s17
      %p215 = scmp.lt.s32.totalorder %s214, 3
      %s216 = scalar_select %p215, %s214, 3
      %s217 = smul.addr %s216, 4
      %s218 = scalar_lea.vmem %s4, %s217
      %p219 = pneg %p153
      %p220 = pneg %p150
      %p221 = scmp.lt.s32.totalorder %s17, 1
      %s222 = scalar_select %p221, %s17, 1
      %s223 = smul.addr %s222, 2
      %s224 = scalar_lea.vmem %s5, %s223
      %s225 = smul.u32 2, %s17
      %p226 = scmp.lt.s32.totalorder %s225, 3
      %s227 = scalar_select %p226, %s225, 3
      %s228 = smul.addr %s227, 9
      %s229 = smul.addr %s228, 4
      %s230 = scalar_lea.vmem %s0, %s229
      %s231 = smul.u32 2, %s17
      %s232 = smul.u32 2, %s17
      %p233 = scmp.lt.s32.totalorder %s232, 3
      %s234 = scalar_select %p233, %s232, 3
      %s235 = smul.addr %s234, 4
      %s236 = scalar_lea.vmem %s4, %s235
      %s237 = smul.u32 2, %s17
      %p238 = scmp.lt.s32.totalorder %s17, 1
      %s239 = scalar_select %p238, %s17, 1
      %s240 = smul.addr %s239, 2
      %s241 = scalar_lea.vmem %s5, %s240
      %v245 = vld [vmem:[%s230] sm:$0xff]
      %v246 = vld [vmem:[%s230 + $0x8] sm:$0xff]
      %v247 = vld [vmem:[%s230 + $0x10] sm:$0xff]
      %v248 = vld [vmem:[%s230 + $0x18] sm:$0xff]
      %v249 = vld [vmem:[%s230 + $0x20] sm:$0xf]
      %v250 = vld [vmem:[%s230 + $0x24] sm:$0xff]
      %v251 = vld [vmem:[%s230 + $0x2c] sm:$0xff]
      %v252 = vld [vmem:[%s230 + $0x34] sm:$0xff]
      %v253 = vld [vmem:[%s230 + $0x3c] sm:$0xff]
      %v254 = vld [vmem:[%s230 + $0x44] sm:$0xf]
      %v255 = vld [vmem:[%s1] sm:$0xff]
      %v256 = vld [vmem:[%s1 + $0x8] sm:$0x1]
      %v257 = vld [vmem:[%s2] sm:$0xff]
      %v258 = vld [vmem:[%s2 + $0x8] sm:$0x1]
      %v259 = vunpack.c.l.bf16 %v245
      %v260 = vunpack.c.h.bf16 %v245
      %v261 = vunpack.c.l.bf16 %v246
      %v262 = vunpack.c.h.bf16 %v246
      %v263 = vunpack.c.l.bf16 %v247
      %v264 = vunpack.c.h.bf16 %v247
      %v265 = vunpack.c.l.bf16 %v248
      %v266 = vunpack.c.h.bf16 %v248
      %v267 = vunpack.c.l.bf16 %v249
      %v268 = vunpack.c.l.bf16 %v250
      %v269 = vunpack.c.h.bf16 %v250
      %v270 = vunpack.c.l.bf16 %v251
      %v271 = vunpack.c.h.bf16 %v251
      %v272 = vunpack.c.l.bf16 %v252
      %v273 = vunpack.c.h.bf16 %v252
      %v274 = vunpack.c.l.bf16 %v253
      %v275 = vunpack.c.h.bf16 %v253
      %v276 = vunpack.c.l.bf16 %v254
      %v279 = vlaneseq
      %v280 = vshrl.u32 %v279, 7
      %v281 = vsub.s32 0, %v280
      %v282 = vrot.slane %v255, %v281
      %v283 = vlaneseq
      %v284 = vshrl.u32 %v283, 7
      %v285 = vsub.s32 1, %v284
      %v286 = vrot.slane %v255, %v285
      %v287 = vlaneseq
      %v288 = vshrl.u32 %v287, 7
      %v289 = vsub.s32 2, %v288
      %v290 = vrot.slane %v255, %v289
      %v291 = vlaneseq
      %v292 = vshrl.u32 %v291, 7
      %v293 = vsub.s32 3, %v292
      %v294 = vrot.slane %v255, %v293
      %v295 = vlaneseq
      %v296 = vshrl.u32 %v295, 7
      %v297 = vsub.s32 4, %v296
      %v298 = vrot.slane %v255, %v297
      %v299 = vlaneseq
      %v300 = vshrl.u32 %v299, 7
      %v301 = vsub.s32 5, %v300
      %v302 = vrot.slane %v255, %v301
      %v303 = vlaneseq
      %v304 = vshrl.u32 %v303, 7
      %v305 = vsub.s32 6, %v304
      %v306 = vrot.slane %v255, %v305
      %v307 = vlaneseq
      %v308 = vshrl.u32 %v307, 7
      %v309 = vsub.s32 7, %v308
      %v310 = vrot.slane %v255, %v309
      %v311 = vlaneseq
      %v312 = vshrl.u32 %v311, 7
      %v313 = vsub.s32 0, %v312
      %v314 = vrot.slane %v256, %v313
      %v324 = vmul.f32 %v259, %v282
      %v325 = vmul.f32 %v260, %v286
      %v326 = vmul.f32 %v261, %v290
      %v327 = vmul.f32 %v262, %v294
      %v328 = vmul.f32 %v263, %v298
      %v329 = vmul.f32 %v264, %v302
      %v330 = vmul.f32 %v265, %v306
      %v331 = vmul.f32 %v266, %v310
      %v332 = vmul.f32 %v267, %v314
      %v333 = vmul.f32 %v268, %v282
      %v334 = vmul.f32 %v269, %v286
      %v335 = vmul.f32 %v270, %v290
      %v336 = vmul.f32 %v271, %v294
      %v337 = vmul.f32 %v272, %v298
      %v338 = vmul.f32 %v273, %v302
      %v339 = vmul.f32 %v274, %v306
      %v340 = vmul.f32 %v275, %v310
      %v341 = vmul.f32 %v276, %v314
      %v344 = vlaneseq
      %v345 = vshrl.u32 %v344, 7
      %v346 = vsub.s32 0, %v345
      %v347 = vrot.slane %v257, %v346
      %v348 = vlaneseq
      %v349 = vshrl.u32 %v348, 7
      %v350 = vsub.s32 1, %v349
      %v351 = vrot.slane %v257, %v350
      %v352 = vlaneseq
      %v353 = vshrl.u32 %v352, 7
      %v354 = vsub.s32 2, %v353
      %v355 = vrot.slane %v257, %v354
      %v356 = vlaneseq
      %v357 = vshrl.u32 %v356, 7
      %v358 = vsub.s32 3, %v357
      %v359 = vrot.slane %v257, %v358
      %v360 = vlaneseq
      %v361 = vshrl.u32 %v360, 7
      %v362 = vsub.s32 4, %v361
      %v363 = vrot.slane %v257, %v362
      %v364 = vlaneseq
      %v365 = vshrl.u32 %v364, 7
      %v366 = vsub.s32 5, %v365
      %v367 = vrot.slane %v257, %v366
      %v368 = vlaneseq
      %v369 = vshrl.u32 %v368, 7
      %v370 = vsub.s32 6, %v369
      %v371 = vrot.slane %v257, %v370
      %v372 = vlaneseq
      %v373 = vshrl.u32 %v372, 7
      %v374 = vsub.s32 7, %v373
      %v375 = vrot.slane %v257, %v374
      %v376 = vlaneseq
      %v377 = vshrl.u32 %v376, 7
      %v378 = vsub.s32 0, %v377
      %v379 = vrot.slane %v258, %v378
      %v389 = vadd.f32 %v324, %v347
      %v390 = vadd.f32 %v325, %v351
      %v391 = vadd.f32 %v326, %v355
      %v392 = vadd.f32 %v327, %v359
      %v393 = vadd.f32 %v328, %v363
      %v394 = vadd.f32 %v329, %v367
      %v395 = vadd.f32 %v330, %v371
      %v396 = vadd.f32 %v331, %v375
      %v397 = vadd.f32 %v332, %v379
      %v398 = vadd.f32 %v333, %v347
      %v399 = vadd.f32 %v334, %v351
      %v400 = vadd.f32 %v335, %v355
      %v401 = vadd.f32 %v336, %v359
      %v402 = vadd.f32 %v337, %v363
      %v403 = vadd.f32 %v338, %v367
      %v404 = vadd.f32 %v339, %v371
      %v405 = vadd.f32 %v340, %v375
      %v406 = vadd.f32 %v341, %v379
      %vm407 = vcmp.gt.f32.partialorder %v389, 0.0
      %vm408 = vcmp.gt.f32.partialorder %v390, 0.0
      %vm409 = vcmp.gt.f32.partialorder %v391, 0.0
      %vm410 = vcmp.gt.f32.partialorder %v392, 0.0
      %vm411 = vcmp.gt.f32.partialorder %v393, 0.0
      %vm412 = vcmp.gt.f32.partialorder %v394, 0.0
      %vm413 = vcmp.gt.f32.partialorder %v395, 0.0
      %vm414 = vcmp.gt.f32.partialorder %v396, 0.0
      %vm415 = vcmp.gt.f32.partialorder %v397, 0.0
      %vm416 = vcmp.gt.f32.partialorder %v398, 0.0
      %vm417 = vcmp.gt.f32.partialorder %v399, 0.0
      %vm418 = vcmp.gt.f32.partialorder %v400, 0.0
      %vm419 = vcmp.gt.f32.partialorder %v401, 0.0
      %vm420 = vcmp.gt.f32.partialorder %v402, 0.0
      %vm421 = vcmp.gt.f32.partialorder %v403, 0.0
      %vm422 = vcmp.gt.f32.partialorder %v404, 0.0
      %vm423 = vcmp.gt.f32.partialorder %v405, 0.0
      %vm424 = vcmp.gt.f32.partialorder %v406, 0.0
      %v425 = vmul.f32 %v389, 0.2
      %v426 = vmul.f32 %v390, 0.2
      %v427 = vmul.f32 %v391, 0.2
      %v428 = vmul.f32 %v392, 0.2
      %v429 = vmul.f32 %v393, 0.2
      %v430 = vmul.f32 %v394, 0.2
      %v431 = vmul.f32 %v395, 0.2
      %v432 = vmul.f32 %v396, 0.2
      %v433 = vmul.f32 %v397, 0.2
      %v434 = vmul.f32 %v398, 0.2
      %v435 = vmul.f32 %v399, 0.2
      %v436 = vmul.f32 %v400, 0.2
      %v437 = vmul.f32 %v401, 0.2
      %v438 = vmul.f32 %v402, 0.2
      %v439 = vmul.f32 %v403, 0.2
      %v440 = vmul.f32 %v404, 0.2
      %v441 = vmul.f32 %v405, 0.2
      %v442 = vmul.f32 %v406, 0.2
      %v443 = vsel %vm407, %v389, %v425
      %v444 = vsel %vm408, %v390, %v426
      %v445 = vsel %vm409, %v391, %v427
      %v446 = vsel %vm410, %v392, %v428
      %v447 = vsel %vm411, %v393, %v429
      %v448 = vsel %vm412, %v394, %v430
      %v449 = vsel %vm413, %v395, %v431
      %v450 = vsel %vm414, %v396, %v432
      %v451 = vsel %vm415, %v397, %v433
      %v452 = vsel %vm416, %v398, %v434
      %v453 = vsel %vm417, %v399, %v435
      %v454 = vsel %vm418, %v400, %v436
      %v455 = vsel %vm419, %v401, %v437
      %v456 = vsel %vm420, %v402, %v438
      %v457 = vsel %vm421, %v403, %v439
      %v458 = vsel %vm422, %v404, %v440
      %v459 = vsel %vm423, %v405, %v441
      %v460 = vsel %vm424, %v406, %v442
      %vm461 = vcmp.ne.bf16.partialorder %v245, %v245
      %vm462 = vcmp.ne.bf16.partialorder %v246, %v246
      %vm463 = vcmp.ne.bf16.partialorder %v247, %v247
      %vm464 = vcmp.ne.bf16.partialorder %v248, %v248
      %vm465 = vcmp.ne.bf16.partialorder %v249, %v249
      %vm466 = vcmp.ne.bf16.partialorder %v250, %v250
      %vm467 = vcmp.ne.bf16.partialorder %v251, %v251
      %vm468 = vcmp.ne.bf16.partialorder %v252, %v252
      %vm469 = vcmp.ne.bf16.partialorder %v253, %v253
      %vm470 = vcmp.ne.bf16.partialorder %v254, %v254
      %v471 = vsel %vm461, 65537, 0
      %v472 = vsel %vm462, 65537, 0
      %v473 = vsel %vm463, 65537, 0
      %v474 = vsel %vm464, 65537, 0
      %v475 = vsel %vm465, 65537, 0
      %v476 = vsel %vm466, 65537, 0
      %v477 = vsel %vm467, 65537, 0
      %v478 = vsel %vm468, 65537, 0
      %v479 = vsel %vm469, 65537, 0
      %v480 = vsel %vm470, 65537, 0
      %v481 = vunpack.c.l.b16 %v471
      %v482 = vunpack.c.h.b16 %v471
      %v483 = vunpack.c.l.b16 %v472
      %v484 = vunpack.c.h.b16 %v472
      %v485 = vunpack.c.l.b16 %v473
      %v486 = vunpack.c.h.b16 %v473
      %v487 = vunpack.c.l.b16 %v474
      %v488 = vunpack.c.h.b16 %v474
      %v489 = vunpack.c.l.b16 %v475
      %v490 = vunpack.c.l.b16 %v476
      %v491 = vunpack.c.h.b16 %v476
      %v492 = vunpack.c.l.b16 %v477
      %v493 = vunpack.c.h.b16 %v477
      %v494 = vunpack.c.l.b16 %v478
      %v495 = vunpack.c.h.b16 %v478
      %v496 = vunpack.c.l.b16 %v479
      %v497 = vunpack.c.h.b16 %v479
      %v498 = vunpack.c.l.b16 %v480
      %vm499 = vcmp.ne.s32.totalorder %v481, 0
      %vm500 = vcmp.ne.s32.totalorder %v482, 0
      %vm501 = vcmp.ne.s32.totalorder %v483, 0
      %vm502 = vcmp.ne.s32.totalorder %v484, 0
      %vm503 = vcmp.ne.s32.totalorder %v485, 0
      %vm504 = vcmp.ne.s32.totalorder %v486, 0
      %vm505 = vcmp.ne.s32.totalorder %v487, 0
      %vm506 = vcmp.ne.s32.totalorder %v488, 0
      %vm507 = vcmp.ne.s32.totalorder %v489, 0
      %vm508 = vcmp.ne.s32.totalorder %v490, 0
      %vm509 = vcmp.ne.s32.totalorder %v491, 0
      %vm510 = vcmp.ne.s32.totalorder %v492, 0
      %vm511 = vcmp.ne.s32.totalorder %v493, 0
      %vm512 = vcmp.ne.s32.totalorder %v494, 0
      %vm513 = vcmp.ne.s32.totalorder %v495, 0
      %vm514 = vcmp.ne.s32.totalorder %v496, 0
      %vm515 = vcmp.ne.s32.totalorder %v497, 0
      %vm516 = vcmp.ne.s32.totalorder %v498, 0
      %v517 = vsel %vm499, 0.0, %v443
      %v518 = vsel %vm500, 0.0, %v444
      %v519 = vsel %vm501, 0.0, %v445
      %v520 = vsel %vm502, 0.0, %v446
      %v521 = vsel %vm503, 0.0, %v447
      %v522 = vsel %vm504, 0.0, %v448
      %v523 = vsel %vm505, 0.0, %v449
      %v524 = vsel %vm506, 0.0, %v450
      %v525 = vsel %vm507, 0.0, %v451
      %v526 = vsel %vm508, 0.0, %v452
      %v527 = vsel %vm509, 0.0, %v453
      %v528 = vsel %vm510, 0.0, %v454
      %v529 = vsel %vm511, 0.0, %v455
      %v530 = vsel %vm512, 0.0, %v456
      %v531 = vsel %vm513, 0.0, %v457
      %v532 = vsel %vm514, 0.0, %v458
      %v533 = vsel %vm515, 0.0, %v459
      %v534 = vsel %vm516, 0.0, %v460
      %v535 = vpack.c.bf16 %v526, %v517
      %v536 = vpack.c.bf16 %v527, %v518
      %v537 = vpack.c.bf16 %v528, %v519
      %v538 = vpack.c.bf16 %v529, %v520
      %v539 = vpack.c.bf16 %v530, %v521
      %v540 = vpack.c.bf16 %v531, %v522
      %v541 = vpack.c.bf16 %v532, %v523
      %v542 = vpack.c.bf16 %v533, %v524
      %v543 = vpack.c.bf16 %v534, %v525
      %v544 = vld [vmem:[%s3] sm:$0xf]
      %v545 = vld [vmem:[%s3 + $0x4] sm:$0xf]
      %v546 = vld [vmem:[%s3 + $0x8] sm:$0xf]
      %v547 = vld [vmem:[%s3 + $0xc] sm:$0xf]
      %v548 = vld [vmem:[%s3 + $0x10] sm:$0xf]
      %v549 = vld [vmem:[%s3 + $0x14] sm:$0xf]
      %v550 = vld [vmem:[%s3 + $0x18] sm:$0xf]
      %v551 = vld [vmem:[%s3 + $0x1c] sm:$0xf]
      %v552 = vld [vmem:[%s3 + $0x20] sm:$0xf]
      %v553 = vld [vmem:[%s3 + $0x24] sm:$0xf]
      %v554 = vld [vmem:[%s3 + $0x28] sm:$0xf]
      %v555 = vld [vmem:[%s3 + $0x2c] sm:$0xf]
      %v556 = vld [vmem:[%s3 + $0x30] sm:$0xf]
      %v557 = vld [vmem:[%s3 + $0x34] sm:$0xf]
      %v558 = vld [vmem:[%s3 + $0x38] sm:$0xf]
      %v559 = vld [vmem:[%s3 + $0x3c] sm:$0xf]
      %v560 = vld [vmem:[%s3 + $0x40] sm:$0xf]
      %v561 = vld [vmem:[%s3 + $0x44] sm:$0xf]
      %v562 = vld [vmem:[%s3 + $0x48] sm:$0xf]
      %v563 = vld [vmem:[%s3 + $0x4c] sm:$0xf]
      %v564 = vld [vmem:[%s3 + $0x50] sm:$0xf]
      %v565 = vld [vmem:[%s3 + $0x54] sm:$0xf]
      %v566 = vld [vmem:[%s3 + $0x58] sm:$0xf]
      %v567 = vld [vmem:[%s3 + $0x5c] sm:$0xf]
      %v568 = vld [vmem:[%s3 + $0x60] sm:$0xf]
      %v569 = vld [vmem:[%s3 + $0x64] sm:$0xf]
      %v570 = vld [vmem:[%s3 + $0x68] sm:$0xf]
      %v571 = vld [vmem:[%s3 + $0x6c] sm:$0xf]
      %v572 = vld [vmem:[%s3 + $0x70] sm:$0xf]
      %v573 = vld [vmem:[%s3 + $0x74] sm:$0xf]
      %v574 = vld [vmem:[%s3 + $0x78] sm:$0xf]
      %v575 = vld [vmem:[%s3 + $0x7c] sm:$0xf]
      %v576 = vld [vmem:[%s3 + $0x80] sm:$0xf]
      %v577 = vld [vmem:[%s3 + $0x84] sm:$0xf]
      %v578 = vld [vmem:[%s3 + $0x88] sm:$0xf]
      %v579 = vld [vmem:[%s3 + $0x8c] sm:$0xf]
      %v580 = vld [vmem:[%s3 + $0x90] sm:$0xf]
      %v581 = vld [vmem:[%s3 + $0x94] sm:$0xf]
      %v582 = vld [vmem:[%s3 + $0x98] sm:$0xf]
      %v583 = vld [vmem:[%s3 + $0x9c] sm:$0xf]
      %v584 = vld [vmem:[%s3 + $0xa0] sm:$0xf]
      %v585 = vld [vmem:[%s3 + $0xa4] sm:$0xf]
      %v586 = vld [vmem:[%s3 + $0xa8] sm:$0xf]
      %v587 = vld [vmem:[%s3 + $0xac] sm:$0xf]
      %v588 = vld [vmem:[%s3 + $0xb0] sm:$0xf]
      %v589 = vld [vmem:[%s3 + $0xb4] sm:$0xf]
      %v590 = vld [vmem:[%s3 + $0xb8] sm:$0xf]
      %v591 = vld [vmem:[%s3 + $0xbc] sm:$0xf]
      %v592 = vld [vmem:[%s3 + $0xc0] sm:$0xf]
      %v593 = vld [vmem:[%s3 + $0xc4] sm:$0xf]
      %v594 = vld [vmem:[%s3 + $0xc8] sm:$0xf]
      %v595 = vld [vmem:[%s3 + $0xcc] sm:$0xf]
      %v596 = vld [vmem:[%s3 + $0xd0] sm:$0xf]
      %v597 = vld [vmem:[%s3 + $0xd4] sm:$0xf]
      %v598 = vld [vmem:[%s3 + $0xd8] sm:$0xf]
      %v599 = vld [vmem:[%s3 + $0xdc] sm:$0xf]
      %v600 = vld [vmem:[%s3 + $0xe0] sm:$0xf]
      %v601 = vld [vmem:[%s3 + $0xe4] sm:$0xf]
      %v602 = vld [vmem:[%s3 + $0xe8] sm:$0xf]
      %v603 = vld [vmem:[%s3 + $0xec] sm:$0xf]
      %v604 = vld [vmem:[%s3 + $0xf0] sm:$0xf]
      %v605 = vld [vmem:[%s3 + $0xf4] sm:$0xf]
      %v606 = vld [vmem:[%s3 + $0xf8] sm:$0xf]
      %v607 = vld [vmem:[%s3 + $0xfc] sm:$0xf]
      %v608 = vld [vmem:[%s3 + $0x100] sm:$0xf]
      %v609 = vld [vmem:[%s3 + $0x104] sm:$0xf]
      %v610 = vld [vmem:[%s3 + $0x108] sm:$0xf]
      %v611 = vld [vmem:[%s3 + $0x10c] sm:$0xf]
      %v612 = vld [vmem:[%s3 + $0x110] sm:$0xf]
      %v613 = vld [vmem:[%s3 + $0x114] sm:$0xf]
      %v614 = vld [vmem:[%s3 + $0x118] sm:$0xf]
      %v615 = vld [vmem:[%s3 + $0x11c] sm:$0xf]
      %v616 = vld [vmem:[%s3 + $0x120] sm:$0xf]
      %v617 = vld [vmem:[%s3 + $0x124] sm:$0xf]
      %v618 = vld [vmem:[%s3 + $0x128] sm:$0xf]
      %v619 = vld [vmem:[%s3 + $0x12c] sm:$0xf]
      %v620 = vld [vmem:[%s3 + $0x130] sm:$0xf]
      %v621 = vld [vmem:[%s3 + $0x134] sm:$0xf]
      %v622 = vld [vmem:[%s3 + $0x138] sm:$0xf]
      %v623 = vld [vmem:[%s3 + $0x13c] sm:$0xf]
      %v624 = vld [vmem:[%s3 + $0x140] sm:$0xf]
      %v625 = vld [vmem:[%s3 + $0x144] sm:$0xf]
      %v626 = vld [vmem:[%s3 + $0x148] sm:$0xf]
      %v627 = vld [vmem:[%s3 + $0x14c] sm:$0xf]
      %v628 = vld [vmem:[%s3 + $0x150] sm:$0xf]
      %v629 = vld [vmem:[%s3 + $0x154] sm:$0xf]
      %v630 = vld [vmem:[%s3 + $0x158] sm:$0xf]
      %v631 = vld [vmem:[%s3 + $0x15c] sm:$0xf]
      %v632 = vld [vmem:[%s3 + $0x160] sm:$0xf]
      %v633 = vld [vmem:[%s3 + $0x164] sm:$0xf]
      %v634 = vld [vmem:[%s3 + $0x168] sm:$0xf]
      %v635 = vld [vmem:[%s3 + $0x16c] sm:$0xf]
      %v636 = vld [vmem:[%s3 + $0x170] sm:$0xf]
      %v637 = vld [vmem:[%s3 + $0x174] sm:$0xf]
      %v638 = vld [vmem:[%s3 + $0x178] sm:$0xf]
      %v639 = vld [vmem:[%s3 + $0x17c] sm:$0xf]
      %v640 = vld [vmem:[%s3 + $0x180] sm:$0xf]
      %v641 = vld [vmem:[%s3 + $0x184] sm:$0xf]
      %v642 = vld [vmem:[%s3 + $0x188] sm:$0xf]
      %v643 = vld [vmem:[%s3 + $0x18c] sm:$0xf]
      %v644 = vld [vmem:[%s3 + $0x190] sm:$0xf]
      %v645 = vld [vmem:[%s3 + $0x194] sm:$0xf]
      %v646 = vld [vmem:[%s3 + $0x198] sm:$0xf]
      %v647 = vld [vmem:[%s3 + $0x19c] sm:$0xf]
      %v648 = vld [vmem:[%s3 + $0x1a0] sm:$0xf]
      %v649 = vld [vmem:[%s3 + $0x1a4] sm:$0xf]
      %v650 = vld [vmem:[%s3 + $0x1a8] sm:$0xf]
      %v651 = vld [vmem:[%s3 + $0x1ac] sm:$0xf]
      %v652 = vld [vmem:[%s3 + $0x1b0] sm:$0xf]
      %v653 = vld [vmem:[%s3 + $0x1b4] sm:$0xf]
      %v654 = vld [vmem:[%s3 + $0x1b8] sm:$0xf]
      %v655 = vld [vmem:[%s3 + $0x1bc] sm:$0xf]
      %v656 = vld [vmem:[%s3 + $0x1c0] sm:$0xf]
      %v657 = vld [vmem:[%s3 + $0x1c4] sm:$0xf]
      %v658 = vld [vmem:[%s3 + $0x1c8] sm:$0xf]
      %v659 = vld [vmem:[%s3 + $0x1cc] sm:$0xf]
      %v660 = vld [vmem:[%s3 + $0x1d0] sm:$0xf]
      %v661 = vld [vmem:[%s3 + $0x1d4] sm:$0xf]
      %v662 = vld [vmem:[%s3 + $0x1d8] sm:$0xf]
      %v663 = vld [vmem:[%s3 + $0x1dc] sm:$0xf]
      %v664 = vld [vmem:[%s3 + $0x1e0] sm:$0xf]
      %v665 = vld [vmem:[%s3 + $0x1e4] sm:$0xf]
      %v666 = vld [vmem:[%s3 + $0x1e8] sm:$0xf]
      %v667 = vld [vmem:[%s3 + $0x1ec] sm:$0xf]
      %v668 = vld [vmem:[%s3 + $0x1f0] sm:$0xf]
      %v669 = vld [vmem:[%s3 + $0x1f4] sm:$0xf]
      %v670 = vld [vmem:[%s3 + $0x1f8] sm:$0xf]
      %v671 = vld [vmem:[%s3 + $0x1fc] sm:$0xf]
      %v672 = vld [vmem:[%s3 + $0x200] sm:$0xf]
      %v673 = vld [vmem:[%s3 + $0x204] sm:$0xf]
      %v674 = vld [vmem:[%s3 + $0x208] sm:$0xf]
      %v675 = vld [vmem:[%s3 + $0x20c] sm:$0xf]
      %v676 = vld [vmem:[%s3 + $0x210] sm:$0xf]
      %v677 = vld [vmem:[%s3 + $0x214] sm:$0xf]
      %v678 = vld [vmem:[%s3 + $0x218] sm:$0xf]
      %v679 = vld [vmem:[%s3 + $0x21c] sm:$0xf]
      %v680 = vld [vmem:[%s3 + $0x220] sm:$0xf]
      %v681 = vld [vmem:[%s3 + $0x224] sm:$0xf]
      %v682 = vld [vmem:[%s3 + $0x228] sm:$0xf]
      %v683 = vld [vmem:[%s3 + $0x22c] sm:$0xf]
      %v684 = vld [vmem:[%s3 + $0x230] sm:$0xf]
      %v685 = vld [vmem:[%s3 + $0x234] sm:$0xf]
      %v686 = vld [vmem:[%s3 + $0x238] sm:$0xf]
      %v687 = vld [vmem:[%s3 + $0x23c] sm:$0xf]
      %v832 = vunpack.c.l.b16 %v544
      %v833 = vunpack.c.l.b16 %v545
      %v834 = vunpack.c.l.b16 %v546
      %v835 = vunpack.c.l.b16 %v547
      %v836 = vunpack.c.l.b16 %v548
      %v837 = vunpack.c.l.b16 %v549
      %v838 = vunpack.c.l.b16 %v550
      %v839 = vunpack.c.l.b16 %v551
      %v840 = vunpack.c.l.b16 %v552
      %v841 = vunpack.c.l.b16 %v553
      %v842 = vunpack.c.l.b16 %v554
      %v843 = vunpack.c.l.b16 %v555
      %v844 = vunpack.c.l.b16 %v556
      %v845 = vunpack.c.l.b16 %v557
      %v846 = vunpack.c.l.b16 %v558
      %v847 = vunpack.c.l.b16 %v559
      %v848 = vunpack.c.l.b16 %v560
      %v849 = vunpack.c.l.b16 %v561
      %v850 = vunpack.c.l.b16 %v562
      %v851 = vunpack.c.l.b16 %v563
      %v852 = vunpack.c.l.b16 %v564
      %v853 = vunpack.c.l.b16 %v565
      %v854 = vunpack.c.l.b16 %v566
      %v855 = vunpack.c.l.b16 %v567
      %v856 = vunpack.c.l.b16 %v568
      %v857 = vunpack.c.l.b16 %v569
      %v858 = vunpack.c.l.b16 %v570
      %v859 = vunpack.c.l.b16 %v571
      %v860 = vunpack.c.l.b16 %v572
      %v861 = vunpack.c.l.b16 %v573
      %v862 = vunpack.c.l.b16 %v574
      %v863 = vunpack.c.l.b16 %v575
      %v864 = vunpack.c.l.b16 %v576
      %v865 = vunpack.c.l.b16 %v577
      %v866 = vunpack.c.l.b16 %v578
      %v867 = vunpack.c.l.b16 %v579
      %v868 = vunpack.c.l.b16 %v580
      %v869 = vunpack.c.l.b16 %v581
      %v870 = vunpack.c.l.b16 %v582
      %v871 = vunpack.c.l.b16 %v583
      %v872 = vunpack.c.l.b16 %v584
      %v873 = vunpack.c.l.b16 %v585
      %v874 = vunpack.c.l.b16 %v586
      %v875 = vunpack.c.l.b16 %v587
      %v876 = vunpack.c.l.b16 %v588
      %v877 = vunpack.c.l.b16 %v589
      %v878 = vunpack.c.l.b16 %v590
      %v879 = vunpack.c.l.b16 %v591
      %v880 = vunpack.c.l.b16 %v592
      %v881 = vunpack.c.l.b16 %v593
      %v882 = vunpack.c.l.b16 %v594
      %v883 = vunpack.c.l.b16 %v595
      %v884 = vunpack.c.l.b16 %v596
      %v885 = vunpack.c.l.b16 %v597
      %v886 = vunpack.c.l.b16 %v598
      %v887 = vunpack.c.l.b16 %v599
      %v888 = vunpack.c.l.b16 %v600
      %v889 = vunpack.c.l.b16 %v601
      %v890 = vunpack.c.l.b16 %v602
      %v891 = vunpack.c.l.b16 %v603
      %v892 = vunpack.c.l.b16 %v604
      %v893 = vunpack.c.l.b16 %v605
      %v894 = vunpack.c.l.b16 %v606
      %v895 = vunpack.c.l.b16 %v607
      %v896 = vunpack.c.l.b16 %v608
      %v897 = vunpack.c.l.b16 %v609
      %v898 = vunpack.c.l.b16 %v610
      %v899 = vunpack.c.l.b16 %v611
      %v900 = vunpack.c.l.b16 %v612
      %v901 = vunpack.c.l.b16 %v613
      %v902 = vunpack.c.l.b16 %v614
      %v903 = vunpack.c.l.b16 %v615
      %v904 = vunpack.c.l.b16 %v616
      %v905 = vunpack.c.l.b16 %v617
      %v906 = vunpack.c.l.b16 %v618
      %v907 = vunpack.c.l.b16 %v619
      %v908 = vunpack.c.l.b16 %v620
      %v909 = vunpack.c.l.b16 %v621
      %v910 = vunpack.c.l.b16 %v622
      %v911 = vunpack.c.l.b16 %v623
      %v912 = vunpack.c.l.b16 %v624
      %v913 = vunpack.c.l.b16 %v625
      %v914 = vunpack.c.l.b16 %v626
      %v915 = vunpack.c.l.b16 %v627
      %v916 = vunpack.c.l.b16 %v628
      %v917 = vunpack.c.l.b16 %v629
      %v918 = vunpack.c.l.b16 %v630
      %v919 = vunpack.c.l.b16 %v631
      %v920 = vunpack.c.l.b16 %v632
      %v921 = vunpack.c.l.b16 %v633
      %v922 = vunpack.c.l.b16 %v634
      %v923 = vunpack.c.l.b16 %v635
      %v924 = vunpack.c.l.b16 %v636
      %v925 = vunpack.c.l.b16 %v637
      %v926 = vunpack.c.l.b16 %v638
      %v927 = vunpack.c.l.b16 %v639
      %v928 = vunpack.c.l.b16 %v640
      %v929 = vunpack.c.l.b16 %v641
      %v930 = vunpack.c.l.b16 %v642
      %v931 = vunpack.c.l.b16 %v643
      %v932 = vunpack.c.l.b16 %v644
      %v933 = vunpack.c.l.b16 %v645
      %v934 = vunpack.c.l.b16 %v646
      %v935 = vunpack.c.l.b16 %v647
      %v936 = vunpack.c.l.b16 %v648
      %v937 = vunpack.c.l.b16 %v649
      %v938 = vunpack.c.l.b16 %v650
      %v939 = vunpack.c.l.b16 %v651
      %v940 = vunpack.c.l.b16 %v652
      %v941 = vunpack.c.l.b16 %v653
      %v942 = vunpack.c.l.b16 %v654
      %v943 = vunpack.c.l.b16 %v655
      %v944 = vunpack.c.l.b16 %v656
      %v945 = vunpack.c.l.b16 %v657
      %v946 = vunpack.c.l.b16 %v658
      %v947 = vunpack.c.l.b16 %v659
      %v948 = vunpack.c.l.b16 %v660
      %v949 = vunpack.c.l.b16 %v661
      %v950 = vunpack.c.l.b16 %v662
      %v951 = vunpack.c.l.b16 %v663
      %v952 = vunpack.c.l.b16 %v664
      %v953 = vunpack.c.l.b16 %v665
      %v954 = vunpack.c.l.b16 %v666
      %v955 = vunpack.c.l.b16 %v667
      %v956 = vunpack.c.l.b16 %v668
      %v957 = vunpack.c.l.b16 %v669
      %v958 = vunpack.c.l.b16 %v670
      %v959 = vunpack.c.l.b16 %v671
      %v960 = vunpack.c.l.b16 %v672
      %v961 = vunpack.c.l.b16 %v673
      %v962 = vunpack.c.l.b16 %v674
      %v963 = vunpack.c.l.b16 %v675
      %v964 = vunpack.c.l.b16 %v676
      %v965 = vunpack.c.l.b16 %v677
      %v966 = vunpack.c.l.b16 %v678
      %v967 = vunpack.c.l.b16 %v679
      %v968 = vunpack.c.l.b16 %v680
      %v969 = vunpack.c.l.b16 %v681
      %v970 = vunpack.c.l.b16 %v682
      %v971 = vunpack.c.l.b16 %v683
      %v972 = vunpack.c.l.b16 %v684
      %v973 = vunpack.c.l.b16 %v685
      %v974 = vunpack.c.l.b16 %v686
      %v975 = vunpack.c.l.b16 %v687
      %v976 = vpack.c.b16 %v833, %v832
      %v977 = vpack.c.b16 %v835, %v834
      %v978 = vpack.c.b16 %v837, %v836
      %v979 = vpack.c.b16 %v839, %v838
      %v980 = vpack.c.b16 %v841, %v840
      %v981 = vpack.c.b16 %v843, %v842
      %v982 = vpack.c.b16 %v845, %v844
      %v983 = vpack.c.b16 %v847, %v846
      %v984 = vpack.c.b16 %v849, %v848
      %v985 = vpack.c.b16 %v851, %v850
      %v986 = vpack.c.b16 %v853, %v852
      %v987 = vpack.c.b16 %v855, %v854
      %v988 = vpack.c.b16 %v857, %v856
      %v989 = vpack.c.b16 %v859, %v858
      %v990 = vpack.c.b16 %v861, %v860
      %v991 = vpack.c.b16 %v863, %v862
      %v992 = vpack.c.b16 %v865, %v864
      %v993 = vpack.c.b16 %v867, %v866
      %v994 = vpack.c.b16 %v869, %v868
      %v995 = vpack.c.b16 %v871, %v870
      %v996 = vpack.c.b16 %v873, %v872
      %v997 = vpack.c.b16 %v875, %v874
      %v998 = vpack.c.b16 %v877, %v876
      %v999 = vpack.c.b16 %v879, %v878
      %v1000 = vpack.c.b16 %v881, %v880
      %v1001 = vpack.c.b16 %v883, %v882
      %v1002 = vpack.c.b16 %v885, %v884
      %v1003 = vpack.c.b16 %v887, %v886
      %v1004 = vpack.c.b16 %v889, %v888
      %v1005 = vpack.c.b16 %v891, %v890
      %v1006 = vpack.c.b16 %v893, %v892
      %v1007 = vpack.c.b16 %v895, %v894
      %v1008 = vpack.c.b16 %v897, %v896
      %v1009 = vpack.c.b16 %v899, %v898
      %v1010 = vpack.c.b16 %v901, %v900
      %v1011 = vpack.c.b16 %v903, %v902
      %v1012 = vpack.c.b16 %v905, %v904
      %v1013 = vpack.c.b16 %v907, %v906
      %v1014 = vpack.c.b16 %v909, %v908
      %v1015 = vpack.c.b16 %v911, %v910
      %v1016 = vpack.c.b16 %v913, %v912
      %v1017 = vpack.c.b16 %v915, %v914
      %v1018 = vpack.c.b16 %v917, %v916
      %v1019 = vpack.c.b16 %v919, %v918
      %v1020 = vpack.c.b16 %v921, %v920
      %v1021 = vpack.c.b16 %v923, %v922
      %v1022 = vpack.c.b16 %v925, %v924
      %v1023 = vpack.c.b16 %v927, %v926
      %v1024 = vpack.c.b16 %v929, %v928
      %v1025 = vpack.c.b16 %v931, %v930
      %v1026 = vpack.c.b16 %v933, %v932
      %v1027 = vpack.c.b16 %v935, %v934
      %v1028 = vpack.c.b16 %v937, %v936
      %v1029 = vpack.c.b16 %v939, %v938
      %v1030 = vpack.c.b16 %v941, %v940
      %v1031 = vpack.c.b16 %v943, %v942
      %v1032 = vpack.c.b16 %v945, %v944
      %v1033 = vpack.c.b16 %v947, %v946
      %v1034 = vpack.c.b16 %v949, %v948
      %v1035 = vpack.c.b16 %v951, %v950
      %v1036 = vpack.c.b16 %v953, %v952
      %v1037 = vpack.c.b16 %v955, %v954
      %v1038 = vpack.c.b16 %v957, %v956
      %v1039 = vpack.c.b16 %v959, %v958
      %v1040 = vpack.c.b16 %v961, %v960
      %v1041 = vpack.c.b16 %v963, %v962
      %v1042 = vpack.c.b16 %v965, %v964
      %v1043 = vpack.c.b16 %v967, %v966
      %v1044 = vpack.c.b16 %v969, %v968
      %v1045 = vpack.c.b16 %v971, %v970
      %v1046 = vpack.c.b16 %v973, %v972
      %v1047 = vpack.c.b16 %v975, %v974
      %1120 = vmatprep.subr.bf16.mxu0 0
      %1121 = vmatpush1.bf16.msra.mxu0 %v983
      %1122 = vmatprep.subr.bf16.mxu0 0
      %1123 = vmatpush1.bf16.msra.mxu0 %v982
      %1124 = vmatprep.subr.bf16.mxu0 0
      %1125 = vmatpush1.bf16.msra.mxu0 %v981
      %1126 = vmatprep.subr.bf16.mxu0 0
      %1127 = vmatpush1.bf16.msra.mxu0 %v980
      %1128 = vmatprep.subr.bf16.mxu0 0
      %1129 = vmatpush1.bf16.msra.mxu0 %v979
      %1130 = vmatprep.subr.bf16.mxu0 0
      %1131 = vmatpush1.bf16.msra.mxu0 %v978
      %1132 = vmatprep.subr.bf16.mxu0 0
      %1133 = vmatpush1.bf16.msra.mxu0 %v977
      %1134 = vmatprep.subr.bf16.mxu0 0
      %1135 = vmatpush1.bf16.msra.mxu0 %v976
      %1136 = vmatprep.subr.bf16.mxu0 0
      %1137 = vmatpush2.bf16.msra.mxu0 %v991
      %1138 = vmatprep.subr.bf16.mxu0 0
      %1139 = vmatpush2.bf16.msra.mxu0 %v990
      %1140 = vmatprep.subr.bf16.mxu0 0
      %1141 = vmatpush2.bf16.msra.mxu0 %v989
      %1142 = vmatprep.subr.bf16.mxu0 0
      %1143 = vmatpush2.bf16.msra.mxu0 %v988
      %1144 = vmatprep.subr.bf16.mxu0 0
      %1145 = vmatpush2.bf16.msra.mxu0 %v987
      %1146 = vmatprep.subr.bf16.mxu0 0
      %1147 = vmatpush2.bf16.msra.mxu0 %v986
      %1148 = vmatprep.subr.bf16.mxu0 0
      %1149 = vmatpush2.bf16.msra.mxu0 %v985
      %1150 = vmatprep.subr.bf16.mxu0 0
      %1151 = vmatpush2.bf16.msra.mxu0 %v984
      %1152 = vmatprep.mubr.bf16.mxu0 %v536
      %1153 = vmatmul.mubr.bf16.gmra.mxu0 %v535
      %v1154 = vpop.f32.mrf.mxu0
      %v1155 = vadd.f32 0.0, %v1154
      %v1156 = vpop.f32.mrf.mxu0
      %v1157 = vpop.f32.mrf.mxu0
      %v1158 = vadd.f32 0.0, %v1157
      %v1159 = vpop.f32.mrf.mxu0
      %1160 = vdwg.mxu0
      %1161 = vmatprep.subr.bf16.mxu0 0
      %1162 = vmatpush1.bf16.msra.mxu0 %v999
      %1163 = vmatprep.subr.bf16.mxu0 0
      %1164 = vmatpush1.bf16.msra.mxu0 %v998
      %1165 = vmatprep.subr.bf16.mxu0 0
      %1166 = vmatpush1.bf16.msra.mxu0 %v997
      %1167 = vmatprep.subr.bf16.mxu0 0
      %1168 = vmatpush1.bf16.msra.mxu0 %v996
      %1169 = vmatprep.subr.bf16.mxu0 0
      %1170 = vmatpush1.bf16.msra.mxu0 %v995
      %1171 = vmatprep.subr.bf16.mxu0 0
      %1172 = vmatpush1.bf16.msra.mxu0 %v994
      %1173 = vmatprep.subr.bf16.mxu0 0
      %1174 = vmatpush1.bf16.msra.mxu0 %v993
      %1175 = vmatprep.subr.bf16.mxu0 0
      %1176 = vmatpush1.bf16.msra.mxu0 %v992
      %1177 = vmatprep.subr.bf16.mxu0 0
      %1178 = vmatpush2.bf16.msra.mxu0 %v1007
      %1179 = vmatprep.subr.bf16.mxu0 0
      %1180 = vmatpush2.bf16.msra.mxu0 %v1006
      %1181 = vmatprep.subr.bf16.mxu0 0
      %1182 = vmatpush2.bf16.msra.mxu0 %v1005
      %1183 = vmatprep.subr.bf16.mxu0 0
      %1184 = vmatpush2.bf16.msra.mxu0 %v1004
      %1185 = vmatprep.subr.bf16.mxu0 0
      %1186 = vmatpush2.bf16.msra.mxu0 %v1003
      %1187 = vmatprep.subr.bf16.mxu0 0
      %1188 = vmatpush2.bf16.msra.mxu0 %v1002
      %1189 = vmatprep.subr.bf16.mxu0 0
      %1190 = vmatpush2.bf16.msra.mxu0 %v1001
      %1191 = vmatprep.subr.bf16.mxu0 0
      %1192 = vmatpush2.bf16.msra.mxu0 %v1000
      %1193 = vmatprep.mubr.bf16.mxu0 %v538
      %1194 = vmatmul.mubr.bf16.gmra.mxu0 %v537
      %v1195 = vpop.f32.mrf.mxu0
      %v1196 = vadd.f32 %v1155, %v1195
      %v1197 = vpop.f32.mrf.mxu0
      %v1198 = vpop.f32.mrf.mxu0
      %v1199 = vadd.f32 %v1158, %v1198
      %v1200 = vpop.f32.mrf.mxu0
      %1201 = vdwg.mxu0
      %1202 = vmatprep.subr.bf16.mxu0 0
      %1203 = vmatpush1.bf16.msra.mxu0 %v1015
      %1204 = vmatprep.subr.bf16.mxu0 0
      %1205 = vmatpush1.bf16.msra.mxu0 %v1014
      %1206 = vmatprep.subr.bf16.mxu0 0
      %1207 = vmatpush1.bf16.msra.mxu0 %v1013
      %1208 = vmatprep.subr.bf16.mxu0 0
      %1209 = vmatpush1.bf16.msra.mxu0 %v1012
      %1210 = vmatprep.subr.bf16.mxu0 0
      %1211 = vmatpush1.bf16.msra.mxu0 %v1011
      %1212 = vmatprep.subr.bf16.mxu0 0
      %1213 = vmatpush1.bf16.msra.mxu0 %v1010
      %1214 = vmatprep.subr.bf16.mxu0 0
      %1215 = vmatpush1.bf16.msra.mxu0 %v1009
      %1216 = vmatprep.subr.bf16.mxu0 0
      %1217 = vmatpush1.bf16.msra.mxu0 %v1008
      %1218 = vmatprep.subr.bf16.mxu0 0
      %1219 = vmatpush2.bf16.msra.mxu0 %v1023
      %1220 = vmatprep.subr.bf16.mxu0 0
      %1221 = vmatpush2.bf16.msra.mxu0 %v1022
      %1222 = vmatprep.subr.bf16.mxu0 0
      %1223 = vmatpush2.bf16.msra.mxu0 %v1021
      %1224 = vmatprep.subr.bf16.mxu0 0
      %1225 = vmatpush2.bf16.msra.mxu0 %v1020
      %1226 = vmatprep.subr.bf16.mxu0 0
      %1227 = vmatpush2.bf16.msra.mxu0 %v1019
      %1228 = vmatprep.subr.bf16.mxu0 0
      %1229 = vmatpush2.bf16.msra.mxu0 %v1018
      %1230 = vmatprep.subr.bf16.mxu0 0
      %1231 = vmatpush2.bf16.msra.mxu0 %v1017
      %1232 = vmatprep.subr.bf16.mxu0 0
      %1233 = vmatpush2.bf16.msra.mxu0 %v1016
      %1234 = vmatprep.mubr.bf16.mxu0 %v540
      %1235 = vmatmul.mubr.bf16.gmra.mxu0 %v539
      %v1236 = vpop.f32.mrf.mxu0
      %v1237 = vadd.f32 %v1196, %v1236
      %v1238 = vpop.f32.mrf.mxu0
      %v1239 = vpop.f32.mrf.mxu0
      %v1240 = vadd.f32 %v1199, %v1239
      %v1241 = vpop.f32.mrf.mxu0
      %1242 = vdwg.mxu0
      %1243 = vmatprep.subr.bf16.mxu0 0
      %1244 = vmatpush1.bf16.msra.mxu0 %v1031
      %1245 = vmatprep.subr.bf16.mxu0 0
      %1246 = vmatpush1.bf16.msra.mxu0 %v1030
      %1247 = vmatprep.subr.bf16.mxu0 0
      %1248 = vmatpush1.bf16.msra.mxu0 %v1029
      %1249 = vmatprep.subr.bf16.mxu0 0
      %1250 = vmatpush1.bf16.msra.mxu0 %v1028
      %1251 = vmatprep.subr.bf16.mxu0 0
      %1252 = vmatpush1.bf16.msra.mxu0 %v1027
      %1253 = vmatprep.subr.bf16.mxu0 0
      %1254 = vmatpush1.bf16.msra.mxu0 %v1026
      %1255 = vmatprep.subr.bf16.mxu0 0
      %1256 = vmatpush1.bf16.msra.mxu0 %v1025
      %1257 = vmatprep.subr.bf16.mxu0 0
      %1258 = vmatpush1.bf16.msra.mxu0 %v1024
      %1259 = vmatprep.subr.bf16.mxu0 0
      %1260 = vmatpush2.bf16.msra.mxu0 %v1039
      %1261 = vmatprep.subr.bf16.mxu0 0
      %1262 = vmatpush2.bf16.msra.mxu0 %v1038
      %1263 = vmatprep.subr.bf16.mxu0 0
      %1264 = vmatpush2.bf16.msra.mxu0 %v1037
      %1265 = vmatprep.subr.bf16.mxu0 0
      %1266 = vmatpush2.bf16.msra.mxu0 %v1036
      %1267 = vmatprep.subr.bf16.mxu0 0
      %1268 = vmatpush2.bf16.msra.mxu0 %v1035
      %1269 = vmatprep.subr.bf16.mxu0 0
      %1270 = vmatpush2.bf16.msra.mxu0 %v1034
      %1271 = vmatprep.subr.bf16.mxu0 0
      %1272 = vmatpush2.bf16.msra.mxu0 %v1033
      %1273 = vmatprep.subr.bf16.mxu0 0
      %1274 = vmatpush2.bf16.msra.mxu0 %v1032
      %1275 = vmatprep.mubr.bf16.mxu0 %v542
      %1276 = vmatmul.mubr.bf16.gmra.mxu0 %v541
      %v1277 = vpop.f32.mrf.mxu0
      %v1278 = vadd.f32 %v1237, %v1277
      %v1279 = vpop.f32.mrf.mxu0
      %v1280 = vpop.f32.mrf.mxu0
      %v1281 = vadd.f32 %v1240, %v1280
      %v1282 = vpop.f32.mrf.mxu0
      %1283 = vdwg.mxu0
      %1284 = vmatprep.subr.bf16.mxu0 0
      %1285 = vmatpush1.bf16.msra.mxu0 %v1047
      %1286 = vmatprep.subr.bf16.mxu0 0
      %1287 = vmatpush1.bf16.msra.mxu0 %v1046
      %1288 = vmatprep.subr.bf16.mxu0 0
      %1289 = vmatpush1.bf16.msra.mxu0 %v1045
      %1290 = vmatprep.subr.bf16.mxu0 0
      %1291 = vmatpush1.bf16.msra.mxu0 %v1044
      %1292 = vmatprep.subr.bf16.mxu0 0
      %1293 = vmatpush1.bf16.msra.mxu0 %v1043
      %1294 = vmatprep.subr.bf16.mxu0 0
      %1295 = vmatpush1.bf16.msra.mxu0 %v1042
      %1296 = vmatprep.subr.bf16.mxu0 0
      %1297 = vmatpush1.bf16.msra.mxu0 %v1041
      %1298 = vmatprep.subr.bf16.mxu0 0
      %1299 = vmatpush1.bf16.msra.mxu0 %v1040
      %1300 = vmatprep.subr.bf16.mxu0 0
      %1301 = vmatpush2.bf16.msra.mxu0 0
      %1302 = vmatprep.subr.bf16.mxu0 0
      %1303 = vmatpush2.bf16.msra.mxu0 0
      %1304 = vmatprep.subr.bf16.mxu0 0
      %1305 = vmatpush2.bf16.msra.mxu0 0
      %1306 = vmatprep.subr.bf16.mxu0 0
      %1307 = vmatpush2.bf16.msra.mxu0 0
      %1308 = vmatprep.subr.bf16.mxu0 0
      %1309 = vmatpush2.bf16.msra.mxu0 0
      %1310 = vmatprep.subr.bf16.mxu0 0
      %1311 = vmatpush2.bf16.msra.mxu0 0
      %1312 = vmatprep.subr.bf16.mxu0 0
      %1313 = vmatpush2.bf16.msra.mxu0 0
      %1314 = vmatprep.subr.bf16.mxu0 0
      %1315 = vmatpush2.bf16.msra.mxu0 0
      %1316 = vmatprep.mubr.bf16.mxu0 0
      %1317 = vmatmul.mubr.bf16.gmra.mxu0 %v543
      %v1318 = vpop.f32.mrf.mxu0
      %v1319 = vadd.f32 %v1278, %v1318
      %v1320 = vpop.f32.mrf.mxu0
      %v1321 = vpop.f32.mrf.mxu0
      %v1322 = vadd.f32 %v1281, %v1321
      %v1323 = vpop.f32.mrf.mxu0
      %1324 = vdwg.mxu0
      %v1325 = vpack.c.bf16 %v1322, %v1319
      %v1327 = vunpack.c.l.b16 %v1325
      %v1328 = vunpack.c.h.b16 %v1325
      %v1329 = vpack.c.b16 %v1327, %v1327
      %v1330 = vpack.c.b16 %v1328, %v1328
      %1333 = vst [vmem:[%s236] sm:$0xf] %v1329
      %1334 = vst [vmem:[%s236 + $0x4] sm:$0xf] %v1330
      %v1335 = vadd.f32 %v1319, %v1322
      %v1336 = vrot.slane %v1335, 4
      %v1337 = vadd.f32 %v1335, %v1336
      %v1338 = vrot.slane %v1337, 2
      %v1339 = vadd.f32 %v1337, %v1338
      %v1340 = vrot.slane %v1339, 1
      %v1341 = vadd.f32 %v1339, %v1340
      %1342 = vst [vmem:[%s241] sm:$0x1] %v1341
      %v1343 = vmul.f32 %v1319, %v1319
      %v1344 = vmul.f32 %v1322, %v1322
      %v1345 = vadd.f32 %v1343, %v1344
      %v1346 = vrot.slane %v1345, 4
      %v1347 = vadd.f32 %v1345, %v1346
      %v1348 = vrot.slane %v1347, 2
      %v1349 = vadd.f32 %v1347, %v1348
      %v1350 = vrot.slane %v1349, 1
      %v1351 = vadd.f32 %v1349, %v1350
      %1352 = vst [vmem:[%s241 + $0x1] sm:$0x1] %v1351
      %s1353 = smul.u32 2, %s17
      %p1354 = scmp.lt.s32.totalorder %s1353, 3
      %s1355 = scalar_select %p1354, %s1353, 3
      %s1356 = smul.addr %s1355, 4
      %s1357 = scalar_lea.vmem %s4, %s1356
      %p1358 = scmp.lt.s32.totalorder %s17, 1
      %s1359 = scalar_select %p1358, %s17, 1
      %s1360 = smul.addr %s1359, 2
      %s1361 = scalar_lea.vmem %s5, %s1360
      // Predicated region
      $region37: #{discriminator_forward.6} parent=35 // pred_check
        %p1362 = pneg %p124
      $region38: #{discriminator_forward.6} parent=35 // pred_check_branch
        %1364 = sbr.rel (%p1362) target = $region40
      $region39: #{discriminator_forward.6} parent=35 // pred_region
        %s1365 = smul.u32 2, %s17
      $region40: #{discriminator_forward.6} parent=35 // pred_fallthru
        _
      // Predicated region
      $region41: #{discriminator_forward.6} parent=35 // pred_check
        %p1366 = pneg %p150
      $region42: #{discriminator_forward.6} parent=35 // pred_check_branch
        %1368 = sbr.rel (%p1366) target = $region44
      $region43: #{discriminator_forward.6} parent=35 // pred_region
        _
      $region44: #{discriminator_forward.6} parent=35 // pred_fallthru
        _
    $region36: #{discriminator_forward.6} parent=5 // pred_fallthru
      _
    %p1369 = scmp.le.s32.totalorder 2, %s12
    // Predicated region
    $region45: #{discriminator_forward.6} parent=5 // pred_check
      %p1370 = pneg %p1369
    $region46: #{discriminator_forward.6} parent=5 // pred_check_branch
      %1372 = sbr.rel (%p1370) target = $region48
    $region47: #{discriminator_forward.6} parent=5 // pred_region
      %s1373 = ssub.s32 %s12, 2
      // Predicated region
      $region49: #{discriminator_forward.6} parent=47 // pred_check
        %p1374 = pneg %p130
      $region50: #{discriminator_forward.6} parent=47 // pred_check_branch
        %1376 = sbr.rel (%p1374) target = $region52
      $region51: #{discriminator_forward.6} parent=47 // pred_region
        %s1377 = smul.u32 2, %s18
        %p1378 = scmp.lt.s32.totalorder %s1377, 3
        %s1379 = scalar_select %p1378, %s1377, 3
        %s1380 = smul.addr %s1379, 4
        %s1381 = scalar_lea.vmem %s4, %s1380
      $region52: #{discriminator_forward.6} parent=47 // pred_fallthru
        _
      // Predicated region
      $region53: #{discriminator_forward.6} parent=47 // pred_check
        %p1382 = pneg %p156
      $region54: #{discriminator_forward.6} parent=47 // pred_check_branch
        %1384 = sbr.rel (%p1382) target = $region56
      $region55: #{discriminator_forward.6} parent=47 // pred_region
        %p1385 = scmp.lt.s32.totalorder %s18, 1
        %s1386 = scalar_select %p1385, %s18, 1
        %s1387 = smul.addr %s1386, 2
        %s1388 = scalar_lea.vmem %s5, %s1387
      $region56: #{discriminator_forward.6} parent=47 // pred_fallthru
        _
    $region48: #{discriminator_forward.6} parent=5 // pred_fallthru
      _
  $region6: #{discriminator_forward.6} parent=0 // loop_footer
    %s16 = sadd.s32 1, %s12
  $region7: #{discriminator_forward.6} parent=0 // loop_footer_branch
    %11 = sbr.rel target = $region3
  $region8: #{discriminator_forward.6} parent=0 // loop_exit
    _

// kernel: discriminator_forward.7
$region0: #{discriminator_forward.7}
  #allocation0 [shape = 'u32[]', space=smem, size = 0x4, offset = 0x4, fixed_abs, tag = 'smem constant byte address 0x4 - core index']
  #allocation1 [shape = 'u32[144,128]{1,0:T(1,128)}', space=vmem, size = 0x12000, scoped, tag = 'internal scratch']
  %s0 = inlined_call_operand.vmem [shape: bf16[8,1152], index: 0, kind: input, shape index: {}]
  %s1 = inlined_call_operand.vmem [shape: f32[1,1152], index: 1, kind: input, shape index: {}]
  %s2 = inlined_call_operand.vmem [shape: f32[1,1152], index: 2, kind: input, shape index: {}]
  %s3 = inlined_call_operand.vmem [shape: bf16[1152,256], index: 3, kind: input, shape index: {}]
  %s4 = inlined_call_operand.vmem [shape: bf16[8,256], index: 4, kind: output, shape index: {0}]
  %s5 = inlined_call_operand.vmem [shape: f32[1,2,256], index: 5, kind: output, shape index: {1}]
  %6 = xla_tuple %s4, %s5
  %s7 = sld [smem:[#allocation0]]
  $region34: #{discriminator_forward.7} parent=0
    _
  %s9 = ssub.s32 1, %s7
  %s10 = scalar_select 0, %s9, %s7
  // Predicated region
  $region2: #{discriminator_forward.7} parent=0 // pred_check
    _
  $region3: #{discriminator_forward.7} parent=0 // pred_check_branch
    %12 = sbr.rel (0) target = $region5
  $region4: #{discriminator_forward.7} parent=0 // pred_region
    _
  $region5: #{discriminator_forward.7} parent=0 // pred_fallthru
    _
  // Predicated region
  $region6: #{discriminator_forward.7} parent=0 // pred_check
    _
  $region7: #{discriminator_forward.7} parent=0 // pred_check_branch
    %14 = sbr.rel (0) target = $region9
  $region8: #{discriminator_forward.7} parent=0 // pred_region
    _
  $region9: #{discriminator_forward.7} parent=0 // pred_fallthru
    _
  // Predicated region
  $region10: #{discriminator_forward.7} parent=0 // pred_check
    _
  $region11: #{discriminator_forward.7} parent=0 // pred_check_branch
    %16 = sbr.rel (0) target = $region13
  $region12: #{discriminator_forward.7} parent=0 // pred_region
    _
  $region13: #{discriminator_forward.7} parent=0 // pred_fallthru
    _
  // Predicated region
  $region14: #{discriminator_forward.7} parent=0 // pred_check
    _
  $region15: #{discriminator_forward.7} parent=0 // pred_check_branch
    %18 = sbr.rel (0) target = $region17
  $region16: #{discriminator_forward.7} parent=0 // pred_region
    _
  $region17: #{discriminator_forward.7} parent=0 // pred_fallthru
    _
  %v22 = vld [vmem:[%s0] sm:$0xff]
  %v23 = vld [vmem:[%s0 + $0x8] sm:$0xff]
  %v24 = vld [vmem:[%s0 + $0x10] sm:$0xff]
  %v25 = vld [vmem:[%s0 + $0x18] sm:$0xff]
  %v26 = vld [vmem:[%s0 + $0x20] sm:$0xf]
  %v27 = vld [vmem:[%s1] sm:$0xff]
  %v28 = vld [vmem:[%s1 + $0x8] sm:$0x1]
  %v29 = vld [vmem:[%s2] sm:$0xff]
  %v30 = vld [vmem:[%s2 + $0x8] sm:$0x1]
  %v31 = vunpack.c.l.bf16 %v22
  %v32 = vunpack.c.h.bf16 %v22
  %v33 = vunpack.c.l.bf16 %v23
  %v34 = vunpack.c.h.bf16 %v23
  %v35 = vunpack.c.l.bf16 %v24
  %v36 = vunpack.c.h.bf16 %v24
  %v37 = vunpack.c.l.bf16 %v25
  %v38 = vunpack.c.h.bf16 %v25
  %v39 = vunpack.c.l.bf16 %v26
  %v42 = vlaneseq
  %v43 = vshrl.u32 %v42, 7
  %v44 = vsub.s32 0, %v43
  %v45 = vrot.slane %v27, %v44
  %v46 = vlaneseq
  %v47 = vshrl.u32 %v46, 7
  %v48 = vsub.s32 1, %v47
  %v49 = vrot.slane %v27, %v48
  %v50 = vlaneseq
  %v51 = vshrl.u32 %v50, 7
  %v52 = vsub.s32 2, %v51
  %v53 = vrot.slane %v27, %v52
  %v54 = vlaneseq
  %v55 = vshrl.u32 %v54, 7
  %v56 = vsub.s32 3, %v55
  %v57 = vrot.slane %v27, %v56
  %v58 = vlaneseq
  %v59 = vshrl.u32 %v58, 7
  %v60 = vsub.s32 4, %v59
  %v61 = vrot.slane %v27, %v60
  %v62 = vlaneseq
  %v63 = vshrl.u32 %v62, 7
  %v64 = vsub.s32 5, %v63
  %v65 = vrot.slane %v27, %v64
  %v66 = vlaneseq
  %v67 = vshrl.u32 %v66, 7
  %v68 = vsub.s32 6, %v67
  %v69 = vrot.slane %v27, %v68
  %v70 = vlaneseq
  %v71 = vshrl.u32 %v70, 7
  %v72 = vsub.s32 7, %v71
  %v73 = vrot.slane %v27, %v72
  %v74 = vlaneseq
  %v75 = vshrl.u32 %v74, 7
  %v76 = vsub.s32 0, %v75
  %v77 = vrot.slane %v28, %v76
  %v87 = vmul.f32 %v31, %v45
  %v88 = vmul.f32 %v32, %v49
  %v89 = vmul.f32 %v33, %v53
  %v90 = vmul.f32 %v34, %v57
  %v91 = vmul.f32 %v35, %v61
  %v92 = vmul.f32 %v36, %v65
  %v93 = vmul.f32 %v37, %v69
  %v94 = vmul.f32 %v38, %v73
  %v95 = vmul.f32 %v39, %v77
  %v98 = vlaneseq
  %v99 = vshrl.u32 %v98, 7
  %v100 = vsub.s32 0, %v99
  %v101 = vrot.slane %v29, %v100
  %v102 = vlaneseq
  %v103 = vshrl.u32 %v102, 7
  %v104 = vsub.s32 1, %v103
  %v105 = vrot.slane %v29, %v104
  %v106 = vlaneseq
  %v107 = vshrl.u32 %v106, 7
  %v108 = vsub.s32 2, %v107
  %v109 = vrot.slane %v29, %v108
  %v110 = vlaneseq
  %v111 = vshrl.u32 %v110, 7
  %v112 = vsub.s32 3, %v111
  %v113 = vrot.slane %v29, %v112
  %v114 = vlaneseq
  %v115 = vshrl.u32 %v114, 7
  %v116 = vsub.s32 4, %v115
  %v117 = vrot.slane %v29, %v116
  %v118 = vlaneseq
  %v119 = vshrl.u32 %v118, 7
  %v120 = vsub.s32 5, %v119
  %v121 = vrot.slane %v29, %v120
  %v122 = vlaneseq
  %v123 = vshrl.u32 %v122, 7
  %v124 = vsub.s32 6, %v123
  %v125 = vrot.slane %v29, %v124
  %v126 = vlaneseq
  %v127 = vshrl.u32 %v126, 7
  %v128 = vsub.s32 7, %v127
  %v129 = vrot.slane %v29, %v128
  %v130 = vlaneseq
  %v131 = vshrl.u32 %v130, 7
  %v132 = vsub.s32 0, %v131
  %v133 = vrot.slane %v30, %v132
  %v143 = vadd.f32 %v87, %v101
  %v144 = vadd.f32 %v88, %v105
  %v145 = vadd.f32 %v89, %v109
  %v146 = vadd.f32 %v90, %v113
  %v147 = vadd.f32 %v91, %v117
  %v148 = vadd.f32 %v92, %v121
  %v149 = vadd.f32 %v93, %v125
  %v150 = vadd.f32 %v94, %v129
  %v151 = vadd.f32 %v95, %v133
  %vm152 = vcmp.gt.f32.partialorder %v143, 0.0
  %vm153 = vcmp.gt.f32.partialorder %v144, 0.0
  %vm154 = vcmp.gt.f32.partialorder %v145, 0.0
  %vm155 = vcmp.gt.f32.partialorder %v146, 0.0
  %vm156 = vcmp.gt.f32.partialorder %v147, 0.0
  %vm157 = vcmp.gt.f32.partialorder %v148, 0.0
  %vm158 = vcmp.gt.f32.partialorder %v149, 0.0
  %vm159 = vcmp.gt.f32.partialorder %v150, 0.0
  %vm160 = vcmp.gt.f32.partialorder %v151, 0.0
  %v161 = vmul.f32 %v143, 0.2
  %v162 = vmul.f32 %v144, 0.2
  %v163 = vmul.f32 %v145, 0.2
  %v164 = vmul.f32 %v146, 0.2
  %v165 = vmul.f32 %v147, 0.2
  %v166 = vmul.f32 %v148, 0.2
  %v167 = vmul.f32 %v149, 0.2
  %v168 = vmul.f32 %v150, 0.2
  %v169 = vmul.f32 %v151, 0.2
  %v170 = vsel %vm152, %v143, %v161
  %v171 = vsel %vm153, %v144, %v162
  %v172 = vsel %vm154, %v145, %v163
  %v173 = vsel %vm155, %v146, %v164
  %v174 = vsel %vm156, %v147, %v165
  %v175 = vsel %vm157, %v148, %v166
  %v176 = vsel %vm158, %v149, %v167
  %v177 = vsel %vm159, %v150, %v168
  %v178 = vsel %vm160, %v151, %v169
  %vm179 = vcmp.ne.bf16.partialorder %v22, %v22
  %vm180 = vcmp.ne.bf16.partialorder %v23, %v23
  %vm181 = vcmp.ne.bf16.partialorder %v24, %v24
  %vm182 = vcmp.ne.bf16.partialorder %v25, %v25
  %vm183 = vcmp.ne.bf16.partialorder %v26, %v26
  %v184 = vsel %vm179, 65537, 0
  %v185 = vsel %vm180, 65537, 0
  %v186 = vsel %vm181, 65537, 0
  %v187 = vsel %vm182, 65537, 0
  %v188 = vsel %vm183, 65537, 0
  %v189 = vunpack.c.l.b16 %v184
  %v190 = vunpack.c.h.b16 %v184
  %v191 = vunpack.c.l.b16 %v185
  %v192 = vunpack.c.h.b16 %v185
  %v193 = vunpack.c.l.b16 %v186
  %v194 = vunpack.c.h.b16 %v186
  %v195 = vunpack.c.l.b16 %v187
  %v196 = vunpack.c.h.b16 %v187
  %v197 = vunpack.c.l.b16 %v188
  %vm198 = vcmp.ne.s32.totalorder %v189, 0
  %vm199 = vcmp.ne.s32.totalorder %v190, 0
  %vm200 = vcmp.ne.s32.totalorder %v191, 0
  %vm201 = vcmp.ne.s32.totalorder %v192, 0
  %vm202 = vcmp.ne.s32.totalorder %v193, 0
  %vm203 = vcmp.ne.s32.totalorder %v194, 0
  %vm204 = vcmp.ne.s32.totalorder %v195, 0
  %vm205 = vcmp.ne.s32.totalorder %v196, 0
  %vm206 = vcmp.ne.s32.totalorder %v197, 0
  %v207 = vsel %vm198, 0.0, %v170
  %v208 = vsel %vm199, 0.0, %v171
  %v209 = vsel %vm200, 0.0, %v172
  %v210 = vsel %vm201, 0.0, %v173
  %v211 = vsel %vm202, 0.0, %v174
  %v212 = vsel %vm203, 0.0, %v175
  %v213 = vsel %vm204, 0.0, %v176
  %v214 = vsel %vm205, 0.0, %v177
  %v215 = vsel %vm206, 0.0, %v178
  %v216 = vpack.c.bf16 %v207, %v207
  %v217 = vpack.c.bf16 %v208, %v208
  %v218 = vpack.c.bf16 %v209, %v209
  %v219 = vpack.c.bf16 %v210, %v210
  %v220 = vpack.c.bf16 %v211, %v211
  %v221 = vpack.c.bf16 %v212, %v212
  %v222 = vpack.c.bf16 %v213, %v213
  %v223 = vpack.c.bf16 %v214, %v214
  %v224 = vpack.c.bf16 %v215, %v215
  %v225 = vld [vmem:[%s3] sm:$0xff]
  %v226 = vld [vmem:[%s3 + $0x8] sm:$0xff]
  %v227 = vld [vmem:[%s3 + $0x10] sm:$0xff]
  %v228 = vld [vmem:[%s3 + $0x18] sm:$0xff]
  %v229 = vld [vmem:[%s3 + $0x20] sm:$0xff]
  %v230 = vld [vmem:[%s3 + $0x28] sm:$0xff]
  %v231 = vld [vmem:[%s3 + $0x30] sm:$0xff]
  %v232 = vld [vmem:[%s3 + $0x38] sm:$0xff]
  %v233 = vld [vmem:[%s3 + $0x40] sm:$0xff]
  %v234 = vld [vmem:[%s3 + $0x48] sm:$0xff]
  %v235 = vld [vmem:[%s3 + $0x50] sm:$0xff]
  %v236 = vld [vmem:[%s3 + $0x58] sm:$0xff]
  %v237 = vld [vmem:[%s3 + $0x60] sm:$0xff]
  %v238 = vld [vmem:[%s3 + $0x68] sm:$0xff]
  %v239 = vld [vmem:[%s3 + $0x70] sm:$0xff]
  %v240 = vld [vmem:[%s3 + $0x78] sm:$0xff]
  %v241 = vld [vmem:[%s3 + $0x80] sm:$0xff]
  %v242 = vld [vmem:[%s3 + $0x88] sm:$0xff]
  %v243 = vld [vmem:[%s3 + $0x90] sm:$0xff]
  %v244 = vld [vmem:[%s3 + $0x98] sm:$0xff]
  %v245 = vld [vmem:[%s3 + $0xa0] sm:$0xff]
  %v246 = vld [vmem:[%s3 + $0xa8] sm:$0xff]
  %v247 = vld [vmem:[%s3 + $0xb0] sm:$0xff]
  %v248 = vld [vmem:[%s3 + $0xb8] sm:$0xff]
  %v249 = vld [vmem:[%s3 + $0xc0] sm:$0xff]
  %v250 = vld [vmem:[%s3 + $0xc8] sm:$0xff]
  %v251 = vld [vmem:[%s3 + $0xd0] sm:$0xff]
  %v252 = vld [vmem:[%s3 + $0xd8] sm:$0xff]
  %v253 = vld [vmem:[%s3 + $0xe0] sm:$0xff]
  %v254 = vld [vmem:[%s3 + $0xe8] sm:$0xff]
  %v255 = vld [vmem:[%s3 + $0xf0] sm:$0xff]
  %v256 = vld [vmem:[%s3 + $0xf8] sm:$0xff]
  %v257 = vld [vmem:[%s3 + $0x100] sm:$0xff]
  %v258 = vld [vmem:[%s3 + $0x108] sm:$0xff]
  %v259 = vld [vmem:[%s3 + $0x110] sm:$0xff]
  %v260 = vld [vmem:[%s3 + $0x118] sm:$0xff]
  %v261 = vld [vmem:[%s3 + $0x120] sm:$0xff]
  %v262 = vld [vmem:[%s3 + $0x128] sm:$0xff]
  %v263 = vld [vmem:[%s3 + $0x130] sm:$0xff]
  %v264 = vld [vmem:[%s3 + $0x138] sm:$0xff]
  %v265 = vld [vmem:[%s3 + $0x140] sm:$0xff]
  %v266 = vld [vmem:[%s3 + $0x148] sm:$0xff]
  %v267 = vld [vmem:[%s3 + $0x150] sm:$0xff]
  %v268 = vld [vmem:[%s3 + $0x158] sm:$0xff]
  %v269 = vld [vmem:[%s3 + $0x160] sm:$0xff]
  %v270 = vld [vmem:[%s3 + $0x168] sm:$0xff]
  %v271 = vld [vmem:[%s3 + $0x170] sm:$0xff]
  %v272 = vld [vmem:[%s3 + $0x178] sm:$0xff]
  %v273 = vld [vmem:[%s3 + $0x180] sm:$0xff]
  %v274 = vld [vmem:[%s3 + $0x188] sm:$0xff]
  %v275 = vld [vmem:[%s3 + $0x190] sm:$0xff]
  %v276 = vld [vmem:[%s3 + $0x198] sm:$0xff]
  %v277 = vld [vmem:[%s3 + $0x1a0] sm:$0xff]
  %v278 = vld [vmem:[%s3 + $0x1a8] sm:$0xff]
  %v279 = vld [vmem:[%s3 + $0x1b0] sm:$0xff]
  %v280 = vld [vmem:[%s3 + $0x1b8] sm:$0xff]
  %v281 = vld [vmem:[%s3 + $0x1c0] sm:$0xff]
  %v282 = vld [vmem:[%s3 + $0x1c8] sm:$0xff]
  %v283 = vld [vmem:[%s3 + $0x1d0] sm:$0xff]
  %v284 = vld [vmem:[%s3 + $0x1d8] sm:$0xff]
  %v285 = vld [vmem:[%s3 + $0x1e0] sm:$0xff]
  %v286 = vld [vmem:[%s3 + $0x1e8] sm:$0xff]
  %v287 = vld [vmem:[%s3 + $0x1f0] sm:$0xff]
  %v288 = vld [vmem:[%s3 + $0x1f8] sm:$0xff]
  %v289 = vld [vmem:[%s3 + $0x200] sm:$0xff]
  %v290 = vld [vmem:[%s3 + $0x208] sm:$0xff]
  %v291 = vld [vmem:[%s3 + $0x210] sm:$0xff]
  %v292 = vld [vmem:[%s3 + $0x218] sm:$0xff]
  %v293 = vld [vmem:[%s3 + $0x220] sm:$0xff]
  %v294 = vld [vmem:[%s3 + $0x228] sm:$0xff]
  %v295 = vld [vmem:[%s3 + $0x230] sm:$0xff]
  %v296 = vld [vmem:[%s3 + $0x238] sm:$0xff]
  %v297 = vld [vmem:[%s3 + $0x240] sm:$0xff]
  %v298 = vld [vmem:[%s3 + $0x248] sm:$0xff]
  %v299 = vld [vmem:[%s3 + $0x250] sm:$0xff]
  %v300 = vld [vmem:[%s3 + $0x258] sm:$0xff]
  %v301 = vld [vmem:[%s3 + $0x260] sm:$0xff]
  %v302 = vld [vmem:[%s3 + $0x268] sm:$0xff]
  %v303 = vld [vmem:[%s3 + $0x270] sm:$0xff]
  %v304 = vld [vmem:[%s3 + $0x278] sm:$0xff]
  %v305 = vld [vmem:[%s3 + $0x280] sm:$0xff]
  %v306 = vld [vmem:[%s3 + $0x288] sm:$0xff]
  %v307 = vld [vmem:[%s3 + $0x290] sm:$0xff]
  %v308 = vld [vmem:[%s3 + $0x298] sm:$0xff]
  %v309 = vld [vmem:[%s3 + $0x2a0] sm:$0xff]
  %v310 = vld [vmem:[%s3 + $0x2a8] sm:$0xff]
  %v311 = vld [vmem:[%s3 + $0x2b0] sm:$0xff]
  %v312 = vld [vmem:[%s3 + $0x2b8] sm:$0xff]
  %v313 = vld [vmem:[%s3 + $0x2c0] sm:$0xff]
  %v314 = vld [vmem:[%s3 + $0x2c8] sm:$0xff]
  %v315 = vld [vmem:[%s3 + $0x2d0] sm:$0xff]
  %v316 = vld [vmem:[%s3 + $0x2d8] sm:$0xff]
  %v317 = vld [vmem:[%s3 + $0x2e0] sm:$0xff]
  %v318 = vld [vmem:[%s3 + $0x2e8] sm:$0xff]
  %v319 = vld [vmem:[%s3 + $0x2f0] sm:$0xff]
  %v320 = vld [vmem:[%s3 + $0x2f8] sm:$0xff]
  %v321 = vld [vmem:[%s3 + $0x300] sm:$0xff]
  %v322 = vld [vmem:[%s3 + $0x308] sm:$0xff]
  %v323 = vld [vmem:[%s3 + $0x310] sm:$0xff]
  %v324 = vld [vmem:[%s3 + $0x318] sm:$0xff]
  %v325 = vld [vmem:[%s3 + $0x320] sm:$0xff]
  %v326 = vld [vmem:[%s3 + $0x328] sm:$0xff]
  %v327 = vld [vmem:[%s3 + $0x330] sm:$0xff]
  %v328 = vld [vmem:[%s3 + $0x338] sm:$0xff]
  %v329 = vld [vmem:[%s3 + $0x340] sm:$0xff]
  %v330 = vld [vmem:[%s3 + $0x348] sm:$0xff]
  %v331 = vld [vmem:[%s3 + $0x350] sm:$0xff]
  %v332 = vld [vmem:[%s3 + $0x358] sm:$0xff]
  %v333 = vld [vmem:[%s3 + $0x360] sm:$0xff]
  %v334 = vld [vmem:[%s3 + $0x368] sm:$0xff]
  %v335 = vld [vmem:[%s3 + $0x370] sm:$0xff]
  %v336 = vld [vmem:[%s3 + $0x378] sm:$0xff]
  %v337 = vld [vmem:[%s3 + $0x380] sm:$0xff]
  %v338 = vld [vmem:[%s3 + $0x388] sm:$0xff]
  %v339 = vld [vmem:[%s3 + $0x390] sm:$0xff]
  %v340 = vld [vmem:[%s3 + $0x398] sm:$0xff]
  %v341 = vld [vmem:[%s3 + $0x3a0] sm:$0xff]
  %v342 = vld [vmem:[%s3 + $0x3a8] sm:$0xff]
  %v343 = vld [vmem:[%s3 + $0x3b0] sm:$0xff]
  %v344 = vld [vmem:[%s3 + $0x3b8] sm:$0xff]
  %v345 = vld [vmem:[%s3 + $0x3c0] sm:$0xff]
  %v346 = vld [vmem:[%s3 + $0x3c8] sm:$0xff]
  %v347 = vld [vmem:[%s3 + $0x3d0] sm:$0xff]
  %v348 = vld [vmem:[%s3 + $0x3d8] sm:$0xff]
  %v349 = vld [vmem:[%s3 + $0x3e0] sm:$0xff]
  %v350 = vld [vmem:[%s3 + $0x3e8] sm:$0xff]
  %v351 = vld [vmem:[%s3 + $0x3f0] sm:$0xff]
  %v352 = vld [vmem:[%s3 + $0x3f8] sm:$0xff]
  %v353 = vld [vmem:[%s3 + $0x400] sm:$0xff]
  %v354 = vld [vmem:[%s3 + $0x408] sm:$0xff]
  %v355 = vld [vmem:[%s3 + $0x410] sm:$0xff]
  %v356 = vld [vmem:[%s3 + $0x418] sm:$0xff]
  %v357 = vld [vmem:[%s3 + $0x420] sm:$0xff]
  %v358 = vld [vmem:[%s3 + $0x428] sm:$0xff]
  %v359 = vld [vmem:[%s3 + $0x430] sm:$0xff]
  %v360 = vld [vmem:[%s3 + $0x438] sm:$0xff]
  %v361 = vld [vmem:[%s3 + $0x440] sm:$0xff]
  %v362 = vld [vmem:[%s3 + $0x448] sm:$0xff]
  %v363 = vld [vmem:[%s3 + $0x450] sm:$0xff]
  %v364 = vld [vmem:[%s3 + $0x458] sm:$0xff]
  %v365 = vld [vmem:[%s3 + $0x460] sm:$0xff]
  %v366 = vld [vmem:[%s3 + $0x468] sm:$0xff]
  %v367 = vld [vmem:[%s3 + $0x470] sm:$0xff]
  %v368 = vld [vmem:[%s3 + $0x478] sm:$0xff]
  %v513 = vunpack.c.l.b16 %v225
  %v514 = vunpack.c.h.b16 %v225
  %v515 = vunpack.c.l.b16 %v226
  %v516 = vunpack.c.h.b16 %v226
  %v517 = vunpack.c.l.b16 %v227
  %v518 = vunpack.c.h.b16 %v227
  %v519 = vunpack.c.l.b16 %v228
  %v520 = vunpack.c.h.b16 %v228
  %v521 = vunpack.c.l.b16 %v229
  %v522 = vunpack.c.h.b16 %v229
  %v523 = vunpack.c.l.b16 %v230
  %v524 = vunpack.c.h.b16 %v230
  %v525 = vunpack.c.l.b16 %v231
  %v526 = vunpack.c.h.b16 %v231
  %v527 = vunpack.c.l.b16 %v232
  %v528 = vunpack.c.h.b16 %v232
  %v529 = vunpack.c.l.b16 %v233
  %v530 = vunpack.c.h.b16 %v233
  %v531 = vunpack.c.l.b16 %v234
  %v532 = vunpack.c.h.b16 %v234
  %v533 = vunpack.c.l.b16 %v235
  %v534 = vunpack.c.h.b16 %v235
  %v535 = vunpack.c.l.b16 %v236
  %v536 = vunpack.c.h.b16 %v236
  %v537 = vunpack.c.l.b16 %v237
  %v538 = vunpack.c.h.b16 %v237
  %v539 = vunpack.c.l.b16 %v238
  %v540 = vunpack.c.h.b16 %v238
  %v541 = vunpack.c.l.b16 %v239
  %v542 = vunpack.c.h.b16 %v239
  %v543 = vunpack.c.l.b16 %v240
  %v544 = vunpack.c.h.b16 %v240
  %v545 = vunpack.c.l.b16 %v241
  %v546 = vunpack.c.h.b16 %v241
  %v547 = vunpack.c.l.b16 %v242
  %v548 = vunpack.c.h.b16 %v242
  %v549 = vunpack.c.l.b16 %v243
  %v550 = vunpack.c.h.b16 %v243
  %v551 = vunpack.c.l.b16 %v244
  %v552 = vunpack.c.h.b16 %v244
  %v553 = vunpack.c.l.b16 %v245
  %v554 = vunpack.c.h.b16 %v245
  %v555 = vunpack.c.l.b16 %v246
  %v556 = vunpack.c.h.b16 %v246
  %v557 = vunpack.c.l.b16 %v247
  %v558 = vunpack.c.h.b16 %v247
  %v559 = vunpack.c.l.b16 %v248
  %v560 = vunpack.c.h.b16 %v248
  %v561 = vunpack.c.l.b16 %v249
  %v562 = vunpack.c.h.b16 %v249
  %v563 = vunpack.c.l.b16 %v250
  %v564 = vunpack.c.h.b16 %v250
  %v565 = vunpack.c.l.b16 %v251
  %v566 = vunpack.c.h.b16 %v251
  %v567 = vunpack.c.l.b16 %v252
  %v568 = vunpack.c.h.b16 %v252
  %v569 = vunpack.c.l.b16 %v253
  %v570 = vunpack.c.h.b16 %v253
  %v571 = vunpack.c.l.b16 %v254
  %v572 = vunpack.c.h.b16 %v254
  %v573 = vunpack.c.l.b16 %v255
  %v574 = vunpack.c.h.b16 %v255
  %v575 = vunpack.c.l.b16 %v256
  %v576 = vunpack.c.h.b16 %v256
  %v577 = vunpack.c.l.b16 %v257
  %v578 = vunpack.c.h.b16 %v257
  %v579 = vunpack.c.l.b16 %v258
  %v580 = vunpack.c.h.b16 %v258
  %v581 = vunpack.c.l.b16 %v259
  %v582 = vunpack.c.h.b16 %v259
  %v583 = vunpack.c.l.b16 %v260
  %v584 = vunpack.c.h.b16 %v260
  %v585 = vunpack.c.l.b16 %v261
  %v586 = vunpack.c.h.b16 %v261
  %v587 = vunpack.c.l.b16 %v262
  %v588 = vunpack.c.h.b16 %v262
  %v589 = vunpack.c.l.b16 %v263
  %v590 = vunpack.c.h.b16 %v263
  %v591 = vunpack.c.l.b16 %v264
  %v592 = vunpack.c.h.b16 %v264
  %v593 = vunpack.c.l.b16 %v265
  %v594 = vunpack.c.h.b16 %v265
  %v595 = vunpack.c.l.b16 %v266
  %v596 = vunpack.c.h.b16 %v266
  %v597 = vunpack.c.l.b16 %v267
  %v598 = vunpack.c.h.b16 %v267
  %v599 = vunpack.c.l.b16 %v268
  %v600 = vunpack.c.h.b16 %v268
  %v601 = vunpack.c.l.b16 %v269
  %v602 = vunpack.c.h.b16 %v269
  %v603 = vunpack.c.l.b16 %v270
  %v604 = vunpack.c.h.b16 %v270
  %v605 = vunpack.c.l.b16 %v271
  %v606 = vunpack.c.h.b16 %v271
  %v607 = vunpack.c.l.b16 %v272
  %v608 = vunpack.c.h.b16 %v272
  %v609 = vunpack.c.l.b16 %v273
  %v610 = vunpack.c.h.b16 %v273
  %v611 = vunpack.c.l.b16 %v274
  %v612 = vunpack.c.h.b16 %v274
  %v613 = vunpack.c.l.b16 %v275
  %v614 = vunpack.c.h.b16 %v275
  %v615 = vunpack.c.l.b16 %v276
  %v616 = vunpack.c.h.b16 %v276
  %v617 = vunpack.c.l.b16 %v277
  %v618 = vunpack.c.h.b16 %v277
  %v619 = vunpack.c.l.b16 %v278
  %v620 = vunpack.c.h.b16 %v278
  %v621 = vunpack.c.l.b16 %v279
  %v622 = vunpack.c.h.b16 %v279
  %v623 = vunpack.c.l.b16 %v280
  %v624 = vunpack.c.h.b16 %v280
  %v625 = vunpack.c.l.b16 %v281
  %v626 = vunpack.c.h.b16 %v281
  %v627 = vunpack.c.l.b16 %v282
  %v628 = vunpack.c.h.b16 %v282
  %v629 = vunpack.c.l.b16 %v283
  %v630 = vunpack.c.h.b16 %v283
  %v631 = vunpack.c.l.b16 %v284
  %v632 = vunpack.c.h.b16 %v284
  %v633 = vunpack.c.l.b16 %v285
  %v634 = vunpack.c.h.b16 %v285
  %v635 = vunpack.c.l.b16 %v286
  %v636 = vunpack.c.h.b16 %v286
  %v637 = vunpack.c.l.b16 %v287
  %v638 = vunpack.c.h.b16 %v287
  %v639 = vunpack.c.l.b16 %v288
  %v640 = vunpack.c.h.b16 %v288
  %v641 = vunpack.c.l.b16 %v289
  %v642 = vunpack.c.h.b16 %v289
  %v643 = vunpack.c.l.b16 %v290
  %v644 = vunpack.c.h.b16 %v290
  %v645 = vunpack.c.l.b16 %v291
  %v646 = vunpack.c.h.b16 %v291
  %v647 = vunpack.c.l.b16 %v292
  %v648 = vunpack.c.h.b16 %v292
  %v649 = vunpack.c.l.b16 %v293
  %v650 = vunpack.c.h.b16 %v293
  %v651 = vunpack.c.l.b16 %v294
  %v652 = vunpack.c.h.b16 %v294
  %v653 = vunpack.c.l.b16 %v295
  %v654 = vunpack.c.h.b16 %v295
  %v655 = vunpack.c.l.b16 %v296
  %v656 = vunpack.c.h.b16 %v296
  %v657 = vunpack.c.l.b16 %v297
  %v658 = vunpack.c.h.b16 %v297
  %v659 = vunpack.c.l.b16 %v298
  %v660 = vunpack.c.h.b16 %v298
  %v661 = vunpack.c.l.b16 %v299
  %v662 = vunpack.c.h.b16 %v299
  %v663 = vunpack.c.l.b16 %v300
  %v664 = vunpack.c.h.b16 %v300
  %v665 = vunpack.c.l.b16 %v301
  %v666 = vunpack.c.h.b16 %v301
  %v667 = vunpack.c.l.b16 %v302
  %v668 = vunpack.c.h.b16 %v302
  %v669 = vunpack.c.l.b16 %v303
  %v670 = vunpack.c.h.b16 %v303
  %v671 = vunpack.c.l.b16 %v304
  %v672 = vunpack.c.h.b16 %v304
  %v673 = vunpack.c.l.b16 %v305
  %v674 = vunpack.c.h.b16 %v305
  %v675 = vunpack.c.l.b16 %v306
  %v676 = vunpack.c.h.b16 %v306
  %v677 = vunpack.c.l.b16 %v307
  %v678 = vunpack.c.h.b16 %v307
  %v679 = vunpack.c.l.b16 %v308
  %v680 = vunpack.c.h.b16 %v308
  %v681 = vunpack.c.l.b16 %v309
  %v682 = vunpack.c.h.b16 %v309
  %v683 = vunpack.c.l.b16 %v310
  %v684 = vunpack.c.h.b16 %v310
  %v685 = vunpack.c.l.b16 %v311
  %v686 = vunpack.c.h.b16 %v311
  %v687 = vunpack.c.l.b16 %v312
  %v688 = vunpack.c.h.b16 %v312
  %v689 = vunpack.c.l.b16 %v313
  %v690 = vunpack.c.h.b16 %v313
  %v691 = vunpack.c.l.b16 %v314
  %v692 = vunpack.c.h.b16 %v314
  %v693 = vunpack.c.l.b16 %v315
  %v694 = vunpack.c.h.b16 %v315
  %v695 = vunpack.c.l.b16 %v316
  %v696 = vunpack.c.h.b16 %v316
  %v697 = vunpack.c.l.b16 %v317
  %v698 = vunpack.c.h.b16 %v317
  %v699 = vunpack.c.l.b16 %v318
  %v700 = vunpack.c.h.b16 %v318
  %v701 = vunpack.c.l.b16 %v319
  %v702 = vunpack.c.h.b16 %v319
  %v703 = vunpack.c.l.b16 %v320
  %v704 = vunpack.c.h.b16 %v320
  %v705 = vunpack.c.l.b16 %v321
  %v706 = vunpack.c.h.b16 %v321
  %v707 = vunpack.c.l.b16 %v322
  %v708 = vunpack.c.h.b16 %v322
  %v709 = vunpack.c.l.b16 %v323
  %v710 = vunpack.c.h.b16 %v323
  %v711 = vunpack.c.l.b16 %v324
  %v712 = vunpack.c.h.b16 %v324
  %v713 = vunpack.c.l.b16 %v325
  %v714 = vunpack.c.h.b16 %v325
  %v715 = vunpack.c.l.b16 %v326
  %v716 = vunpack.c.h.b16 %v326
  %v717 = vunpack.c.l.b16 %v327
  %v718 = vunpack.c.h.b16 %v327
  %v719 = vunpack.c.l.b16 %v328
  %v720 = vunpack.c.h.b16 %v328
  %v721 = vunpack.c.l.b16 %v329
  %v722 = vunpack.c.h.b16 %v329
  %v723 = vunpack.c.l.b16 %v330
  %v724 = vunpack.c.h.b16 %v330
  %v725 = vunpack.c.l.b16 %v331
  %v726 = vunpack.c.h.b16 %v331
  %v727 = vunpack.c.l.b16 %v332
  %v728 = vunpack.c.h.b16 %v332
  %v729 = vunpack.c.l.b16 %v333
  %v730 = vunpack.c.h.b16 %v333
  %v731 = vunpack.c.l.b16 %v334
  %v732 = vunpack.c.h.b16 %v334
  %v733 = vunpack.c.l.b16 %v335
  %v734 = vunpack.c.h.b16 %v335
  %v735 = vunpack.c.l.b16 %v336
  %v736 = vunpack.c.h.b16 %v336
  %v737 = vunpack.c.l.b16 %v337
  %v738 = vunpack.c.h.b16 %v337
  %v739 = vunpack.c.l.b16 %v338
  %v740 = vunpack.c.h.b16 %v338
  %v741 = vunpack.c.l.b16 %v339
  %v742 = vunpack.c.h.b16 %v339
  %v743 = vunpack.c.l.b16 %v340
  %v744 = vunpack.c.h.b16 %v340
  %v745 = vunpack.c.l.b16 %v341
  %v746 = vunpack.c.h.b16 %v341
  %v747 = vunpack.c.l.b16 %v342
  %v748 = vunpack.c.h.b16 %v342
  %v749 = vunpack.c.l.b16 %v343
  %v750 = vunpack.c.h.b16 %v343
  %v751 = vunpack.c.l.b16 %v344
  %v752 = vunpack.c.h.b16 %v344
  %v753 = vunpack.c.l.b16 %v345
  %v754 = vunpack.c.h.b16 %v345
  %v755 = vunpack.c.l.b16 %v346
  %v756 = vunpack.c.h.b16 %v346
  %v757 = vunpack.c.l.b16 %v347
  %v758 = vunpack.c.h.b16 %v347
  %v759 = vunpack.c.l.b16 %v348
  %v760 = vunpack.c.h.b16 %v348
  %v761 = vunpack.c.l.b16 %v349
  %v762 = vunpack.c.h.b16 %v349
  %v763 = vunpack.c.l.b16 %v350
  %v764 = vunpack.c.h.b16 %v350
  %v765 = vunpack.c.l.b16 %v351
  %v766 = vunpack.c.h.b16 %v351
  %v767 = vunpack.c.l.b16 %v352
  %v768 = vunpack.c.h.b16 %v352
  %v769 = vunpack.c.l.b16 %v353
  %v770 = vunpack.c.h.b16 %v353
  %v771 = vunpack.c.l.b16 %v354
  %v772 = vunpack.c.h.b16 %v354
  %v773 = vunpack.c.l.b16 %v355
  %v774 = vunpack.c.h.b16 %v355
  %v775 = vunpack.c.l.b16 %v356
  %v776 = vunpack.c.h.b16 %v356
  %v777 = vunpack.c.l.b16 %v357
  %v778 = vunpack.c.h.b16 %v357
  %v779 = vunpack.c.l.b16 %v358
  %v780 = vunpack.c.h.b16 %v358
  %v781 = vunpack.c.l.b16 %v359
  %v782 = vunpack.c.h.b16 %v359
  %v783 = vunpack.c.l.b16 %v360
  %v784 = vunpack.c.h.b16 %v360
  %v785 = vunpack.c.l.b16 %v361
  %v786 = vunpack.c.h.b16 %v361
  %v787 = vunpack.c.l.b16 %v362
  %v788 = vunpack.c.h.b16 %v362
  %v789 = vunpack.c.l.b16 %v363
  %v790 = vunpack.c.h.b16 %v363
  %v791 = vunpack.c.l.b16 %v364
  %v792 = vunpack.c.h.b16 %v364
  %v793 = vunpack.c.l.b16 %v365
  %v794 = vunpack.c.h.b16 %v365
  %v795 = vunpack.c.l.b16 %v366
  %v796 = vunpack.c.h.b16 %v366
  %v797 = vunpack.c.l.b16 %v367
  %v798 = vunpack.c.h.b16 %v367
  %v799 = vunpack.c.l.b16 %v368
  %v800 = vunpack.c.h.b16 %v368
  %v801 = vpack.c.b16 %v515, %v513
  %v802 = vpack.c.b16 %v516, %v514
  %v803 = vpack.c.b16 %v519, %v517
  %v804 = vpack.c.b16 %v520, %v518
  %v805 = vpack.c.b16 %v523, %v521
  %v806 = vpack.c.b16 %v524, %v522
  %v807 = vpack.c.b16 %v527, %v525
  %v808 = vpack.c.b16 %v528, %v526
  %v809 = vpack.c.b16 %v531, %v529
  %v810 = vpack.c.b16 %v532, %v530
  %v811 = vpack.c.b16 %v535, %v533
  %v812 = vpack.c.b16 %v536, %v534
  %v813 = vpack.c.b16 %v539, %v537
  %v814 = vpack.c.b16 %v540, %v538
  %v815 = vpack.c.b16 %v543, %v541
  %v816 = vpack.c.b16 %v544, %v542
  %v817 = vpack.c.b16 %v547, %v545
  %v818 = vpack.c.b16 %v548, %v546
  %v819 = vpack.c.b16 %v551, %v549
  %v820 = vpack.c.b16 %v552, %v550
  %v821 = vpack.c.b16 %v555, %v553
  %v822 = vpack.c.b16 %v556, %v554
  %v823 = vpack.c.b16 %v559, %v557
  %v824 = vpack.c.b16 %v560, %v558
  %v825 = vpack.c.b16 %v563, %v561
  %v826 = vpack.c.b16 %v564, %v562
  %v827 = vpack.c.b16 %v567, %v565
  %v828 = vpack.c.b16 %v568, %v566
  %v829 = vpack.c.b16 %v571, %v569
  %v830 = vpack.c.b16 %v572, %v570
  %v831 = vpack.c.b16 %v575, %v573
  %v832 = vpack.c.b16 %v576, %v574
  %v833 = vpack.c.b16 %v579, %v577
  %v834 = vpack.c.b16 %v580, %v578
  %v835 = vpack.c.b16 %v583, %v581
  %v836 = vpack.c.b16 %v584, %v582
  %v837 = vpack.c.b16 %v587, %v585
  %v838 = vpack.c.b16 %v588, %v586
  %v839 = vpack.c.b16 %v591, %v589
  %v840 = vpack.c.b16 %v592, %v590
  %v841 = vpack.c.b16 %v595, %v593
  %v842 = vpack.c.b16 %v596, %v594
  %v843 = vpack.c.b16 %v599, %v597
  %v844 = vpack.c.b16 %v600, %v598
  %v845 = vpack.c.b16 %v603, %v601
  %v846 = vpack.c.b16 %v604, %v602
  %v847 = vpack.c.b16 %v607, %v605
  %v848 = vpack.c.b16 %v608, %v606
  %v849 = vpack.c.b16 %v611, %v609
  %v850 = vpack.c.b16 %v612, %v610
  %v851 = vpack.c.b16 %v615, %v613
  %v852 = vpack.c.b16 %v616, %v614
  %v853 = vpack.c.b16 %v619, %v617
  %v854 = vpack.c.b16 %v620, %v618
  %v855 = vpack.c.b16 %v623, %v621
  %v856 = vpack.c.b16 %v624, %v622
  %v857 = vpack.c.b16 %v627, %v625
  %v858 = vpack.c.b16 %v628, %v626
  %v859 = vpack.c.b16 %v631, %v629
  %v860 = vpack.c.b16 %v632, %v630
  %v861 = vpack.c.b16 %v635, %v633
  %v862 = vpack.c.b16 %v636, %v634
  %v863 = vpack.c.b16 %v639, %v637
  %v864 = vpack.c.b16 %v640, %v638
  %v865 = vpack.c.b16 %v643, %v641
  %v866 = vpack.c.b16 %v644, %v642
  %v867 = vpack.c.b16 %v647, %v645
  %v868 = vpack.c.b16 %v648, %v646
  %v869 = vpack.c.b16 %v651, %v649
  %v870 = vpack.c.b16 %v652, %v650
  %v871 = vpack.c.b16 %v655, %v653
  %v872 = vpack.c.b16 %v656, %v654
  %v873 = vpack.c.b16 %v659, %v657
  %v874 = vpack.c.b16 %v660, %v658
  %v875 = vpack.c.b16 %v663, %v661
  %v876 = vpack.c.b16 %v664, %v662
  %v877 = vpack.c.b16 %v667, %v665
  %v878 = vpack.c.b16 %v668, %v666
  %v879 = vpack.c.b16 %v671, %v669
  %v880 = vpack.c.b16 %v672, %v670
  %v881 = vpack.c.b16 %v675, %v673
  %v882 = vpack.c.b16 %v676, %v674
  %v883 = vpack.c.b16 %v679, %v677
  %v884 = vpack.c.b16 %v680, %v678
  %v885 = vpack.c.b16 %v683, %v681
  %v886 = vpack.c.b16 %v684, %v682
  %v887 = vpack.c.b16 %v687, %v685
  %v888 = vpack.c.b16 %v688, %v686
  %v889 = vpack.c.b16 %v691, %v689
  %v890 = vpack.c.b16 %v692, %v690
  %v891 = vpack.c.b16 %v695, %v693
  %v892 = vpack.c.b16 %v696, %v694
  %v893 = vpack.c.b16 %v699, %v697
  %v894 = vpack.c.b16 %v700, %v698
  %v895 = vpack.c.b16 %v703, %v701
  %v896 = vpack.c.b16 %v704, %v702
  %v897 = vpack.c.b16 %v707, %v705
  %v898 = vpack.c.b16 %v708, %v706
  %v899 = vpack.c.b16 %v711, %v709
  %v900 = vpack.c.b16 %v712, %v710
  %v901 = vpack.c.b16 %v715, %v713
  %v902 = vpack.c.b16 %v716, %v714
  %v903 = vpack.c.b16 %v719, %v717
  %v904 = vpack.c.b16 %v720, %v718
  %v905 = vpack.c.b16 %v723, %v721
  %v906 = vpack.c.b16 %v724, %v722
  %v907 = vpack.c.b16 %v727, %v725
  %v908 = vpack.c.b16 %v728, %v726
  %v909 = vpack.c.b16 %v731, %v729
  %v910 = vpack.c.b16 %v732, %v730
  %v911 = vpack.c.b16 %v735, %v733
  %v912 = vpack.c.b16 %v736, %v734
  %v913 = vpack.c.b16 %v739, %v737
  %v914 = vpack.c.b16 %v740, %v738
  %v915 = vpack.c.b16 %v743, %v741
  %v916 = vpack.c.b16 %v744, %v742
  %v917 = vpack.c.b16 %v747, %v745
  %v918 = vpack.c.b16 %v748, %v746
  %v919 = vpack.c.b16 %v751, %v749
  %v920 = vpack.c.b16 %v752, %v750
  %v921 = vpack.c.b16 %v755, %v753
  %v922 = vpack.c.b16 %v756, %v754
  %v923 = vpack.c.b16 %v759, %v757
  %v924 = vpack.c.b16 %v760, %v758
  %v925 = vpack.c.b16 %v763, %v761
  %v926 = vpack.c.b16 %v764, %v762
  %v927 = vpack.c.b16 %v767, %v765
  %v928 = vpack.c.b16 %v768, %v766
  %v929 = vpack.c.b16 %v771, %v769
  %v930 = vpack.c.b16 %v772, %v770
  %v931 = vpack.c.b16 %v775, %v773
  %v932 = vpack.c.b16 %v776, %v774
  %v933 = vpack.c.b16 %v779, %v777
  %v934 = vpack.c.b16 %v780, %v778
  %v935 = vpack.c.b16 %v783, %v781
  %v936 = vpack.c.b16 %v784, %v782
  %v937 = vpack.c.b16 %v787, %v785
  %v938 = vpack.c.b16 %v788, %v786
  %v939 = vpack.c.b16 %v791, %v789
  %v940 = vpack.c.b16 %v792, %v790
  %v941 = vpack.c.b16 %v795, %v793
  %v942 = vpack.c.b16 %v796, %v794
  %v943 = vpack.c.b16 %v799, %v797
  %v944 = vpack.c.b16 %v800, %v798
  %1089 = vmatprep.subr.bf16.mxu0 %v816
  %1090 = vmatpush1.bf16.msra.mxu0 %v815
  %1091 = vmatprep.subr.bf16.mxu0 %v814
  %1092 = vmatpush1.bf16.msra.mxu0 %v813
  %1093 = vmatprep.subr.bf16.mxu0 %v812
  %1094 = vmatpush1.bf16.msra.mxu0 %v811
  %1095 = vmatprep.subr.bf16.mxu0 %v810
  %1096 = vmatpush1.bf16.msra.mxu0 %v809
  %1097 = vmatprep.subr.bf16.mxu0 %v808
  %1098 = vmatpush1.bf16.msra.mxu0 %v807
  %1099 = vmatprep.subr.bf16.mxu0 %v806
  %1100 = vmatpush1.bf16.msra.mxu0 %v805
  %1101 = vmatprep.subr.bf16.mxu0 %v804
  %1102 = vmatpush1.bf16.msra.mxu0 %v803
  %1103 = vmatprep.subr.bf16.mxu0 %v802
  %1104 = vmatpush1.bf16.msra.mxu0 %v801
  %1105 = vmatprep.subr.bf16.mxu0 %v832
  %1106 = vmatpush2.bf16.msra.mxu0 %v831
  %1107 = vmatprep.subr.bf16.mxu0 %v830
  %1108 = vmatpush2.bf16.msra.mxu0 %v829
  %1109 = vmatprep.subr.bf16.mxu0 %v828
  %1110 = vmatpush2.bf16.msra.mxu0 %v827
  %1111 = vmatprep.subr.bf16.mxu0 %v826
  %1112 = vmatpush2.bf16.msra.mxu0 %v825
  %1113 = vmatprep.subr.bf16.mxu0 %v824
  %1114 = vmatpush2.bf16.msra.mxu0 %v823
  %1115 = vmatprep.subr.bf16.mxu0 %v822
  %1116 = vmatpush2.bf16.msra.mxu0 %v821
  %1117 = vmatprep.subr.bf16.mxu0 %v820
  %1118 = vmatpush2.bf16.msra.mxu0 %v819
  %1119 = vmatprep.subr.bf16.mxu0 %v818
  %1120 = vmatpush2.bf16.msra.mxu0 %v817
  %1121 = vmatprep.mubr.bf16.mxu0 %v217
  %1122 = vmatmul.mubr.bf16.gmra.mxu0 %v216
  %v1123 = vpop.f32.mrf.mxu0
  %v1124 = vadd.f32 0.0, %v1123
  %v1125 = vpop.f32.mrf.mxu0
  %v1126 = vadd.f32 0.0, %v1125
  %v1127 = vpop.f32.mrf.mxu0
  %v1128 = vpop.f32.mrf.mxu0
  %1129 = vdwg.mxu0
  %1130 = vmatprep.subr.bf16.mxu0 %v848
  %1131 = vmatpush1.bf16.msra.mxu0 %v847
  %1132 = vmatprep.subr.bf16.mxu0 %v846
  %1133 = vmatpush1.bf16.msra.mxu0 %v845
  %1134 = vmatprep.subr.bf16.mxu0 %v844
  %1135 = vmatpush1.bf16.msra.mxu0 %v843
  %1136 = vmatprep.subr.bf16.mxu0 %v842
  %1137 = vmatpush1.bf16.msra.mxu0 %v841
  %1138 = vmatprep.subr.bf16.mxu0 %v840
  %1139 = vmatpush1.bf16.msra.mxu0 %v839
  %1140 = vmatprep.subr.bf16.mxu0 %v838
  %1141 = vmatpush1.bf16.msra.mxu0 %v837
  %1142 = vmatprep.subr.bf16.mxu0 %v836
  %1143 = vmatpush1.bf16.msra.mxu0 %v835
  %1144 = vmatprep.subr.bf16.mxu0 %v834
  %1145 = vmatpush1.bf16.msra.mxu0 %v833
  %1146 = vmatprep.subr.bf16.mxu0 %v864
  %1147 = vmatpush2.bf16.msra.mxu0 %v863
  %1148 = vmatprep.subr.bf16.mxu0 %v862
  %1149 = vmatpush2.bf16.msra.mxu0 %v861
  %1150 = vmatprep.subr.bf16.mxu0 %v860
  %1151 = vmatpush2.bf16.msra.mxu0 %v859
  %1152 = vmatprep.subr.bf16.mxu0 %v858
  %1153 = vmatpush2.bf16.msra.mxu0 %v857
  %1154 = vmatprep.subr.bf16.mxu0 %v856
  %1155 = vmatpush2.bf16.msra.mxu0 %v855
  %1156 = vmatprep.subr.bf16.mxu0 %v854
  %1157 = vmatpush2.bf16.msra.mxu0 %v853
  %1158 = vmatprep.subr.bf16.mxu0 %v852
  %1159 = vmatpush2.bf16.msra.mxu0 %v851
  %1160 = vmatprep.subr.bf16.mxu0 %v850
  %1161 = vmatpush2.bf16.msra.mxu0 %v849
  %1162 = vmatprep.mubr.bf16.mxu0 %v219
  %1163 = vmatmul.mubr.bf16.gmra.mxu0 %v218
  %v1164 = vpop.f32.mrf.mxu0
  %v1165 = vadd.f32 %v1124, %v1164
  %v1166 = vpop.f32.mrf.mxu0
  %v1167 = vadd.f32 %v1126, %v1166
  %v1168 = vpop.f32.mrf.mxu0
  %v1169 = vpop.f32.mrf.mxu0
  %1170 = vdwg.mxu0
  %1171 = vmatprep.subr.bf16.mxu0 %v880
  %1172 = vmatpush1.bf16.msra.mxu0 %v879
  %1173 = vmatprep.subr.bf16.mxu0 %v878
  %1174 = vmatpush1.bf16.msra.mxu0 %v877
  %1175 = vmatprep.subr.bf16.mxu0 %v876
  %1176 = vmatpush1.bf16.msra.mxu0 %v875
  %1177 = vmatprep.subr.bf16.mxu0 %v874
  %1178 = vmatpush1.bf16.msra.mxu0 %v873
  %1179 = vmatprep.subr.bf16.mxu0 %v872
  %1180 = vmatpush1.bf16.msra.mxu0 %v871
  %1181 = vmatprep.subr.bf16.mxu0 %v870
  %1182 = vmatpush1.bf16.msra.mxu0 %v869
  %1183 = vmatprep.subr.bf16.mxu0 %v868
  %1184 = vmatpush1.bf16.msra.mxu0 %v867
  %1185 = vmatprep.subr.bf16.mxu0 %v866
  %1186 = vmatpush1.bf16.msra.mxu0 %v865
  %1187 = vmatprep.subr.bf16.mxu0 %v896
  %1188 = vmatpush2.bf16.msra.mxu0 %v895
  %1189 = vmatprep.subr.bf16.mxu0 %v894
  %1190 = vmatpush2.bf16.msra.mxu0 %v893
  %1191 = vmatprep.subr.bf16.mxu0 %v892
  %1192 = vmatpush2.bf16.msra.mxu0 %v891
  %1193 = vmatprep.subr.bf16.mxu0 %v890
  %1194 = vmatpush2.bf16.msra.mxu0 %v889
  %1195 = vmatprep.subr.bf16.mxu0 %v888
  %1196 = vmatpush2.bf16.msra.mxu0 %v887
  %1197 = vmatprep.subr.bf16.mxu0 %v886
  %1198 = vmatpush2.bf16.msra.mxu0 %v885
  %1199 = vmatprep.subr.bf16.mxu0 %v884
  %1200 = vmatpush2.bf16.msra.mxu0 %v883
  %1201 = vmatprep.subr.bf16.mxu0 %v882
  %1202 = vmatpush2.bf16.msra.mxu0 %v881
  %1203 = vmatprep.mubr.bf16.mxu0 %v221
  %1204 = vmatmul.mubr.bf16.gmra.mxu0 %v220
  %v1205 = vpop.f32.mrf.mxu0
  %v1206 = vadd.f32 %v1165, %v1205
  %v1207 = vpop.f32.mrf.mxu0
  %v1208 = vadd.f32 %v1167, %v1207
  %v1209 = vpop.f32.mrf.mxu0
  %v1210 = vpop.f32.mrf.mxu0
  %1211 = vdwg.mxu0
  %1212 = vmatprep.subr.bf16.mxu0 %v912
  %1213 = vmatpush1.bf16.msra.mxu0 %v911
  %1214 = vmatprep.subr.bf16.mxu0 %v910
  %1215 = vmatpush1.bf16.msra.mxu0 %v909
  %1216 = vmatprep.subr.bf16.mxu0 %v908
  %1217 = vmatpush1.bf16.msra.mxu0 %v907
  %1218 = vmatprep.subr.bf16.mxu0 %v906
  %1219 = vmatpush1.bf16.msra.mxu0 %v905
  %1220 = vmatprep.subr.bf16.mxu0 %v904
  %1221 = vmatpush1.bf16.msra.mxu0 %v903
  %1222 = vmatprep.subr.bf16.mxu0 %v902
  %1223 = vmatpush1.bf16.msra.mxu0 %v901
  %1224 = vmatprep.subr.bf16.mxu0 %v900
  %1225 = vmatpush1.bf16.msra.mxu0 %v899
  %1226 = vmatprep.subr.bf16.mxu0 %v898
  %1227 = vmatpush1.bf16.msra.mxu0 %v897
  %1228 = vmatprep.subr.bf16.mxu0 %v928
  %1229 = vmatpush2.bf16.msra.mxu0 %v927
  %1230 = vmatprep.subr.bf16.mxu0 %v926
  %1231 = vmatpush2.bf16.msra.mxu0 %v925
  %1232 = vmatprep.subr.bf16.mxu0 %v924
  %1233 = vmatpush2.bf16.msra.mxu0 %v923
  %1234 = vmatprep.subr.bf16.mxu0 %v922
  %1235 = vmatpush2.bf16.msra.mxu0 %v921
  %1236 = vmatprep.subr.bf16.mxu0 %v920
  %1237 = vmatpush2.bf16.msra.mxu0 %v919
  %1238 = vmatprep.subr.bf16.mxu0 %v918
  %1239 = vmatpush2.bf16.msra.mxu0 %v917
  %1240 = vmatprep.subr.bf16.mxu0 %v916
  %1241 = vmatpush2.bf16.msra.mxu0 %v915
  %1242 = vmatprep.subr.bf16.mxu0 %v914
  %1243 = vmatpush2.bf16.msra.mxu0 %v913
  %1244 = vmatprep.mubr.bf16.mxu0 %v223
  %1245 = vmatmul.mubr.bf16.gmra.mxu0 %v222
  %v1246 = vpop.f32.mrf.mxu0
  %v1247 = vadd.f32 %v1206, %v1246
  %v1248 = vpop.f32.mrf.mxu0
  %v1249 = vadd.f32 %v1208, %v1248
  %v1250 = vpop.f32.mrf.mxu0
  %v1251 = vpop.f32.mrf.mxu0
  %1252 = vdwg.mxu0
  %1253 = vmatprep.subr.bf16.mxu0 %v944
  %1254 = vmatpush1.bf16.msra.mxu0 %v943
  %1255 = vmatprep.subr.bf16.mxu0 %v942
  %1256 = vmatpush1.bf16.msra.mxu0 %v941
  %1257 = vmatprep.subr.bf16.mxu0 %v940
  %1258 = vmatpush1.bf16.msra.mxu0 %v939
  %1259 = vmatprep.subr.bf16.mxu0 %v938
  %1260 = vmatpush1.bf16.msra.mxu0 %v937
  %1261 = vmatprep.subr.bf16.mxu0 %v936
  %1262 = vmatpush1.bf16.msra.mxu0 %v935
  %1263 = vmatprep.subr.bf16.mxu0 %v934
  %1264 = vmatpush1.bf16.msra.mxu0 %v933
  %1265 = vmatprep.subr.bf16.mxu0 %v932
  %1266 = vmatpush1.bf16.msra.mxu0 %v931
  %1267 = vmatprep.subr.bf16.mxu0 %v930
  %1268 = vmatpush1.bf16.msra.mxu0 %v929
  %1269 = vmatprep.subr.bf16.mxu0 0
  %1270 = vmatpush2.bf16.msra.mxu0 0
  %1271 = vmatprep.subr.bf16.mxu0 0
  %1272 = vmatpush2.bf16.msra.mxu0 0
  %1273 = vmatprep.subr.bf16.mxu0 0
  %1274 = vmatpush2.bf16.msra.mxu0 0
  %1275 = vmatprep.subr.bf16.mxu0 0
  %1276 = vmatpush2.bf16.msra.mxu0 0
  %1277 = vmatprep.subr.bf16.mxu0 0
  %1278 = vmatpush2.bf16.msra.mxu0 0
  %1279 = vmatprep.subr.bf16.mxu0 0
  %1280 = vmatpush2.bf16.msra.mxu0 0
  %1281 = vmatprep.subr.bf16.mxu0 0
  %1282 = vmatpush2.bf16.msra.mxu0 0
  %1283 = vmatprep.subr.bf16.mxu0 0
  %1284 = vmatpush2.bf16.msra.mxu0 0
  %1285 = vmatprep.mubr.bf16.mxu0 0
  %1286 = vmatmul.mubr.bf16.gmra.mxu0 %v224
  %v1287 = vpop.f32.mrf.mxu0
  %v1288 = vadd.f32 %v1247, %v1287
  %v1289 = vpop.f32.mrf.mxu0
  %v1290 = vadd.f32 %v1249, %v1289
  %v1291 = vpop.f32.mrf.mxu0
  %v1292 = vpop.f32.mrf.mxu0
  %1293 = vdwg.mxu0
  %v1294 = vpack.c.bf16 %v1288, %v1288
  %v1295 = vpack.c.bf16 %v1290, %v1290
  %v1298 = vunpack.c.l.b16 %v1294
  %v1299 = vunpack.c.l.b16 %v1295
  %v1300 = vpack.c.b16 %v1299, %v1298
  %1302 = vst [vmem:[%s4] sm:$0xff] %v1300
  %v1303 = vrot.slane %v1288, 4
  %v1304 = vadd.f32 %v1288, %v1303
  %v1305 = vrot.slane %v1304, 2
  %v1306 = vadd.f32 %v1304, %v1305
  %v1307 = vrot.slane %v1306, 1
  %v1308 = vadd.f32 %v1306, %v1307
  %v1309 = vrot.slane %v1290, 4
  %v1310 = vadd.f32 %v1290, %v1309
  %v1311 = vrot.slane %v1310, 2
  %v1312 = vadd.f32 %v1310, %v1311
  %v1313 = vrot.slane %v1312, 1
  %v1314 = vadd.f32 %v1312, %v1313
  %v1317 = vcombine.low %v1308, %v1314
  %v1319 = vunpack.c.l.s4 1966171168
  %v1320 = vunpack.c.0.s8 %v1319
  %v1321 = vlaneseq
  %v1322 = vshrl.u32 %v1321, 7
  %v1323 = vsub.s32 %v1320, %v1322
  %v1324 = vrot.slane %v1317, %v1323
  %v1326 = vunpack.c.l.s4 1966171168
  %v1327 = vunpack.c.0.s8 %v1326
  %v1328 = vlaneseq
  %v1329 = vshrl.u32 %v1328, 7
  %v1330 = vsub.s32 %v1327, %v1329
  %v1331 = vrot.slane %v1324, %v1330
  %v1333 = vlaneseq
  %vm1334 = vcmp.ge.s32.totalorder %v1333, 0
  %vm1335 = vcmp.lt.s32.totalorder %v1333, 256
  %vm1336 = vmand %vm1334, %vm1335
  %1337 = vst.msk [vmem:[%s5] ss:$2 sm:$0x3] %vm1336, %v1331
  %v1338 = vmul.f32 %v1288, %v1288
  %v1339 = vmul.f32 %v1290, %v1290
  %v1340 = vrot.slane %v1338, 4
  %v1341 = vadd.f32 %v1338, %v1340
  %v1342 = vrot.slane %v1341, 2
  %v1343 = vadd.f32 %v1341, %v1342
  %v1344 = vrot.slane %v1343, 1
  %v1345 = vadd.f32 %v1343, %v1344
  %v1346 = vrot.slane %v1339, 4
  %v1347 = vadd.f32 %v1339, %v1346
  %v1348 = vrot.slane %v1347, 2
  %v1349 = vadd.f32 %v1347, %v1348
  %v1350 = vrot.slane %v1349, 1
  %v1351 = vadd.f32 %v1349, %v1350
  %v1354 = vcombine.low %v1345, %v1351
  %v1356 = vunpack.c.l.s4 1966171168
  %v1357 = vunpack.c.0.s8 %v1356
  %v1358 = vlaneseq
  %v1359 = vshrl.u32 %v1358, 7
  %v1360 = vsub.s32 %v1357, %v1359
  %v1361 = vrot.slane %v1354, %v1360
  %v1363 = vunpack.c.l.s4 1966171168
  %v1364 = vunpack.c.0.s8 %v1363
  %v1365 = vlaneseq
  %v1366 = vshrl.u32 %v1365, 7
  %v1367 = vsub.s32 %v1364, %v1366
  %v1368 = vrot.slane %v1361, %v1367
  %s1370 = scalar_lea.vmem %s5, 1
  %1371 = vst.msk [vmem:[%s1370] ss:$2 sm:$0x3] %vm1336, %v1368
  // Predicated region
  $region18: #{discriminator_forward.7} parent=0 // pred_check
    _
  $region19: #{discriminator_forward.7} parent=0 // pred_check_branch
    %1373 = sbr.rel (0) target = $region21
  $region20: #{discriminator_forward.7} parent=0 // pred_region
    _
  $region21: #{discriminator_forward.7} parent=0 // pred_fallthru
    _
  // Predicated region
  $region22: #{discriminator_forward.7} parent=0 // pred_check
    _
  $region23: #{discriminator_forward.7} parent=0 // pred_check_branch
    %1375 = sbr.rel (0) target = $region25
  $region24: #{discriminator_forward.7} parent=0 // pred_region
    _
  $region25: #{discriminator_forward.7} parent=0 // pred_fallthru
    _
  // Predicated region
  $region26: #{discriminator_forward.7} parent=0 // pred_check
    _
  $region27: #{discriminator_forward.7} parent=0 // pred_check_branch
    %1377 = sbr.rel (0) target = $region29
  $region28: #{discriminator_forward.7} parent=0 // pred_region
    _
  $region29: #{discriminator_forward.7} parent=0 // pred_fallthru
    _
  // Predicated region
  $region30: #{discriminator_forward.7} parent=0 // pred_check
    _
  $region31: #{discriminator_forward.7} parent=0 // pred_check_branch
    %1379 = sbr.rel (0) target = $region33
  $region32: #{discriminator_forward.7} parent=0 // pred_region
    _
  $region33: #{discriminator_forward.7} parent=0 // pred_fallthru
    _

// kernel: discriminator_forward.8
$region0: #{discriminator_forward.8}
  #allocation0 [shape = 'u32[]', space=smem, size = 0x4, offset = 0x4, fixed_abs, tag = 'smem constant byte address 0x4 - core index']
  #allocation1 [shape = 'u32[144,128]{1,0:T(1,128)}', space=vmem, size = 0x12000, scoped, tag = 'internal scratch']
  %s0 = inlined_call_operand.vmem [shape: bf16[8,2304], index: 0, kind: input, shape index: {}]
  %s1 = inlined_call_operand.vmem [shape: f32[1,2304], index: 1, kind: input, shape index: {}]
  %s2 = inlined_call_operand.vmem [shape: f32[1,2304], index: 2, kind: input, shape index: {}]
  %s3 = inlined_call_operand.vmem [shape: bf16[2304,512], index: 3, kind: input, shape index: {}]
  %s4 = inlined_call_operand.vmem [shape: bf16[8,512], index: 4, kind: output, shape index: {0}]
  %s5 = inlined_call_operand.vmem [shape: f32[1,2,512], index: 5, kind: output, shape index: {1}]
  %6 = xla_tuple %s4, %s5
  %s7 = sld [smem:[#allocation0]]
  $region34: #{discriminator_forward.8} parent=0
    _
  %s9 = ssub.s32 1, %s7
  %s10 = scalar_select 0, %s9, %s7
  // Predicated region
  $region2: #{discriminator_forward.8} parent=0 // pred_check
    _
  $region3: #{discriminator_forward.8} parent=0 // pred_check_branch
    %12 = sbr.rel (0) target = $region5
  $region4: #{discriminator_forward.8} parent=0 // pred_region
    _
  $region5: #{discriminator_forward.8} parent=0 // pred_fallthru
    _
  // Predicated region
  $region6: #{discriminator_forward.8} parent=0 // pred_check
    _
  $region7: #{discriminator_forward.8} parent=0 // pred_check_branch
    %14 = sbr.rel (0) target = $region9
  $region8: #{discriminator_forward.8} parent=0 // pred_region
    _
  $region9: #{discriminator_forward.8} parent=0 // pred_fallthru
    _
  // Predicated region
  $region10: #{discriminator_forward.8} parent=0 // pred_check
    _
  $region11: #{discriminator_forward.8} parent=0 // pred_check_branch
    %16 = sbr.rel (0) target = $region13
  $region12: #{discriminator_forward.8} parent=0 // pred_region
    _
  $region13: #{discriminator_forward.8} parent=0 // pred_fallthru
    _
  // Predicated region
  $region14: #{discriminator_forward.8} parent=0 // pred_check
    _
  $region15: #{discriminator_forward.8} parent=0 // pred_check_branch
    %18 = sbr.rel (0) target = $region17
  $region16: #{discriminator_forward.8} parent=0 // pred_region
    _
  $region17: #{discriminator_forward.8} parent=0 // pred_fallthru
    _
  %v21 = vld [vmem:[%s0] sm:$0xff]
  %v22 = vld [vmem:[%s0 + $0x8] sm:$0xff]
  %v23 = vld [vmem:[%s0 + $0x10] sm:$0xff]
  %v24 = vld [vmem:[%s0 + $0x18] sm:$0xff]
  %v25 = vld [vmem:[%s0 + $0x20] sm:$0xff]
  %v26 = vld [vmem:[%s0 + $0x28] sm:$0xff]
  %v27 = vld [vmem:[%s0 + $0x30] sm:$0xff]
  %v28 = vld [vmem:[%s0 + $0x38] sm:$0xff]
  %v29 = vld [vmem:[%s0 + $0x40] sm:$0xff]
  %v30 = vld [vmem:[%s1] sm:$0xff]
  %v31 = vld [vmem:[%s1 + $0x8] sm:$0xff]
  %v32 = vld [vmem:[%s1 + $0x10] sm:$0x3]
  %v33 = vld [vmem:[%s2] sm:$0xff]
  %v34 = vld [vmem:[%s2 + $0x8] sm:$0xff]
  %v35 = vld [vmem:[%s2 + $0x10] sm:$0x3]
  %v36 = vunpack.c.l.bf16 %v21
  %v37 = vunpack.c.h.bf16 %v21
  %v38 = vunpack.c.l.bf16 %v22
  %v39 = vunpack.c.h.bf16 %v22
  %v40 = vunpack.c.l.bf16 %v23
  %v41 = vunpack.c.h.bf16 %v23
  %v42 = vunpack.c.l.bf16 %v24
  %v43 = vunpack.c.h.bf16 %v24
  %v44 = vunpack.c.l.bf16 %v25
  %v45 = vunpack.c.h.bf16 %v25
  %v46 = vunpack.c.l.bf16 %v26
  %v47 = vunpack.c.h.bf16 %v26
  %v48 = vunpack.c.l.bf16 %v27
  %v49 = vunpack.c.h.bf16 %v27
  %v50 = vunpack.c.l.bf16 %v28
  %v51 = vunpack.c.h.bf16 %v28
  %v52 = vunpack.c.l.bf16 %v29
  %v53 = vunpack.c.h.bf16 %v29
  %v57 = vlaneseq
  %v58 = vshrl.u32 %v57, 7
  %v59 = vsub.s32 0, %v58
  %v60 = vrot.slane %v30, %v59
  %v61 = vlaneseq
  %v62 = vshrl.u32 %v61, 7
  %v63 = vsub.s32 1, %v62
  %v64 = vrot.slane %v30, %v63
  %v65 = vlaneseq
  %v66 = vshrl.u32 %v65, 7
  %v67 = vsub.s32 2, %v66
  %v68 = vrot.slane %v30, %v67
  %v69 = vlaneseq
  %v70 = vshrl.u32 %v69, 7
  %v71 = vsub.s32 3, %v70
  %v72 = vrot.slane %v30, %v71
  %v73 = vlaneseq
  %v74 = vshrl.u32 %v73, 7
  %v75 = vsub.s32 4, %v74
  %v76 = vrot.slane %v30, %v75
  %v77 = vlaneseq
  %v78 = vshrl.u32 %v77, 7
  %v79 = vsub.s32 5, %v78
  %v80 = vrot.slane %v30, %v79
  %v81 = vlaneseq
  %v82 = vshrl.u32 %v81, 7
  %v83 = vsub.s32 6, %v82
  %v84 = vrot.slane %v30, %v83
  %v85 = vlaneseq
  %v86 = vshrl.u32 %v85, 7
  %v87 = vsub.s32 7, %v86
  %v88 = vrot.slane %v30, %v87
  %v89 = vlaneseq
  %v90 = vshrl.u32 %v89, 7
  %v91 = vsub.s32 0, %v90
  %v92 = vrot.slane %v31, %v91
  %v93 = vlaneseq
  %v94 = vshrl.u32 %v93, 7
  %v95 = vsub.s32 1, %v94
  %v96 = vrot.slane %v31, %v95
  %v97 = vlaneseq
  %v98 = vshrl.u32 %v97, 7
  %v99 = vsub.s32 2, %v98
  %v100 = vrot.slane %v31, %v99
  %v101 = vlaneseq
  %v102 = vshrl.u32 %v101, 7
  %v103 = vsub.s32 3, %v102
  %v104 = vrot.slane %v31, %v103
  %v105 = vlaneseq
  %v106 = vshrl.u32 %v105, 7
  %v107 = vsub.s32 4, %v106
  %v108 = vrot.slane %v31, %v107
  %v109 = vlaneseq
  %v110 = vshrl.u32 %v109, 7
  %v111 = vsub.s32 5, %v110
  %v112 = vrot.slane %v31, %v111
  %v113 = vlaneseq
  %v114 = vshrl.u32 %v113, 7
  %v115 = vsub.s32 6, %v114
  %v116 = vrot.slane %v31, %v115
  %v117 = vlaneseq
  %v118 = vshrl.u32 %v117, 7
  %v119 = vsub.s32 7, %v118
  %v120 = vrot.slane %v31, %v119
  %v121 = vlaneseq
  %v122 = vshrl.u32 %v121, 7
  %v123 = vsub.s32 0, %v122
  %v124 = vrot.slane %v32, %v123
  %v125 = vlaneseq
  %v126 = vshrl.u32 %v125, 7
  %v127 = vsub.s32 1, %v126
  %v128 = vrot.slane %v32, %v127
  %v147 = vmul.f32 %v36, %v60
  %v148 = vmul.f32 %v37, %v64
  %v149 = vmul.f32 %v38, %v68
  %v150 = vmul.f32 %v39, %v72
  %v151 = vmul.f32 %v40, %v76
  %v152 = vmul.f32 %v41, %v80
  %v153 = vmul.f32 %v42, %v84
  %v154 = vmul.f32 %v43, %v88
  %v155 = vmul.f32 %v44, %v92
  %v156 = vmul.f32 %v45, %v96
  %v157 = vmul.f32 %v46, %v100
  %v158 = vmul.f32 %v47, %v104
  %v159 = vmul.f32 %v48, %v108
  %v160 = vmul.f32 %v49, %v112
  %v161 = vmul.f32 %v50, %v116
  %v162 = vmul.f32 %v51, %v120
  %v163 = vmul.f32 %v52, %v124
  %v164 = vmul.f32 %v53, %v128
  %v168 = vlaneseq
  %v169 = vshrl.u32 %v168, 7
  %v170 = vsub.s32 0, %v169
  %v171 = vrot.slane %v33, %v170
  %v172 = vlaneseq
  %v173 = vshrl.u32 %v172, 7
  %v174 = vsub.s32 1, %v173
  %v175 = vrot.slane %v33, %v174
  %v176 = vlaneseq
  %v177 = vshrl.u32 %v176, 7
  %v178 = vsub.s32 2, %v177
  %v179 = vrot.slane %v33, %v178
  %v180 = vlaneseq
  %v181 = vshrl.u32 %v180, 7
  %v182 = vsub.s32 3, %v181
  %v183 = vrot.slane %v33, %v182
  %v184 = vlaneseq
  %v185 = vshrl.u32 %v184, 7
  %v186 = vsub.s32 4, %v185
  %v187 = vrot.slane %v33, %v186
  %v188 = vlaneseq
  %v189 = vshrl.u32 %v188, 7
  %v190 = vsub.s32 5, %v189
  %v191 = vrot.slane %v33, %v190
  %v192 = vlaneseq
  %v193 = vshrl.u32 %v192, 7
  %v194 = vsub.s32 6, %v193
  %v195 = vrot.slane %v33, %v194
  %v196 = vlaneseq
  %v197 = vshrl.u32 %v196, 7
  %v198 = vsub.s32 7, %v197
  %v199 = vrot.slane %v33, %v198
  %v200 = vlaneseq
  %v201 = vshrl.u32 %v200, 7
  %v202 = vsub.s32 0, %v201
  %v203 = vrot.slane %v34, %v202
  %v204 = vlaneseq
  %v205 = vshrl.u32 %v204, 7
  %v206 = vsub.s32 1, %v205
  %v207 = vrot.slane %v34, %v206
  %v208 = vlaneseq
  %v209 = vshrl.u32 %v208, 7
  %v210 = vsub.s32 2, %v209
  %v211 = vrot.slane %v34, %v210
  %v212 = vlaneseq
  %v213 = vshrl.u32 %v212, 7
  %v214 = vsub.s32 3, %v213
  %v215 = vrot.slane %v34, %v214
  %v216 = vlaneseq
  %v217 = vshrl.u32 %v216, 7
  %v218 = vsub.s32 4, %v217
  %v219 = vrot.slane %v34, %v218
  %v220 = vlaneseq
  %v221 = vshrl.u32 %v220, 7
  %v222 = vsub.s32 5, %v221
  %v223 = vrot.slane %v34, %v222
  %v224 = vlaneseq
  %v225 = vshrl.u32 %v224, 7
  %v226 = vsub.s32 6, %v225
  %v227 = vrot.slane %v34, %v226
  %v228 = vlaneseq
  %v229 = vshrl.u32 %v228, 7
  %v230 = vsub.s32 7, %v229
  %v231 = vrot.slane %v34, %v230
  %v232 = vlaneseq
  %v233 = vshrl.u32 %v232, 7
  %v234 = vsub.s32 0, %v233
  %v235 = vrot.slane %v35, %v234
  %v236 = vlaneseq
  %v237 = vshrl.u32 %v236, 7
  %v238 = vsub.s32 1, %v237
  %v239 = vrot.slane %v35, %v238
  %v258 = vadd.f32 %v147, %v171
  %v259 = vadd.f32 %v148, %v175
  %v260 = vadd.f32 %v149, %v179
  %v261 = vadd.f32 %v150, %v183
  %v262 = vadd.f32 %v151, %v187
  %v263 = vadd.f32 %v152, %v191
  %v264 = vadd.f32 %v153, %v195
  %v265 = vadd.f32 %v154, %v199
  %v266 = vadd.f32 %v155, %v203
  %v267 = vadd.f32 %v156, %v207
  %v268 = vadd.f32 %v157, %v211
  %v269 = vadd.f32 %v158, %v215
  %v270 = vadd.f32 %v159, %v219
  %v271 = vadd.f32 %v160, %v223
  %v272 = vadd.f32 %v161, %v227
  %v273 = vadd.f32 %v162, %v231
  %v274 = vadd.f32 %v163, %v235
  %v275 = vadd.f32 %v164, %v239
  %vm276 = vcmp.gt.f32.partialorder %v258, 0.0
  %vm277 = vcmp.gt.f32.partialorder %v259, 0.0
  %vm278 = vcmp.gt.f32.partialorder %v260, 0.0
  %vm279 = vcmp.gt.f32.partialorder %v261, 0.0
  %vm280 = vcmp.gt.f32.partialorder %v262, 0.0
  %vm281 = vcmp.gt.f32.partialorder %v263, 0.0
  %vm282 = vcmp.gt.f32.partialorder %v264, 0.0
  %vm283 = vcmp.gt.f32.partialorder %v265, 0.0
  %vm284 = vcmp.gt.f32.partialorder %v266, 0.0
  %vm285 = vcmp.gt.f32.partialorder %v267, 0.0
  %vm286 = vcmp.gt.f32.partialorder %v268, 0.0
  %vm287 = vcmp.gt.f32.partialorder %v269, 0.0
  %vm288 = vcmp.gt.f32.partialorder %v270, 0.0
  %vm289 = vcmp.gt.f32.partialorder %v271, 0.0
  %vm290 = vcmp.gt.f32.partialorder %v272, 0.0
  %vm291 = vcmp.gt.f32.partialorder %v273, 0.0
  %vm292 = vcmp.gt.f32.partialorder %v274, 0.0
  %vm293 = vcmp.gt.f32.partialorder %v275, 0.0
  %v294 = vmul.f32 %v258, 0.2
  %v295 = vmul.f32 %v259, 0.2
  %v296 = vmul.f32 %v260, 0.2
  %v297 = vmul.f32 %v261, 0.2
  %v298 = vmul.f32 %v262, 0.2
  %v299 = vmul.f32 %v263, 0.2
  %v300 = vmul.f32 %v264, 0.2
  %v301 = vmul.f32 %v265, 0.2
  %v302 = vmul.f32 %v266, 0.2
  %v303 = vmul.f32 %v267, 0.2
  %v304 = vmul.f32 %v268, 0.2
  %v305 = vmul.f32 %v269, 0.2
  %v306 = vmul.f32 %v270, 0.2
  %v307 = vmul.f32 %v271, 0.2
  %v308 = vmul.f32 %v272, 0.2
  %v309 = vmul.f32 %v273, 0.2
  %v310 = vmul.f32 %v274, 0.2
  %v311 = vmul.f32 %v275, 0.2
  %v312 = vsel %vm276, %v258, %v294
  %v313 = vsel %vm277, %v259, %v295
  %v314 = vsel %vm278, %v260, %v296
  %v315 = vsel %vm279, %v261, %v297
  %v316 = vsel %vm280, %v262, %v298
  %v317 = vsel %vm281, %v263, %v299
  %v318 = vsel %vm282, %v264, %v300
  %v319 = vsel %vm283, %v265, %v301
  %v320 = vsel %vm284, %v266, %v302
  %v321 = vsel %vm285, %v267, %v303
  %v322 = vsel %vm286, %v268, %v304
  %v323 = vsel %vm287, %v269, %v305
  %v324 = vsel %vm288, %v270, %v306
  %v325 = vsel %vm289, %v271, %v307
  %v326 = vsel %vm290, %v272, %v308
  %v327 = vsel %vm291, %v273, %v309
  %v328 = vsel %vm292, %v274, %v310
  %v329 = vsel %vm293, %v275, %v311
  %vm330 = vcmp.ne.bf16.partialorder %v21, %v21
  %vm331 = vcmp.ne.bf16.partialorder %v22, %v22
  %vm332 = vcmp.ne.bf16.partialorder %v23, %v23
  %vm333 = vcmp.ne.bf16.partialorder %v24, %v24
  %vm334 = vcmp.ne.bf16.partialorder %v25, %v25
  %vm335 = vcmp.ne.bf16.partialorder %v26, %v26
  %vm336 = vcmp.ne.bf16.partialorder %v27, %v27
  %vm337 = vcmp.ne.bf16.partialorder %v28, %v28
  %vm338 = vcmp.ne.bf16.partialorder %v29, %v29
  %v339 = vsel %vm330, 65537, 0
  %v340 = vsel %vm331, 65537, 0
  %v341 = vsel %vm332, 65537, 0
  %v342 = vsel %vm333, 65537, 0
  %v343 = vsel %vm334, 65537, 0
  %v344 = vsel %vm335, 65537, 0
  %v345 = vsel %vm336, 65537, 0
  %v346 = vsel %vm337, 65537, 0
  %v347 = vsel %vm338, 65537, 0
  %v348 = vunpack.c.l.b16 %v339
  %v349 = vunpack.c.h.b16 %v339
  %v350 = vunpack.c.l.b16 %v340
  %v351 = vunpack.c.h.b16 %v340
  %v352 = vunpack.c.l.b16 %v341
  %v353 = vunpack.c.h.b16 %v341
  %v354 = vunpack.c.l.b16 %v342
  %v355 = vunpack.c.h.b16 %v342
  %v356 = vunpack.c.l.b16 %v343
  %v357 = vunpack.c.h.b16 %v343
  %v358 = vunpack.c.l.b16 %v344
  %v359 = vunpack.c.h.b16 %v344
  %v360 = vunpack.c.l.b16 %v345
  %v361 = vunpack.c.h.b16 %v345
  %v362 = vunpack.c.l.b16 %v346
  %v363 = vunpack.c.h.b16 %v346
  %v364 = vunpack.c.l.b16 %v347
  %v365 = vunpack.c.h.b16 %v347
  %vm366 = vcmp.ne.s32.totalorder %v348, 0
  %vm367 = vcmp.ne.s32.totalorder %v349, 0
  %vm368 = vcmp.ne.s32.totalorder %v350, 0
  %vm369 = vcmp.ne.s32.totalorder %v351, 0
  %vm370 = vcmp.ne.s32.totalorder %v352, 0
  %vm371 = vcmp.ne.s32.totalorder %v353, 0
  %vm372 = vcmp.ne.s32.totalorder %v354, 0
  %vm373 = vcmp.ne.s32.totalorder %v355, 0
  %vm374 = vcmp.ne.s32.totalorder %v356, 0
  %vm375 = vcmp.ne.s32.totalorder %v357, 0
  %vm376 = vcmp.ne.s32.totalorder %v358, 0
  %vm377 = vcmp.ne.s32.totalorder %v359, 0
  %vm378 = vcmp.ne.s32.totalorder %v360, 0
  %vm379 = vcmp.ne.s32.totalorder %v361, 0
  %vm380 = vcmp.ne.s32.totalorder %v362, 0
  %vm381 = vcmp.ne.s32.totalorder %v363, 0
  %vm382 = vcmp.ne.s32.totalorder %v364, 0
  %vm383 = vcmp.ne.s32.totalorder %v365, 0
  %v384 = vsel %vm366, 0.0, %v312
  %v385 = vsel %vm367, 0.0, %v313
  %v386 = vsel %vm368, 0.0, %v314
  %v387 = vsel %vm369, 0.0, %v315
  %v388 = vsel %vm370, 0.0, %v316
  %v389 = vsel %vm371, 0.0, %v317
  %v390 = vsel %vm372, 0.0, %v318
  %v391 = vsel %vm373, 0.0, %v319
  %v392 = vsel %vm374, 0.0, %v320
  %v393 = vsel %vm375, 0.0, %v321
  %v394 = vsel %vm376, 0.0, %v322
  %v395 = vsel %vm377, 0.0, %v323
  %v396 = vsel %vm378, 0.0, %v324
  %v397 = vsel %vm379, 0.0, %v325
  %v398 = vsel %vm380, 0.0, %v326
  %v399 = vsel %vm381, 0.0, %v327
  %v400 = vsel %vm382, 0.0, %v328
  %v401 = vsel %vm383, 0.0, %v329
  %v402 = vpack.c.bf16 %v384, %v384
  %v403 = vpack.c.bf16 %v385, %v385
  %v404 = vpack.c.bf16 %v386, %v386
  %v405 = vpack.c.bf16 %v387, %v387
  %v406 = vpack.c.bf16 %v388, %v388
  %v407 = vpack.c.bf16 %v389, %v389
  %v408 = vpack.c.bf16 %v390, %v390
  %v409 = vpack.c.bf16 %v391, %v391
  %v410 = vpack.c.bf16 %v392, %v392
  %v411 = vpack.c.bf16 %v393, %v393
  %v412 = vpack.c.bf16 %v394, %v394
  %v413 = vpack.c.bf16 %v395, %v395
  %v414 = vpack.c.bf16 %v396, %v396
  %v415 = vpack.c.bf16 %v397, %v397
  %v416 = vpack.c.bf16 %v398, %v398
  %v417 = vpack.c.bf16 %v399, %v399
  %v418 = vpack.c.bf16 %v400, %v400
  %v419 = vpack.c.bf16 %v401, %v401
  %v420 = vld [vmem:[%s3] sm:$0xff]
  %v421 = vld [vmem:[%s3 + $0x8] sm:$0xff]
  %v422 = vld [vmem:[%s3 + $0x10] sm:$0xff]
  %v423 = vld [vmem:[%s3 + $0x18] sm:$0xff]
  %v424 = vld [vmem:[%s3 + $0x20] sm:$0xff]
  %v425 = vld [vmem:[%s3 + $0x28] sm:$0xff]
  %v426 = vld [vmem:[%s3 + $0x30] sm:$0xff]
  %v427 = vld [vmem:[%s3 + $0x38] sm:$0xff]
  %v428 = vld [vmem:[%s3 + $0x40] sm:$0xff]
  %v429 = vld [vmem:[%s3 + $0x48] sm:$0xff]
  %v430 = vld [vmem:[%s3 + $0x50] sm:$0xff]
  %v431 = vld [vmem:[%s3 + $0x58] sm:$0xff]
  %v432 = vld [vmem:[%s3 + $0x60] sm:$0xff]
  %v433 = vld [vmem:[%s3 + $0x68] sm:$0xff]
  %v434 = vld [vmem:[%s3 + $0x70] sm:$0xff]
  %v435 = vld [vmem:[%s3 + $0x78] sm:$0xff]
  %v436 = vld [vmem:[%s3 + $0x80] sm:$0xff]
  %v437 = vld [vmem:[%s3 + $0x88] sm:$0xff]
  %v438 = vld [vmem:[%s3 + $0x90] sm:$0xff]
  %v439 = vld [vmem:[%s3 + $0x98] sm:$0xff]
  %v440 = vld [vmem:[%s3 + $0xa0] sm:$0xff]
  %v441 = vld [vmem:[%s3 + $0xa8] sm:$0xff]
  %v442 = vld [vmem:[%s3 + $0xb0] sm:$0xff]
  %v443 = vld [vmem:[%s3 + $0xb8] sm:$0xff]
  %v444 = vld [vmem:[%s3 + $0xc0] sm:$0xff]
  %v445 = vld [vmem:[%s3 + $0xc8] sm:$0xff]
  %v446 = vld [vmem:[%s3 + $0xd0] sm:$0xff]
  %v447 = vld [vmem:[%s3 + $0xd8] sm:$0xff]
  %v448 = vld [vmem:[%s3 + $0xe0] sm:$0xff]
  %v449 = vld [vmem:[%s3 + $0xe8] sm:$0xff]
  %v450 = vld [vmem:[%s3 + $0xf0] sm:$0xff]
  %v451 = vld [vmem:[%s3 + $0xf8] sm:$0xff]
  %v452 = vld [vmem:[%s3 + $0x100] sm:$0xff]
  %v453 = vld [vmem:[%s3 + $0x108] sm:$0xff]
  %v454 = vld [vmem:[%s3 + $0x110] sm:$0xff]
  %v455 = vld [vmem:[%s3 + $0x118] sm:$0xff]
  %v456 = vld [vmem:[%s3 + $0x120] sm:$0xff]
  %v457 = vld [vmem:[%s3 + $0x128] sm:$0xff]
  %v458 = vld [vmem:[%s3 + $0x130] sm:$0xff]
  %v459 = vld [vmem:[%s3 + $0x138] sm:$0xff]
  %v460 = vld [vmem:[%s3 + $0x140] sm:$0xff]
  %v461 = vld [vmem:[%s3 + $0x148] sm:$0xff]
  %v462 = vld [vmem:[%s3 + $0x150] sm:$0xff]
  %v463 = vld [vmem:[%s3 + $0x158] sm:$0xff]
  %v464 = vld [vmem:[%s3 + $0x160] sm:$0xff]
  %v465 = vld [vmem:[%s3 + $0x168] sm:$0xff]
  %v466 = vld [vmem:[%s3 + $0x170] sm:$0xff]
  %v467 = vld [vmem:[%s3 + $0x178] sm:$0xff]
  %v468 = vld [vmem:[%s3 + $0x180] sm:$0xff]
  %v469 = vld [vmem:[%s3 + $0x188] sm:$0xff]
  %v470 = vld [vmem:[%s3 + $0x190] sm:$0xff]
  %v471 = vld [vmem:[%s3 + $0x198] sm:$0xff]
  %v472 = vld [vmem:[%s3 + $0x1a0] sm:$0xff]
  %v473 = vld [vmem:[%s3 + $0x1a8] sm:$0xff]
  %v474 = vld [vmem:[%s3 + $0x1b0] sm:$0xff]
  %v475 = vld [vmem:[%s3 + $0x1b8] sm:$0xff]
  %v476 = vld [vmem:[%s3 + $0x1c0] sm:$0xff]
  %v477 = vld [vmem:[%s3 + $0x1c8] sm:$0xff]
  %v478 = vld [vmem:[%s3 + $0x1d0] sm:$0xff]
  %v479 = vld [vmem:[%s3 + $0x1d8] sm:$0xff]
  %v480 = vld [vmem:[%s3 + $0x1e0] sm:$0xff]
  %v481 = vld [vmem:[%s3 + $0x1e8] sm:$0xff]
  %v482 = vld [vmem:[%s3 + $0x1f0] sm:$0xff]
  %v483 = vld [vmem:[%s3 + $0x1f8] sm:$0xff]
  %v484 = vld [vmem:[%s3 + $0x200] sm:$0xff]
  %v485 = vld [vmem:[%s3 + $0x208] sm:$0xff]
  %v486 = vld [vmem:[%s3 + $0x210] sm:$0xff]
  %v487 = vld [vmem:[%s3 + $0x218] sm:$0xff]
  %v488 = vld [vmem:[%s3 + $0x220] sm:$0xff]
  %v489 = vld [vmem:[%s3 + $0x228] sm:$0xff]
  %v490 = vld [vmem:[%s3 + $0x230] sm:$0xff]
  %v491 = vld [vmem:[%s3 + $0x238] sm:$0xff]
  %v492 = vld [vmem:[%s3 + $0x240] sm:$0xff]
  %v493 = vld [vmem:[%s3 + $0x248] sm:$0xff]
  %v494 = vld [vmem:[%s3 + $0x250] sm:$0xff]
  %v495 = vld [vmem:[%s3 + $0x258] sm:$0xff]
  %v496 = vld [vmem:[%s3 + $0x260] sm:$0xff]
  %v497 = vld [vmem:[%s3 + $0x268] sm:$0xff]
  %v498 = vld [vmem:[%s3 + $0x270] sm:$0xff]
  %v499 = vld [vmem:[%s3 + $0x278] sm:$0xff]
  %v500 = vld [vmem:[%s3 + $0x280] sm:$0xff]
  %v501 = vld [vmem:[%s3 + $0x288] sm:$0xff]
  %v502 = vld [vmem:[%s3 + $0x290] sm:$0xff]
  %v503 = vld [vmem:[%s3 + $0x298] sm:$0xff]
  %v504 = vld [vmem:[%s3 + $0x2a0] sm:$0xff]
  %v505 = vld [vmem:[%s3 + $0x2a8] sm:$0xff]
  %v506 = vld [vmem:[%s3 + $0x2b0] sm:$0xff]
  %v507 = vld [vmem:[%s3 + $0x2b8] sm:$0xff]
  %v508 = vld [vmem:[%s3 + $0x2c0] sm:$0xff]
  %v509 = vld [vmem:[%s3 + $0x2c8] sm:$0xff]
  %v510 = vld [vmem:[%s3 + $0x2d0] sm:$0xff]
  %v511 = vld [vmem:[%s3 + $0x2d8] sm:$0xff]
  %v512 = vld [vmem:[%s3 + $0x2e0] sm:$0xff]
  %v513 = vld [vmem:[%s3 + $0x2e8] sm:$0xff]
  %v514 = vld [vmem:[%s3 + $0x2f0] sm:$0xff]
  %v515 = vld [vmem:[%s3 + $0x2f8] sm:$0xff]
  %v516 = vld [vmem:[%s3 + $0x300] sm:$0xff]
  %v517 = vld [vmem:[%s3 + $0x308] sm:$0xff]
  %v518 = vld [vmem:[%s3 + $0x310] sm:$0xff]
  %v519 = vld [vmem:[%s3 + $0x318] sm:$0xff]
  %v520 = vld [vmem:[%s3 + $0x320] sm:$0xff]
  %v521 = vld [vmem:[%s3 + $0x328] sm:$0xff]
  %v522 = vld [vmem:[%s3 + $0x330] sm:$0xff]
  %v523 = vld [vmem:[%s3 + $0x338] sm:$0xff]
  %v524 = vld [vmem:[%s3 + $0x340] sm:$0xff]
  %v525 = vld [vmem:[%s3 + $0x348] sm:$0xff]
  %v526 = vld [vmem:[%s3 + $0x350] sm:$0xff]
  %v527 = vld [vmem:[%s3 + $0x358] sm:$0xff]
  %v528 = vld [vmem:[%s3 + $0x360] sm:$0xff]
  %v529 = vld [vmem:[%s3 + $0x368] sm:$0xff]
  %v530 = vld [vmem:[%s3 + $0x370] sm:$0xff]
  %v531 = vld [vmem:[%s3 + $0x378] sm:$0xff]
  %v532 = vld [vmem:[%s3 + $0x380] sm:$0xff]
  %v533 = vld [vmem:[%s3 + $0x388] sm:$0xff]
  %v534 = vld [vmem:[%s3 + $0x390] sm:$0xff]
  %v535 = vld [vmem:[%s3 + $0x398] sm:$0xff]
  %v536 = vld [vmem:[%s3 + $0x3a0] sm:$0xff]
  %v537 = vld [vmem:[%s3 + $0x3a8] sm:$0xff]
  %v538 = vld [vmem:[%s3 + $0x3b0] sm:$0xff]
  %v539 = vld [vmem:[%s3 + $0x3b8] sm:$0xff]
  %v540 = vld [vmem:[%s3 + $0x3c0] sm:$0xff]
  %v541 = vld [vmem:[%s3 + $0x3c8] sm:$0xff]
  %v542 = vld [vmem:[%s3 + $0x3d0] sm:$0xff]
  %v543 = vld [vmem:[%s3 + $0x3d8] sm:$0xff]
  %v544 = vld [vmem:[%s3 + $0x3e0] sm:$0xff]
  %v545 = vld [vmem:[%s3 + $0x3e8] sm:$0xff]
  %v546 = vld [vmem:[%s3 + $0x3f0] sm:$0xff]
  %v547 = vld [vmem:[%s3 + $0x3f8] sm:$0xff]
  %v548 = vld [vmem:[%s3 + $0x400] sm:$0xff]
  %v549 = vld [vmem:[%s3 + $0x408] sm:$0xff]
  %v550 = vld [vmem:[%s3 + $0x410] sm:$0xff]
  %v551 = vld [vmem:[%s3 + $0x418] sm:$0xff]
  %v552 = vld [vmem:[%s3 + $0x420] sm:$0xff]
  %v553 = vld [vmem:[%s3 + $0x428] sm:$0xff]
  %v554 = vld [vmem:[%s3 + $0x430] sm:$0xff]
  %v555 = vld [vmem:[%s3 + $0x438] sm:$0xff]
  %v556 = vld [vmem:[%s3 + $0x440] sm:$0xff]
  %v557 = vld [vmem:[%s3 + $0x448] sm:$0xff]
  %v558 = vld [vmem:[%s3 + $0x450] sm:$0xff]
  %v559 = vld [vmem:[%s3 + $0x458] sm:$0xff]
  %v560 = vld [vmem:[%s3 + $0x460] sm:$0xff]
  %v561 = vld [vmem:[%s3 + $0x468] sm:$0xff]
  %v562 = vld [vmem:[%s3 + $0x470] sm:$0xff]
  %v563 = vld [vmem:[%s3 + $0x478] sm:$0xff]
  %v564 = vld [vmem:[%s3 + $0x480] sm:$0xff]
  %v565 = vld [vmem:[%s3 + $0x488] sm:$0xff]
  %v566 = vld [vmem:[%s3 + $0x490] sm:$0xff]
  %v567 = vld [vmem:[%s3 + $0x498] sm:$0xff]
  %v568 = vld [vmem:[%s3 + $0x4a0] sm:$0xff]
  %v569 = vld [vmem:[%s3 + $0x4a8] sm:$0xff]
  %v570 = vld [vmem:[%s3 + $0x4b0] sm:$0xff]
  %v571 = vld [vmem:[%s3 + $0x4b8] sm:$0xff]
  %v572 = vld [vmem:[%s3 + $0x4c0] sm:$0xff]
  %v573 = vld [vmem:[%s3 + $0x4c8] sm:$0xff]
  %v574 = vld [vmem:[%s3 + $0x4d0] sm:$0xff]
  %v575 = vld [vmem:[%s3 + $0x4d8] sm:$0xff]
  %v576 = vld [vmem:[%s3 + $0x4e0] sm:$0xff]
  %v577 = vld [vmem:[%s3 + $0x4e8] sm:$0xff]
  %v578 = vld [vmem:[%s3 + $0x4f0] sm:$0xff]
  %v579 = vld [vmem:[%s3 + $0x4f8] sm:$0xff]
  %v580 = vld [vmem:[%s3 + $0x500] sm:$0xff]
  %v581 = vld [vmem:[%s3 + $0x508] sm:$0xff]
  %v582 = vld [vmem:[%s3 + $0x510] sm:$0xff]
  %v583 = vld [vmem:[%s3 + $0x518] sm:$0xff]
  %v584 = vld [vmem:[%s3 + $0x520] sm:$0xff]
  %v585 = vld [vmem:[%s3 + $0x528] sm:$0xff]
  %v586 = vld [vmem:[%s3 + $0x530] sm:$0xff]
  %v587 = vld [vmem:[%s3 + $0x538] sm:$0xff]
  %v588 = vld [vmem:[%s3 + $0x540] sm:$0xff]
  %v589 = vld [vmem:[%s3 + $0x548] sm:$0xff]
  %v590 = vld [vmem:[%s3 + $0x550] sm:$0xff]
  %v591 = vld [vmem:[%s3 + $0x558] sm:$0xff]
  %v592 = vld [vmem:[%s3 + $0x560] sm:$0xff]
  %v593 = vld [vmem:[%s3 + $0x568] sm:$0xff]
  %v594 = vld [vmem:[%s3 + $0x570] sm:$0xff]
  %v595 = vld [vmem:[%s3 + $0x578] sm:$0xff]
  %v596 = vld [vmem:[%s3 + $0x580] sm:$0xff]
  %v597 = vld [vmem:[%s3 + $0x588] sm:$0xff]
  %v598 = vld [vmem:[%s3 + $0x590] sm:$0xff]
  %v599 = vld [vmem:[%s3 + $0x598] sm:$0xff]
  %v600 = vld [vmem:[%s3 + $0x5a0] sm:$0xff]
  %v601 = vld [vmem:[%s3 + $0x5a8] sm:$0xff]
  %v602 = vld [vmem:[%s3 + $0x5b0] sm:$0xff]
  %v603 = vld [vmem:[%s3 + $0x5b8] sm:$0xff]
  %v604 = vld [vmem:[%s3 + $0x5c0] sm:$0xff]
  %v605 = vld [vmem:[%s3 + $0x5c8] sm:$0xff]
  %v606 = vld [vmem:[%s3 + $0x5d0] sm:$0xff]
  %v607 = vld [vmem:[%s3 + $0x5d8] sm:$0xff]
  %v608 = vld [vmem:[%s3 + $0x5e0] sm:$0xff]
  %v609 = vld [vmem:[%s3 + $0x5e8] sm:$0xff]
  %v610 = vld [vmem:[%s3 + $0x5f0] sm:$0xff]
  %v611 = vld [vmem:[%s3 + $0x5f8] sm:$0xff]
  %v612 = vld [vmem:[%s3 + $0x600] sm:$0xff]
  %v613 = vld [vmem:[%s3 + $0x608] sm:$0xff]
  %v614 = vld [vmem:[%s3 + $0x610] sm:$0xff]
  %v615 = vld [vmem:[%s3 + $0x618] sm:$0xff]
  %v616 = vld [vmem:[%s3 + $0x620] sm:$0xff]
  %v617 = vld [vmem:[%s3 + $0x628] sm:$0xff]
  %v618 = vld [vmem:[%s3 + $0x630] sm:$0xff]
  %v619 = vld [vmem:[%s3 + $0x638] sm:$0xff]
  %v620 = vld [vmem:[%s3 + $0x640] sm:$0xff]
  %v621 = vld [vmem:[%s3 + $0x648] sm:$0xff]
  %v622 = vld [vmem:[%s3 + $0x650] sm:$0xff]
  %v623 = vld [vmem:[%s3 + $0x658] sm:$0xff]
  %v624 = vld [vmem:[%s3 + $0x660] sm:$0xff]
  %v625 = vld [vmem:[%s3 + $0x668] sm:$0xff]
  %v626 = vld [vmem:[%s3 + $0x670] sm:$0xff]
  %v627 = vld [vmem:[%s3 + $0x678] sm:$0xff]
  %v628 = vld [vmem:[%s3 + $0x680] sm:$0xff]
  %v629 = vld [vmem:[%s3 + $0x688] sm:$0xff]
  %v630 = vld [vmem:[%s3 + $0x690] sm:$0xff]
  %v631 = vld [vmem:[%s3 + $0x698] sm:$0xff]
  %v632 = vld [vmem:[%s3 + $0x6a0] sm:$0xff]
  %v633 = vld [vmem:[%s3 + $0x6a8] sm:$0xff]
  %v634 = vld [vmem:[%s3 + $0x6b0] sm:$0xff]
  %v635 = vld [vmem:[%s3 + $0x6b8] sm:$0xff]
  %v636 = vld [vmem:[%s3 + $0x6c0] sm:$0xff]
  %v637 = vld [vmem:[%s3 + $0x6c8] sm:$0xff]
  %v638 = vld [vmem:[%s3 + $0x6d0] sm:$0xff]
  %v639 = vld [vmem:[%s3 + $0x6d8] sm:$0xff]
  %v640 = vld [vmem:[%s3 + $0x6e0] sm:$0xff]
  %v641 = vld [vmem:[%s3 + $0x6e8] sm:$0xff]
  %v642 = vld [vmem:[%s3 + $0x6f0] sm:$0xff]
  %v643 = vld [vmem:[%s3 + $0x6f8] sm:$0xff]
  %v644 = vld [vmem:[%s3 + $0x700] sm:$0xff]
  %v645 = vld [vmem:[%s3 + $0x708] sm:$0xff]
  %v646 = vld [vmem:[%s3 + $0x710] sm:$0xff]
  %v647 = vld [vmem:[%s3 + $0x718] sm:$0xff]
  %v648 = vld [vmem:[%s3 + $0x720] sm:$0xff]
  %v649 = vld [vmem:[%s3 + $0x728] sm:$0xff]
  %v650 = vld [vmem:[%s3 + $0x730] sm:$0xff]
  %v651 = vld [vmem:[%s3 + $0x738] sm:$0xff]
  %v652 = vld [vmem:[%s3 + $0x740] sm:$0xff]
  %v653 = vld [vmem:[%s3 + $0x748] sm:$0xff]
  %v654 = vld [vmem:[%s3 + $0x750] sm:$0xff]
  %v655 = vld [vmem:[%s3 + $0x758] sm:$0xff]
  %v656 = vld [vmem:[%s3 + $0x760] sm:$0xff]
  %v657 = vld [vmem:[%s3 + $0x768] sm:$0xff]
  %v658 = vld [vmem:[%s3 + $0x770] sm:$0xff]
  %v659 = vld [vmem:[%s3 + $0x778] sm:$0xff]
  %v660 = vld [vmem:[%s3 + $0x780] sm:$0xff]
  %v661 = vld [vmem:[%s3 + $0x788] sm:$0xff]
  %v662 = vld [vmem:[%s3 + $0x790] sm:$0xff]
  %v663 = vld [vmem:[%s3 + $0x798] sm:$0xff]
  %v664 = vld [vmem:[%s3 + $0x7a0] sm:$0xff]
  %v665 = vld [vmem:[%s3 + $0x7a8] sm:$0xff]
  %v666 = vld [vmem:[%s3 + $0x7b0] sm:$0xff]
  %v667 = vld [vmem:[%s3 + $0x7b8] sm:$0xff]
  %v668 = vld [vmem:[%s3 + $0x7c0] sm:$0xff]
  %v669 = vld [vmem:[%s3 + $0x7c8] sm:$0xff]
  %v670 = vld [vmem:[%s3 + $0x7d0] sm:$0xff]
  %v671 = vld [vmem:[%s3 + $0x7d8] sm:$0xff]
  %v672 = vld [vmem:[%s3 + $0x7e0] sm:$0xff]
  %v673 = vld [vmem:[%s3 + $0x7e8] sm:$0xff]
  %v674 = vld [vmem:[%s3 + $0x7f0] sm:$0xff]
  %v675 = vld [vmem:[%s3 + $0x7f8] sm:$0xff]
  %v676 = vld [vmem:[%s3 + $0x800] sm:$0xff]
  %v677 = vld [vmem:[%s3 + $0x808] sm:$0xff]
  %v678 = vld [vmem:[%s3 + $0x810] sm:$0xff]
  %v679 = vld [vmem:[%s3 + $0x818] sm:$0xff]
  %v680 = vld [vmem:[%s3 + $0x820] sm:$0xff]
  %v681 = vld [vmem:[%s3 + $0x828] sm:$0xff]
  %v682 = vld [vmem:[%s3 + $0x830] sm:$0xff]
  %v683 = vld [vmem:[%s3 + $0x838] sm:$0xff]
  %v684 = vld [vmem:[%s3 + $0x840] sm:$0xff]
  %v685 = vld [vmem:[%s3 + $0x848] sm:$0xff]
  %v686 = vld [vmem:[%s3 + $0x850] sm:$0xff]
  %v687 = vld [vmem:[%s3 + $0x858] sm:$0xff]
  %v688 = vld [vmem:[%s3 + $0x860] sm:$0xff]
  %v689 = vld [vmem:[%s3 + $0x868] sm:$0xff]
  %v690 = vld [vmem:[%s3 + $0x870] sm:$0xff]
  %v691 = vld [vmem:[%s3 + $0x878] sm:$0xff]
  %v692 = vld [vmem:[%s3 + $0x880] sm:$0xff]
  %v693 = vld [vmem:[%s3 + $0x888] sm:$0xff]
  %v694 = vld [vmem:[%s3 + $0x890] sm:$0xff]
  %v695 = vld [vmem:[%s3 + $0x898] sm:$0xff]
  %v696 = vld [vmem:[%s3 + $0x8a0] sm:$0xff]
  %v697 = vld [vmem:[%s3 + $0x8a8] sm:$0xff]
  %v698 = vld [vmem:[%s3 + $0x8b0] sm:$0xff]
  %v699 = vld [vmem:[%s3 + $0x8b8] sm:$0xff]
  %v700 = vld [vmem:[%s3 + $0x8c0] sm:$0xff]
  %v701 = vld [vmem:[%s3 + $0x8c8] sm:$0xff]
  %v702 = vld [vmem:[%s3 + $0x8d0] sm:$0xff]
  %v703 = vld [vmem:[%s3 + $0x8d8] sm:$0xff]
  %v704 = vld [vmem:[%s3 + $0x8e0] sm:$0xff]
  %v705 = vld [vmem:[%s3 + $0x8e8] sm:$0xff]
  %v706 = vld [vmem:[%s3 + $0x8f0] sm:$0xff]
  %v707 = vld [vmem:[%s3 + $0x8f8] sm:$0xff]
  %v708 = vld [vmem:[%s3 + $0x900] sm:$0xff]
  %v709 = vld [vmem:[%s3 + $0x908] sm:$0xff]
  %v710 = vld [vmem:[%s3 + $0x910] sm:$0xff]
  %v711 = vld [vmem:[%s3 + $0x918] sm:$0xff]
  %v712 = vld [vmem:[%s3 + $0x920] sm:$0xff]
  %v713 = vld [vmem:[%s3 + $0x928] sm:$0xff]
  %v714 = vld [vmem:[%s3 + $0x930] sm:$0xff]
  %v715 = vld [vmem:[%s3 + $0x938] sm:$0xff]
  %v716 = vld [vmem:[%s3 + $0x940] sm:$0xff]
  %v717 = vld [vmem:[%s3 + $0x948] sm:$0xff]
  %v718 = vld [vmem:[%s3 + $0x950] sm:$0xff]
  %v719 = vld [vmem:[%s3 + $0x958] sm:$0xff]
  %v720 = vld [vmem:[%s3 + $0x960] sm:$0xff]
  %v721 = vld [vmem:[%s3 + $0x968] sm:$0xff]
  %v722 = vld [vmem:[%s3 + $0x970] sm:$0xff]
  %v723 = vld [vmem:[%s3 + $0x978] sm:$0xff]
  %v724 = vld [vmem:[%s3 + $0x980] sm:$0xff]
  %v725 = vld [vmem:[%s3 + $0x988] sm:$0xff]
  %v726 = vld [vmem:[%s3 + $0x990] sm:$0xff]
  %v727 = vld [vmem:[%s3 + $0x998] sm:$0xff]
  %v728 = vld [vmem:[%s3 + $0x9a0] sm:$0xff]
  %v729 = vld [vmem:[%s3 + $0x9a8] sm:$0xff]
  %v730 = vld [vmem:[%s3 + $0x9b0] sm:$0xff]
  %v731 = vld [vmem:[%s3 + $0x9b8] sm:$0xff]
  %v732 = vld [vmem:[%s3 + $0x9c0] sm:$0xff]
  %v733 = vld [vmem:[%s3 + $0x9c8] sm:$0xff]
  %v734 = vld [vmem:[%s3 + $0x9d0] sm:$0xff]
  %v735 = vld [vmem:[%s3 + $0x9d8] sm:$0xff]
  %v736 = vld [vmem:[%s3 + $0x9e0] sm:$0xff]
  %v737 = vld [vmem:[%s3 + $0x9e8] sm:$0xff]
  %v738 = vld [vmem:[%s3 + $0x9f0] sm:$0xff]
  %v739 = vld [vmem:[%s3 + $0x9f8] sm:$0xff]
  %v740 = vld [vmem:[%s3 + $0xa00] sm:$0xff]
  %v741 = vld [vmem:[%s3 + $0xa08] sm:$0xff]
  %v742 = vld [vmem:[%s3 + $0xa10] sm:$0xff]
  %v743 = vld [vmem:[%s3 + $0xa18] sm:$0xff]
  %v744 = vld [vmem:[%s3 + $0xa20] sm:$0xff]
  %v745 = vld [vmem:[%s3 + $0xa28] sm:$0xff]
  %v746 = vld [vmem:[%s3 + $0xa30] sm:$0xff]
  %v747 = vld [vmem:[%s3 + $0xa38] sm:$0xff]
  %v748 = vld [vmem:[%s3 + $0xa40] sm:$0xff]
  %v749 = vld [vmem:[%s3 + $0xa48] sm:$0xff]
  %v750 = vld [vmem:[%s3 + $0xa50] sm:$0xff]
  %v751 = vld [vmem:[%s3 + $0xa58] sm:$0xff]
  %v752 = vld [vmem:[%s3 + $0xa60] sm:$0xff]
  %v753 = vld [vmem:[%s3 + $0xa68] sm:$0xff]
  %v754 = vld [vmem:[%s3 + $0xa70] sm:$0xff]
  %v755 = vld [vmem:[%s3 + $0xa78] sm:$0xff]
  %v756 = vld [vmem:[%s3 + $0xa80] sm:$0xff]
  %v757 = vld [vmem:[%s3 + $0xa88] sm:$0xff]
  %v758 = vld [vmem:[%s3 + $0xa90] sm:$0xff]
  %v759 = vld [vmem:[%s3 + $0xa98] sm:$0xff]
  %v760 = vld [vmem:[%s3 + $0xaa0] sm:$0xff]
  %v761 = vld [vmem:[%s3 + $0xaa8] sm:$0xff]
  %v762 = vld [vmem:[%s3 + $0xab0] sm:$0xff]
  %v763 = vld [vmem:[%s3 + $0xab8] sm:$0xff]
  %v764 = vld [vmem:[%s3 + $0xac0] sm:$0xff]
  %v765 = vld [vmem:[%s3 + $0xac8] sm:$0xff]
  %v766 = vld [vmem:[%s3 + $0xad0] sm:$0xff]
  %v767 = vld [vmem:[%s3 + $0xad8] sm:$0xff]
  %v768 = vld [vmem:[%s3 + $0xae0] sm:$0xff]
  %v769 = vld [vmem:[%s3 + $0xae8] sm:$0xff]
  %v770 = vld [vmem:[%s3 + $0xaf0] sm:$0xff]
  %v771 = vld [vmem:[%s3 + $0xaf8] sm:$0xff]
  %v772 = vld [vmem:[%s3 + $0xb00] sm:$0xff]
  %v773 = vld [vmem:[%s3 + $0xb08] sm:$0xff]
  %v774 = vld [vmem:[%s3 + $0xb10] sm:$0xff]
  %v775 = vld [vmem:[%s3 + $0xb18] sm:$0xff]
  %v776 = vld [vmem:[%s3 + $0xb20] sm:$0xff]
  %v777 = vld [vmem:[%s3 + $0xb28] sm:$0xff]
  %v778 = vld [vmem:[%s3 + $0xb30] sm:$0xff]
  %v779 = vld [vmem:[%s3 + $0xb38] sm:$0xff]
  %v780 = vld [vmem:[%s3 + $0xb40] sm:$0xff]
  %v781 = vld [vmem:[%s3 + $0xb48] sm:$0xff]
  %v782 = vld [vmem:[%s3 + $0xb50] sm:$0xff]
  %v783 = vld [vmem:[%s3 + $0xb58] sm:$0xff]
  %v784 = vld [vmem:[%s3 + $0xb60] sm:$0xff]
  %v785 = vld [vmem:[%s3 + $0xb68] sm:$0xff]
  %v786 = vld [vmem:[%s3 + $0xb70] sm:$0xff]
  %v787 = vld [vmem:[%s3 + $0xb78] sm:$0xff]
  %v788 = vld [vmem:[%s3 + $0xb80] sm:$0xff]
  %v789 = vld [vmem:[%s3 + $0xb88] sm:$0xff]
  %v790 = vld [vmem:[%s3 + $0xb90] sm:$0xff]
  %v791 = vld [vmem:[%s3 + $0xb98] sm:$0xff]
  %v792 = vld [vmem:[%s3 + $0xba0] sm:$0xff]
  %v793 = vld [vmem:[%s3 + $0xba8] sm:$0xff]
  %v794 = vld [vmem:[%s3 + $0xbb0] sm:$0xff]
  %v795 = vld [vmem:[%s3 + $0xbb8] sm:$0xff]
  %v796 = vld [vmem:[%s3 + $0xbc0] sm:$0xff]
  %v797 = vld [vmem:[%s3 + $0xbc8] sm:$0xff]
  %v798 = vld [vmem:[%s3 + $0xbd0] sm:$0xff]
  %v799 = vld [vmem:[%s3 + $0xbd8] sm:$0xff]
  %v800 = vld [vmem:[%s3 + $0xbe0] sm:$0xff]
  %v801 = vld [vmem:[%s3 + $0xbe8] sm:$0xff]
  %v802 = vld [vmem:[%s3 + $0xbf0] sm:$0xff]
  %v803 = vld [vmem:[%s3 + $0xbf8] sm:$0xff]
  %v804 = vld [vmem:[%s3 + $0xc00] sm:$0xff]
  %v805 = vld [vmem:[%s3 + $0xc08] sm:$0xff]
  %v806 = vld [vmem:[%s3 + $0xc10] sm:$0xff]
  %v807 = vld [vmem:[%s3 + $0xc18] sm:$0xff]
  %v808 = vld [vmem:[%s3 + $0xc20] sm:$0xff]
  %v809 = vld [vmem:[%s3 + $0xc28] sm:$0xff]
  %v810 = vld [vmem:[%s3 + $0xc30] sm:$0xff]
  %v811 = vld [vmem:[%s3 + $0xc38] sm:$0xff]
  %v812 = vld [vmem:[%s3 + $0xc40] sm:$0xff]
  %v813 = vld [vmem:[%s3 + $0xc48] sm:$0xff]
  %v814 = vld [vmem:[%s3 + $0xc50] sm:$0xff]
  %v815 = vld [vmem:[%s3 + $0xc58] sm:$0xff]
  %v816 = vld [vmem:[%s3 + $0xc60] sm:$0xff]
  %v817 = vld [vmem:[%s3 + $0xc68] sm:$0xff]
  %v818 = vld [vmem:[%s3 + $0xc70] sm:$0xff]
  %v819 = vld [vmem:[%s3 + $0xc78] sm:$0xff]
  %v820 = vld [vmem:[%s3 + $0xc80] sm:$0xff]
  %v821 = vld [vmem:[%s3 + $0xc88] sm:$0xff]
  %v822 = vld [vmem:[%s3 + $0xc90] sm:$0xff]
  %v823 = vld [vmem:[%s3 + $0xc98] sm:$0xff]
  %v824 = vld [vmem:[%s3 + $0xca0] sm:$0xff]
  %v825 = vld [vmem:[%s3 + $0xca8] sm:$0xff]
  %v826 = vld [vmem:[%s3 + $0xcb0] sm:$0xff]
  %v827 = vld [vmem:[%s3 + $0xcb8] sm:$0xff]
  %v828 = vld [vmem:[%s3 + $0xcc0] sm:$0xff]
  %v829 = vld [vmem:[%s3 + $0xcc8] sm:$0xff]
  %v830 = vld [vmem:[%s3 + $0xcd0] sm:$0xff]
  %v831 = vld [vmem:[%s3 + $0xcd8] sm:$0xff]
  %v832 = vld [vmem:[%s3 + $0xce0] sm:$0xff]
  %v833 = vld [vmem:[%s3 + $0xce8] sm:$0xff]
  %v834 = vld [vmem:[%s3 + $0xcf0] sm:$0xff]
  %v835 = vld [vmem:[%s3 + $0xcf8] sm:$0xff]
  %v836 = vld [vmem:[%s3 + $0xd00] sm:$0xff]
  %v837 = vld [vmem:[%s3 + $0xd08] sm:$0xff]
  %v838 = vld [vmem:[%s3 + $0xd10] sm:$0xff]
  %v839 = vld [vmem:[%s3 + $0xd18] sm:$0xff]
  %v840 = vld [vmem:[%s3 + $0xd20] sm:$0xff]
  %v841 = vld [vmem:[%s3 + $0xd28] sm:$0xff]
  %v842 = vld [vmem:[%s3 + $0xd30] sm:$0xff]
  %v843 = vld [vmem:[%s3 + $0xd38] sm:$0xff]
  %v844 = vld [vmem:[%s3 + $0xd40] sm:$0xff]
  %v845 = vld [vmem:[%s3 + $0xd48] sm:$0xff]
  %v846 = vld [vmem:[%s3 + $0xd50] sm:$0xff]
  %v847 = vld [vmem:[%s3 + $0xd58] sm:$0xff]
  %v848 = vld [vmem:[%s3 + $0xd60] sm:$0xff]
  %v849 = vld [vmem:[%s3 + $0xd68] sm:$0xff]
  %v850 = vld [vmem:[%s3 + $0xd70] sm:$0xff]
  %v851 = vld [vmem:[%s3 + $0xd78] sm:$0xff]
  %v852 = vld [vmem:[%s3 + $0xd80] sm:$0xff]
  %v853 = vld [vmem:[%s3 + $0xd88] sm:$0xff]
  %v854 = vld [vmem:[%s3 + $0xd90] sm:$0xff]
  %v855 = vld [vmem:[%s3 + $0xd98] sm:$0xff]
  %v856 = vld [vmem:[%s3 + $0xda0] sm:$0xff]
  %v857 = vld [vmem:[%s3 + $0xda8] sm:$0xff]
  %v858 = vld [vmem:[%s3 + $0xdb0] sm:$0xff]
  %v859 = vld [vmem:[%s3 + $0xdb8] sm:$0xff]
  %v860 = vld [vmem:[%s3 + $0xdc0] sm:$0xff]
  %v861 = vld [vmem:[%s3 + $0xdc8] sm:$0xff]
  %v862 = vld [vmem:[%s3 + $0xdd0] sm:$0xff]
  %v863 = vld [vmem:[%s3 + $0xdd8] sm:$0xff]
  %v864 = vld [vmem:[%s3 + $0xde0] sm:$0xff]
  %v865 = vld [vmem:[%s3 + $0xde8] sm:$0xff]
  %v866 = vld [vmem:[%s3 + $0xdf0] sm:$0xff]
  %v867 = vld [vmem:[%s3 + $0xdf8] sm:$0xff]
  %v868 = vld [vmem:[%s3 + $0xe00] sm:$0xff]
  %v869 = vld [vmem:[%s3 + $0xe08] sm:$0xff]
  %v870 = vld [vmem:[%s3 + $0xe10] sm:$0xff]
  %v871 = vld [vmem:[%s3 + $0xe18] sm:$0xff]
  %v872 = vld [vmem:[%s3 + $0xe20] sm:$0xff]
  %v873 = vld [vmem:[%s3 + $0xe28] sm:$0xff]
  %v874 = vld [vmem:[%s3 + $0xe30] sm:$0xff]
  %v875 = vld [vmem:[%s3 + $0xe38] sm:$0xff]
  %v876 = vld [vmem:[%s3 + $0xe40] sm:$0xff]
  %v877 = vld [vmem:[%s3 + $0xe48] sm:$0xff]
  %v878 = vld [vmem:[%s3 + $0xe50] sm:$0xff]
  %v879 = vld [vmem:[%s3 + $0xe58] sm:$0xff]
  %v880 = vld [vmem:[%s3 + $0xe60] sm:$0xff]
  %v881 = vld [vmem:[%s3 + $0xe68] sm:$0xff]
  %v882 = vld [vmem:[%s3 + $0xe70] sm:$0xff]
  %v883 = vld [vmem:[%s3 + $0xe78] sm:$0xff]
  %v884 = vld [vmem:[%s3 + $0xe80] sm:$0xff]
  %v885 = vld [vmem:[%s3 + $0xe88] sm:$0xff]
  %v886 = vld [vmem:[%s3 + $0xe90] sm:$0xff]
  %v887 = vld [vmem:[%s3 + $0xe98] sm:$0xff]
  %v888 = vld [vmem:[%s3 + $0xea0] sm:$0xff]
  %v889 = vld [vmem:[%s3 + $0xea8] sm:$0xff]
  %v890 = vld [vmem:[%s3 + $0xeb0] sm:$0xff]
  %v891 = vld [vmem:[%s3 + $0xeb8] sm:$0xff]
  %v892 = vld [vmem:[%s3 + $0xec0] sm:$0xff]
  %v893 = vld [vmem:[%s3 + $0xec8] sm:$0xff]
  %v894 = vld [vmem:[%s3 + $0xed0] sm:$0xff]
  %v895 = vld [vmem:[%s3 + $0xed8] sm:$0xff]
  %v896 = vld [vmem:[%s3 + $0xee0] sm:$0xff]
  %v897 = vld [vmem:[%s3 + $0xee8] sm:$0xff]
  %v898 = vld [vmem:[%s3 + $0xef0] sm:$0xff]
  %v899 = vld [vmem:[%s3 + $0xef8] sm:$0xff]
  %v900 = vld [vmem:[%s3 + $0xf00] sm:$0xff]
  %v901 = vld [vmem:[%s3 + $0xf08] sm:$0xff]
  %v902 = vld [vmem:[%s3 + $0xf10] sm:$0xff]
  %v903 = vld [vmem:[%s3 + $0xf18] sm:$0xff]
  %v904 = vld [vmem:[%s3 + $0xf20] sm:$0xff]
  %v905 = vld [vmem:[%s3 + $0xf28] sm:$0xff]
  %v906 = vld [vmem:[%s3 + $0xf30] sm:$0xff]
  %v907 = vld [vmem:[%s3 + $0xf38] sm:$0xff]
  %v908 = vld [vmem:[%s3 + $0xf40] sm:$0xff]
  %v909 = vld [vmem:[%s3 + $0xf48] sm:$0xff]
  %v910 = vld [vmem:[%s3 + $0xf50] sm:$0xff]
  %v911 = vld [vmem:[%s3 + $0xf58] sm:$0xff]
  %v912 = vld [vmem:[%s3 + $0xf60] sm:$0xff]
  %v913 = vld [vmem:[%s3 + $0xf68] sm:$0xff]
  %v914 = vld [vmem:[%s3 + $0xf70] sm:$0xff]
  %v915 = vld [vmem:[%s3 + $0xf78] sm:$0xff]
  %v916 = vld [vmem:[%s3 + $0xf80] sm:$0xff]
  %v917 = vld [vmem:[%s3 + $0xf88] sm:$0xff]
  %v918 = vld [vmem:[%s3 + $0xf90] sm:$0xff]
  %v919 = vld [vmem:[%s3 + $0xf98] sm:$0xff]
  %v920 = vld [vmem:[%s3 + $0xfa0] sm:$0xff]
  %v921 = vld [vmem:[%s3 + $0xfa8] sm:$0xff]
  %v922 = vld [vmem:[%s3 + $0xfb0] sm:$0xff]
  %v923 = vld [vmem:[%s3 + $0xfb8] sm:$0xff]
  %v924 = vld [vmem:[%s3 + $0xfc0] sm:$0xff]
  %v925 = vld [vmem:[%s3 + $0xfc8] sm:$0xff]
  %v926 = vld [vmem:[%s3 + $0xfd0] sm:$0xff]
  %v927 = vld [vmem:[%s3 + $0xfd8] sm:$0xff]
  %v928 = vld [vmem:[%s3 + $0xfe0] sm:$0xff]
  %v929 = vld [vmem:[%s3 + $0xfe8] sm:$0xff]
  %v930 = vld [vmem:[%s3 + $0xff0] sm:$0xff]
  %v931 = vld [vmem:[%s3 + $0xff8] sm:$0xff]
  %v932 = vld [vmem:[%s3 + $0x1000] sm:$0xff]
  %v933 = vld [vmem:[%s3 + $0x1008] sm:$0xff]
  %v934 = vld [vmem:[%s3 + $0x1010] sm:$0xff]
  %v935 = vld [vmem:[%s3 + $0x1018] sm:$0xff]
  %v936 = vld [vmem:[%s3 + $0x1020] sm:$0xff]
  %v937 = vld [vmem:[%s3 + $0x1028] sm:$0xff]
  %v938 = vld [vmem:[%s3 + $0x1030] sm:$0xff]
  %v939 = vld [vmem:[%s3 + $0x1038] sm:$0xff]
  %v940 = vld [vmem:[%s3 + $0x1040] sm:$0xff]
  %v941 = vld [vmem:[%s3 + $0x1048] sm:$0xff]
  %v942 = vld [vmem:[%s3 + $0x1050] sm:$0xff]
  %v943 = vld [vmem:[%s3 + $0x1058] sm:$0xff]
  %v944 = vld [vmem:[%s3 + $0x1060] sm:$0xff]
  %v945 = vld [vmem:[%s3 + $0x1068] sm:$0xff]
  %v946 = vld [vmem:[%s3 + $0x1070] sm:$0xff]
  %v947 = vld [vmem:[%s3 + $0x1078] sm:$0xff]
  %v948 = vld [vmem:[%s3 + $0x1080] sm:$0xff]
  %v949 = vld [vmem:[%s3 + $0x1088] sm:$0xff]
  %v950 = vld [vmem:[%s3 + $0x1090] sm:$0xff]
  %v951 = vld [vmem:[%s3 + $0x1098] sm:$0xff]
  %v952 = vld [vmem:[%s3 + $0x10a0] sm:$0xff]
  %v953 = vld [vmem:[%s3 + $0x10a8] sm:$0xff]
  %v954 = vld [vmem:[%s3 + $0x10b0] sm:$0xff]
  %v955 = vld [vmem:[%s3 + $0x10b8] sm:$0xff]
  %v956 = vld [vmem:[%s3 + $0x10c0] sm:$0xff]
  %v957 = vld [vmem:[%s3 + $0x10c8] sm:$0xff]
  %v958 = vld [vmem:[%s3 + $0x10d0] sm:$0xff]
  %v959 = vld [vmem:[%s3 + $0x10d8] sm:$0xff]
  %v960 = vld [vmem:[%s3 + $0x10e0] sm:$0xff]
  %v961 = vld [vmem:[%s3 + $0x10e8] sm:$0xff]
  %v962 = vld [vmem:[%s3 + $0x10f0] sm:$0xff]
  %v963 = vld [vmem:[%s3 + $0x10f8] sm:$0xff]
  %v964 = vld [vmem:[%s3 + $0x1100] sm:$0xff]
  %v965 = vld [vmem:[%s3 + $0x1108] sm:$0xff]
  %v966 = vld [vmem:[%s3 + $0x1110] sm:$0xff]
  %v967 = vld [vmem:[%s3 + $0x1118] sm:$0xff]
  %v968 = vld [vmem:[%s3 + $0x1120] sm:$0xff]
  %v969 = vld [vmem:[%s3 + $0x1128] sm:$0xff]
  %v970 = vld [vmem:[%s3 + $0x1130] sm:$0xff]
  %v971 = vld [vmem:[%s3 + $0x1138] sm:$0xff]
  %v972 = vld [vmem:[%s3 + $0x1140] sm:$0xff]
  %v973 = vld [vmem:[%s3 + $0x1148] sm:$0xff]
  %v974 = vld [vmem:[%s3 + $0x1150] sm:$0xff]
  %v975 = vld [vmem:[%s3 + $0x1158] sm:$0xff]
  %v976 = vld [vmem:[%s3 + $0x1160] sm:$0xff]
  %v977 = vld [vmem:[%s3 + $0x1168] sm:$0xff]
  %v978 = vld [vmem:[%s3 + $0x1170] sm:$0xff]
  %v979 = vld [vmem:[%s3 + $0x1178] sm:$0xff]
  %v980 = vld [vmem:[%s3 + $0x1180] sm:$0xff]
  %v981 = vld [vmem:[%s3 + $0x1188] sm:$0xff]
  %v982 = vld [vmem:[%s3 + $0x1190] sm:$0xff]
  %v983 = vld [vmem:[%s3 + $0x1198] sm:$0xff]
  %v984 = vld [vmem:[%s3 + $0x11a0] sm:$0xff]
  %v985 = vld [vmem:[%s3 + $0x11a8] sm:$0xff]
  %v986 = vld [vmem:[%s3 + $0x11b0] sm:$0xff]
  %v987 = vld [vmem:[%s3 + $0x11b8] sm:$0xff]
  %v988 = vld [vmem:[%s3 + $0x11c0] sm:$0xff]
  %v989 = vld [vmem:[%s3 + $0x11c8] sm:$0xff]
  %v990 = vld [vmem:[%s3 + $0x11d0] sm:$0xff]
  %v991 = vld [vmem:[%s3 + $0x11d8] sm:$0xff]
  %v992 = vld [vmem:[%s3 + $0x11e0] sm:$0xff]
  %v993 = vld [vmem:[%s3 + $0x11e8] sm:$0xff]
  %v994 = vld [vmem:[%s3 + $0x11f0] sm:$0xff]
  %v995 = vld [vmem:[%s3 + $0x11f8] sm:$0xff]
  %v1572 = vunpack.c.l.b16 %v420
  %v1573 = vunpack.c.h.b16 %v420
  %v1574 = vunpack.c.l.b16 %v421
  %v1575 = vunpack.c.h.b16 %v421
  %v1576 = vunpack.c.l.b16 %v422
  %v1577 = vunpack.c.h.b16 %v422
  %v1578 = vunpack.c.l.b16 %v423
  %v1579 = vunpack.c.h.b16 %v423
  %v1580 = vunpack.c.l.b16 %v424
  %v1581 = vunpack.c.h.b16 %v424
  %v1582 = vunpack.c.l.b16 %v425
  %v1583 = vunpack.c.h.b16 %v425
  %v1584 = vunpack.c.l.b16 %v426
  %v1585 = vunpack.c.h.b16 %v426
  %v1586 = vunpack.c.l.b16 %v427
  %v1587 = vunpack.c.h.b16 %v427
  %v1588 = vunpack.c.l.b16 %v428
  %v1589 = vunpack.c.h.b16 %v428
  %v1590 = vunpack.c.l.b16 %v429
  %v1591 = vunpack.c.h.b16 %v429
  %v1592 = vunpack.c.l.b16 %v430
  %v1593 = vunpack.c.h.b16 %v430
  %v1594 = vunpack.c.l.b16 %v431
  %v1595 = vunpack.c.h.b16 %v431
  %v1596 = vunpack.c.l.b16 %v432
  %v1597 = vunpack.c.h.b16 %v432
  %v1598 = vunpack.c.l.b16 %v433
  %v1599 = vunpack.c.h.b16 %v433
  %v1600 = vunpack.c.l.b16 %v434
  %v1601 = vunpack.c.h.b16 %v434
  %v1602 = vunpack.c.l.b16 %v435
  %v1603 = vunpack.c.h.b16 %v435
  %v1604 = vunpack.c.l.b16 %v436
  %v1605 = vunpack.c.h.b16 %v436
  %v1606 = vunpack.c.l.b16 %v437
  %v1607 = vunpack.c.h.b16 %v437
  %v1608 = vunpack.c.l.b16 %v438
  %v1609 = vunpack.c.h.b16 %v438
  %v1610 = vunpack.c.l.b16 %v439
  %v1611 = vunpack.c.h.b16 %v439
  %v1612 = vunpack.c.l.b16 %v440
  %v1613 = vunpack.c.h.b16 %v440
  %v1614 = vunpack.c.l.b16 %v441
  %v1615 = vunpack.c.h.b16 %v441
  %v1616 = vunpack.c.l.b16 %v442
  %v1617 = vunpack.c.h.b16 %v442
  %v1618 = vunpack.c.l.b16 %v443
  %v1619 = vunpack.c.h.b16 %v443
  %v1620 = vunpack.c.l.b16 %v444
  %v1621 = vunpack.c.h.b16 %v444
  %v1622 = vunpack.c.l.b16 %v445
  %v1623 = vunpack.c.h.b16 %v445
  %v1624 = vunpack.c.l.b16 %v446
  %v1625 = vunpack.c.h.b16 %v446
  %v1626 = vunpack.c.l.b16 %v447
  %v1627 = vunpack.c.h.b16 %v447
  %v1628 = vunpack.c.l.b16 %v448
  %v1629 = vunpack.c.h.b16 %v448
  %v1630 = vunpack.c.l.b16 %v449
  %v1631 = vunpack.c.h.b16 %v449
  %v1632 = vunpack.c.l.b16 %v450
  %v1633 = vunpack.c.h.b16 %v450
  %v1634 = vunpack.c.l.b16 %v451
  %v1635 = vunpack.c.h.b16 %v451
  %v1636 = vunpack.c.l.b16 %v452
  %v1637 = vunpack.c.h.b16 %v452
  %v1638 = vunpack.c.l.b16 %v453
  %v1639 = vunpack.c.h.b16 %v453
  %v1640 = vunpack.c.l.b16 %v454
  %v1641 = vunpack.c.h.b16 %v454
  %v1642 = vunpack.c.l.b16 %v455
  %v1643 = vunpack.c.h.b16 %v455
  %v1644 = vunpack.c.l.b16 %v456
  %v1645 = vunpack.c.h.b16 %v456
  %v1646 = vunpack.c.l.b16 %v457
  %v1647 = vunpack.c.h.b16 %v457
  %v1648 = vunpack.c.l.b16 %v458
  %v1649 = vunpack.c.h.b16 %v458
  %v1650 = vunpack.c.l.b16 %v459
  %v1651 = vunpack.c.h.b16 %v459
  %v1652 = vunpack.c.l.b16 %v460
  %v1653 = vunpack.c.h.b16 %v460
  %v1654 = vunpack.c.l.b16 %v461
  %v1655 = vunpack.c.h.b16 %v461
  %v1656 = vunpack.c.l.b16 %v462
  %v1657 = vunpack.c.h.b16 %v462
  %v1658 = vunpack.c.l.b16 %v463
  %v1659 = vunpack.c.h.b16 %v463
  %v1660 = vunpack.c.l.b16 %v464
  %v1661 = vunpack.c.h.b16 %v464
  %v1662 = vunpack.c.l.b16 %v465
  %v1663 = vunpack.c.h.b16 %v465
  %v1664 = vunpack.c.l.b16 %v466
  %v1665 = vunpack.c.h.b16 %v466
  %v1666 = vunpack.c.l.b16 %v467
  %v1667 = vunpack.c.h.b16 %v467
  %v1668 = vunpack.c.l.b16 %v468
  %v1669 = vunpack.c.h.b16 %v468
  %v1670 = vunpack.c.l.b16 %v469
  %v1671 = vunpack.c.h.b16 %v469
  %v1672 = vunpack.c.l.b16 %v470
  %v1673 = vunpack.c.h.b16 %v470
  %v1674 = vunpack.c.l.b16 %v471
  %v1675 = vunpack.c.h.b16 %v471
  %v1676 = vunpack.c.l.b16 %v472
  %v1677 = vunpack.c.h.b16 %v472
  %v1678 = vunpack.c.l.b16 %v473
  %v1679 = vunpack.c.h.b16 %v473
  %v1680 = vunpack.c.l.b16 %v474
  %v1681 = vunpack.c.h.b16 %v474
  %v1682 = vunpack.c.l.b16 %v475
  %v1683 = vunpack.c.h.b16 %v475
  %v1684 = vunpack.c.l.b16 %v476
  %v1685 = vunpack.c.h.b16 %v476
  %v1686 = vunpack.c.l.b16 %v477
  %v1687 = vunpack.c.h.b16 %v477
  %v1688 = vunpack.c.l.b16 %v478
  %v1689 = vunpack.c.h.b16 %v478
  %v1690 = vunpack.c.l.b16 %v479
  %v1691 = vunpack.c.h.b16 %v479
  %v1692 = vunpack.c.l.b16 %v480
  %v1693 = vunpack.c.h.b16 %v480
  %v1694 = vunpack.c.l.b16 %v481
  %v1695 = vunpack.c.h.b16 %v481
  %v1696 = vunpack.c.l.b16 %v482
  %v1697 = vunpack.c.h.b16 %v482
  %v1698 = vunpack.c.l.b16 %v483
  %v1699 = vunpack.c.h.b16 %v483
  %v1700 = vunpack.c.l.b16 %v484
  %v1701 = vunpack.c.h.b16 %v484
  %v1702 = vunpack.c.l.b16 %v485
  %v1703 = vunpack.c.h.b16 %v485
  %v1704 = vunpack.c.l.b16 %v486
  %v1705 = vunpack.c.h.b16 %v486
  %v1706 = vunpack.c.l.b16 %v487
  %v1707 = vunpack.c.h.b16 %v487
  %v1708 = vunpack.c.l.b16 %v488
  %v1709 = vunpack.c.h.b16 %v488
  %v1710 = vunpack.c.l.b16 %v489
  %v1711 = vunpack.c.h.b16 %v489
  %v1712 = vunpack.c.l.b16 %v490
  %v1713 = vunpack.c.h.b16 %v490
  %v1714 = vunpack.c.l.b16 %v491
  %v1715 = vunpack.c.h.b16 %v491
  %v1716 = vunpack.c.l.b16 %v492
  %v1717 = vunpack.c.h.b16 %v492
  %v1718 = vunpack.c.l.b16 %v493
  %v1719 = vunpack.c.h.b16 %v493
  %v1720 = vunpack.c.l.b16 %v494
  %v1721 = vunpack.c.h.b16 %v494
  %v1722 = vunpack.c.l.b16 %v495
  %v1723 = vunpack.c.h.b16 %v495
  %v1724 = vunpack.c.l.b16 %v496
  %v1725 = vunpack.c.h.b16 %v496
  %v1726 = vunpack.c.l.b16 %v497
  %v1727 = vunpack.c.h.b16 %v497
  %v1728 = vunpack.c.l.b16 %v498
  %v1729 = vunpack.c.h.b16 %v498
  %v1730 = vunpack.c.l.b16 %v499
  %v1731 = vunpack.c.h.b16 %v499
  %v1732 = vunpack.c.l.b16 %v500
  %v1733 = vunpack.c.h.b16 %v500
  %v1734 = vunpack.c.l.b16 %v501
  %v1735 = vunpack.c.h.b16 %v501
  %v1736 = vunpack.c.l.b16 %v502
  %v1737 = vunpack.c.h.b16 %v502
  %v1738 = vunpack.c.l.b16 %v503
  %v1739 = vunpack.c.h.b16 %v503
  %v1740 = vunpack.c.l.b16 %v504
  %v1741 = vunpack.c.h.b16 %v504
  %v1742 = vunpack.c.l.b16 %v505
  %v1743 = vunpack.c.h.b16 %v505
  %v1744 = vunpack.c.l.b16 %v506
  %v1745 = vunpack.c.h.b16 %v506
  %v1746 = vunpack.c.l.b16 %v507
  %v1747 = vunpack.c.h.b16 %v507
  %v1748 = vunpack.c.l.b16 %v508
  %v1749 = vunpack.c.h.b16 %v508
  %v1750 = vunpack.c.l.b16 %v509
  %v1751 = vunpack.c.h.b16 %v509
  %v1752 = vunpack.c.l.b16 %v510
  %v1753 = vunpack.c.h.b16 %v510
  %v1754 = vunpack.c.l.b16 %v511
  %v1755 = vunpack.c.h.b16 %v511
  %v1756 = vunpack.c.l.b16 %v512
  %v1757 = vunpack.c.h.b16 %v512
  %v1758 = vunpack.c.l.b16 %v513
  %v1759 = vunpack.c.h.b16 %v513
  %v1760 = vunpack.c.l.b16 %v514
  %v1761 = vunpack.c.h.b16 %v514
  %v1762 = vunpack.c.l.b16 %v515
  %v1763 = vunpack.c.h.b16 %v515
  %v1764 = vunpack.c.l.b16 %v516
  %v1765 = vunpack.c.h.b16 %v516
  %v1766 = vunpack.c.l.b16 %v517
  %v1767 = vunpack.c.h.b16 %v517
  %v1768 = vunpack.c.l.b16 %v518
  %v1769 = vunpack.c.h.b16 %v518
  %v1770 = vunpack.c.l.b16 %v519
  %v1771 = vunpack.c.h.b16 %v519
  %v1772 = vunpack.c.l.b16 %v520
  %v1773 = vunpack.c.h.b16 %v520
  %v1774 = vunpack.c.l.b16 %v521
  %v1775 = vunpack.c.h.b16 %v521
  %v1776 = vunpack.c.l.b16 %v522
  %v1777 = vunpack.c.h.b16 %v522
  %v1778 = vunpack.c.l.b16 %v523
  %v1779 = vunpack.c.h.b16 %v523
  %v1780 = vunpack.c.l.b16 %v524
  %v1781 = vunpack.c.h.b16 %v524
  %v1782 = vunpack.c.l.b16 %v525
  %v1783 = vunpack.c.h.b16 %v525
  %v1784 = vunpack.c.l.b16 %v526
  %v1785 = vunpack.c.h.b16 %v526
  %v1786 = vunpack.c.l.b16 %v527
  %v1787 = vunpack.c.h.b16 %v527
  %v1788 = vunpack.c.l.b16 %v528
  %v1789 = vunpack.c.h.b16 %v528
  %v1790 = vunpack.c.l.b16 %v529
  %v1791 = vunpack.c.h.b16 %v529
  %v1792 = vunpack.c.l.b16 %v530
  %v1793 = vunpack.c.h.b16 %v530
  %v1794 = vunpack.c.l.b16 %v531
  %v1795 = vunpack.c.h.b16 %v531
  %v1796 = vunpack.c.l.b16 %v532
  %v1797 = vunpack.c.h.b16 %v532
  %v1798 = vunpack.c.l.b16 %v533
  %v1799 = vunpack.c.h.b16 %v533
  %v1800 = vunpack.c.l.b16 %v534
  %v1801 = vunpack.c.h.b16 %v534
  %v1802 = vunpack.c.l.b16 %v535
  %v1803 = vunpack.c.h.b16 %v535
  %v1804 = vunpack.c.l.b16 %v536
  %v1805 = vunpack.c.h.b16 %v536
  %v1806 = vunpack.c.l.b16 %v537
  %v1807 = vunpack.c.h.b16 %v537
  %v1808 = vunpack.c.l.b16 %v538
  %v1809 = vunpack.c.h.b16 %v538
  %v1810 = vunpack.c.l.b16 %v539
  %v1811 = vunpack.c.h.b16 %v539
  %v1812 = vunpack.c.l.b16 %v540
  %v1813 = vunpack.c.h.b16 %v540
  %v1814 = vunpack.c.l.b16 %v541
  %v1815 = vunpack.c.h.b16 %v541
  %v1816 = vunpack.c.l.b16 %v542
  %v1817 = vunpack.c.h.b16 %v542
  %v1818 = vunpack.c.l.b16 %v543
  %v1819 = vunpack.c.h.b16 %v543
  %v1820 = vunpack.c.l.b16 %v544
  %v1821 = vunpack.c.h.b16 %v544
  %v1822 = vunpack.c.l.b16 %v545
  %v1823 = vunpack.c.h.b16 %v545
  %v1824 = vunpack.c.l.b16 %v546
  %v1825 = vunpack.c.h.b16 %v546
  %v1826 = vunpack.c.l.b16 %v547
  %v1827 = vunpack.c.h.b16 %v547
  %v1828 = vunpack.c.l.b16 %v548
  %v1829 = vunpack.c.h.b16 %v548
  %v1830 = vunpack.c.l.b16 %v549
  %v1831 = vunpack.c.h.b16 %v549
  %v1832 = vunpack.c.l.b16 %v550
  %v1833 = vunpack.c.h.b16 %v550
  %v1834 = vunpack.c.l.b16 %v551
  %v1835 = vunpack.c.h.b16 %v551
  %v1836 = vunpack.c.l.b16 %v552
  %v1837 = vunpack.c.h.b16 %v552
  %v1838 = vunpack.c.l.b16 %v553
  %v1839 = vunpack.c.h.b16 %v553
  %v1840 = vunpack.c.l.b16 %v554
  %v1841 = vunpack.c.h.b16 %v554
  %v1842 = vunpack.c.l.b16 %v555
  %v1843 = vunpack.c.h.b16 %v555
  %v1844 = vunpack.c.l.b16 %v556
  %v1845 = vunpack.c.h.b16 %v556
  %v1846 = vunpack.c.l.b16 %v557
  %v1847 = vunpack.c.h.b16 %v557
  %v1848 = vunpack.c.l.b16 %v558
  %v1849 = vunpack.c.h.b16 %v558
  %v1850 = vunpack.c.l.b16 %v559
  %v1851 = vunpack.c.h.b16 %v559
  %v1852 = vunpack.c.l.b16 %v560
  %v1853 = vunpack.c.h.b16 %v560
  %v1854 = vunpack.c.l.b16 %v561
  %v1855 = vunpack.c.h.b16 %v561
  %v1856 = vunpack.c.l.b16 %v562
  %v1857 = vunpack.c.h.b16 %v562
  %v1858 = vunpack.c.l.b16 %v563
  %v1859 = vunpack.c.h.b16 %v563
  %v1860 = vunpack.c.l.b16 %v564
  %v1861 = vunpack.c.h.b16 %v564
  %v1862 = vunpack.c.l.b16 %v565
  %v1863 = vunpack.c.h.b16 %v565
  %v1864 = vunpack.c.l.b16 %v566
  %v1865 = vunpack.c.h.b16 %v566
  %v1866 = vunpack.c.l.b16 %v567
  %v1867 = vunpack.c.h.b16 %v567
  %v1868 = vunpack.c.l.b16 %v568
  %v1869 = vunpack.c.h.b16 %v568
  %v1870 = vunpack.c.l.b16 %v569
  %v1871 = vunpack.c.h.b16 %v569
  %v1872 = vunpack.c.l.b16 %v570
  %v1873 = vunpack.c.h.b16 %v570
  %v1874 = vunpack.c.l.b16 %v571
  %v1875 = vunpack.c.h.b16 %v571
  %v1876 = vunpack.c.l.b16 %v572
  %v1877 = vunpack.c.h.b16 %v572
  %v1878 = vunpack.c.l.b16 %v573
  %v1879 = vunpack.c.h.b16 %v573
  %v1880 = vunpack.c.l.b16 %v574
  %v1881 = vunpack.c.h.b16 %v574
  %v1882 = vunpack.c.l.b16 %v575
  %v1883 = vunpack.c.h.b16 %v575
  %v1884 = vunpack.c.l.b16 %v576
  %v1885 = vunpack.c.h.b16 %v576
  %v1886 = vunpack.c.l.b16 %v577
  %v1887 = vunpack.c.h.b16 %v577
  %v1888 = vunpack.c.l.b16 %v578
  %v1889 = vunpack.c.h.b16 %v578
  %v1890 = vunpack.c.l.b16 %v579
  %v1891 = vunpack.c.h.b16 %v579
  %v1892 = vunpack.c.l.b16 %v580
  %v1893 = vunpack.c.h.b16 %v580
  %v1894 = vunpack.c.l.b16 %v581
  %v1895 = vunpack.c.h.b16 %v581
  %v1896 = vunpack.c.l.b16 %v582
  %v1897 = vunpack.c.h.b16 %v582
  %v1898 = vunpack.c.l.b16 %v583
  %v1899 = vunpack.c.h.b16 %v583
  %v1900 = vunpack.c.l.b16 %v584
  %v1901 = vunpack.c.h.b16 %v584
  %v1902 = vunpack.c.l.b16 %v585
  %v1903 = vunpack.c.h.b16 %v585
  %v1904 = vunpack.c.l.b16 %v586
  %v1905 = vunpack.c.h.b16 %v586
  %v1906 = vunpack.c.l.b16 %v587
  %v1907 = vunpack.c.h.b16 %v587
  %v1908 = vunpack.c.l.b16 %v588
  %v1909 = vunpack.c.h.b16 %v588
  %v1910 = vunpack.c.l.b16 %v589
  %v1911 = vunpack.c.h.b16 %v589
  %v1912 = vunpack.c.l.b16 %v590
  %v1913 = vunpack.c.h.b16 %v590
  %v1914 = vunpack.c.l.b16 %v591
  %v1915 = vunpack.c.h.b16 %v591
  %v1916 = vunpack.c.l.b16 %v592
  %v1917 = vunpack.c.h.b16 %v592
  %v1918 = vunpack.c.l.b16 %v593
  %v1919 = vunpack.c.h.b16 %v593
  %v1920 = vunpack.c.l.b16 %v594
  %v1921 = vunpack.c.h.b16 %v594
  %v1922 = vunpack.c.l.b16 %v595
  %v1923 = vunpack.c.h.b16 %v595
  %v1924 = vunpack.c.l.b16 %v596
  %v1925 = vunpack.c.h.b16 %v596
  %v1926 = vunpack.c.l.b16 %v597
  %v1927 = vunpack.c.h.b16 %v597
  %v1928 = vunpack.c.l.b16 %v598
  %v1929 = vunpack.c.h.b16 %v598
  %v1930 = vunpack.c.l.b16 %v599
  %v1931 = vunpack.c.h.b16 %v599
  %v1932 = vunpack.c.l.b16 %v600
  %v1933 = vunpack.c.h.b16 %v600
  %v1934 = vunpack.c.l.b16 %v601
  %v1935 = vunpack.c.h.b16 %v601
  %v1936 = vunpack.c.l.b16 %v602
  %v1937 = vunpack.c.h.b16 %v602
  %v1938 = vunpack.c.l.b16 %v603
  %v1939 = vunpack.c.h.b16 %v603
  %v1940 = vunpack.c.l.b16 %v604
  %v1941 = vunpack.c.h.b16 %v604
  %v1942 = vunpack.c.l.b16 %v605
  %v1943 = vunpack.c.h.b16 %v605
  %v1944 = vunpack.c.l.b16 %v606
  %v1945 = vunpack.c.h.b16 %v606
  %v1946 = vunpack.c.l.b16 %v607
  %v1947 = vunpack.c.h.b16 %v607
  %v1948 = vunpack.c.l.b16 %v608
  %v1949 = vunpack.c.h.b16 %v608
  %v1950 = vunpack.c.l.b16 %v609
  %v1951 = vunpack.c.h.b16 %v609
  %v1952 = vunpack.c.l.b16 %v610
  %v1953 = vunpack.c.h.b16 %v610
  %v1954 = vunpack.c.l.b16 %v611
  %v1955 = vunpack.c.h.b16 %v611
  %v1956 = vunpack.c.l.b16 %v612
  %v1957 = vunpack.c.h.b16 %v612
  %v1958 = vunpack.c.l.b16 %v613
  %v1959 = vunpack.c.h.b16 %v613
  %v1960 = vunpack.c.l.b16 %v614
  %v1961 = vunpack.c.h.b16 %v614
  %v1962 = vunpack.c.l.b16 %v615
  %v1963 = vunpack.c.h.b16 %v615
  %v1964 = vunpack.c.l.b16 %v616
  %v1965 = vunpack.c.h.b16 %v616
  %v1966 = vunpack.c.l.b16 %v617
  %v1967 = vunpack.c.h.b16 %v617
  %v1968 = vunpack.c.l.b16 %v618
  %v1969 = vunpack.c.h.b16 %v618
  %v1970 = vunpack.c.l.b16 %v619
  %v1971 = vunpack.c.h.b16 %v619
  %v1972 = vunpack.c.l.b16 %v620
  %v1973 = vunpack.c.h.b16 %v620
  %v1974 = vunpack.c.l.b16 %v621
  %v1975 = vunpack.c.h.b16 %v621
  %v1976 = vunpack.c.l.b16 %v622
  %v1977 = vunpack.c.h.b16 %v622
  %v1978 = vunpack.c.l.b16 %v623
  %v1979 = vunpack.c.h.b16 %v623
  %v1980 = vunpack.c.l.b16 %v624
  %v1981 = vunpack.c.h.b16 %v624
  %v1982 = vunpack.c.l.b16 %v625
  %v1983 = vunpack.c.h.b16 %v625
  %v1984 = vunpack.c.l.b16 %v626
  %v1985 = vunpack.c.h.b16 %v626
  %v1986 = vunpack.c.l.b16 %v627
  %v1987 = vunpack.c.h.b16 %v627
  %v1988 = vunpack.c.l.b16 %v628
  %v1989 = vunpack.c.h.b16 %v628
  %v1990 = vunpack.c.l.b16 %v629
  %v1991 = vunpack.c.h.b16 %v629
  %v1992 = vunpack.c.l.b16 %v630
  %v1993 = vunpack.c.h.b16 %v630
  %v1994 = vunpack.c.l.b16 %v631
  %v1995 = vunpack.c.h.b16 %v631
  %v1996 = vunpack.c.l.b16 %v632
  %v1997 = vunpack.c.h.b16 %v632
  %v1998 = vunpack.c.l.b16 %v633
  %v1999 = vunpack.c.h.b16 %v633
  %v2000 = vunpack.c.l.b16 %v634
  %v2001 = vunpack.c.h.b16 %v634
  %v2002 = vunpack.c.l.b16 %v635
  %v2003 = vunpack.c.h.b16 %v635
  %v2004 = vunpack.c.l.b16 %v636
  %v2005 = vunpack.c.h.b16 %v636
  %v2006 = vunpack.c.l.b16 %v637
  %v2007 = vunpack.c.h.b16 %v637
  %v2008 = vunpack.c.l.b16 %v638
  %v2009 = vunpack.c.h.b16 %v638
  %v2010 = vunpack.c.l.b16 %v639
  %v2011 = vunpack.c.h.b16 %v639
  %v2012 = vunpack.c.l.b16 %v640
  %v2013 = vunpack.c.h.b16 %v640
  %v2014 = vunpack.c.l.b16 %v641
  %v2015 = vunpack.c.h.b16 %v641
  %v2016 = vunpack.c.l.b16 %v642
  %v2017 = vunpack.c.h.b16 %v642
  %v2018 = vunpack.c.l.b16 %v643
  %v2019 = vunpack.c.h.b16 %v643
  %v2020 = vunpack.c.l.b16 %v644
  %v2021 = vunpack.c.h.b16 %v644
  %v2022 = vunpack.c.l.b16 %v645
  %v2023 = vunpack.c.h.b16 %v645
  %v2024 = vunpack.c.l.b16 %v646
  %v2025 = vunpack.c.h.b16 %v646
  %v2026 = vunpack.c.l.b16 %v647
  %v2027 = vunpack.c.h.b16 %v647
  %v2028 = vunpack.c.l.b16 %v648
  %v2029 = vunpack.c.h.b16 %v648
  %v2030 = vunpack.c.l.b16 %v649
  %v2031 = vunpack.c.h.b16 %v649
  %v2032 = vunpack.c.l.b16 %v650
  %v2033 = vunpack.c.h.b16 %v650
  %v2034 = vunpack.c.l.b16 %v651
  %v2035 = vunpack.c.h.b16 %v651
  %v2036 = vunpack.c.l.b16 %v652
  %v2037 = vunpack.c.h.b16 %v652
  %v2038 = vunpack.c.l.b16 %v653
  %v2039 = vunpack.c.h.b16 %v653
  %v2040 = vunpack.c.l.b16 %v654
  %v2041 = vunpack.c.h.b16 %v654
  %v2042 = vunpack.c.l.b16 %v655
  %v2043 = vunpack.c.h.b16 %v655
  %v2044 = vunpack.c.l.b16 %v656
  %v2045 = vunpack.c.h.b16 %v656
  %v2046 = vunpack.c.l.b16 %v657
  %v2047 = vunpack.c.h.b16 %v657
  %v2048 = vunpack.c.l.b16 %v658
  %v2049 = vunpack.c.h.b16 %v658
  %v2050 = vunpack.c.l.b16 %v659
  %v2051 = vunpack.c.h.b16 %v659
  %v2052 = vunpack.c.l.b16 %v660
  %v2053 = vunpack.c.h.b16 %v660
  %v2054 = vunpack.c.l.b16 %v661
  %v2055 = vunpack.c.h.b16 %v661
  %v2056 = vunpack.c.l.b16 %v662
  %v2057 = vunpack.c.h.b16 %v662
  %v2058 = vunpack.c.l.b16 %v663
  %v2059 = vunpack.c.h.b16 %v663
  %v2060 = vunpack.c.l.b16 %v664
  %v2061 = vunpack.c.h.b16 %v664
  %v2062 = vunpack.c.l.b16 %v665
  %v2063 = vunpack.c.h.b16 %v665
  %v2064 = vunpack.c.l.b16 %v666
  %v2065 = vunpack.c.h.b16 %v666
  %v2066 = vunpack.c.l.b16 %v667
  %v2067 = vunpack.c.h.b16 %v667
  %v2068 = vunpack.c.l.b16 %v668
  %v2069 = vunpack.c.h.b16 %v668
  %v2070 = vunpack.c.l.b16 %v669
  %v2071 = vunpack.c.h.b16 %v669
  %v2072 = vunpack.c.l.b16 %v670
  %v2073 = vunpack.c.h.b16 %v670
  %v2074 = vunpack.c.l.b16 %v671
  %v2075 = vunpack.c.h.b16 %v671
  %v2076 = vunpack.c.l.b16 %v672
  %v2077 = vunpack.c.h.b16 %v672
  %v2078 = vunpack.c.l.b16 %v673
  %v2079 = vunpack.c.h.b16 %v673
  %v2080 = vunpack.c.l.b16 %v674
  %v2081 = vunpack.c.h.b16 %v674
  %v2082 = vunpack.c.l.b16 %v675
  %v2083 = vunpack.c.h.b16 %v675
  %v2084 = vunpack.c.l.b16 %v676
  %v2085 = vunpack.c.h.b16 %v676
  %v2086 = vunpack.c.l.b16 %v677
  %v2087 = vunpack.c.h.b16 %v677
  %v2088 = vunpack.c.l.b16 %v678
  %v2089 = vunpack.c.h.b16 %v678
  %v2090 = vunpack.c.l.b16 %v679
  %v2091 = vunpack.c.h.b16 %v679
  %v2092 = vunpack.c.l.b16 %v680
  %v2093 = vunpack.c.h.b16 %v680
  %v2094 = vunpack.c.l.b16 %v681
  %v2095 = vunpack.c.h.b16 %v681
  %v2096 = vunpack.c.l.b16 %v682
  %v2097 = vunpack.c.h.b16 %v682
  %v2098 = vunpack.c.l.b16 %v683
  %v2099 = vunpack.c.h.b16 %v683
  %v2100 = vunpack.c.l.b16 %v684
  %v2101 = vunpack.c.h.b16 %v684
  %v2102 = vunpack.c.l.b16 %v685
  %v2103 = vunpack.c.h.b16 %v685
  %v2104 = vunpack.c.l.b16 %v686
  %v2105 = vunpack.c.h.b16 %v686
  %v2106 = vunpack.c.l.b16 %v687
  %v2107 = vunpack.c.h.b16 %v687
  %v2108 = vunpack.c.l.b16 %v688
  %v2109 = vunpack.c.h.b16 %v688
  %v2110 = vunpack.c.l.b16 %v689
  %v2111 = vunpack.c.h.b16 %v689
  %v2112 = vunpack.c.l.b16 %v690
  %v2113 = vunpack.c.h.b16 %v690
  %v2114 = vunpack.c.l.b16 %v691
  %v2115 = vunpack.c.h.b16 %v691
  %v2116 = vunpack.c.l.b16 %v692
  %v2117 = vunpack.c.h.b16 %v692
  %v2118 = vunpack.c.l.b16 %v693
  %v2119 = vunpack.c.h.b16 %v693
  %v2120 = vunpack.c.l.b16 %v694
  %v2121 = vunpack.c.h.b16 %v694
  %v2122 = vunpack.c.l.b16 %v695
  %v2123 = vunpack.c.h.b16 %v695
  %v2124 = vunpack.c.l.b16 %v696
  %v2125 = vunpack.c.h.b16 %v696
  %v2126 = vunpack.c.l.b16 %v697
  %v2127 = vunpack.c.h.b16 %v697
  %v2128 = vunpack.c.l.b16 %v698
  %v2129 = vunpack.c.h.b16 %v698
  %v2130 = vunpack.c.l.b16 %v699
  %v2131 = vunpack.c.h.b16 %v699
  %v2132 = vunpack.c.l.b16 %v700
  %v2133 = vunpack.c.h.b16 %v700
  %v2134 = vunpack.c.l.b16 %v701
  %v2135 = vunpack.c.h.b16 %v701
  %v2136 = vunpack.c.l.b16 %v702
  %v2137 = vunpack.c.h.b16 %v702
  %v2138 = vunpack.c.l.b16 %v703
  %v2139 = vunpack.c.h.b16 %v703
  %v2140 = vunpack.c.l.b16 %v704
  %v2141 = vunpack.c.h.b16 %v704
  %v2142 = vunpack.c.l.b16 %v705
  %v2143 = vunpack.c.h.b16 %v705
  %v2144 = vunpack.c.l.b16 %v706
  %v2145 = vunpack.c.h.b16 %v706
  %v2146 = vunpack.c.l.b16 %v707
  %v2147 = vunpack.c.h.b16 %v707
  %v2148 = vunpack.c.l.b16 %v708
  %v2149 = vunpack.c.h.b16 %v708
  %v2150 = vunpack.c.l.b16 %v709
  %v2151 = vunpack.c.h.b16 %v709
  %v2152 = vunpack.c.l.b16 %v710
  %v2153 = vunpack.c.h.b16 %v710
  %v2154 = vunpack.c.l.b16 %v711
  %v2155 = vunpack.c.h.b16 %v711
  %v2156 = vunpack.c.l.b16 %v712
  %v2157 = vunpack.c.h.b16 %v712
  %v2158 = vunpack.c.l.b16 %v713
  %v2159 = vunpack.c.h.b16 %v713
  %v2160 = vunpack.c.l.b16 %v714
  %v2161 = vunpack.c.h.b16 %v714
  %v2162 = vunpack.c.l.b16 %v715
  %v2163 = vunpack.c.h.b16 %v715
  %v2164 = vunpack.c.l.b16 %v716
  %v2165 = vunpack.c.h.b16 %v716
  %v2166 = vunpack.c.l.b16 %v717
  %v2167 = vunpack.c.h.b16 %v717
  %v2168 = vunpack.c.l.b16 %v718
  %v2169 = vunpack.c.h.b16 %v718
  %v2170 = vunpack.c.l.b16 %v719
  %v2171 = vunpack.c.h.b16 %v719
  %v2172 = vunpack.c.l.b16 %v720
  %v2173 = vunpack.c.h.b16 %v720
  %v2174 = vunpack.c.l.b16 %v721
  %v2175 = vunpack.c.h.b16 %v721
  %v2176 = vunpack.c.l.b16 %v722
  %v2177 = vunpack.c.h.b16 %v722
  %v2178 = vunpack.c.l.b16 %v723
  %v2179 = vunpack.c.h.b16 %v723
  %v2180 = vunpack.c.l.b16 %v724
  %v2181 = vunpack.c.h.b16 %v724
  %v2182 = vunpack.c.l.b16 %v725
  %v2183 = vunpack.c.h.b16 %v725
  %v2184 = vunpack.c.l.b16 %v726
  %v2185 = vunpack.c.h.b16 %v726
  %v2186 = vunpack.c.l.b16 %v727
  %v2187 = vunpack.c.h.b16 %v727
  %v2188 = vunpack.c.l.b16 %v728
  %v2189 = vunpack.c.h.b16 %v728
  %v2190 = vunpack.c.l.b16 %v729
  %v2191 = vunpack.c.h.b16 %v729
  %v2192 = vunpack.c.l.b16 %v730
  %v2193 = vunpack.c.h.b16 %v730
  %v2194 = vunpack.c.l.b16 %v731
  %v2195 = vunpack.c.h.b16 %v731
  %v2196 = vunpack.c.l.b16 %v732
  %v2197 = vunpack.c.h.b16 %v732
  %v2198 = vunpack.c.l.b16 %v733
  %v2199 = vunpack.c.h.b16 %v733
  %v2200 = vunpack.c.l.b16 %v734
  %v2201 = vunpack.c.h.b16 %v734
  %v2202 = vunpack.c.l.b16 %v735
  %v2203 = vunpack.c.h.b16 %v735
  %v2204 = vunpack.c.l.b16 %v736
  %v2205 = vunpack.c.h.b16 %v736
  %v2206 = vunpack.c.l.b16 %v737
  %v2207 = vunpack.c.h.b16 %v737
  %v2208 = vunpack.c.l.b16 %v738
  %v2209 = vunpack.c.h.b16 %v738
  %v2210 = vunpack.c.l.b16 %v739
  %v2211 = vunpack.c.h.b16 %v739
  %v2212 = vunpack.c.l.b16 %v740
  %v2213 = vunpack.c.h.b16 %v740
  %v2214 = vunpack.c.l.b16 %v741
  %v2215 = vunpack.c.h.b16 %v741
  %v2216 = vunpack.c.l.b16 %v742
  %v2217 = vunpack.c.h.b16 %v742
  %v2218 = vunpack.c.l.b16 %v743
  %v2219 = vunpack.c.h.b16 %v743
  %v2220 = vunpack.c.l.b16 %v744
  %v2221 = vunpack.c.h.b16 %v744
  %v2222 = vunpack.c.l.b16 %v745
  %v2223 = vunpack.c.h.b16 %v745
  %v2224 = vunpack.c.l.b16 %v746
  %v2225 = vunpack.c.h.b16 %v746
  %v2226 = vunpack.c.l.b16 %v747
  %v2227 = vunpack.c.h.b16 %v747
  %v2228 = vunpack.c.l.b16 %v748
  %v2229 = vunpack.c.h.b16 %v748
  %v2230 = vunpack.c.l.b16 %v749
  %v2231 = vunpack.c.h.b16 %v749
  %v2232 = vunpack.c.l.b16 %v750
  %v2233 = vunpack.c.h.b16 %v750
  %v2234 = vunpack.c.l.b16 %v751
  %v2235 = vunpack.c.h.b16 %v751
  %v2236 = vunpack.c.l.b16 %v752
  %v2237 = vunpack.c.h.b16 %v752
  %v2238 = vunpack.c.l.b16 %v753
  %v2239 = vunpack.c.h.b16 %v753
  %v2240 = vunpack.c.l.b16 %v754
  %v2241 = vunpack.c.h.b16 %v754
  %v2242 = vunpack.c.l.b16 %v755
  %v2243 = vunpack.c.h.b16 %v755
  %v2244 = vunpack.c.l.b16 %v756
  %v2245 = vunpack.c.h.b16 %v756
  %v2246 = vunpack.c.l.b16 %v757
  %v2247 = vunpack.c.h.b16 %v757
  %v2248 = vunpack.c.l.b16 %v758
  %v2249 = vunpack.c.h.b16 %v758
  %v2250 = vunpack.c.l.b16 %v759
  %v2251 = vunpack.c.h.b16 %v759
  %v2252 = vunpack.c.l.b16 %v760
  %v2253 = vunpack.c.h.b16 %v760
  %v2254 = vunpack.c.l.b16 %v761
  %v2255 = vunpack.c.h.b16 %v761
  %v2256 = vunpack.c.l.b16 %v762
  %v2257 = vunpack.c.h.b16 %v762
  %v2258 = vunpack.c.l.b16 %v763
  %v2259 = vunpack.c.h.b16 %v763
  %v2260 = vunpack.c.l.b16 %v764
  %v2261 = vunpack.c.h.b16 %v764
  %v2262 = vunpack.c.l.b16 %v765
  %v2263 = vunpack.c.h.b16 %v765
  %v2264 = vunpack.c.l.b16 %v766
  %v2265 = vunpack.c.h.b16 %v766
  %v2266 = vunpack.c.l.b16 %v767
  %v2267 = vunpack.c.h.b16 %v767
  %v2268 = vunpack.c.l.b16 %v768
  %v2269 = vunpack.c.h.b16 %v768
  %v2270 = vunpack.c.l.b16 %v769
  %v2271 = vunpack.c.h.b16 %v769
  %v2272 = vunpack.c.l.b16 %v770
  %v2273 = vunpack.c.h.b16 %v770
  %v2274 = vunpack.c.l.b16 %v771
  %v2275 = vunpack.c.h.b16 %v771
  %v2276 = vunpack.c.l.b16 %v772
  %v2277 = vunpack.c.h.b16 %v772
  %v2278 = vunpack.c.l.b16 %v773
  %v2279 = vunpack.c.h.b16 %v773
  %v2280 = vunpack.c.l.b16 %v774
  %v2281 = vunpack.c.h.b16 %v774
  %v2282 = vunpack.c.l.b16 %v775
  %v2283 = vunpack.c.h.b16 %v775
  %v2284 = vunpack.c.l.b16 %v776
  %v2285 = vunpack.c.h.b16 %v776
  %v2286 = vunpack.c.l.b16 %v777
  %v2287 = vunpack.c.h.b16 %v777
  %v2288 = vunpack.c.l.b16 %v778
  %v2289 = vunpack.c.h.b16 %v778
  %v2290 = vunpack.c.l.b16 %v779
  %v2291 = vunpack.c.h.b16 %v779
  %v2292 = vunpack.c.l.b16 %v780
  %v2293 = vunpack.c.h.b16 %v780
  %v2294 = vunpack.c.l.b16 %v781
  %v2295 = vunpack.c.h.b16 %v781
  %v2296 = vunpack.c.l.b16 %v782
  %v2297 = vunpack.c.h.b16 %v782
  %v2298 = vunpack.c.l.b16 %v783
  %v2299 = vunpack.c.h.b16 %v783
  %v2300 = vunpack.c.l.b16 %v784
  %v2301 = vunpack.c.h.b16 %v784
  %v2302 = vunpack.c.l.b16 %v785
  %v2303 = vunpack.c.h.b16 %v785
  %v2304 = vunpack.c.l.b16 %v786
  %v2305 = vunpack.c.h.b16 %v786
  %v2306 = vunpack.c.l.b16 %v787
  %v2307 = vunpack.c.h.b16 %v787
  %v2308 = vunpack.c.l.b16 %v788
  %v2309 = vunpack.c.h.b16 %v788
  %v2310 = vunpack.c.l.b16 %v789
  %v2311 = vunpack.c.h.b16 %v789
  %v2312 = vunpack.c.l.b16 %v790
  %v2313 = vunpack.c.h.b16 %v790
  %v2314 = vunpack.c.l.b16 %v791
  %v2315 = vunpack.c.h.b16 %v791
  %v2316 = vunpack.c.l.b16 %v792
  %v2317 = vunpack.c.h.b16 %v792
  %v2318 = vunpack.c.l.b16 %v793
  %v2319 = vunpack.c.h.b16 %v793
  %v2320 = vunpack.c.l.b16 %v794
  %v2321 = vunpack.c.h.b16 %v794
  %v2322 = vunpack.c.l.b16 %v795
  %v2323 = vunpack.c.h.b16 %v795
  %v2324 = vunpack.c.l.b16 %v796
  %v2325 = vunpack.c.h.b16 %v796
  %v2326 = vunpack.c.l.b16 %v797
  %v2327 = vunpack.c.h.b16 %v797
  %v2328 = vunpack.c.l.b16 %v798
  %v2329 = vunpack.c.h.b16 %v798
  %v2330 = vunpack.c.l.b16 %v799
  %v2331 = vunpack.c.h.b16 %v799
  %v2332 = vunpack.c.l.b16 %v800
  %v2333 = vunpack.c.h.b16 %v800
  %v2334 = vunpack.c.l.b16 %v801
  %v2335 = vunpack.c.h.b16 %v801
  %v2336 = vunpack.c.l.b16 %v802
  %v2337 = vunpack.c.h.b16 %v802
  %v2338 = vunpack.c.l.b16 %v803
  %v2339 = vunpack.c.h.b16 %v803
  %v2340 = vunpack.c.l.b16 %v804
  %v2341 = vunpack.c.h.b16 %v804
  %v2342 = vunpack.c.l.b16 %v805
  %v2343 = vunpack.c.h.b16 %v805
  %v2344 = vunpack.c.l.b16 %v806
  %v2345 = vunpack.c.h.b16 %v806
  %v2346 = vunpack.c.l.b16 %v807
  %v2347 = vunpack.c.h.b16 %v807
  %v2348 = vunpack.c.l.b16 %v808
  %v2349 = vunpack.c.h.b16 %v808
  %v2350 = vunpack.c.l.b16 %v809
  %v2351 = vunpack.c.h.b16 %v809
  %v2352 = vunpack.c.l.b16 %v810
  %v2353 = vunpack.c.h.b16 %v810
  %v2354 = vunpack.c.l.b16 %v811
  %v2355 = vunpack.c.h.b16 %v811
  %v2356 = vunpack.c.l.b16 %v812
  %v2357 = vunpack.c.h.b16 %v812
  %v2358 = vunpack.c.l.b16 %v813
  %v2359 = vunpack.c.h.b16 %v813
  %v2360 = vunpack.c.l.b16 %v814
  %v2361 = vunpack.c.h.b16 %v814
  %v2362 = vunpack.c.l.b16 %v815
  %v2363 = vunpack.c.h.b16 %v815
  %v2364 = vunpack.c.l.b16 %v816
  %v2365 = vunpack.c.h.b16 %v816
  %v2366 = vunpack.c.l.b16 %v817
  %v2367 = vunpack.c.h.b16 %v817
  %v2368 = vunpack.c.l.b16 %v818
  %v2369 = vunpack.c.h.b16 %v818
  %v2370 = vunpack.c.l.b16 %v819
  %v2371 = vunpack.c.h.b16 %v819
  %v2372 = vunpack.c.l.b16 %v820
  %v2373 = vunpack.c.h.b16 %v820
  %v2374 = vunpack.c.l.b16 %v821
  %v2375 = vunpack.c.h.b16 %v821
  %v2376 = vunpack.c.l.b16 %v822
  %v2377 = vunpack.c.h.b16 %v822
  %v2378 = vunpack.c.l.b16 %v823
  %v2379 = vunpack.c.h.b16 %v823
  %v2380 = vunpack.c.l.b16 %v824
  %v2381 = vunpack.c.h.b16 %v824
  %v2382 = vunpack.c.l.b16 %v825
  %v2383 = vunpack.c.h.b16 %v825
  %v2384 = vunpack.c.l.b16 %v826
  %v2385 = vunpack.c.h.b16 %v826
  %v2386 = vunpack.c.l.b16 %v827
  %v2387 = vunpack.c.h.b16 %v827
  %v2388 = vunpack.c.l.b16 %v828
  %v2389 = vunpack.c.h.b16 %v828
  %v2390 = vunpack.c.l.b16 %v829
  %v2391 = vunpack.c.h.b16 %v829
  %v2392 = vunpack.c.l.b16 %v830
  %v2393 = vunpack.c.h.b16 %v830
  %v2394 = vunpack.c.l.b16 %v831
  %v2395 = vunpack.c.h.b16 %v831
  %v2396 = vunpack.c.l.b16 %v832
  %v2397 = vunpack.c.h.b16 %v832
  %v2398 = vunpack.c.l.b16 %v833
  %v2399 = vunpack.c.h.b16 %v833
  %v2400 = vunpack.c.l.b16 %v834
  %v2401 = vunpack.c.h.b16 %v834
  %v2402 = vunpack.c.l.b16 %v835
  %v2403 = vunpack.c.h.b16 %v835
  %v2404 = vunpack.c.l.b16 %v836
  %v2405 = vunpack.c.h.b16 %v836
  %v2406 = vunpack.c.l.b16 %v837
  %v2407 = vunpack.c.h.b16 %v837
  %v2408 = vunpack.c.l.b16 %v838
  %v2409 = vunpack.c.h.b16 %v838
  %v2410 = vunpack.c.l.b16 %v839
  %v2411 = vunpack.c.h.b16 %v839
  %v2412 = vunpack.c.l.b16 %v840
  %v2413 = vunpack.c.h.b16 %v840
  %v2414 = vunpack.c.l.b16 %v841
  %v2415 = vunpack.c.h.b16 %v841
  %v2416 = vunpack.c.l.b16 %v842
  %v2417 = vunpack.c.h.b16 %v842
  %v2418 = vunpack.c.l.b16 %v843
  %v2419 = vunpack.c.h.b16 %v843
  %v2420 = vunpack.c.l.b16 %v844
  %v2421 = vunpack.c.h.b16 %v844
  %v2422 = vunpack.c.l.b16 %v845
  %v2423 = vunpack.c.h.b16 %v845
  %v2424 = vunpack.c.l.b16 %v846
  %v2425 = vunpack.c.h.b16 %v846
  %v2426 = vunpack.c.l.b16 %v847
  %v2427 = vunpack.c.h.b16 %v847
  %v2428 = vunpack.c.l.b16 %v848
  %v2429 = vunpack.c.h.b16 %v848
  %v2430 = vunpack.c.l.b16 %v849
  %v2431 = vunpack.c.h.b16 %v849
  %v2432 = vunpack.c.l.b16 %v850
  %v2433 = vunpack.c.h.b16 %v850
  %v2434 = vunpack.c.l.b16 %v851
  %v2435 = vunpack.c.h.b16 %v851
  %v2436 = vunpack.c.l.b16 %v852
  %v2437 = vunpack.c.h.b16 %v852
  %v2438 = vunpack.c.l.b16 %v853
  %v2439 = vunpack.c.h.b16 %v853
  %v2440 = vunpack.c.l.b16 %v854
  %v2441 = vunpack.c.h.b16 %v854
  %v2442 = vunpack.c.l.b16 %v855
  %v2443 = vunpack.c.h.b16 %v855
  %v2444 = vunpack.c.l.b16 %v856
  %v2445 = vunpack.c.h.b16 %v856
  %v2446 = vunpack.c.l.b16 %v857
  %v2447 = vunpack.c.h.b16 %v857
  %v2448 = vunpack.c.l.b16 %v858
  %v2449 = vunpack.c.h.b16 %v858
  %v2450 = vunpack.c.l.b16 %v859
  %v2451 = vunpack.c.h.b16 %v859
  %v2452 = vunpack.c.l.b16 %v860
  %v2453 = vunpack.c.h.b16 %v860
  %v2454 = vunpack.c.l.b16 %v861
  %v2455 = vunpack.c.h.b16 %v861
  %v2456 = vunpack.c.l.b16 %v862
  %v2457 = vunpack.c.h.b16 %v862
  %v2458 = vunpack.c.l.b16 %v863
  %v2459 = vunpack.c.h.b16 %v863
  %v2460 = vunpack.c.l.b16 %v864
  %v2461 = vunpack.c.h.b16 %v864
  %v2462 = vunpack.c.l.b16 %v865
  %v2463 = vunpack.c.h.b16 %v865
  %v2464 = vunpack.c.l.b16 %v866
  %v2465 = vunpack.c.h.b16 %v866
  %v2466 = vunpack.c.l.b16 %v867
  %v2467 = vunpack.c.h.b16 %v867
  %v2468 = vunpack.c.l.b16 %v868
  %v2469 = vunpack.c.h.b16 %v868
  %v2470 = vunpack.c.l.b16 %v869
  %v2471 = vunpack.c.h.b16 %v869
  %v2472 = vunpack.c.l.b16 %v870
  %v2473 = vunpack.c.h.b16 %v870
  %v2474 = vunpack.c.l.b16 %v871
  %v2475 = vunpack.c.h.b16 %v871
  %v2476 = vunpack.c.l.b16 %v872
  %v2477 = vunpack.c.h.b16 %v872
  %v2478 = vunpack.c.l.b16 %v873
  %v2479 = vunpack.c.h.b16 %v873
  %v2480 = vunpack.c.l.b16 %v874
  %v2481 = vunpack.c.h.b16 %v874
  %v2482 = vunpack.c.l.b16 %v875
  %v2483 = vunpack.c.h.b16 %v875
  %v2484 = vunpack.c.l.b16 %v876
  %v2485 = vunpack.c.h.b16 %v876
  %v2486 = vunpack.c.l.b16 %v877
  %v2487 = vunpack.c.h.b16 %v877
  %v2488 = vunpack.c.l.b16 %v878
  %v2489 = vunpack.c.h.b16 %v878
  %v2490 = vunpack.c.l.b16 %v879
  %v2491 = vunpack.c.h.b16 %v879
  %v2492 = vunpack.c.l.b16 %v880
  %v2493 = vunpack.c.h.b16 %v880
  %v2494 = vunpack.c.l.b16 %v881
  %v2495 = vunpack.c.h.b16 %v881
  %v2496 = vunpack.c.l.b16 %v882
  %v2497 = vunpack.c.h.b16 %v882
  %v2498 = vunpack.c.l.b16 %v883
  %v2499 = vunpack.c.h.b16 %v883
  %v2500 = vunpack.c.l.b16 %v884
  %v2501 = vunpack.c.h.b16 %v884
  %v2502 = vunpack.c.l.b16 %v885
  %v2503 = vunpack.c.h.b16 %v885
  %v2504 = vunpack.c.l.b16 %v886
  %v2505 = vunpack.c.h.b16 %v886
  %v2506 = vunpack.c.l.b16 %v887
  %v2507 = vunpack.c.h.b16 %v887
  %v2508 = vunpack.c.l.b16 %v888
  %v2509 = vunpack.c.h.b16 %v888
  %v2510 = vunpack.c.l.b16 %v889
  %v2511 = vunpack.c.h.b16 %v889
  %v2512 = vunpack.c.l.b16 %v890
  %v2513 = vunpack.c.h.b16 %v890
  %v2514 = vunpack.c.l.b16 %v891
  %v2515 = vunpack.c.h.b16 %v891
  %v2516 = vunpack.c.l.b16 %v892
  %v2517 = vunpack.c.h.b16 %v892
  %v2518 = vunpack.c.l.b16 %v893
  %v2519 = vunpack.c.h.b16 %v893
  %v2520 = vunpack.c.l.b16 %v894
  %v2521 = vunpack.c.h.b16 %v894
  %v2522 = vunpack.c.l.b16 %v895
  %v2523 = vunpack.c.h.b16 %v895
  %v2524 = vunpack.c.l.b16 %v896
  %v2525 = vunpack.c.h.b16 %v896
  %v2526 = vunpack.c.l.b16 %v897
  %v2527 = vunpack.c.h.b16 %v897
  %v2528 = vunpack.c.l.b16 %v898
  %v2529 = vunpack.c.h.b16 %v898
  %v2530 = vunpack.c.l.b16 %v899
  %v2531 = vunpack.c.h.b16 %v899
  %v2532 = vunpack.c.l.b16 %v900
  %v2533 = vunpack.c.h.b16 %v900
  %v2534 = vunpack.c.l.b16 %v901
  %v2535 = vunpack.c.h.b16 %v901
  %v2536 = vunpack.c.l.b16 %v902
  %v2537 = vunpack.c.h.b16 %v902
  %v2538 = vunpack.c.l.b16 %v903
  %v2539 = vunpack.c.h.b16 %v903
  %v2540 = vunpack.c.l.b16 %v904
  %v2541 = vunpack.c.h.b16 %v904
  %v2542 = vunpack.c.l.b16 %v905
  %v2543 = vunpack.c.h.b16 %v905
  %v2544 = vunpack.c.l.b16 %v906
  %v2545 = vunpack.c.h.b16 %v906
  %v2546 = vunpack.c.l.b16 %v907
  %v2547 = vunpack.c.h.b16 %v907
  %v2548 = vunpack.c.l.b16 %v908
  %v2549 = vunpack.c.h.b16 %v908
  %v2550 = vunpack.c.l.b16 %v909
  %v2551 = vunpack.c.h.b16 %v909
  %v2552 = vunpack.c.l.b16 %v910
  %v2553 = vunpack.c.h.b16 %v910
  %v2554 = vunpack.c.l.b16 %v911
  %v2555 = vunpack.c.h.b16 %v911
  %v2556 = vunpack.c.l.b16 %v912
  %v2557 = vunpack.c.h.b16 %v912
  %v2558 = vunpack.c.l.b16 %v913
  %v2559 = vunpack.c.h.b16 %v913
  %v2560 = vunpack.c.l.b16 %v914
  %v2561 = vunpack.c.h.b16 %v914
  %v2562 = vunpack.c.l.b16 %v915
  %v2563 = vunpack.c.h.b16 %v915
  %v2564 = vunpack.c.l.b16 %v916
  %v2565 = vunpack.c.h.b16 %v916
  %v2566 = vunpack.c.l.b16 %v917
  %v2567 = vunpack.c.h.b16 %v917
  %v2568 = vunpack.c.l.b16 %v918
  %v2569 = vunpack.c.h.b16 %v918
  %v2570 = vunpack.c.l.b16 %v919
  %v2571 = vunpack.c.h.b16 %v919
  %v2572 = vunpack.c.l.b16 %v920
  %v2573 = vunpack.c.h.b16 %v920
  %v2574 = vunpack.c.l.b16 %v921
  %v2575 = vunpack.c.h.b16 %v921
  %v2576 = vunpack.c.l.b16 %v922
  %v2577 = vunpack.c.h.b16 %v922
  %v2578 = vunpack.c.l.b16 %v923
  %v2579 = vunpack.c.h.b16 %v923
  %v2580 = vunpack.c.l.b16 %v924
  %v2581 = vunpack.c.h.b16 %v924
  %v2582 = vunpack.c.l.b16 %v925
  %v2583 = vunpack.c.h.b16 %v925
  %v2584 = vunpack.c.l.b16 %v926
  %v2585 = vunpack.c.h.b16 %v926
  %v2586 = vunpack.c.l.b16 %v927
  %v2587 = vunpack.c.h.b16 %v927
  %v2588 = vunpack.c.l.b16 %v928
  %v2589 = vunpack.c.h.b16 %v928
  %v2590 = vunpack.c.l.b16 %v929
  %v2591 = vunpack.c.h.b16 %v929
  %v2592 = vunpack.c.l.b16 %v930
  %v2593 = vunpack.c.h.b16 %v930
  %v2594 = vunpack.c.l.b16 %v931
  %v2595 = vunpack.c.h.b16 %v931
  %v2596 = vunpack.c.l.b16 %v932
  %v2597 = vunpack.c.h.b16 %v932
  %v2598 = vunpack.c.l.b16 %v933
  %v2599 = vunpack.c.h.b16 %v933
  %v2600 = vunpack.c.l.b16 %v934
  %v2601 = vunpack.c.h.b16 %v934
  %v2602 = vunpack.c.l.b16 %v935
  %v2603 = vunpack.c.h.b16 %v935
  %v2604 = vunpack.c.l.b16 %v936
  %v2605 = vunpack.c.h.b16 %v936
  %v2606 = vunpack.c.l.b16 %v937
  %v2607 = vunpack.c.h.b16 %v937
  %v2608 = vunpack.c.l.b16 %v938
  %v2609 = vunpack.c.h.b16 %v938
  %v2610 = vunpack.c.l.b16 %v939
  %v2611 = vunpack.c.h.b16 %v939
  %v2612 = vunpack.c.l.b16 %v940
  %v2613 = vunpack.c.h.b16 %v940
  %v2614 = vunpack.c.l.b16 %v941
  %v2615 = vunpack.c.h.b16 %v941
  %v2616 = vunpack.c.l.b16 %v942
  %v2617 = vunpack.c.h.b16 %v942
  %v2618 = vunpack.c.l.b16 %v943
  %v2619 = vunpack.c.h.b16 %v943
  %v2620 = vunpack.c.l.b16 %v944
  %v2621 = vunpack.c.h.b16 %v944
  %v2622 = vunpack.c.l.b16 %v945
  %v2623 = vunpack.c.h.b16 %v945
  %v2624 = vunpack.c.l.b16 %v946
  %v2625 = vunpack.c.h.b16 %v946
  %v2626 = vunpack.c.l.b16 %v947
  %v2627 = vunpack.c.h.b16 %v947
  %v2628 = vunpack.c.l.b16 %v948
  %v2629 = vunpack.c.h.b16 %v948
  %v2630 = vunpack.c.l.b16 %v949
  %v2631 = vunpack.c.h.b16 %v949
  %v2632 = vunpack.c.l.b16 %v950
  %v2633 = vunpack.c.h.b16 %v950
  %v2634 = vunpack.c.l.b16 %v951
  %v2635 = vunpack.c.h.b16 %v951
  %v2636 = vunpack.c.l.b16 %v952
  %v2637 = vunpack.c.h.b16 %v952
  %v2638 = vunpack.c.l.b16 %v953
  %v2639 = vunpack.c.h.b16 %v953
  %v2640 = vunpack.c.l.b16 %v954
  %v2641 = vunpack.c.h.b16 %v954
  %v2642 = vunpack.c.l.b16 %v955
  %v2643 = vunpack.c.h.b16 %v955
  %v2644 = vunpack.c.l.b16 %v956
  %v2645 = vunpack.c.h.b16 %v956
  %v2646 = vunpack.c.l.b16 %v957
  %v2647 = vunpack.c.h.b16 %v957
  %v2648 = vunpack.c.l.b16 %v958
  %v2649 = vunpack.c.h.b16 %v958
  %v2650 = vunpack.c.l.b16 %v959
  %v2651 = vunpack.c.h.b16 %v959
  %v2652 = vunpack.c.l.b16 %v960
  %v2653 = vunpack.c.h.b16 %v960
  %v2654 = vunpack.c.l.b16 %v961
  %v2655 = vunpack.c.h.b16 %v961
  %v2656 = vunpack.c.l.b16 %v962
  %v2657 = vunpack.c.h.b16 %v962
  %v2658 = vunpack.c.l.b16 %v963
  %v2659 = vunpack.c.h.b16 %v963
  %v2660 = vunpack.c.l.b16 %v964
  %v2661 = vunpack.c.h.b16 %v964
  %v2662 = vunpack.c.l.b16 %v965
  %v2663 = vunpack.c.h.b16 %v965
  %v2664 = vunpack.c.l.b16 %v966
  %v2665 = vunpack.c.h.b16 %v966
  %v2666 = vunpack.c.l.b16 %v967
  %v2667 = vunpack.c.h.b16 %v967
  %v2668 = vunpack.c.l.b16 %v968
  %v2669 = vunpack.c.h.b16 %v968
  %v2670 = vunpack.c.l.b16 %v969
  %v2671 = vunpack.c.h.b16 %v969
  %v2672 = vunpack.c.l.b16 %v970
  %v2673 = vunpack.c.h.b16 %v970
  %v2674 = vunpack.c.l.b16 %v971
  %v2675 = vunpack.c.h.b16 %v971
  %v2676 = vunpack.c.l.b16 %v972
  %v2677 = vunpack.c.h.b16 %v972
  %v2678 = vunpack.c.l.b16 %v973
  %v2679 = vunpack.c.h.b16 %v973
  %v2680 = vunpack.c.l.b16 %v974
  %v2681 = vunpack.c.h.b16 %v974
  %v2682 = vunpack.c.l.b16 %v975
  %v2683 = vunpack.c.h.b16 %v975
  %v2684 = vunpack.c.l.b16 %v976
  %v2685 = vunpack.c.h.b16 %v976
  %v2686 = vunpack.c.l.b16 %v977
  %v2687 = vunpack.c.h.b16 %v977
  %v2688 = vunpack.c.l.b16 %v978
  %v2689 = vunpack.c.h.b16 %v978
  %v2690 = vunpack.c.l.b16 %v979
  %v2691 = vunpack.c.h.b16 %v979
  %v2692 = vunpack.c.l.b16 %v980
  %v2693 = vunpack.c.h.b16 %v980
  %v2694 = vunpack.c.l.b16 %v981
  %v2695 = vunpack.c.h.b16 %v981
  %v2696 = vunpack.c.l.b16 %v982
  %v2697 = vunpack.c.h.b16 %v982
  %v2698 = vunpack.c.l.b16 %v983
  %v2699 = vunpack.c.h.b16 %v983
  %v2700 = vunpack.c.l.b16 %v984
  %v2701 = vunpack.c.h.b16 %v984
  %v2702 = vunpack.c.l.b16 %v985
  %v2703 = vunpack.c.h.b16 %v985
  %v2704 = vunpack.c.l.b16 %v986
  %v2705 = vunpack.c.h.b16 %v986
  %v2706 = vunpack.c.l.b16 %v987
  %v2707 = vunpack.c.h.b16 %v987
  %v2708 = vunpack.c.l.b16 %v988
  %v2709 = vunpack.c.h.b16 %v988
  %v2710 = vunpack.c.l.b16 %v989
  %v2711 = vunpack.c.h.b16 %v989
  %v2712 = vunpack.c.l.b16 %v990
  %v2713 = vunpack.c.h.b16 %v990
  %v2714 = vunpack.c.l.b16 %v991
  %v2715 = vunpack.c.h.b16 %v991
  %v2716 = vunpack.c.l.b16 %v992
  %v2717 = vunpack.c.h.b16 %v992
  %v2718 = vunpack.c.l.b16 %v993
  %v2719 = vunpack.c.h.b16 %v993
  %v2720 = vunpack.c.l.b16 %v994
  %v2721 = vunpack.c.h.b16 %v994
  %v2722 = vunpack.c.l.b16 %v995
  %v2723 = vunpack.c.h.b16 %v995
  %v2724 = vpack.c.b16 %v1576, %v1572
  %v2725 = vpack.c.b16 %v1577, %v1573
  %v2726 = vpack.c.b16 %v1578, %v1574
  %v2727 = vpack.c.b16 %v1579, %v1575
  %v2728 = vpack.c.b16 %v1584, %v1580
  %v2729 = vpack.c.b16 %v1585, %v1581
  %v2730 = vpack.c.b16 %v1586, %v1582
  %v2731 = vpack.c.b16 %v1587, %v1583
  %v2732 = vpack.c.b16 %v1592, %v1588
  %v2733 = vpack.c.b16 %v1593, %v1589
  %v2734 = vpack.c.b16 %v1594, %v1590
  %v2735 = vpack.c.b16 %v1595, %v1591
  %v2736 = vpack.c.b16 %v1600, %v1596
  %v2737 = vpack.c.b16 %v1601, %v1597
  %v2738 = vpack.c.b16 %v1602, %v1598
  %v2739 = vpack.c.b16 %v1603, %v1599
  %v2740 = vpack.c.b16 %v1608, %v1604
  %v2741 = vpack.c.b16 %v1609, %v1605
  %v2742 = vpack.c.b16 %v1610, %v1606
  %v2743 = vpack.c.b16 %v1611, %v1607
  %v2744 = vpack.c.b16 %v1616, %v1612
  %v2745 = vpack.c.b16 %v1617, %v1613
  %v2746 = vpack.c.b16 %v1618, %v1614
  %v2747 = vpack.c.b16 %v1619, %v1615
  %v2748 = vpack.c.b16 %v1624, %v1620
  %v2749 = vpack.c.b16 %v1625, %v1621
  %v2750 = vpack.c.b16 %v1626, %v1622
  %v2751 = vpack.c.b16 %v1627, %v1623
  %v2752 = vpack.c.b16 %v1632, %v1628
  %v2753 = vpack.c.b16 %v1633, %v1629
  %v2754 = vpack.c.b16 %v1634, %v1630
  %v2755 = vpack.c.b16 %v1635, %v1631
  %v2756 = vpack.c.b16 %v1640, %v1636
  %v2757 = vpack.c.b16 %v1641, %v1637
  %v2758 = vpack.c.b16 %v1642, %v1638
  %v2759 = vpack.c.b16 %v1643, %v1639
  %v2760 = vpack.c.b16 %v1648, %v1644
  %v2761 = vpack.c.b16 %v1649, %v1645
  %v2762 = vpack.c.b16 %v1650, %v1646
  %v2763 = vpack.c.b16 %v1651, %v1647
  %v2764 = vpack.c.b16 %v1656, %v1652
  %v2765 = vpack.c.b16 %v1657, %v1653
  %v2766 = vpack.c.b16 %v1658, %v1654
  %v2767 = vpack.c.b16 %v1659, %v1655
  %v2768 = vpack.c.b16 %v1664, %v1660
  %v2769 = vpack.c.b16 %v1665, %v1661
  %v2770 = vpack.c.b16 %v1666, %v1662
  %v2771 = vpack.c.b16 %v1667, %v1663
  %v2772 = vpack.c.b16 %v1672, %v1668
  %v2773 = vpack.c.b16 %v1673, %v1669
  %v2774 = vpack.c.b16 %v1674, %v1670
  %v2775 = vpack.c.b16 %v1675, %v1671
  %v2776 = vpack.c.b16 %v1680, %v1676
  %v2777 = vpack.c.b16 %v1681, %v1677
  %v2778 = vpack.c.b16 %v1682, %v1678
  %v2779 = vpack.c.b16 %v1683, %v1679
  %v2780 = vpack.c.b16 %v1688, %v1684
  %v2781 = vpack.c.b16 %v1689, %v1685
  %v2782 = vpack.c.b16 %v1690, %v1686
  %v2783 = vpack.c.b16 %v1691, %v1687
  %v2784 = vpack.c.b16 %v1696, %v1692
  %v2785 = vpack.c.b16 %v1697, %v1693
  %v2786 = vpack.c.b16 %v1698, %v1694
  %v2787 = vpack.c.b16 %v1699, %v1695
  %v2788 = vpack.c.b16 %v1704, %v1700
  %v2789 = vpack.c.b16 %v1705, %v1701
  %v2790 = vpack.c.b16 %v1706, %v1702
  %v2791 = vpack.c.b16 %v1707, %v1703
  %v2792 = vpack.c.b16 %v1712, %v1708
  %v2793 = vpack.c.b16 %v1713, %v1709
  %v2794 = vpack.c.b16 %v1714, %v1710
  %v2795 = vpack.c.b16 %v1715, %v1711
  %v2796 = vpack.c.b16 %v1720, %v1716
  %v2797 = vpack.c.b16 %v1721, %v1717
  %v2798 = vpack.c.b16 %v1722, %v1718
  %v2799 = vpack.c.b16 %v1723, %v1719
  %v2800 = vpack.c.b16 %v1728, %v1724
  %v2801 = vpack.c.b16 %v1729, %v1725
  %v2802 = vpack.c.b16 %v1730, %v1726
  %v2803 = vpack.c.b16 %v1731, %v1727
  %v2804 = vpack.c.b16 %v1736, %v1732
  %v2805 = vpack.c.b16 %v1737, %v1733
  %v2806 = vpack.c.b16 %v1738, %v1734
  %v2807 = vpack.c.b16 %v1739, %v1735
  %v2808 = vpack.c.b16 %v1744, %v1740
  %v2809 = vpack.c.b16 %v1745, %v1741
  %v2810 = vpack.c.b16 %v1746, %v1742
  %v2811 = vpack.c.b16 %v1747, %v1743
  %v2812 = vpack.c.b16 %v1752, %v1748
  %v2813 = vpack.c.b16 %v1753, %v1749
  %v2814 = vpack.c.b16 %v1754, %v1750
  %v2815 = vpack.c.b16 %v1755, %v1751
  %v2816 = vpack.c.b16 %v1760, %v1756
  %v2817 = vpack.c.b16 %v1761, %v1757
  %v2818 = vpack.c.b16 %v1762, %v1758
  %v2819 = vpack.c.b16 %v1763, %v1759
  %v2820 = vpack.c.b16 %v1768, %v1764
  %v2821 = vpack.c.b16 %v1769, %v1765
  %v2822 = vpack.c.b16 %v1770, %v1766
  %v2823 = vpack.c.b16 %v1771, %v1767
  %v2824 = vpack.c.b16 %v1776, %v1772
  %v2825 = vpack.c.b16 %v1777, %v1773
  %v2826 = vpack.c.b16 %v1778, %v1774
  %v2827 = vpack.c.b16 %v1779, %v1775
  %v2828 = vpack.c.b16 %v1784, %v1780
  %v2829 = vpack.c.b16 %v1785, %v1781
  %v2830 = vpack.c.b16 %v1786, %v1782
  %v2831 = vpack.c.b16 %v1787, %v1783
  %v2832 = vpack.c.b16 %v1792, %v1788
  %v2833 = vpack.c.b16 %v1793, %v1789
  %v2834 = vpack.c.b16 %v1794, %v1790
  %v2835 = vpack.c.b16 %v1795, %v1791
  %v2836 = vpack.c.b16 %v1800, %v1796
  %v2837 = vpack.c.b16 %v1801, %v1797
  %v2838 = vpack.c.b16 %v1802, %v1798
  %v2839 = vpack.c.b16 %v1803, %v1799
  %v2840 = vpack.c.b16 %v1808, %v1804
  %v2841 = vpack.c.b16 %v1809, %v1805
  %v2842 = vpack.c.b16 %v1810, %v1806
  %v2843 = vpack.c.b16 %v1811, %v1807
  %v2844 = vpack.c.b16 %v1816, %v1812
  %v2845 = vpack.c.b16 %v1817, %v1813
  %v2846 = vpack.c.b16 %v1818, %v1814
  %v2847 = vpack.c.b16 %v1819, %v1815
  %v2848 = vpack.c.b16 %v1824, %v1820
  %v2849 = vpack.c.b16 %v1825, %v1821
  %v2850 = vpack.c.b16 %v1826, %v1822
  %v2851 = vpack.c.b16 %v1827, %v1823
  %v2852 = vpack.c.b16 %v1832, %v1828
  %v2853 = vpack.c.b16 %v1833, %v1829
  %v2854 = vpack.c.b16 %v1834, %v1830
  %v2855 = vpack.c.b16 %v1835, %v1831
  %v2856 = vpack.c.b16 %v1840, %v1836
  %v2857 = vpack.c.b16 %v1841, %v1837
  %v2858 = vpack.c.b16 %v1842, %v1838
  %v2859 = vpack.c.b16 %v1843, %v1839
  %v2860 = vpack.c.b16 %v1848, %v1844
  %v2861 = vpack.c.b16 %v1849, %v1845
  %v2862 = vpack.c.b16 %v1850, %v1846
  %v2863 = vpack.c.b16 %v1851, %v1847
  %v2864 = vpack.c.b16 %v1856, %v1852
  %v2865 = vpack.c.b16 %v1857, %v1853
  %v2866 = vpack.c.b16 %v1858, %v1854
  %v2867 = vpack.c.b16 %v1859, %v1855
  %v2868 = vpack.c.b16 %v1864, %v1860
  %v2869 = vpack.c.b16 %v1865, %v1861
  %v2870 = vpack.c.b16 %v1866, %v1862
  %v2871 = vpack.c.b16 %v1867, %v1863
  %v2872 = vpack.c.b16 %v1872, %v1868
  %v2873 = vpack.c.b16 %v1873, %v1869
  %v2874 = vpack.c.b16 %v1874, %v1870
  %v2875 = vpack.c.b16 %v1875, %v1871
  %v2876 = vpack.c.b16 %v1880, %v1876
  %v2877 = vpack.c.b16 %v1881, %v1877
  %v2878 = vpack.c.b16 %v1882, %v1878
  %v2879 = vpack.c.b16 %v1883, %v1879
  %v2880 = vpack.c.b16 %v1888, %v1884
  %v2881 = vpack.c.b16 %v1889, %v1885
  %v2882 = vpack.c.b16 %v1890, %v1886
  %v2883 = vpack.c.b16 %v1891, %v1887
  %v2884 = vpack.c.b16 %v1896, %v1892
  %v2885 = vpack.c.b16 %v1897, %v1893
  %v2886 = vpack.c.b16 %v1898, %v1894
  %v2887 = vpack.c.b16 %v1899, %v1895
  %v2888 = vpack.c.b16 %v1904, %v1900
  %v2889 = vpack.c.b16 %v1905, %v1901
  %v2890 = vpack.c.b16 %v1906, %v1902
  %v2891 = vpack.c.b16 %v1907, %v1903
  %v2892 = vpack.c.b16 %v1912, %v1908
  %v2893 = vpack.c.b16 %v1913, %v1909
  %v2894 = vpack.c.b16 %v1914, %v1910
  %v2895 = vpack.c.b16 %v1915, %v1911
  %v2896 = vpack.c.b16 %v1920, %v1916
  %v2897 = vpack.c.b16 %v1921, %v1917
  %v2898 = vpack.c.b16 %v1922, %v1918
  %v2899 = vpack.c.b16 %v1923, %v1919
  %v2900 = vpack.c.b16 %v1928, %v1924
  %v2901 = vpack.c.b16 %v1929, %v1925
  %v2902 = vpack.c.b16 %v1930, %v1926
  %v2903 = vpack.c.b16 %v1931, %v1927
  %v2904 = vpack.c.b16 %v1936, %v1932
  %v2905 = vpack.c.b16 %v1937, %v1933
  %v2906 = vpack.c.b16 %v1938, %v1934
  %v2907 = vpack.c.b16 %v1939, %v1935
  %v2908 = vpack.c.b16 %v1944, %v1940
  %v2909 = vpack.c.b16 %v1945, %v1941
  %v2910 = vpack.c.b16 %v1946, %v1942
  %v2911 = vpack.c.b16 %v1947, %v1943
  %v2912 = vpack.c.b16 %v1952, %v1948
  %v2913 = vpack.c.b16 %v1953, %v1949
  %v2914 = vpack.c.b16 %v1954, %v1950
  %v2915 = vpack.c.b16 %v1955, %v1951
  %v2916 = vpack.c.b16 %v1960, %v1956
  %v2917 = vpack.c.b16 %v1961, %v1957
  %v2918 = vpack.c.b16 %v1962, %v1958
  %v2919 = vpack.c.b16 %v1963, %v1959
  %v2920 = vpack.c.b16 %v1968, %v1964
  %v2921 = vpack.c.b16 %v1969, %v1965
  %v2922 = vpack.c.b16 %v1970, %v1966
  %v2923 = vpack.c.b16 %v1971, %v1967
  %v2924 = vpack.c.b16 %v1976, %v1972
  %v2925 = vpack.c.b16 %v1977, %v1973
  %v2926 = vpack.c.b16 %v1978, %v1974
  %v2927 = vpack.c.b16 %v1979, %v1975
  %v2928 = vpack.c.b16 %v1984, %v1980
  %v2929 = vpack.c.b16 %v1985, %v1981
  %v2930 = vpack.c.b16 %v1986, %v1982
  %v2931 = vpack.c.b16 %v1987, %v1983
  %v2932 = vpack.c.b16 %v1992, %v1988
  %v2933 = vpack.c.b16 %v1993, %v1989
  %v2934 = vpack.c.b16 %v1994, %v1990
  %v2935 = vpack.c.b16 %v1995, %v1991
  %v2936 = vpack.c.b16 %v2000, %v1996
  %v2937 = vpack.c.b16 %v2001, %v1997
  %v2938 = vpack.c.b16 %v2002, %v1998
  %v2939 = vpack.c.b16 %v2003, %v1999
  %v2940 = vpack.c.b16 %v2008, %v2004
  %v2941 = vpack.c.b16 %v2009, %v2005
  %v2942 = vpack.c.b16 %v2010, %v2006
  %v2943 = vpack.c.b16 %v2011, %v2007
  %v2944 = vpack.c.b16 %v2016, %v2012
  %v2945 = vpack.c.b16 %v2017, %v2013
  %v2946 = vpack.c.b16 %v2018, %v2014
  %v2947 = vpack.c.b16 %v2019, %v2015
  %v2948 = vpack.c.b16 %v2024, %v2020
  %v2949 = vpack.c.b16 %v2025, %v2021
  %v2950 = vpack.c.b16 %v2026, %v2022
  %v2951 = vpack.c.b16 %v2027, %v2023
  %v2952 = vpack.c.b16 %v2032, %v2028
  %v2953 = vpack.c.b16 %v2033, %v2029
  %v2954 = vpack.c.b16 %v2034, %v2030
  %v2955 = vpack.c.b16 %v2035, %v2031
  %v2956 = vpack.c.b16 %v2040, %v2036
  %v2957 = vpack.c.b16 %v2041, %v2037
  %v2958 = vpack.c.b16 %v2042, %v2038
  %v2959 = vpack.c.b16 %v2043, %v2039
  %v2960 = vpack.c.b16 %v2048, %v2044
  %v2961 = vpack.c.b16 %v2049, %v2045
  %v2962 = vpack.c.b16 %v2050, %v2046
  %v2963 = vpack.c.b16 %v2051, %v2047
  %v2964 = vpack.c.b16 %v2056, %v2052
  %v2965 = vpack.c.b16 %v2057, %v2053
  %v2966 = vpack.c.b16 %v2058, %v2054
  %v2967 = vpack.c.b16 %v2059, %v2055
  %v2968 = vpack.c.b16 %v2064, %v2060
  %v2969 = vpack.c.b16 %v2065, %v2061
  %v2970 = vpack.c.b16 %v2066, %v2062
  %v2971 = vpack.c.b16 %v2067, %v2063
  %v2972 = vpack.c.b16 %v2072, %v2068
  %v2973 = vpack.c.b16 %v2073, %v2069
  %v2974 = vpack.c.b16 %v2074, %v2070
  %v2975 = vpack.c.b16 %v2075, %v2071
  %v2976 = vpack.c.b16 %v2080, %v2076
  %v2977 = vpack.c.b16 %v2081, %v2077
  %v2978 = vpack.c.b16 %v2082, %v2078
  %v2979 = vpack.c.b16 %v2083, %v2079
  %v2980 = vpack.c.b16 %v2088, %v2084
  %v2981 = vpack.c.b16 %v2089, %v2085
  %v2982 = vpack.c.b16 %v2090, %v2086
  %v2983 = vpack.c.b16 %v2091, %v2087
  %v2984 = vpack.c.b16 %v2096, %v2092
  %v2985 = vpack.c.b16 %v2097, %v2093
  %v2986 = vpack.c.b16 %v2098, %v2094
  %v2987 = vpack.c.b16 %v2099, %v2095
  %v2988 = vpack.c.b16 %v2104, %v2100
  %v2989 = vpack.c.b16 %v2105, %v2101
  %v2990 = vpack.c.b16 %v2106, %v2102
  %v2991 = vpack.c.b16 %v2107, %v2103
  %v2992 = vpack.c.b16 %v2112, %v2108
  %v2993 = vpack.c.b16 %v2113, %v2109
  %v2994 = vpack.c.b16 %v2114, %v2110
  %v2995 = vpack.c.b16 %v2115, %v2111
  %v2996 = vpack.c.b16 %v2120, %v2116
  %v2997 = vpack.c.b16 %v2121, %v2117
  %v2998 = vpack.c.b16 %v2122, %v2118
  %v2999 = vpack.c.b16 %v2123, %v2119
  %v3000 = vpack.c.b16 %v2128, %v2124
  %v3001 = vpack.c.b16 %v2129, %v2125
  %v3002 = vpack.c.b16 %v2130, %v2126
  %v3003 = vpack.c.b16 %v2131, %v2127
  %v3004 = vpack.c.b16 %v2136, %v2132
  %v3005 = vpack.c.b16 %v2137, %v2133
  %v3006 = vpack.c.b16 %v2138, %v2134
  %v3007 = vpack.c.b16 %v2139, %v2135
  %v3008 = vpack.c.b16 %v2144, %v2140
  %v3009 = vpack.c.b16 %v2145, %v2141
  %v3010 = vpack.c.b16 %v2146, %v2142
  %v3011 = vpack.c.b16 %v2147, %v2143
  %v3012 = vpack.c.b16 %v2152, %v2148
  %v3013 = vpack.c.b16 %v2153, %v2149
  %v3014 = vpack.c.b16 %v2154, %v2150
  %v3015 = vpack.c.b16 %v2155, %v2151
  %v3016 = vpack.c.b16 %v2160, %v2156
  %v3017 = vpack.c.b16 %v2161, %v2157
  %v3018 = vpack.c.b16 %v2162, %v2158
  %v3019 = vpack.c.b16 %v2163, %v2159
  %v3020 = vpack.c.b16 %v2168, %v2164
  %v3021 = vpack.c.b16 %v2169, %v2165
  %v3022 = vpack.c.b16 %v2170, %v2166
  %v3023 = vpack.c.b16 %v2171, %v2167
  %v3024 = vpack.c.b16 %v2176, %v2172
  %v3025 = vpack.c.b16 %v2177, %v2173
  %v3026 = vpack.c.b16 %v2178, %v2174
  %v3027 = vpack.c.b16 %v2179, %v2175
  %v3028 = vpack.c.b16 %v2184, %v2180
  %v3029 = vpack.c.b16 %v2185, %v2181
  %v3030 = vpack.c.b16 %v2186, %v2182
  %v3031 = vpack.c.b16 %v2187, %v2183
  %v3032 = vpack.c.b16 %v2192, %v2188
  %v3033 = vpack.c.b16 %v2193, %v2189
  %v3034 = vpack.c.b16 %v2194, %v2190
  %v3035 = vpack.c.b16 %v2195, %v2191
  %v3036 = vpack.c.b16 %v2200, %v2196
  %v3037 = vpack.c.b16 %v2201, %v2197
  %v3038 = vpack.c.b16 %v2202, %v2198
  %v3039 = vpack.c.b16 %v2203, %v2199
  %v3040 = vpack.c.b16 %v2208, %v2204
  %v3041 = vpack.c.b16 %v2209, %v2205
  %v3042 = vpack.c.b16 %v2210, %v2206
  %v3043 = vpack.c.b16 %v2211, %v2207
  %v3044 = vpack.c.b16 %v2216, %v2212
  %v3045 = vpack.c.b16 %v2217, %v2213
  %v3046 = vpack.c.b16 %v2218, %v2214
  %v3047 = vpack.c.b16 %v2219, %v2215
  %v3048 = vpack.c.b16 %v2224, %v2220
  %v3049 = vpack.c.b16 %v2225, %v2221
  %v3050 = vpack.c.b16 %v2226, %v2222
  %v3051 = vpack.c.b16 %v2227, %v2223
  %v3052 = vpack.c.b16 %v2232, %v2228
  %v3053 = vpack.c.b16 %v2233, %v2229
  %v3054 = vpack.c.b16 %v2234, %v2230
  %v3055 = vpack.c.b16 %v2235, %v2231
  %v3056 = vpack.c.b16 %v2240, %v2236
  %v3057 = vpack.c.b16 %v2241, %v2237
  %v3058 = vpack.c.b16 %v2242, %v2238
  %v3059 = vpack.c.b16 %v2243, %v2239
  %v3060 = vpack.c.b16 %v2248, %v2244
  %v3061 = vpack.c.b16 %v2249, %v2245
  %v3062 = vpack.c.b16 %v2250, %v2246
  %v3063 = vpack.c.b16 %v2251, %v2247
  %v3064 = vpack.c.b16 %v2256, %v2252
  %v3065 = vpack.c.b16 %v2257, %v2253
  %v3066 = vpack.c.b16 %v2258, %v2254
  %v3067 = vpack.c.b16 %v2259, %v2255
  %v3068 = vpack.c.b16 %v2264, %v2260
  %v3069 = vpack.c.b16 %v2265, %v2261
  %v3070 = vpack.c.b16 %v2266, %v2262
  %v3071 = vpack.c.b16 %v2267, %v2263
  %v3072 = vpack.c.b16 %v2272, %v2268
  %v3073 = vpack.c.b16 %v2273, %v2269
  %v3074 = vpack.c.b16 %v2274, %v2270
  %v3075 = vpack.c.b16 %v2275, %v2271
  %v3076 = vpack.c.b16 %v2280, %v2276
  %v3077 = vpack.c.b16 %v2281, %v2277
  %v3078 = vpack.c.b16 %v2282, %v2278
  %v3079 = vpack.c.b16 %v2283, %v2279
  %v3080 = vpack.c.b16 %v2288, %v2284
  %v3081 = vpack.c.b16 %v2289, %v2285
  %v3082 = vpack.c.b16 %v2290, %v2286
  %v3083 = vpack.c.b16 %v2291, %v2287
  %v3084 = vpack.c.b16 %v2296, %v2292
  %v3085 = vpack.c.b16 %v2297, %v2293
  %v3086 = vpack.c.b16 %v2298, %v2294
  %v3087 = vpack.c.b16 %v2299, %v2295
  %v3088 = vpack.c.b16 %v2304, %v2300
  %v3089 = vpack.c.b16 %v2305, %v2301
  %v3090 = vpack.c.b16 %v2306, %v2302
  %v3091 = vpack.c.b16 %v2307, %v2303
  %v3092 = vpack.c.b16 %v2312, %v2308
  %v3093 = vpack.c.b16 %v2313, %v2309
  %v3094 = vpack.c.b16 %v2314, %v2310
  %v3095 = vpack.c.b16 %v2315, %v2311
  %v3096 = vpack.c.b16 %v2320, %v2316
  %v3097 = vpack.c.b16 %v2321, %v2317
  %v3098 = vpack.c.b16 %v2322, %v2318
  %v3099 = vpack.c.b16 %v2323, %v2319
  %v3100 = vpack.c.b16 %v2328, %v2324
  %v3101 = vpack.c.b16 %v2329, %v2325
  %v3102 = vpack.c.b16 %v2330, %v2326
  %v3103 = vpack.c.b16 %v2331, %v2327
  %v3104 = vpack.c.b16 %v2336, %v2332
  %v3105 = vpack.c.b16 %v2337, %v2333
  %v3106 = vpack.c.b16 %v2338, %v2334
  %v3107 = vpack.c.b16 %v2339, %v2335
  %v3108 = vpack.c.b16 %v2344, %v2340
  %v3109 = vpack.c.b16 %v2345, %v2341
  %v3110 = vpack.c.b16 %v2346, %v2342
  %v3111 = vpack.c.b16 %v2347, %v2343
  %v3112 = vpack.c.b16 %v2352, %v2348
  %v3113 = vpack.c.b16 %v2353, %v2349
  %v3114 = vpack.c.b16 %v2354, %v2350
  %v3115 = vpack.c.b16 %v2355, %v2351
  %v3116 = vpack.c.b16 %v2360, %v2356
  %v3117 = vpack.c.b16 %v2361, %v2357
  %v3118 = vpack.c.b16 %v2362, %v2358
  %v3119 = vpack.c.b16 %v2363, %v2359
  %v3120 = vpack.c.b16 %v2368, %v2364
  %v3121 = vpack.c.b16 %v2369, %v2365
  %v3122 = vpack.c.b16 %v2370, %v2366
  %v3123 = vpack.c.b16 %v2371, %v2367
  %v3124 = vpack.c.b16 %v2376, %v2372
  %v3125 = vpack.c.b16 %v2377, %v2373
  %v3126 = vpack.c.b16 %v2378, %v2374
  %v3127 = vpack.c.b16 %v2379, %v2375
  %v3128 = vpack.c.b16 %v2384, %v2380
  %v3129 = vpack.c.b16 %v2385, %v2381
  %v3130 = vpack.c.b16 %v2386, %v2382
  %v3131 = vpack.c.b16 %v2387, %v2383
  %v3132 = vpack.c.b16 %v2392, %v2388
  %v3133 = vpack.c.b16 %v2393, %v2389
  %v3134 = vpack.c.b16 %v2394, %v2390
  %v3135 = vpack.c.b16 %v2395, %v2391
  %v3136 = vpack.c.b16 %v2400, %v2396
  %v3137 = vpack.c.b16 %v2401, %v2397
  %v3138 = vpack.c.b16 %v2402, %v2398
  %v3139 = vpack.c.b16 %v2403, %v2399
  %v3140 = vpack.c.b16 %v2408, %v2404
  %v3141 = vpack.c.b16 %v2409, %v2405
  %v3142 = vpack.c.b16 %v2410, %v2406
  %v3143 = vpack.c.b16 %v2411, %v2407
  %v3144 = vpack.c.b16 %v2416, %v2412
  %v3145 = vpack.c.b16 %v2417, %v2413
  %v3146 = vpack.c.b16 %v2418, %v2414
  %v3147 = vpack.c.b16 %v2419, %v2415
  %v3148 = vpack.c.b16 %v2424, %v2420
  %v3149 = vpack.c.b16 %v2425, %v2421
  %v3150 = vpack.c.b16 %v2426, %v2422
  %v3151 = vpack.c.b16 %v2427, %v2423
  %v3152 = vpack.c.b16 %v2432, %v2428
  %v3153 = vpack.c.b16 %v2433, %v2429
  %v3154 = vpack.c.b16 %v2434, %v2430
  %v3155 = vpack.c.b16 %v2435, %v2431
  %v3156 = vpack.c.b16 %v2440, %v2436
  %v3157 = vpack.c.b16 %v2441, %v2437
  %v3158 = vpack.c.b16 %v2442, %v2438
  %v3159 = vpack.c.b16 %v2443, %v2439
  %v3160 = vpack.c.b16 %v2448, %v2444
  %v3161 = vpack.c.b16 %v2449, %v2445
  %v3162 = vpack.c.b16 %v2450, %v2446
  %v3163 = vpack.c.b16 %v2451, %v2447
  %v3164 = vpack.c.b16 %v2456, %v2452
  %v3165 = vpack.c.b16 %v2457, %v2453
  %v3166 = vpack.c.b16 %v2458, %v2454
  %v3167 = vpack.c.b16 %v2459, %v2455
  %v3168 = vpack.c.b16 %v2464, %v2460
  %v3169 = vpack.c.b16 %v2465, %v2461
  %v3170 = vpack.c.b16 %v2466, %v2462
  %v3171 = vpack.c.b16 %v2467, %v2463
  %v3172 = vpack.c.b16 %v2472, %v2468
  %v3173 = vpack.c.b16 %v2473, %v2469
  %v3174 = vpack.c.b16 %v2474, %v2470
  %v3175 = vpack.c.b16 %v2475, %v2471
  %v3176 = vpack.c.b16 %v2480, %v2476
  %v3177 = vpack.c.b16 %v2481, %v2477
  %v3178 = vpack.c.b16 %v2482, %v2478
  %v3179 = vpack.c.b16 %v2483, %v2479
  %v3180 = vpack.c.b16 %v2488, %v2484
  %v3181 = vpack.c.b16 %v2489, %v2485
  %v3182 = vpack.c.b16 %v2490, %v2486
  %v3183 = vpack.c.b16 %v2491, %v2487
  %v3184 = vpack.c.b16 %v2496, %v2492
  %v3185 = vpack.c.b16 %v2497, %v2493
  %v3186 = vpack.c.b16 %v2498, %v2494
  %v3187 = vpack.c.b16 %v2499, %v2495
  %v3188 = vpack.c.b16 %v2504, %v2500
  %v3189 = vpack.c.b16 %v2505, %v2501
  %v3190 = vpack.c.b16 %v2506, %v2502
  %v3191 = vpack.c.b16 %v2507, %v2503
  %v3192 = vpack.c.b16 %v2512, %v2508
  %v3193 = vpack.c.b16 %v2513, %v2509
  %v3194 = vpack.c.b16 %v2514, %v2510
  %v3195 = vpack.c.b16 %v2515, %v2511
  %v3196 = vpack.c.b16 %v2520, %v2516
  %v3197 = vpack.c.b16 %v2521, %v2517
  %v3198 = vpack.c.b16 %v2522, %v2518
  %v3199 = vpack.c.b16 %v2523, %v2519
  %v3200 = vpack.c.b16 %v2528, %v2524
  %v3201 = vpack.c.b16 %v2529, %v2525
  %v3202 = vpack.c.b16 %v2530, %v2526
  %v3203 = vpack.c.b16 %v2531, %v2527
  %v3204 = vpack.c.b16 %v2536, %v2532
  %v3205 = vpack.c.b16 %v2537, %v2533
  %v3206 = vpack.c.b16 %v2538, %v2534
  %v3207 = vpack.c.b16 %v2539, %v2535
  %v3208 = vpack.c.b16 %v2544, %v2540
  %v3209 = vpack.c.b16 %v2545, %v2541
  %v3210 = vpack.c.b16 %v2546, %v2542
  %v3211 = vpack.c.b16 %v2547, %v2543
  %v3212 = vpack.c.b16 %v2552, %v2548
  %v3213 = vpack.c.b16 %v2553, %v2549
  %v3214 = vpack.c.b16 %v2554, %v2550
  %v3215 = vpack.c.b16 %v2555, %v2551
  %v3216 = vpack.c.b16 %v2560, %v2556
  %v3217 = vpack.c.b16 %v2561, %v2557
  %v3218 = vpack.c.b16 %v2562, %v2558
  %v3219 = vpack.c.b16 %v2563, %v2559
  %v3220 = vpack.c.b16 %v2568, %v2564
  %v3221 = vpack.c.b16 %v2569, %v2565
  %v3222 = vpack.c.b16 %v2570, %v2566
  %v3223 = vpack.c.b16 %v2571, %v2567
  %v3224 = vpack.c.b16 %v2576, %v2572
  %v3225 = vpack.c.b16 %v2577, %v2573
  %v3226 = vpack.c.b16 %v2578, %v2574
  %v3227 = vpack.c.b16 %v2579, %v2575
  %v3228 = vpack.c.b16 %v2584, %v2580
  %v3229 = vpack.c.b16 %v2585, %v2581
  %v3230 = vpack.c.b16 %v2586, %v2582
  %v3231 = vpack.c.b16 %v2587, %v2583
  %v3232 = vpack.c.b16 %v2592, %v2588
  %v3233 = vpack.c.b16 %v2593, %v2589
  %v3234 = vpack.c.b16 %v2594, %v2590
  %v3235 = vpack.c.b16 %v2595, %v2591
  %v3236 = vpack.c.b16 %v2600, %v2596
  %v3237 = vpack.c.b16 %v2601, %v2597
  %v3238 = vpack.c.b16 %v2602, %v2598
  %v3239 = vpack.c.b16 %v2603, %v2599
  %v3240 = vpack.c.b16 %v2608, %v2604
  %v3241 = vpack.c.b16 %v2609, %v2605
  %v3242 = vpack.c.b16 %v2610, %v2606
  %v3243 = vpack.c.b16 %v2611, %v2607
  %v3244 = vpack.c.b16 %v2616, %v2612
  %v3245 = vpack.c.b16 %v2617, %v2613
  %v3246 = vpack.c.b16 %v2618, %v2614
  %v3247 = vpack.c.b16 %v2619, %v2615
  %v3248 = vpack.c.b16 %v2624, %v2620
  %v3249 = vpack.c.b16 %v2625, %v2621
  %v3250 = vpack.c.b16 %v2626, %v2622
  %v3251 = vpack.c.b16 %v2627, %v2623
  %v3252 = vpack.c.b16 %v2632, %v2628
  %v3253 = vpack.c.b16 %v2633, %v2629
  %v3254 = vpack.c.b16 %v2634, %v2630
  %v3255 = vpack.c.b16 %v2635, %v2631
  %v3256 = vpack.c.b16 %v2640, %v2636
  %v3257 = vpack.c.b16 %v2641, %v2637
  %v3258 = vpack.c.b16 %v2642, %v2638
  %v3259 = vpack.c.b16 %v2643, %v2639
  %v3260 = vpack.c.b16 %v2648, %v2644
  %v3261 = vpack.c.b16 %v2649, %v2645
  %v3262 = vpack.c.b16 %v2650, %v2646
  %v3263 = vpack.c.b16 %v2651, %v2647
  %v3264 = vpack.c.b16 %v2656, %v2652
  %v3265 = vpack.c.b16 %v2657, %v2653
  %v3266 = vpack.c.b16 %v2658, %v2654
  %v3267 = vpack.c.b16 %v2659, %v2655
  %v3268 = vpack.c.b16 %v2664, %v2660
  %v3269 = vpack.c.b16 %v2665, %v2661
  %v3270 = vpack.c.b16 %v2666, %v2662
  %v3271 = vpack.c.b16 %v2667, %v2663
  %v3272 = vpack.c.b16 %v2672, %v2668
  %v3273 = vpack.c.b16 %v2673, %v2669
  %v3274 = vpack.c.b16 %v2674, %v2670
  %v3275 = vpack.c.b16 %v2675, %v2671
  %v3276 = vpack.c.b16 %v2680, %v2676
  %v3277 = vpack.c.b16 %v2681, %v2677
  %v3278 = vpack.c.b16 %v2682, %v2678
  %v3279 = vpack.c.b16 %v2683, %v2679
  %v3280 = vpack.c.b16 %v2688, %v2684
  %v3281 = vpack.c.b16 %v2689, %v2685
  %v3282 = vpack.c.b16 %v2690, %v2686
  %v3283 = vpack.c.b16 %v2691, %v2687
  %v3284 = vpack.c.b16 %v2696, %v2692
  %v3285 = vpack.c.b16 %v2697, %v2693
  %v3286 = vpack.c.b16 %v2698, %v2694
  %v3287 = vpack.c.b16 %v2699, %v2695
  %v3288 = vpack.c.b16 %v2704, %v2700
  %v3289 = vpack.c.b16 %v2705, %v2701
  %v3290 = vpack.c.b16 %v2706, %v2702
  %v3291 = vpack.c.b16 %v2707, %v2703
  %v3292 = vpack.c.b16 %v2712, %v2708
  %v3293 = vpack.c.b16 %v2713, %v2709
  %v3294 = vpack.c.b16 %v2714, %v2710
  %v3295 = vpack.c.b16 %v2715, %v2711
  %v3296 = vpack.c.b16 %v2720, %v2716
  %v3297 = vpack.c.b16 %v2721, %v2717
  %v3298 = vpack.c.b16 %v2722, %v2718
  %v3299 = vpack.c.b16 %v2723, %v2719
  %3876 = vmatprep.subr.bf16.mxu0 %v2753
  %3877 = vmatpush1.bf16.msra.mxu0 %v2752
  %3878 = vmatprep.subr.bf16.mxu0 %v2749
  %3879 = vmatpush1.bf16.msra.mxu0 %v2748
  %3880 = vmatprep.subr.bf16.mxu0 %v2745
  %3881 = vmatpush1.bf16.msra.mxu0 %v2744
  %3882 = vmatprep.subr.bf16.mxu0 %v2741
  %3883 = vmatpush1.bf16.msra.mxu0 %v2740
  %3884 = vmatprep.subr.bf16.mxu0 %v2737
  %3885 = vmatpush1.bf16.msra.mxu0 %v2736
  %3886 = vmatprep.subr.bf16.mxu0 %v2733
  %3887 = vmatpush1.bf16.msra.mxu0 %v2732
  %3888 = vmatprep.subr.bf16.mxu0 %v2729
  %3889 = vmatpush1.bf16.msra.mxu0 %v2728
  %3890 = vmatprep.subr.bf16.mxu0 %v2725
  %3891 = vmatpush1.bf16.msra.mxu0 %v2724
  %3892 = vmatprep.subr.bf16.mxu0 %v2785
  %3893 = vmatpush2.bf16.msra.mxu0 %v2784
  %3894 = vmatprep.subr.bf16.mxu0 %v2781
  %3895 = vmatpush2.bf16.msra.mxu0 %v2780
  %3896 = vmatprep.subr.bf16.mxu0 %v2777
  %3897 = vmatpush2.bf16.msra.mxu0 %v2776
  %3898 = vmatprep.subr.bf16.mxu0 %v2773
  %3899 = vmatpush2.bf16.msra.mxu0 %v2772
  %3900 = vmatprep.subr.bf16.mxu0 %v2769
  %3901 = vmatpush2.bf16.msra.mxu0 %v2768
  %3902 = vmatprep.subr.bf16.mxu0 %v2765
  %3903 = vmatpush2.bf16.msra.mxu0 %v2764
  %3904 = vmatprep.subr.bf16.mxu0 %v2761
  %3905 = vmatpush2.bf16.msra.mxu0 %v2760
  %3906 = vmatprep.subr.bf16.mxu0 %v2757
  %3907 = vmatpush2.bf16.msra.mxu0 %v2756
  %3908 = vmatprep.mubr.bf16.mxu0 %v403
  %3909 = vmatmul.mubr.bf16.gmra.mxu0 %v402
  %v3910 = vpop.f32.mrf.mxu0
  %v3911 = vadd.f32 0.0, %v3910
  %v3912 = vpop.f32.mrf.mxu0
  %v3913 = vadd.f32 0.0, %v3912
  %v3914 = vpop.f32.mrf.mxu0
  %v3915 = vpop.f32.mrf.mxu0
  %3916 = vdwg.mxu0
  %3917 = vmatprep.subr.bf16.mxu0 %v2817
  %3918 = vmatpush1.bf16.msra.mxu0 %v2816
  %3919 = vmatprep.subr.bf16.mxu0 %v2813
  %3920 = vmatpush1.bf16.msra.mxu0 %v2812
  %3921 = vmatprep.subr.bf16.mxu0 %v2809
  %3922 = vmatpush1.bf16.msra.mxu0 %v2808
  %3923 = vmatprep.subr.bf16.mxu0 %v2805
  %3924 = vmatpush1.bf16.msra.mxu0 %v2804
  %3925 = vmatprep.subr.bf16.mxu0 %v2801
  %3926 = vmatpush1.bf16.msra.mxu0 %v2800
  %3927 = vmatprep.subr.bf16.mxu0 %v2797
  %3928 = vmatpush1.bf16.msra.mxu0 %v2796
  %3929 = vmatprep.subr.bf16.mxu0 %v2793
  %3930 = vmatpush1.bf16.msra.mxu0 %v2792
  %3931 = vmatprep.subr.bf16.mxu0 %v2789
  %3932 = vmatpush1.bf16.msra.mxu0 %v2788
  %3933 = vmatprep.subr.bf16.mxu0 %v2849
  %3934 = vmatpush2.bf16.msra.mxu0 %v2848
  %3935 = vmatprep.subr.bf16.mxu0 %v2845
  %3936 = vmatpush2.bf16.msra.mxu0 %v2844
  %3937 = vmatprep.subr.bf16.mxu0 %v2841
  %3938 = vmatpush2.bf16.msra.mxu0 %v2840
  %3939 = vmatprep.subr.bf16.mxu0 %v2837
  %3940 = vmatpush2.bf16.msra.mxu0 %v2836
  %3941 = vmatprep.subr.bf16.mxu0 %v2833
  %3942 = vmatpush2.bf16.msra.mxu0 %v2832
  %3943 = vmatprep.subr.bf16.mxu0 %v2829
  %3944 = vmatpush2.bf16.msra.mxu0 %v2828
  %3945 = vmatprep.subr.bf16.mxu0 %v2825
  %3946 = vmatpush2.bf16.msra.mxu0 %v2824
  %3947 = vmatprep.subr.bf16.mxu0 %v2821
  %3948 = vmatpush2.bf16.msra.mxu0 %v2820
  %3949 = vmatprep.mubr.bf16.mxu0 %v405
  %3950 = vmatmul.mubr.bf16.gmra.mxu0 %v404
  %v3951 = vpop.f32.mrf.mxu0
  %v3952 = vadd.f32 %v3911, %v3951
  %v3953 = vpop.f32.mrf.mxu0
  %v3954 = vadd.f32 %v3913, %v3953
  %v3955 = vpop.f32.mrf.mxu0
  %v3956 = vpop.f32.mrf.mxu0
  %3957 = vdwg.mxu0
  %3958 = vmatprep.subr.bf16.mxu0 %v2881
  %3959 = vmatpush1.bf16.msra.mxu0 %v2880
  %3960 = vmatprep.subr.bf16.mxu0 %v2877
  %3961 = vmatpush1.bf16.msra.mxu0 %v2876
  %3962 = vmatprep.subr.bf16.mxu0 %v2873
  %3963 = vmatpush1.bf16.msra.mxu0 %v2872
  %3964 = vmatprep.subr.bf16.mxu0 %v2869
  %3965 = vmatpush1.bf16.msra.mxu0 %v2868
  %3966 = vmatprep.subr.bf16.mxu0 %v2865
  %3967 = vmatpush1.bf16.msra.mxu0 %v2864
  %3968 = vmatprep.subr.bf16.mxu0 %v2861
  %3969 = vmatpush1.bf16.msra.mxu0 %v2860
  %3970 = vmatprep.subr.bf16.mxu0 %v2857
  %3971 = vmatpush1.bf16.msra.mxu0 %v2856
  %3972 = vmatprep.subr.bf16.mxu0 %v2853
  %3973 = vmatpush1.bf16.msra.mxu0 %v2852
  %3974 = vmatprep.subr.bf16.mxu0 %v2913
  %3975 = vmatpush2.bf16.msra.mxu0 %v2912
  %3976 = vmatprep.subr.bf16.mxu0 %v2909
  %3977 = vmatpush2.bf16.msra.mxu0 %v2908
  %3978 = vmatprep.subr.bf16.mxu0 %v2905
  %3979 = vmatpush2.bf16.msra.mxu0 %v2904
  %3980 = vmatprep.subr.bf16.mxu0 %v2901
  %3981 = vmatpush2.bf16.msra.mxu0 %v2900
  %3982 = vmatprep.subr.bf16.mxu0 %v2897
  %3983 = vmatpush2.bf16.msra.mxu0 %v2896
  %3984 = vmatprep.subr.bf16.mxu0 %v2893
  %3985 = vmatpush2.bf16.msra.mxu0 %v2892
  %3986 = vmatprep.subr.bf16.mxu0 %v2889
  %3987 = vmatpush2.bf16.msra.mxu0 %v2888
  %3988 = vmatprep.subr.bf16.mxu0 %v2885
  %3989 = vmatpush2.bf16.msra.mxu0 %v2884
  %3990 = vmatprep.mubr.bf16.mxu0 %v407
  %3991 = vmatmul.mubr.bf16.gmra.mxu0 %v406
  %v3992 = vpop.f32.mrf.mxu0
  %v3993 = vadd.f32 %v3952, %v3992
  %v3994 = vpop.f32.mrf.mxu0
  %v3995 = vadd.f32 %v3954, %v3994
  %v3996 = vpop.f32.mrf.mxu0
  %v3997 = vpop.f32.mrf.mxu0
  %3998 = vdwg.mxu0
  %3999 = vmatprep.subr.bf16.mxu0 %v2945
  %4000 = vmatpush1.bf16.msra.mxu0 %v2944
  %4001 = vmatprep.subr.bf16.mxu0 %v2941
  %4002 = vmatpush1.bf16.msra.mxu0 %v2940
  %4003 = vmatprep.subr.bf16.mxu0 %v2937
  %4004 = vmatpush1.bf16.msra.mxu0 %v2936
  %4005 = vmatprep.subr.bf16.mxu0 %v2933
  %4006 = vmatpush1.bf16.msra.mxu0 %v2932
  %4007 = vmatprep.subr.bf16.mxu0 %v2929
  %4008 = vmatpush1.bf16.msra.mxu0 %v2928
  %4009 = vmatprep.subr.bf16.mxu0 %v2925
  %4010 = vmatpush1.bf16.msra.mxu0 %v2924
  %4011 = vmatprep.subr.bf16.mxu0 %v2921
  %4012 = vmatpush1.bf16.msra.mxu0 %v2920
  %4013 = vmatprep.subr.bf16.mxu0 %v2917
  %4014 = vmatpush1.bf16.msra.mxu0 %v2916
  %4015 = vmatprep.subr.bf16.mxu0 %v2977
  %4016 = vmatpush2.bf16.msra.mxu0 %v2976
  %4017 = vmatprep.subr.bf16.mxu0 %v2973
  %4018 = vmatpush2.bf16.msra.mxu0 %v2972
  %4019 = vmatprep.subr.bf16.mxu0 %v2969
  %4020 = vmatpush2.bf16.msra.mxu0 %v2968
  %4021 = vmatprep.subr.bf16.mxu0 %v2965
  %4022 = vmatpush2.bf16.msra.mxu0 %v2964
  %4023 = vmatprep.subr.bf16.mxu0 %v2961
  %4024 = vmatpush2.bf16.msra.mxu0 %v2960
  %4025 = vmatprep.subr.bf16.mxu0 %v2957
  %4026 = vmatpush2.bf16.msra.mxu0 %v2956
  %4027 = vmatprep.subr.bf16.mxu0 %v2953
  %4028 = vmatpush2.bf16.msra.mxu0 %v2952
  %4029 = vmatprep.subr.bf16.mxu0 %v2949
  %4030 = vmatpush2.bf16.msra.mxu0 %v2948
  %4031 = vmatprep.mubr.bf16.mxu0 %v409
  %4032 = vmatmul.mubr.bf16.gmra.mxu0 %v408
  %v4033 = vpop.f32.mrf.mxu0
  %v4034 = vadd.f32 %v3993, %v4033
  %v4035 = vpop.f32.mrf.mxu0
  %v4036 = vadd.f32 %v3995, %v4035
  %v4037 = vpop.f32.mrf.mxu0
  %v4038 = vpop.f32.mrf.mxu0
  %4039 = vdwg.mxu0
  %4040 = vmatprep.subr.bf16.mxu0 %v3009
  %4041 = vmatpush1.bf16.msra.mxu0 %v3008
  %4042 = vmatprep.subr.bf16.mxu0 %v3005
  %4043 = vmatpush1.bf16.msra.mxu0 %v3004
  %4044 = vmatprep.subr.bf16.mxu0 %v3001
  %4045 = vmatpush1.bf16.msra.mxu0 %v3000
  %4046 = vmatprep.subr.bf16.mxu0 %v2997
  %4047 = vmatpush1.bf16.msra.mxu0 %v2996
  %4048 = vmatprep.subr.bf16.mxu0 %v2993
  %4049 = vmatpush1.bf16.msra.mxu0 %v2992
  %4050 = vmatprep.subr.bf16.mxu0 %v2989
  %4051 = vmatpush1.bf16.msra.mxu0 %v2988
  %4052 = vmatprep.subr.bf16.mxu0 %v2985
  %4053 = vmatpush1.bf16.msra.mxu0 %v2984
  %4054 = vmatprep.subr.bf16.mxu0 %v2981
  %4055 = vmatpush1.bf16.msra.mxu0 %v2980
  %4056 = vmatprep.subr.bf16.mxu0 %v3041
  %4057 = vmatpush2.bf16.msra.mxu0 %v3040
  %4058 = vmatprep.subr.bf16.mxu0 %v3037
  %4059 = vmatpush2.bf16.msra.mxu0 %v3036
  %4060 = vmatprep.subr.bf16.mxu0 %v3033
  %4061 = vmatpush2.bf16.msra.mxu0 %v3032
  %4062 = vmatprep.subr.bf16.mxu0 %v3029
  %4063 = vmatpush2.bf16.msra.mxu0 %v3028
  %4064 = vmatprep.subr.bf16.mxu0 %v3025
  %4065 = vmatpush2.bf16.msra.mxu0 %v3024
  %4066 = vmatprep.subr.bf16.mxu0 %v3021
  %4067 = vmatpush2.bf16.msra.mxu0 %v3020
  %4068 = vmatprep.subr.bf16.mxu0 %v3017
  %4069 = vmatpush2.bf16.msra.mxu0 %v3016
  %4070 = vmatprep.subr.bf16.mxu0 %v3013
  %4071 = vmatpush2.bf16.msra.mxu0 %v3012
  %4072 = vmatprep.mubr.bf16.mxu0 %v411
  %4073 = vmatmul.mubr.bf16.gmra.mxu0 %v410
  %v4074 = vpop.f32.mrf.mxu0
  %v4075 = vadd.f32 %v4034, %v4074
  %v4076 = vpop.f32.mrf.mxu0
  %v4077 = vadd.f32 %v4036, %v4076
  %v4078 = vpop.f32.mrf.mxu0
  %v4079 = vpop.f32.mrf.mxu0
  %4080 = vdwg.mxu0
  %4081 = vmatprep.subr.bf16.mxu0 %v3073
  %4082 = vmatpush1.bf16.msra.mxu0 %v3072
  %4083 = vmatprep.subr.bf16.mxu0 %v3069
  %4084 = vmatpush1.bf16.msra.mxu0 %v3068
  %4085 = vmatprep.subr.bf16.mxu0 %v3065
  %4086 = vmatpush1.bf16.msra.mxu0 %v3064
  %4087 = vmatprep.subr.bf16.mxu0 %v3061
  %4088 = vmatpush1.bf16.msra.mxu0 %v3060
  %4089 = vmatprep.subr.bf16.mxu0 %v3057
  %4090 = vmatpush1.bf16.msra.mxu0 %v3056
  %4091 = vmatprep.subr.bf16.mxu0 %v3053
  %4092 = vmatpush1.bf16.msra.mxu0 %v3052
  %4093 = vmatprep.subr.bf16.mxu0 %v3049
  %4094 = vmatpush1.bf16.msra.mxu0 %v3048
  %4095 = vmatprep.subr.bf16.mxu0 %v3045
  %4096 = vmatpush1.bf16.msra.mxu0 %v3044
  %4097 = vmatprep.subr.bf16.mxu0 %v3105
  %4098 = vmatpush2.bf16.msra.mxu0 %v3104
  %4099 = vmatprep.subr.bf16.mxu0 %v3101
  %4100 = vmatpush2.bf16.msra.mxu0 %v3100
  %4101 = vmatprep.subr.bf16.mxu0 %v3097
  %4102 = vmatpush2.bf16.msra.mxu0 %v3096
  %4103 = vmatprep.subr.bf16.mxu0 %v3093
  %4104 = vmatpush2.bf16.msra.mxu0 %v3092
  %4105 = vmatprep.subr.bf16.mxu0 %v3089
  %4106 = vmatpush2.bf16.msra.mxu0 %v3088
  %4107 = vmatprep.subr.bf16.mxu0 %v3085
  %4108 = vmatpush2.bf16.msra.mxu0 %v3084
  %4109 = vmatprep.subr.bf16.mxu0 %v3081
  %4110 = vmatpush2.bf16.msra.mxu0 %v3080
  %4111 = vmatprep.subr.bf16.mxu0 %v3077
  %4112 = vmatpush2.bf16.msra.mxu0 %v3076
  %4113 = vmatprep.mubr.bf16.mxu0 %v413
  %4114 = vmatmul.mubr.bf16.gmra.mxu0 %v412
  %v4115 = vpop.f32.mrf.mxu0
  %v4116 = vadd.f32 %v4075, %v4115
  %v4117 = vpop.f32.mrf.mxu0
  %v4118 = vadd.f32 %v4077, %v4117
  %v4119 = vpop.f32.mrf.mxu0
  %v4120 = vpop.f32.mrf.mxu0
  %4121 = vdwg.mxu0
  %4122 = vmatprep.subr.bf16.mxu0 %v3137
  %4123 = vmatpush1.bf16.msra.mxu0 %v3136
  %4124 = vmatprep.subr.bf16.mxu0 %v3133
  %4125 = vmatpush1.bf16.msra.mxu0 %v3132
  %4126 = vmatprep.subr.bf16.mxu0 %v3129
  %4127 = vmatpush1.bf16.msra.mxu0 %v3128
  %4128 = vmatprep.subr.bf16.mxu0 %v3125
  %4129 = vmatpush1.bf16.msra.mxu0 %v3124
  %4130 = vmatprep.subr.bf16.mxu0 %v3121
  %4131 = vmatpush1.bf16.msra.mxu0 %v3120
  %4132 = vmatprep.subr.bf16.mxu0 %v3117
  %4133 = vmatpush1.bf16.msra.mxu0 %v3116
  %4134 = vmatprep.subr.bf16.mxu0 %v3113
  %4135 = vmatpush1.bf16.msra.mxu0 %v3112
  %4136 = vmatprep.subr.bf16.mxu0 %v3109
  %4137 = vmatpush1.bf16.msra.mxu0 %v3108
  %4138 = vmatprep.subr.bf16.mxu0 %v3169
  %4139 = vmatpush2.bf16.msra.mxu0 %v3168
  %4140 = vmatprep.subr.bf16.mxu0 %v3165
  %4141 = vmatpush2.bf16.msra.mxu0 %v3164
  %4142 = vmatprep.subr.bf16.mxu0 %v3161
  %4143 = vmatpush2.bf16.msra.mxu0 %v3160
  %4144 = vmatprep.subr.bf16.mxu0 %v3157
  %4145 = vmatpush2.bf16.msra.mxu0 %v3156
  %4146 = vmatprep.subr.bf16.mxu0 %v3153
  %4147 = vmatpush2.bf16.msra.mxu0 %v3152
  %4148 = vmatprep.subr.bf16.mxu0 %v3149
  %4149 = vmatpush2.bf16.msra.mxu0 %v3148
  %4150 = vmatprep.subr.bf16.mxu0 %v3145
  %4151 = vmatpush2.bf16.msra.mxu0 %v3144
  %4152 = vmatprep.subr.bf16.mxu0 %v3141
  %4153 = vmatpush2.bf16.msra.mxu0 %v3140
  %4154 = vmatprep.mubr.bf16.mxu0 %v415
  %4155 = vmatmul.mubr.bf16.gmra.mxu0 %v414
  %v4156 = vpop.f32.mrf.mxu0
  %v4157 = vadd.f32 %v4116, %v4156
  %v4158 = vpop.f32.mrf.mxu0
  %v4159 = vadd.f32 %v4118, %v4158
  %v4160 = vpop.f32.mrf.mxu0
  %v4161 = vpop.f32.mrf.mxu0
  %4162 = vdwg.mxu0
  %4163 = vmatprep.subr.bf16.mxu0 %v3201
  %4164 = vmatpush1.bf16.msra.mxu0 %v3200
  %4165 = vmatprep.subr.bf16.mxu0 %v3197
  %4166 = vmatpush1.bf16.msra.mxu0 %v3196
  %4167 = vmatprep.subr.bf16.mxu0 %v3193
  %4168 = vmatpush1.bf16.msra.mxu0 %v3192
  %4169 = vmatprep.subr.bf16.mxu0 %v3189
  %4170 = vmatpush1.bf16.msra.mxu0 %v3188
  %4171 = vmatprep.subr.bf16.mxu0 %v3185
  %4172 = vmatpush1.bf16.msra.mxu0 %v3184
  %4173 = vmatprep.subr.bf16.mxu0 %v3181
  %4174 = vmatpush1.bf16.msra.mxu0 %v3180
  %4175 = vmatprep.subr.bf16.mxu0 %v3177
  %4176 = vmatpush1.bf16.msra.mxu0 %v3176
  %4177 = vmatprep.subr.bf16.mxu0 %v3173
  %4178 = vmatpush1.bf16.msra.mxu0 %v3172
  %4179 = vmatprep.subr.bf16.mxu0 %v3233
  %4180 = vmatpush2.bf16.msra.mxu0 %v3232
  %4181 = vmatprep.subr.bf16.mxu0 %v3229
  %4182 = vmatpush2.bf16.msra.mxu0 %v3228
  %4183 = vmatprep.subr.bf16.mxu0 %v3225
  %4184 = vmatpush2.bf16.msra.mxu0 %v3224
  %4185 = vmatprep.subr.bf16.mxu0 %v3221
  %4186 = vmatpush2.bf16.msra.mxu0 %v3220
  %4187 = vmatprep.subr.bf16.mxu0 %v3217
  %4188 = vmatpush2.bf16.msra.mxu0 %v3216
  %4189 = vmatprep.subr.bf16.mxu0 %v3213
  %4190 = vmatpush2.bf16.msra.mxu0 %v3212
  %4191 = vmatprep.subr.bf16.mxu0 %v3209
  %4192 = vmatpush2.bf16.msra.mxu0 %v3208
  %4193 = vmatprep.subr.bf16.mxu0 %v3205
  %4194 = vmatpush2.bf16.msra.mxu0 %v3204
  %4195 = vmatprep.mubr.bf16.mxu0 %v417
  %4196 = vmatmul.mubr.bf16.gmra.mxu0 %v416
  %v4197 = vpop.f32.mrf.mxu0
  %v4198 = vadd.f32 %v4157, %v4197
  %v4199 = vpop.f32.mrf.mxu0
  %v4200 = vadd.f32 %v4159, %v4199
  %v4201 = vpop.f32.mrf.mxu0
  %v4202 = vpop.f32.mrf.mxu0
  %4203 = vdwg.mxu0
  %4204 = vmatprep.subr.bf16.mxu0 %v3265
  %4205 = vmatpush1.bf16.msra.mxu0 %v3264
  %4206 = vmatprep.subr.bf16.mxu0 %v3261
  %4207 = vmatpush1.bf16.msra.mxu0 %v3260
  %4208 = vmatprep.subr.bf16.mxu0 %v3257
  %4209 = vmatpush1.bf16.msra.mxu0 %v3256
  %4210 = vmatprep.subr.bf16.mxu0 %v3253
  %4211 = vmatpush1.bf16.msra.mxu0 %v3252
  %4212 = vmatprep.subr.bf16.mxu0 %v3249
  %4213 = vmatpush1.bf16.msra.mxu0 %v3248
  %4214 = vmatprep.subr.bf16.mxu0 %v3245
  %4215 = vmatpush1.bf16.msra.mxu0 %v3244
  %4216 = vmatprep.subr.bf16.mxu0 %v3241
  %4217 = vmatpush1.bf16.msra.mxu0 %v3240
  %4218 = vmatprep.subr.bf16.mxu0 %v3237
  %4219 = vmatpush1.bf16.msra.mxu0 %v3236
  %4220 = vmatprep.subr.bf16.mxu0 %v3297
  %4221 = vmatpush2.bf16.msra.mxu0 %v3296
  %4222 = vmatprep.subr.bf16.mxu0 %v3293
  %4223 = vmatpush2.bf16.msra.mxu0 %v3292
  %4224 = vmatprep.subr.bf16.mxu0 %v3289
  %4225 = vmatpush2.bf16.msra.mxu0 %v3288
  %4226 = vmatprep.subr.bf16.mxu0 %v3285
  %4227 = vmatpush2.bf16.msra.mxu0 %v3284
  %4228 = vmatprep.subr.bf16.mxu0 %v3281
  %4229 = vmatpush2.bf16.msra.mxu0 %v3280
  %4230 = vmatprep.subr.bf16.mxu0 %v3277
  %4231 = vmatpush2.bf16.msra.mxu0 %v3276
  %4232 = vmatprep.subr.bf16.mxu0 %v3273
  %4233 = vmatpush2.bf16.msra.mxu0 %v3272
  %4234 = vmatprep.subr.bf16.mxu0 %v3269
  %4235 = vmatpush2.bf16.msra.mxu0 %v3268
  %4236 = vmatprep.mubr.bf16.mxu0 %v419
  %4237 = vmatmul.mubr.bf16.gmra.mxu0 %v418
  %v4238 = vpop.f32.mrf.mxu0
  %v4239 = vadd.f32 %v4198, %v4238
  %v4240 = vpop.f32.mrf.mxu0
  %v4241 = vadd.f32 %v4200, %v4240
  %v4242 = vpop.f32.mrf.mxu0
  %v4243 = vpop.f32.mrf.mxu0
  %4244 = vdwg.mxu0
  %4245 = vmatprep.subr.bf16.mxu0 %v2755
  %4246 = vmatpush1.bf16.msra.mxu0 %v2754
  %4247 = vmatprep.subr.bf16.mxu0 %v2751
  %4248 = vmatpush1.bf16.msra.mxu0 %v2750
  %4249 = vmatprep.subr.bf16.mxu0 %v2747
  %4250 = vmatpush1.bf16.msra.mxu0 %v2746
  %4251 = vmatprep.subr.bf16.mxu0 %v2743
  %4252 = vmatpush1.bf16.msra.mxu0 %v2742
  %4253 = vmatprep.subr.bf16.mxu0 %v2739
  %4254 = vmatpush1.bf16.msra.mxu0 %v2738
  %4255 = vmatprep.subr.bf16.mxu0 %v2735
  %4256 = vmatpush1.bf16.msra.mxu0 %v2734
  %4257 = vmatprep.subr.bf16.mxu0 %v2731
  %4258 = vmatpush1.bf16.msra.mxu0 %v2730
  %4259 = vmatprep.subr.bf16.mxu0 %v2727
  %4260 = vmatpush1.bf16.msra.mxu0 %v2726
  %4261 = vmatprep.subr.bf16.mxu0 %v2787
  %4262 = vmatpush2.bf16.msra.mxu0 %v2786
  %4263 = vmatprep.subr.bf16.mxu0 %v2783
  %4264 = vmatpush2.bf16.msra.mxu0 %v2782
  %4265 = vmatprep.subr.bf16.mxu0 %v2779
  %4266 = vmatpush2.bf16.msra.mxu0 %v2778
  %4267 = vmatprep.subr.bf16.mxu0 %v2775
  %4268 = vmatpush2.bf16.msra.mxu0 %v2774
  %4269 = vmatprep.subr.bf16.mxu0 %v2771
  %4270 = vmatpush2.bf16.msra.mxu0 %v2770
  %4271 = vmatprep.subr.bf16.mxu0 %v2767
  %4272 = vmatpush2.bf16.msra.mxu0 %v2766
  %4273 = vmatprep.subr.bf16.mxu0 %v2763
  %4274 = vmatpush2.bf16.msra.mxu0 %v2762
  %4275 = vmatprep.subr.bf16.mxu0 %v2759
  %4276 = vmatpush2.bf16.msra.mxu0 %v2758
  %4277 = vmatprep.mubr.bf16.mxu0 %v403
  %4278 = vmatmul.mubr.bf16.gmra.mxu0 %v402
  %v4279 = vpop.f32.mrf.mxu0
  %v4280 = vadd.f32 0.0, %v4279
  %v4281 = vpop.f32.mrf.mxu0
  %v4282 = vadd.f32 0.0, %v4281
  %v4283 = vpop.f32.mrf.mxu0
  %v4284 = vpop.f32.mrf.mxu0
  %4285 = vdwg.mxu0
  %4286 = vmatprep.subr.bf16.mxu0 %v2819
  %4287 = vmatpush1.bf16.msra.mxu0 %v2818
  %4288 = vmatprep.subr.bf16.mxu0 %v2815
  %4289 = vmatpush1.bf16.msra.mxu0 %v2814
  %4290 = vmatprep.subr.bf16.mxu0 %v2811
  %4291 = vmatpush1.bf16.msra.mxu0 %v2810
  %4292 = vmatprep.subr.bf16.mxu0 %v2807
  %4293 = vmatpush1.bf16.msra.mxu0 %v2806
  %4294 = vmatprep.subr.bf16.mxu0 %v2803
  %4295 = vmatpush1.bf16.msra.mxu0 %v2802
  %4296 = vmatprep.subr.bf16.mxu0 %v2799
  %4297 = vmatpush1.bf16.msra.mxu0 %v2798
  %4298 = vmatprep.subr.bf16.mxu0 %v2795
  %4299 = vmatpush1.bf16.msra.mxu0 %v2794
  %4300 = vmatprep.subr.bf16.mxu0 %v2791
  %4301 = vmatpush1.bf16.msra.mxu0 %v2790
  %4302 = vmatprep.subr.bf16.mxu0 %v2851
  %4303 = vmatpush2.bf16.msra.mxu0 %v2850
  %4304 = vmatprep.subr.bf16.mxu0 %v2847
  %4305 = vmatpush2.bf16.msra.mxu0 %v2846
  %4306 = vmatprep.subr.bf16.mxu0 %v2843
  %4307 = vmatpush2.bf16.msra.mxu0 %v2842
  %4308 = vmatprep.subr.bf16.mxu0 %v2839
  %4309 = vmatpush2.bf16.msra.mxu0 %v2838
  %4310 = vmatprep.subr.bf16.mxu0 %v2835
  %4311 = vmatpush2.bf16.msra.mxu0 %v2834
  %4312 = vmatprep.subr.bf16.mxu0 %v2831
  %4313 = vmatpush2.bf16.msra.mxu0 %v2830
  %4314 = vmatprep.subr.bf16.mxu0 %v2827
  %4315 = vmatpush2.bf16.msra.mxu0 %v2826
  %4316 = vmatprep.subr.bf16.mxu0 %v2823
  %4317 = vmatpush2.bf16.msra.mxu0 %v2822
  %4318 = vmatprep.mubr.bf16.mxu0 %v405
  %4319 = vmatmul.mubr.bf16.gmra.mxu0 %v404
  %v4320 = vpop.f32.mrf.mxu0
  %v4321 = vadd.f32 %v4280, %v4320
  %v4322 = vpop.f32.mrf.mxu0
  %v4323 = vadd.f32 %v4282, %v4322
  %v4324 = vpop.f32.mrf.mxu0
  %v4325 = vpop.f32.mrf.mxu0
  %4326 = vdwg.mxu0
  %4327 = vmatprep.subr.bf16.mxu0 %v2883
  %4328 = vmatpush1.bf16.msra.mxu0 %v2882
  %4329 = vmatprep.subr.bf16.mxu0 %v2879
  %4330 = vmatpush1.bf16.msra.mxu0 %v2878
  %4331 = vmatprep.subr.bf16.mxu0 %v2875
  %4332 = vmatpush1.bf16.msra.mxu0 %v2874
  %4333 = vmatprep.subr.bf16.mxu0 %v2871
  %4334 = vmatpush1.bf16.msra.mxu0 %v2870
  %4335 = vmatprep.subr.bf16.mxu0 %v2867
  %4336 = vmatpush1.bf16.msra.mxu0 %v2866
  %4337 = vmatprep.subr.bf16.mxu0 %v2863
  %4338 = vmatpush1.bf16.msra.mxu0 %v2862
  %4339 = vmatprep.subr.bf16.mxu0 %v2859
  %4340 = vmatpush1.bf16.msra.mxu0 %v2858
  %4341 = vmatprep.subr.bf16.mxu0 %v2855
  %4342 = vmatpush1.bf16.msra.mxu0 %v2854
  %4343 = vmatprep.subr.bf16.mxu0 %v2915
  %4344 = vmatpush2.bf16.msra.mxu0 %v2914
  %4345 = vmatprep.subr.bf16.mxu0 %v2911
  %4346 = vmatpush2.bf16.msra.mxu0 %v2910
  %4347 = vmatprep.subr.bf16.mxu0 %v2907
  %4348 = vmatpush2.bf16.msra.mxu0 %v2906
  %4349 = vmatprep.subr.bf16.mxu0 %v2903
  %4350 = vmatpush2.bf16.msra.mxu0 %v2902
  %4351 = vmatprep.subr.bf16.mxu0 %v2899
  %4352 = vmatpush2.bf16.msra.mxu0 %v2898
  %4353 = vmatprep.subr.bf16.mxu0 %v2895
  %4354 = vmatpush2.bf16.msra.mxu0 %v2894
  %4355 = vmatprep.subr.bf16.mxu0 %v2891
  %4356 = vmatpush2.bf16.msra.mxu0 %v2890
  %4357 = vmatprep.subr.bf16.mxu0 %v2887
  %4358 = vmatpush2.bf16.msra.mxu0 %v2886
  %4359 = vmatprep.mubr.bf16.mxu0 %v407
  %4360 = vmatmul.mubr.bf16.gmra.mxu0 %v406
  %v4361 = vpop.f32.mrf.mxu0
  %v4362 = vadd.f32 %v4321, %v4361
  %v4363 = vpop.f32.mrf.mxu0
  %v4364 = vadd.f32 %v4323, %v4363
  %v4365 = vpop.f32.mrf.mxu0
  %v4366 = vpop.f32.mrf.mxu0
  %4367 = vdwg.mxu0
  %4368 = vmatprep.subr.bf16.mxu0 %v2947
  %4369 = vmatpush1.bf16.msra.mxu0 %v2946
  %4370 = vmatprep.subr.bf16.mxu0 %v2943
  %4371 = vmatpush1.bf16.msra.mxu0 %v2942
  %4372 = vmatprep.subr.bf16.mxu0 %v2939
  %4373 = vmatpush1.bf16.msra.mxu0 %v2938
  %4374 = vmatprep.subr.bf16.mxu0 %v2935
  %4375 = vmatpush1.bf16.msra.mxu0 %v2934
  %4376 = vmatprep.subr.bf16.mxu0 %v2931
  %4377 = vmatpush1.bf16.msra.mxu0 %v2930
  %4378 = vmatprep.subr.bf16.mxu0 %v2927
  %4379 = vmatpush1.bf16.msra.mxu0 %v2926
  %4380 = vmatprep.subr.bf16.mxu0 %v2923
  %4381 = vmatpush1.bf16.msra.mxu0 %v2922
  %4382 = vmatprep.subr.bf16.mxu0 %v2919
  %4383 = vmatpush1.bf16.msra.mxu0 %v2918
  %4384 = vmatprep.subr.bf16.mxu0 %v2979
  %4385 = vmatpush2.bf16.msra.mxu0 %v2978
  %4386 = vmatprep.subr.bf16.mxu0 %v2975
  %4387 = vmatpush2.bf16.msra.mxu0 %v2974
  %4388 = vmatprep.subr.bf16.mxu0 %v2971
  %4389 = vmatpush2.bf16.msra.mxu0 %v2970
  %4390 = vmatprep.subr.bf16.mxu0 %v2967
  %4391 = vmatpush2.bf16.msra.mxu0 %v2966
  %4392 = vmatprep.subr.bf16.mxu0 %v2963
  %4393 = vmatpush2.bf16.msra.mxu0 %v2962
  %4394 = vmatprep.subr.bf16.mxu0 %v2959
  %4395 = vmatpush2.bf16.msra.mxu0 %v2958
  %4396 = vmatprep.subr.bf16.mxu0 %v2955
  %4397 = vmatpush2.bf16.msra.mxu0 %v2954
  %4398 = vmatprep.subr.bf16.mxu0 %v2951
  %4399 = vmatpush2.bf16.msra.mxu0 %v2950
  %4400 = vmatprep.mubr.bf16.mxu0 %v409
  %4401 = vmatmul.mubr.bf16.gmra.mxu0 %v408
  %v4402 = vpop.f32.mrf.mxu0
  %v4403 = vadd.f32 %v4362, %v4402
  %v4404 = vpop.f32.mrf.mxu0
  %v4405 = vadd.f32 %v4364, %v4404
  %v4406 = vpop.f32.mrf.mxu0
  %v4407 = vpop.f32.mrf.mxu0
  %4408 = vdwg.mxu0
  %4409 = vmatprep.subr.bf16.mxu0 %v3011
  %4410 = vmatpush1.bf16.msra.mxu0 %v3010
  %4411 = vmatprep.subr.bf16.mxu0 %v3007
  %4412 = vmatpush1.bf16.msra.mxu0 %v3006
  %4413 = vmatprep.subr.bf16.mxu0 %v3003
  %4414 = vmatpush1.bf16.msra.mxu0 %v3002
  %4415 = vmatprep.subr.bf16.mxu0 %v2999
  %4416 = vmatpush1.bf16.msra.mxu0 %v2998
  %4417 = vmatprep.subr.bf16.mxu0 %v2995
  %4418 = vmatpush1.bf16.msra.mxu0 %v2994
  %4419 = vmatprep.subr.bf16.mxu0 %v2991
  %4420 = vmatpush1.bf16.msra.mxu0 %v2990
  %4421 = vmatprep.subr.bf16.mxu0 %v2987
  %4422 = vmatpush1.bf16.msra.mxu0 %v2986
  %4423 = vmatprep.subr.bf16.mxu0 %v2983
  %4424 = vmatpush1.bf16.msra.mxu0 %v2982
  %4425 = vmatprep.subr.bf16.mxu0 %v3043
  %4426 = vmatpush2.bf16.msra.mxu0 %v3042
  %4427 = vmatprep.subr.bf16.mxu0 %v3039
  %4428 = vmatpush2.bf16.msra.mxu0 %v3038
  %4429 = vmatprep.subr.bf16.mxu0 %v3035
  %4430 = vmatpush2.bf16.msra.mxu0 %v3034
  %4431 = vmatprep.subr.bf16.mxu0 %v3031
  %4432 = vmatpush2.bf16.msra.mxu0 %v3030
  %4433 = vmatprep.subr.bf16.mxu0 %v3027
  %4434 = vmatpush2.bf16.msra.mxu0 %v3026
  %4435 = vmatprep.subr.bf16.mxu0 %v3023
  %4436 = vmatpush2.bf16.msra.mxu0 %v3022
  %4437 = vmatprep.subr.bf16.mxu0 %v3019
  %4438 = vmatpush2.bf16.msra.mxu0 %v3018
  %4439 = vmatprep.subr.bf16.mxu0 %v3015
  %4440 = vmatpush2.bf16.msra.mxu0 %v3014
  %4441 = vmatprep.mubr.bf16.mxu0 %v411
  %4442 = vmatmul.mubr.bf16.gmra.mxu0 %v410
  %v4443 = vpop.f32.mrf.mxu0
  %v4444 = vadd.f32 %v4403, %v4443
  %v4445 = vpop.f32.mrf.mxu0
  %v4446 = vadd.f32 %v4405, %v4445
  %v4447 = vpop.f32.mrf.mxu0
  %v4448 = vpop.f32.mrf.mxu0
  %4449 = vdwg.mxu0
  %4450 = vmatprep.subr.bf16.mxu0 %v3075
  %4451 = vmatpush1.bf16.msra.mxu0 %v3074
  %4452 = vmatprep.subr.bf16.mxu0 %v3071
  %4453 = vmatpush1.bf16.msra.mxu0 %v3070
  %4454 = vmatprep.subr.bf16.mxu0 %v3067
  %4455 = vmatpush1.bf16.msra.mxu0 %v3066
  %4456 = vmatprep.subr.bf16.mxu0 %v3063
  %4457 = vmatpush1.bf16.msra.mxu0 %v3062
  %4458 = vmatprep.subr.bf16.mxu0 %v3059
  %4459 = vmatpush1.bf16.msra.mxu0 %v3058
  %4460 = vmatprep.subr.bf16.mxu0 %v3055
  %4461 = vmatpush1.bf16.msra.mxu0 %v3054
  %4462 = vmatprep.subr.bf16.mxu0 %v3051
  %4463 = vmatpush1.bf16.msra.mxu0 %v3050
  %4464 = vmatprep.subr.bf16.mxu0 %v3047
  %4465 = vmatpush1.bf16.msra.mxu0 %v3046
  %4466 = vmatprep.subr.bf16.mxu0 %v3107
  %4467 = vmatpush2.bf16.msra.mxu0 %v3106
  %4468 = vmatprep.subr.bf16.mxu0 %v3103
  %4469 = vmatpush2.bf16.msra.mxu0 %v3102
  %4470 = vmatprep.subr.bf16.mxu0 %v3099
  %4471 = vmatpush2.bf16.msra.mxu0 %v3098
  %4472 = vmatprep.subr.bf16.mxu0 %v3095
  %4473 = vmatpush2.bf16.msra.mxu0 %v3094
  %4474 = vmatprep.subr.bf16.mxu0 %v3091
  %4475 = vmatpush2.bf16.msra.mxu0 %v3090
  %4476 = vmatprep.subr.bf16.mxu0 %v3087
  %4477 = vmatpush2.bf16.msra.mxu0 %v3086
  %4478 = vmatprep.subr.bf16.mxu0 %v3083
  %4479 = vmatpush2.bf16.msra.mxu0 %v3082
  %4480 = vmatprep.subr.bf16.mxu0 %v3079
  %4481 = vmatpush2.bf16.msra.mxu0 %v3078
  %4482 = vmatprep.mubr.bf16.mxu0 %v413
  %4483 = vmatmul.mubr.bf16.gmra.mxu0 %v412
  %v4484 = vpop.f32.mrf.mxu0
  %v4485 = vadd.f32 %v4444, %v4484
  %v4486 = vpop.f32.mrf.mxu0
  %v4487 = vadd.f32 %v4446, %v4486
  %v4488 = vpop.f32.mrf.mxu0
  %v4489 = vpop.f32.mrf.mxu0
  %4490 = vdwg.mxu0
  %4491 = vmatprep.subr.bf16.mxu0 %v3139
  %4492 = vmatpush1.bf16.msra.mxu0 %v3138
  %4493 = vmatprep.subr.bf16.mxu0 %v3135
  %4494 = vmatpush1.bf16.msra.mxu0 %v3134
  %4495 = vmatprep.subr.bf16.mxu0 %v3131
  %4496 = vmatpush1.bf16.msra.mxu0 %v3130
  %4497 = vmatprep.subr.bf16.mxu0 %v3127
  %4498 = vmatpush1.bf16.msra.mxu0 %v3126
  %4499 = vmatprep.subr.bf16.mxu0 %v3123
  %4500 = vmatpush1.bf16.msra.mxu0 %v3122
  %4501 = vmatprep.subr.bf16.mxu0 %v3119
  %4502 = vmatpush1.bf16.msra.mxu0 %v3118
  %4503 = vmatprep.subr.bf16.mxu0 %v3115
  %4504 = vmatpush1.bf16.msra.mxu0 %v3114
  %4505 = vmatprep.subr.bf16.mxu0 %v3111
  %4506 = vmatpush1.bf16.msra.mxu0 %v3110
  %4507 = vmatprep.subr.bf16.mxu0 %v3171
  %4508 = vmatpush2.bf16.msra.mxu0 %v3170
  %4509 = vmatprep.subr.bf16.mxu0 %v3167
  %4510 = vmatpush2.bf16.msra.mxu0 %v3166
  %4511 = vmatprep.subr.bf16.mxu0 %v3163
  %4512 = vmatpush2.bf16.msra.mxu0 %v3162
  %4513 = vmatprep.subr.bf16.mxu0 %v3159
  %4514 = vmatpush2.bf16.msra.mxu0 %v3158
  %4515 = vmatprep.subr.bf16.mxu0 %v3155
  %4516 = vmatpush2.bf16.msra.mxu0 %v3154
  %4517 = vmatprep.subr.bf16.mxu0 %v3151
  %4518 = vmatpush2.bf16.msra.mxu0 %v3150
  %4519 = vmatprep.subr.bf16.mxu0 %v3147
  %4520 = vmatpush2.bf16.msra.mxu0 %v3146
  %4521 = vmatprep.subr.bf16.mxu0 %v3143
  %4522 = vmatpush2.bf16.msra.mxu0 %v3142
  %4523 = vmatprep.mubr.bf16.mxu0 %v415
  %4524 = vmatmul.mubr.bf16.gmra.mxu0 %v414
  %v4525 = vpop.f32.mrf.mxu0
  %v4526 = vadd.f32 %v4485, %v4525
  %v4527 = vpop.f32.mrf.mxu0
  %v4528 = vadd.f32 %v4487, %v4527
  %v4529 = vpop.f32.mrf.mxu0
  %v4530 = vpop.f32.mrf.mxu0
  %4531 = vdwg.mxu0
  %4532 = vmatprep.subr.bf16.mxu0 %v3203
  %4533 = vmatpush1.bf16.msra.mxu0 %v3202
  %4534 = vmatprep.subr.bf16.mxu0 %v3199
  %4535 = vmatpush1.bf16.msra.mxu0 %v3198
  %4536 = vmatprep.subr.bf16.mxu0 %v3195
  %4537 = vmatpush1.bf16.msra.mxu0 %v3194
  %4538 = vmatprep.subr.bf16.mxu0 %v3191
  %4539 = vmatpush1.bf16.msra.mxu0 %v3190
  %4540 = vmatprep.subr.bf16.mxu0 %v3187
  %4541 = vmatpush1.bf16.msra.mxu0 %v3186
  %4542 = vmatprep.subr.bf16.mxu0 %v3183
  %4543 = vmatpush1.bf16.msra.mxu0 %v3182
  %4544 = vmatprep.subr.bf16.mxu0 %v3179
  %4545 = vmatpush1.bf16.msra.mxu0 %v3178
  %4546 = vmatprep.subr.bf16.mxu0 %v3175
  %4547 = vmatpush1.bf16.msra.mxu0 %v3174
  %4548 = vmatprep.subr.bf16.mxu0 %v3235
  %4549 = vmatpush2.bf16.msra.mxu0 %v3234
  %4550 = vmatprep.subr.bf16.mxu0 %v3231
  %4551 = vmatpush2.bf16.msra.mxu0 %v3230
  %4552 = vmatprep.subr.bf16.mxu0 %v3227
  %4553 = vmatpush2.bf16.msra.mxu0 %v3226
  %4554 = vmatprep.subr.bf16.mxu0 %v3223
  %4555 = vmatpush2.bf16.msra.mxu0 %v3222
  %4556 = vmatprep.subr.bf16.mxu0 %v3219
  %4557 = vmatpush2.bf16.msra.mxu0 %v3218
  %4558 = vmatprep.subr.bf16.mxu0 %v3215
  %4559 = vmatpush2.bf16.msra.mxu0 %v3214
  %4560 = vmatprep.subr.bf16.mxu0 %v3211
  %4561 = vmatpush2.bf16.msra.mxu0 %v3210
  %4562 = vmatprep.subr.bf16.mxu0 %v3207
  %4563 = vmatpush2.bf16.msra.mxu0 %v3206
  %4564 = vmatprep.mubr.bf16.mxu0 %v417
  %4565 = vmatmul.mubr.bf16.gmra.mxu0 %v416
  %v4566 = vpop.f32.mrf.mxu0
  %v4567 = vadd.f32 %v4526, %v4566
  %v4568 = vpop.f32.mrf.mxu0
  %v4569 = vadd.f32 %v4528, %v4568
  %v4570 = vpop.f32.mrf.mxu0
  %v4571 = vpop.f32.mrf.mxu0
  %4572 = vdwg.mxu0
  %4573 = vmatprep.subr.bf16.mxu0 %v3267
  %4574 = vmatpush1.bf16.msra.mxu0 %v3266
  %4575 = vmatprep.subr.bf16.mxu0 %v3263
  %4576 = vmatpush1.bf16.msra.mxu0 %v3262
  %4577 = vmatprep.subr.bf16.mxu0 %v3259
  %4578 = vmatpush1.bf16.msra.mxu0 %v3258
  %4579 = vmatprep.subr.bf16.mxu0 %v3255
  %4580 = vmatpush1.bf16.msra.mxu0 %v3254
  %4581 = vmatprep.subr.bf16.mxu0 %v3251
  %4582 = vmatpush1.bf16.msra.mxu0 %v3250
  %4583 = vmatprep.subr.bf16.mxu0 %v3247
  %4584 = vmatpush1.bf16.msra.mxu0 %v3246
  %4585 = vmatprep.subr.bf16.mxu0 %v3243
  %4586 = vmatpush1.bf16.msra.mxu0 %v3242
  %4587 = vmatprep.subr.bf16.mxu0 %v3239
  %4588 = vmatpush1.bf16.msra.mxu0 %v3238
  %4589 = vmatprep.subr.bf16.mxu0 %v3299
  %4590 = vmatpush2.bf16.msra.mxu0 %v3298
  %4591 = vmatprep.subr.bf16.mxu0 %v3295
  %4592 = vmatpush2.bf16.msra.mxu0 %v3294
  %4593 = vmatprep.subr.bf16.mxu0 %v3291
  %4594 = vmatpush2.bf16.msra.mxu0 %v3290
  %4595 = vmatprep.subr.bf16.mxu0 %v3287
  %4596 = vmatpush2.bf16.msra.mxu0 %v3286
  %4597 = vmatprep.subr.bf16.mxu0 %v3283
  %4598 = vmatpush2.bf16.msra.mxu0 %v3282
  %4599 = vmatprep.subr.bf16.mxu0 %v3279
  %4600 = vmatpush2.bf16.msra.mxu0 %v3278
  %4601 = vmatprep.subr.bf16.mxu0 %v3275
  %4602 = vmatpush2.bf16.msra.mxu0 %v3274
  %4603 = vmatprep.subr.bf16.mxu0 %v3271
  %4604 = vmatpush2.bf16.msra.mxu0 %v3270
  %4605 = vmatprep.mubr.bf16.mxu0 %v419
  %4606 = vmatmul.mubr.bf16.gmra.mxu0 %v418
  %v4607 = vpop.f32.mrf.mxu0
  %v4608 = vadd.f32 %v4567, %v4607
  %v4609 = vpop.f32.mrf.mxu0
  %v4610 = vadd.f32 %v4569, %v4609
  %v4611 = vpop.f32.mrf.mxu0
  %v4612 = vpop.f32.mrf.mxu0
  %4613 = vdwg.mxu0
  %v4614 = vpack.c.bf16 %v4239, %v4239
  %v4615 = vpack.c.bf16 %v4241, %v4241
  %v4616 = vpack.c.bf16 %v4608, %v4608
  %v4617 = vpack.c.bf16 %v4610, %v4610
  %v4622 = vunpack.c.l.b16 %v4614
  %v4623 = vunpack.c.l.b16 %v4615
  %v4624 = vunpack.c.l.b16 %v4616
  %v4625 = vunpack.c.l.b16 %v4617
  %v4626 = vpack.c.b16 %v4623, %v4622
  %v4627 = vpack.c.b16 %v4625, %v4624
  %4630 = vst [vmem:[%s4] sm:$0xff] %v4626
  %4631 = vst [vmem:[%s4 + $0x8] sm:$0xff] %v4627
  %v4632 = vrot.slane %v4239, 4
  %v4633 = vadd.f32 %v4239, %v4632
  %v4634 = vrot.slane %v4633, 2
  %v4635 = vadd.f32 %v4633, %v4634
  %v4636 = vrot.slane %v4635, 1
  %v4637 = vadd.f32 %v4635, %v4636
  %v4638 = vrot.slane %v4241, 4
  %v4639 = vadd.f32 %v4241, %v4638
  %v4640 = vrot.slane %v4639, 2
  %v4641 = vadd.f32 %v4639, %v4640
  %v4642 = vrot.slane %v4641, 1
  %v4643 = vadd.f32 %v4641, %v4642
  %v4644 = vrot.slane %v4608, 4
  %v4645 = vadd.f32 %v4608, %v4644
  %v4646 = vrot.slane %v4645, 2
  %v4647 = vadd.f32 %v4645, %v4646
  %v4648 = vrot.slane %v4647, 1
  %v4649 = vadd.f32 %v4647, %v4648
  %v4650 = vrot.slane %v4610, 4
  %v4651 = vadd.f32 %v4610, %v4650
  %v4652 = vrot.slane %v4651, 2
  %v4653 = vadd.f32 %v4651, %v4652
  %v4654 = vrot.slane %v4653, 1
  %v4655 = vadd.f32 %v4653, %v4654
  %v4660 = vcombine.low %v4637, %v4643
  %v4661 = vcombine.low %v4649, %v4655
  %v4663 = vunpack.c.l.s4 1966171168
  %v4664 = vunpack.c.0.s8 %v4663
  %v4665 = vlaneseq
  %v4666 = vshrl.u32 %v4665, 7
  %v4667 = vsub.s32 %v4664, %v4666
  %v4668 = vrot.slane %v4660, %v4667
  %v4670 = vunpack.c.l.s4 1966171168
  %v4671 = vunpack.c.0.s8 %v4670
  %v4672 = vlaneseq
  %v4673 = vshrl.u32 %v4672, 7
  %v4674 = vsub.s32 %v4671, %v4673
  %v4675 = vrot.slane %v4661, %v4674
  %v4676 = vcombine.low %v4668, %v4675
  %v4678 = vunpack.c.l.s4 1966171168
  %v4679 = vunpack.c.0.s8 %v4678
  %v4680 = vlaneseq
  %v4681 = vshrl.u32 %v4680, 7
  %v4682 = vsub.s32 %v4679, %v4681
  %v4683 = vrot.slane %v4676, %v4682
  %v4685 = vlaneseq
  %vm4686 = vcmp.ge.s32.totalorder %v4685, 0
  %vm4687 = vcmp.lt.s32.totalorder %v4685, 512
  %vm4688 = vmand %vm4686, %vm4687
  %4689 = vst.msk [vmem:[%s5] ss:$2 sm:$0xf] %vm4688, %v4683
  %v4690 = vmul.f32 %v4239, %v4239
  %v4691 = vmul.f32 %v4241, %v4241
  %v4692 = vmul.f32 %v4608, %v4608
  %v4693 = vmul.f32 %v4610, %v4610
  %v4694 = vrot.slane %v4690, 4
  %v4695 = vadd.f32 %v4690, %v4694
  %v4696 = vrot.slane %v4695, 2
  %v4697 = vadd.f32 %v4695, %v4696
  %v4698 = vrot.slane %v4697, 1
  %v4699 = vadd.f32 %v4697, %v4698
  %v4700 = vrot.slane %v4691, 4
  %v4701 = vadd.f32 %v4691, %v4700
  %v4702 = vrot.slane %v4701, 2
  %v4703 = vadd.f32 %v4701, %v4702
  %v4704 = vrot.slane %v4703, 1
  %v4705 = vadd.f32 %v4703, %v4704
  %v4706 = vrot.slane %v4692, 4
  %v4707 = vadd.f32 %v4692, %v4706
  %v4708 = vrot.slane %v4707, 2
  %v4709 = vadd.f32 %v4707, %v4708
  %v4710 = vrot.slane %v4709, 1
  %v4711 = vadd.f32 %v4709, %v4710
  %v4712 = vrot.slane %v4693, 4
  %v4713 = vadd.f32 %v4693, %v4712
  %v4714 = vrot.slane %v4713, 2
  %v4715 = vadd.f32 %v4713, %v4714
  %v4716 = vrot.slane %v4715, 1
  %v4717 = vadd.f32 %v4715, %v4716
  %v4722 = vcombine.low %v4699, %v4705
  %v4723 = vcombine.low %v4711, %v4717
  %v4725 = vunpack.c.l.s4 1966171168
  %v4726 = vunpack.c.0.s8 %v4725
  %v4727 = vlaneseq
  %v4728 = vshrl.u32 %v4727, 7
  %v4729 = vsub.s32 %v4726, %v4728
  %v4730 = vrot.slane %v4722, %v4729
  %v4732 = vunpack.c.l.s4 1966171168
  %v4733 = vunpack.c.0.s8 %v4732
  %v4734 = vlaneseq
  %v4735 = vshrl.u32 %v4734, 7
  %v4736 = vsub.s32 %v4733, %v4735
  %v4737 = vrot.slane %v4723, %v4736
  %v4738 = vcombine.low %v4730, %v4737
  %v4740 = vunpack.c.l.s4 1966171168
  %v4741 = vunpack.c.0.s8 %v4740
  %v4742 = vlaneseq
  %v4743 = vshrl.u32 %v4742, 7
  %v4744 = vsub.s32 %v4741, %v4743
  %v4745 = vrot.slane %v4738, %v4744
  %s4747 = scalar_lea.vmem %s5, 1
  %4748 = vst.msk [vmem:[%s4747] ss:$2 sm:$0xf] %vm4688, %v4745
  // Predicated region
  $region18: #{discriminator_forward.8} parent=0 // pred_check
    _
  $region19: #{discriminator_forward.8} parent=0 // pred_check_branch
    %4750 = sbr.rel (0) target = $region21
  $region20: #{discriminator_forward.8} parent=0 // pred_region
    _
  $region21: #{discriminator_forward.8} parent=0 // pred_fallthru
    _
  // Predicated region
  $region22: #{discriminator_forward.8} parent=0 // pred_check
    _
  $region23: #{discriminator_forward.8} parent=0 // pred_check_branch
    %4752 = sbr.rel (0) target = $region25
  $region24: #{discriminator_forward.8} parent=0 // pred_region
    _
  $region25: #{discriminator_forward.8} parent=0 // pred_fallthru
    _
  // Predicated region
  $region26: #{discriminator_forward.8} parent=0 // pred_check
    _
  $region27: #{discriminator_forward.8} parent=0 // pred_check_branch
    %4754 = sbr.rel (0) target = $region29
  $region28: #{discriminator_forward.8} parent=0 // pred_region
    _
  $region29: #{discriminator_forward.8} parent=0 // pred_fallthru
    _
  // Predicated region
  $region30: #{discriminator_forward.8} parent=0 // pred_check
    _
  $region31: #{discriminator_forward.8} parent=0 // pred_check_branch
    %4756 = sbr.rel (0) target = $region33
  $region32: #{discriminator_forward.8} parent=0 // pred_region
    _
  $region33: #{discriminator_forward.8} parent=0 // pred_fallthru
    _

// kernel: discriminator_forward.9
$region0: #{discriminator_forward.9}
  #allocation0 [shape = 'u32[]', space=smem, size = 0x4, offset = 0x4, fixed_abs, tag = 'smem constant byte address 0x4 - core index']
  #allocation1 [shape = 'u32[144,128]{1,0:T(1,128)}', space=vmem, size = 0x12000, scoped, tag = 'internal scratch']
  %s0 = inlined_call_operand.vmem [shape: bf16[8,4608], index: 0, kind: input, shape index: {}]
  %s1 = inlined_call_operand.vmem [shape: f32[1,4608], index: 1, kind: input, shape index: {}]
  %s2 = inlined_call_operand.vmem [shape: f32[1,4608], index: 2, kind: input, shape index: {}]
  %s3 = inlined_call_operand.vmem [shape: bf16[4608,128], index: 3, kind: input, shape index: {}]
  %s4 = inlined_call_operand.vmem [shape: f32[1,128], index: 4, kind: input, shape index: {}]
  %s5 = inlined_call_operand.vmem [shape: f32[8,128], index: 5, kind: output, shape index: {}]
  %s6 = sld [smem:[#allocation0]]
  $region30: #{discriminator_forward.9} parent=0
    _
  %s8 = ssub.s32 1, %s6
  %s9 = scalar_select 0, %s8, %s6
  // Predicated region
  $region2: #{discriminator_forward.9} parent=0 // pred_check
    _
  $region3: #{discriminator_forward.9} parent=0 // pred_check_branch
    %11 = sbr.rel (0) target = $region5
  $region4: #{discriminator_forward.9} parent=0 // pred_region
    _
  $region5: #{discriminator_forward.9} parent=0 // pred_fallthru
    _
  // Predicated region
  $region6: #{discriminator_forward.9} parent=0 // pred_check
    _
  $region7: #{discriminator_forward.9} parent=0 // pred_check_branch
    %13 = sbr.rel (0) target = $region9
  $region8: #{discriminator_forward.9} parent=0 // pred_region
    _
  $region9: #{discriminator_forward.9} parent=0 // pred_fallthru
    _
  // Predicated region
  $region10: #{discriminator_forward.9} parent=0 // pred_check
    _
  $region11: #{discriminator_forward.9} parent=0 // pred_check_branch
    %15 = sbr.rel (0) target = $region13
  $region12: #{discriminator_forward.9} parent=0 // pred_region
    _
  $region13: #{discriminator_forward.9} parent=0 // pred_fallthru
    _
  // Predicated region
  $region14: #{discriminator_forward.9} parent=0 // pred_check
    _
  $region15: #{discriminator_forward.9} parent=0 // pred_check_branch
    %17 = sbr.rel (0) target = $region17
  $region16: #{discriminator_forward.9} parent=0 // pred_region
    _
  $region17: #{discriminator_forward.9} parent=0 // pred_fallthru
    _
  // Predicated region
  $region18: #{discriminator_forward.9} parent=0 // pred_check
    _
  $region19: #{discriminator_forward.9} parent=0 // pred_check_branch
    %19 = sbr.rel (0) target = $region21
  $region20: #{discriminator_forward.9} parent=0 // pred_region
    _
  $region21: #{discriminator_forward.9} parent=0 // pred_fallthru
    _
  %v23 = vld [vmem:[%s0] sm:$0xff]
  %v24 = vld [vmem:[%s0 + $0x8] sm:$0xff]
  %v25 = vld [vmem:[%s0 + $0x10] sm:$0xff]
  %v26 = vld [vmem:[%s0 + $0x18] sm:$0xff]
  %v27 = vld [vmem:[%s0 + $0x20] sm:$0xff]
  %v28 = vld [vmem:[%s0 + $0x28] sm:$0xff]
  %v29 = vld [vmem:[%s0 + $0x30] sm:$0xff]
  %v30 = vld [vmem:[%s0 + $0x38] sm:$0xff]
  %v31 = vld [vmem:[%s0 + $0x40] sm:$0xff]
  %v32 = vld [vmem:[%s0 + $0x48] sm:$0xff]
  %v33 = vld [vmem:[%s0 + $0x50] sm:$0xff]
  %v34 = vld [vmem:[%s0 + $0x58] sm:$0xff]
  %v35 = vld [vmem:[%s0 + $0x60] sm:$0xff]
  %v36 = vld [vmem:[%s0 + $0x68] sm:$0xff]
  %v37 = vld [vmem:[%s0 + $0x70] sm:$0xff]
  %v38 = vld [vmem:[%s0 + $0x78] sm:$0xff]
  %v39 = vld [vmem:[%s0 + $0x80] sm:$0xff]
  %v40 = vld [vmem:[%s0 + $0x88] sm:$0xff]
  %v41 = vld [vmem:[%s1] sm:$0xff]
  %v42 = vld [vmem:[%s1 + $0x8] sm:$0xff]
  %v43 = vld [vmem:[%s1 + $0x10] sm:$0xff]
  %v44 = vld [vmem:[%s1 + $0x18] sm:$0xff]
  %v45 = vld [vmem:[%s1 + $0x20] sm:$0xf]
  %v46 = vld [vmem:[%s2] sm:$0xff]
  %v47 = vld [vmem:[%s2 + $0x8] sm:$0xff]
  %v48 = vld [vmem:[%s2 + $0x10] sm:$0xff]
  %v49 = vld [vmem:[%s2 + $0x18] sm:$0xff]
  %v50 = vld [vmem:[%s2 + $0x20] sm:$0xf]
  %v51 = vunpack.c.l.bf16 %v23
  %v52 = vunpack.c.h.bf16 %v23
  %v53 = vunpack.c.l.bf16 %v24
  %v54 = vunpack.c.h.bf16 %v24
  %v55 = vunpack.c.l.bf16 %v25
  %v56 = vunpack.c.h.bf16 %v25
  %v57 = vunpack.c.l.bf16 %v26
  %v58 = vunpack.c.h.bf16 %v26
  %v59 = vunpack.c.l.bf16 %v27
  %v60 = vunpack.c.h.bf16 %v27
  %v61 = vunpack.c.l.bf16 %v28
  %v62 = vunpack.c.h.bf16 %v28
  %v63 = vunpack.c.l.bf16 %v29
  %v64 = vunpack.c.h.bf16 %v29
  %v65 = vunpack.c.l.bf16 %v30
  %v66 = vunpack.c.h.bf16 %v30
  %v67 = vunpack.c.l.bf16 %v31
  %v68 = vunpack.c.h.bf16 %v31
  %v69 = vunpack.c.l.bf16 %v32
  %v70 = vunpack.c.h.bf16 %v32
  %v71 = vunpack.c.l.bf16 %v33
  %v72 = vunpack.c.h.bf16 %v33
  %v73 = vunpack.c.l.bf16 %v34
  %v74 = vunpack.c.h.bf16 %v34
  %v75 = vunpack.c.l.bf16 %v35
  %v76 = vunpack.c.h.bf16 %v35
  %v77 = vunpack.c.l.bf16 %v36
  %v78 = vunpack.c.h.bf16 %v36
  %v79 = vunpack.c.l.bf16 %v37
  %v80 = vunpack.c.h.bf16 %v37
  %v81 = vunpack.c.l.bf16 %v38
  %v82 = vunpack.c.h.bf16 %v38
  %v83 = vunpack.c.l.bf16 %v39
  %v84 = vunpack.c.h.bf16 %v39
  %v85 = vunpack.c.l.bf16 %v40
  %v86 = vunpack.c.h.bf16 %v40
  %v92 = vlaneseq
  %v93 = vshrl.u32 %v92, 7
  %v94 = vsub.s32 0, %v93
  %v95 = vrot.slane %v41, %v94
  %v96 = vlaneseq
  %v97 = vshrl.u32 %v96, 7
  %v98 = vsub.s32 1, %v97
  %v99 = vrot.slane %v41, %v98
  %v100 = vlaneseq
  %v101 = vshrl.u32 %v100, 7
  %v102 = vsub.s32 2, %v101
  %v103 = vrot.slane %v41, %v102
  %v104 = vlaneseq
  %v105 = vshrl.u32 %v104, 7
  %v106 = vsub.s32 3, %v105
  %v107 = vrot.slane %v41, %v106
  %v108 = vlaneseq
  %v109 = vshrl.u32 %v108, 7
  %v110 = vsub.s32 4, %v109
  %v111 = vrot.slane %v41, %v110
  %v112 = vlaneseq
  %v113 = vshrl.u32 %v112, 7
  %v114 = vsub.s32 5, %v113
  %v115 = vrot.slane %v41, %v114
  %v116 = vlaneseq
  %v117 = vshrl.u32 %v116, 7
  %v118 = vsub.s32 6, %v117
  %v119 = vrot.slane %v41, %v118
  %v120 = vlaneseq
  %v121 = vshrl.u32 %v120, 7
  %v122 = vsub.s32 7, %v121
  %v123 = vrot.slane %v41, %v122
  %v124 = vlaneseq
  %v125 = vshrl.u32 %v124, 7
  %v126 = vsub.s32 0, %v125
  %v127 = vrot.slane %v42, %v126
  %v128 = vlaneseq
  %v129 = vshrl.u32 %v128, 7
  %v130 = vsub.s32 1, %v129
  %v131 = vrot.slane %v42, %v130
  %v132 = vlaneseq
  %v133 = vshrl.u32 %v132, 7
  %v134 = vsub.s32 2, %v133
  %v135 = vrot.slane %v42, %v134
  %v136 = vlaneseq
  %v137 = vshrl.u32 %v136, 7
  %v138 = vsub.s32 3, %v137
  %v139 = vrot.slane %v42, %v138
  %v140 = vlaneseq
  %v141 = vshrl.u32 %v140, 7
  %v142 = vsub.s32 4, %v141
  %v143 = vrot.slane %v42, %v142
  %v144 = vlaneseq
  %v145 = vshrl.u32 %v144, 7
  %v146 = vsub.s32 5, %v145
  %v147 = vrot.slane %v42, %v146
  %v148 = vlaneseq
  %v149 = vshrl.u32 %v148, 7
  %v150 = vsub.s32 6, %v149
  %v151 = vrot.slane %v42, %v150
  %v152 = vlaneseq
  %v153 = vshrl.u32 %v152, 7
  %v154 = vsub.s32 7, %v153
  %v155 = vrot.slane %v42, %v154
  %v156 = vlaneseq
  %v157 = vshrl.u32 %v156, 7
  %v158 = vsub.s32 0, %v157
  %v159 = vrot.slane %v43, %v158
  %v160 = vlaneseq
  %v161 = vshrl.u32 %v160, 7
  %v162 = vsub.s32 1, %v161
  %v163 = vrot.slane %v43, %v162
  %v164 = vlaneseq
  %v165 = vshrl.u32 %v164, 7
  %v166 = vsub.s32 2, %v165
  %v167 = vrot.slane %v43, %v166
  %v168 = vlaneseq
  %v169 = vshrl.u32 %v168, 7
  %v170 = vsub.s32 3, %v169
  %v171 = vrot.slane %v43, %v170
  %v172 = vlaneseq
  %v173 = vshrl.u32 %v172, 7
  %v174 = vsub.s32 4, %v173
  %v175 = vrot.slane %v43, %v174
  %v176 = vlaneseq
  %v177 = vshrl.u32 %v176, 7
  %v178 = vsub.s32 5, %v177
  %v179 = vrot.slane %v43, %v178
  %v180 = vlaneseq
  %v181 = vshrl.u32 %v180, 7
  %v182 = vsub.s32 6, %v181
  %v183 = vrot.slane %v43, %v182
  %v184 = vlaneseq
  %v185 = vshrl.u32 %v184, 7
  %v186 = vsub.s32 7, %v185
  %v187 = vrot.slane %v43, %v186
  %v188 = vlaneseq
  %v189 = vshrl.u32 %v188, 7
  %v190 = vsub.s32 0, %v189
  %v191 = vrot.slane %v44, %v190
  %v192 = vlaneseq
  %v193 = vshrl.u32 %v192, 7
  %v194 = vsub.s32 1, %v193
  %v195 = vrot.slane %v44, %v194
  %v196 = vlaneseq
  %v197 = vshrl.u32 %v196, 7
  %v198 = vsub.s32 2, %v197
  %v199 = vrot.slane %v44, %v198
  %v200 = vlaneseq
  %v201 = vshrl.u32 %v200, 7
  %v202 = vsub.s32 3, %v201
  %v203 = vrot.slane %v44, %v202
  %v204 = vlaneseq
  %v205 = vshrl.u32 %v204, 7
  %v206 = vsub.s32 4, %v205
  %v207 = vrot.slane %v44, %v206
  %v208 = vlaneseq
  %v209 = vshrl.u32 %v208, 7
  %v210 = vsub.s32 5, %v209
  %v211 = vrot.slane %v44, %v210
  %v212 = vlaneseq
  %v213 = vshrl.u32 %v212, 7
  %v214 = vsub.s32 6, %v213
  %v215 = vrot.slane %v44, %v214
  %v216 = vlaneseq
  %v217 = vshrl.u32 %v216, 7
  %v218 = vsub.s32 7, %v217
  %v219 = vrot.slane %v44, %v218
  %v220 = vlaneseq
  %v221 = vshrl.u32 %v220, 7
  %v222 = vsub.s32 0, %v221
  %v223 = vrot.slane %v45, %v222
  %v224 = vlaneseq
  %v225 = vshrl.u32 %v224, 7
  %v226 = vsub.s32 1, %v225
  %v227 = vrot.slane %v45, %v226
  %v228 = vlaneseq
  %v229 = vshrl.u32 %v228, 7
  %v230 = vsub.s32 2, %v229
  %v231 = vrot.slane %v45, %v230
  %v232 = vlaneseq
  %v233 = vshrl.u32 %v232, 7
  %v234 = vsub.s32 3, %v233
  %v235 = vrot.slane %v45, %v234
  %v272 = vmul.f32 %v51, %v95
  %v273 = vmul.f32 %v52, %v99
  %v274 = vmul.f32 %v53, %v103
  %v275 = vmul.f32 %v54, %v107
  %v276 = vmul.f32 %v55, %v111
  %v277 = vmul.f32 %v56, %v115
  %v278 = vmul.f32 %v57, %v119
  %v279 = vmul.f32 %v58, %v123
  %v280 = vmul.f32 %v59, %v127
  %v281 = vmul.f32 %v60, %v131
  %v282 = vmul.f32 %v61, %v135
  %v283 = vmul.f32 %v62, %v139
  %v284 = vmul.f32 %v63, %v143
  %v285 = vmul.f32 %v64, %v147
  %v286 = vmul.f32 %v65, %v151
  %v287 = vmul.f32 %v66, %v155
  %v288 = vmul.f32 %v67, %v159
  %v289 = vmul.f32 %v68, %v163
  %v290 = vmul.f32 %v69, %v167
  %v291 = vmul.f32 %v70, %v171
  %v292 = vmul.f32 %v71, %v175
  %v293 = vmul.f32 %v72, %v179
  %v294 = vmul.f32 %v73, %v183
  %v295 = vmul.f32 %v74, %v187
  %v296 = vmul.f32 %v75, %v191
  %v297 = vmul.f32 %v76, %v195
  %v298 = vmul.f32 %v77, %v199
  %v299 = vmul.f32 %v78, %v203
  %v300 = vmul.f32 %v79, %v207
  %v301 = vmul.f32 %v80, %v211
  %v302 = vmul.f32 %v81, %v215
  %v303 = vmul.f32 %v82, %v219
  %v304 = vmul.f32 %v83, %v223
  %v305 = vmul.f32 %v84, %v227
  %v306 = vmul.f32 %v85, %v231
  %v307 = vmul.f32 %v86, %v235
  %v313 = vlaneseq
  %v314 = vshrl.u32 %v313, 7
  %v315 = vsub.s32 0, %v314
  %v316 = vrot.slane %v46, %v315
  %v317 = vlaneseq
  %v318 = vshrl.u32 %v317, 7
  %v319 = vsub.s32 1, %v318
  %v320 = vrot.slane %v46, %v319
  %v321 = vlaneseq
  %v322 = vshrl.u32 %v321, 7
  %v323 = vsub.s32 2, %v322
  %v324 = vrot.slane %v46, %v323
  %v325 = vlaneseq
  %v326 = vshrl.u32 %v325, 7
  %v327 = vsub.s32 3, %v326
  %v328 = vrot.slane %v46, %v327
  %v329 = vlaneseq
  %v330 = vshrl.u32 %v329, 7
  %v331 = vsub.s32 4, %v330
  %v332 = vrot.slane %v46, %v331
  %v333 = vlaneseq
  %v334 = vshrl.u32 %v333, 7
  %v335 = vsub.s32 5, %v334
  %v336 = vrot.slane %v46, %v335
  %v337 = vlaneseq
  %v338 = vshrl.u32 %v337, 7
  %v339 = vsub.s32 6, %v338
  %v340 = vrot.slane %v46, %v339
  %v341 = vlaneseq
  %v342 = vshrl.u32 %v341, 7
  %v343 = vsub.s32 7, %v342
  %v344 = vrot.slane %v46, %v343
  %v345 = vlaneseq
  %v346 = vshrl.u32 %v345, 7
  %v347 = vsub.s32 0, %v346
  %v348 = vrot.slane %v47, %v347
  %v349 = vlaneseq
  %v350 = vshrl.u32 %v349, 7
  %v351 = vsub.s32 1, %v350
  %v352 = vrot.slane %v47, %v351
  %v353 = vlaneseq
  %v354 = vshrl.u32 %v353, 7
  %v355 = vsub.s32 2, %v354
  %v356 = vrot.slane %v47, %v355
  %v357 = vlaneseq
  %v358 = vshrl.u32 %v357, 7
  %v359 = vsub.s32 3, %v358
  %v360 = vrot.slane %v47, %v359
  %v361 = vlaneseq
  %v362 = vshrl.u32 %v361, 7
  %v363 = vsub.s32 4, %v362
  %v364 = vrot.slane %v47, %v363
  %v365 = vlaneseq
  %v366 = vshrl.u32 %v365, 7
  %v367 = vsub.s32 5, %v366
  %v368 = vrot.slane %v47, %v367
  %v369 = vlaneseq
  %v370 = vshrl.u32 %v369, 7
  %v371 = vsub.s32 6, %v370
  %v372 = vrot.slane %v47, %v371
  %v373 = vlaneseq
  %v374 = vshrl.u32 %v373, 7
  %v375 = vsub.s32 7, %v374
  %v376 = vrot.slane %v47, %v375
  %v377 = vlaneseq
  %v378 = vshrl.u32 %v377, 7
  %v379 = vsub.s32 0, %v378
  %v380 = vrot.slane %v48, %v379
  %v381 = vlaneseq
  %v382 = vshrl.u32 %v381, 7
  %v383 = vsub.s32 1, %v382
  %v384 = vrot.slane %v48, %v383
  %v385 = vlaneseq
  %v386 = vshrl.u32 %v385, 7
  %v387 = vsub.s32 2, %v386
  %v388 = vrot.slane %v48, %v387
  %v389 = vlaneseq
  %v390 = vshrl.u32 %v389, 7
  %v391 = vsub.s32 3, %v390
  %v392 = vrot.slane %v48, %v391
  %v393 = vlaneseq
  %v394 = vshrl.u32 %v393, 7
  %v395 = vsub.s32 4, %v394
  %v396 = vrot.slane %v48, %v395
  %v397 = vlaneseq
  %v398 = vshrl.u32 %v397, 7
  %v399 = vsub.s32 5, %v398
  %v400 = vrot.slane %v48, %v399
  %v401 = vlaneseq
  %v402 = vshrl.u32 %v401, 7
  %v403 = vsub.s32 6, %v402
  %v404 = vrot.slane %v48, %v403
  %v405 = vlaneseq
  %v406 = vshrl.u32 %v405, 7
  %v407 = vsub.s32 7, %v406
  %v408 = vrot.slane %v48, %v407
  %v409 = vlaneseq
  %v410 = vshrl.u32 %v409, 7
  %v411 = vsub.s32 0, %v410
  %v412 = vrot.slane %v49, %v411
  %v413 = vlaneseq
  %v414 = vshrl.u32 %v413, 7
  %v415 = vsub.s32 1, %v414
  %v416 = vrot.slane %v49, %v415
  %v417 = vlaneseq
  %v418 = vshrl.u32 %v417, 7
  %v419 = vsub.s32 2, %v418
  %v420 = vrot.slane %v49, %v419
  %v421 = vlaneseq
  %v422 = vshrl.u32 %v421, 7
  %v423 = vsub.s32 3, %v422
  %v424 = vrot.slane %v49, %v423
  %v425 = vlaneseq
  %v426 = vshrl.u32 %v425, 7
  %v427 = vsub.s32 4, %v426
  %v428 = vrot.slane %v49, %v427
  %v429 = vlaneseq
  %v430 = vshrl.u32 %v429, 7
  %v431 = vsub.s32 5, %v430
  %v432 = vrot.slane %v49, %v431
  %v433 = vlaneseq
  %v434 = vshrl.u32 %v433, 7
  %v435 = vsub.s32 6, %v434
  %v436 = vrot.slane %v49, %v435
  %v437 = vlaneseq
  %v438 = vshrl.u32 %v437, 7
  %v439 = vsub.s32 7, %v438
  %v440 = vrot.slane %v49, %v439
  %v441 = vlaneseq
  %v442 = vshrl.u32 %v441, 7
  %v443 = vsub.s32 0, %v442
  %v444 = vrot.slane %v50, %v443
  %v445 = vlaneseq
  %v446 = vshrl.u32 %v445, 7
  %v447 = vsub.s32 1, %v446
  %v448 = vrot.slane %v50, %v447
  %v449 = vlaneseq
  %v450 = vshrl.u32 %v449, 7
  %v451 = vsub.s32 2, %v450
  %v452 = vrot.slane %v50, %v451
  %v453 = vlaneseq
  %v454 = vshrl.u32 %v453, 7
  %v455 = vsub.s32 3, %v454
  %v456 = vrot.slane %v50, %v455
  %v493 = vadd.f32 %v272, %v316
  %v494 = vadd.f32 %v273, %v320
  %v495 = vadd.f32 %v274, %v324
  %v496 = vadd.f32 %v275, %v328
  %v497 = vadd.f32 %v276, %v332
  %v498 = vadd.f32 %v277, %v336
  %v499 = vadd.f32 %v278, %v340
  %v500 = vadd.f32 %v279, %v344
  %v501 = vadd.f32 %v280, %v348
  %v502 = vadd.f32 %v281, %v352
  %v503 = vadd.f32 %v282, %v356
  %v504 = vadd.f32 %v283, %v360
  %v505 = vadd.f32 %v284, %v364
  %v506 = vadd.f32 %v285, %v368
  %v507 = vadd.f32 %v286, %v372
  %v508 = vadd.f32 %v287, %v376
  %v509 = vadd.f32 %v288, %v380
  %v510 = vadd.f32 %v289, %v384
  %v511 = vadd.f32 %v290, %v388
  %v512 = vadd.f32 %v291, %v392
  %v513 = vadd.f32 %v292, %v396
  %v514 = vadd.f32 %v293, %v400
  %v515 = vadd.f32 %v294, %v404
  %v516 = vadd.f32 %v295, %v408
  %v517 = vadd.f32 %v296, %v412
  %v518 = vadd.f32 %v297, %v416
  %v519 = vadd.f32 %v298, %v420
  %v520 = vadd.f32 %v299, %v424
  %v521 = vadd.f32 %v300, %v428
  %v522 = vadd.f32 %v301, %v432
  %v523 = vadd.f32 %v302, %v436
  %v524 = vadd.f32 %v303, %v440
  %v525 = vadd.f32 %v304, %v444
  %v526 = vadd.f32 %v305, %v448
  %v527 = vadd.f32 %v306, %v452
  %v528 = vadd.f32 %v307, %v456
  %vm529 = vcmp.gt.f32.partialorder %v493, 0.0
  %vm530 = vcmp.gt.f32.partialorder %v494, 0.0
  %vm531 = vcmp.gt.f32.partialorder %v495, 0.0
  %vm532 = vcmp.gt.f32.partialorder %v496, 0.0
  %vm533 = vcmp.gt.f32.partialorder %v497, 0.0
  %vm534 = vcmp.gt.f32.partialorder %v498, 0.0
  %vm535 = vcmp.gt.f32.partialorder %v499, 0.0
  %vm536 = vcmp.gt.f32.partialorder %v500, 0.0
  %vm537 = vcmp.gt.f32.partialorder %v501, 0.0
  %vm538 = vcmp.gt.f32.partialorder %v502, 0.0
  %vm539 = vcmp.gt.f32.partialorder %v503, 0.0
  %vm540 = vcmp.gt.f32.partialorder %v504, 0.0
  %vm541 = vcmp.gt.f32.partialorder %v505, 0.0
  %vm542 = vcmp.gt.f32.partialorder %v506, 0.0
  %vm543 = vcmp.gt.f32.partialorder %v507, 0.0
  %vm544 = vcmp.gt.f32.partialorder %v508, 0.0
  %vm545 = vcmp.gt.f32.partialorder %v509, 0.0
  %vm546 = vcmp.gt.f32.partialorder %v510, 0.0
  %vm547 = vcmp.gt.f32.partialorder %v511, 0.0
  %vm548 = vcmp.gt.f32.partialorder %v512, 0.0
  %vm549 = vcmp.gt.f32.partialorder %v513, 0.0
  %vm550 = vcmp.gt.f32.partialorder %v514, 0.0
  %vm551 = vcmp.gt.f32.partialorder %v515, 0.0
  %vm552 = vcmp.gt.f32.partialorder %v516, 0.0
  %vm553 = vcmp.gt.f32.partialorder %v517, 0.0
  %vm554 = vcmp.gt.f32.partialorder %v518, 0.0
  %vm555 = vcmp.gt.f32.partialorder %v519, 0.0
  %vm556 = vcmp.gt.f32.partialorder %v520, 0.0
  %vm557 = vcmp.gt.f32.partialorder %v521, 0.0
  %vm558 = vcmp.gt.f32.partialorder %v522, 0.0
  %vm559 = vcmp.gt.f32.partialorder %v523, 0.0
  %vm560 = vcmp.gt.f32.partialorder %v524, 0.0
  %vm561 = vcmp.gt.f32.partialorder %v525, 0.0
  %vm562 = vcmp.gt.f32.partialorder %v526, 0.0
  %vm563 = vcmp.gt.f32.partialorder %v527, 0.0
  %vm564 = vcmp.gt.f32.partialorder %v528, 0.0
  %v565 = vmul.f32 %v493, 0.2
  %v566 = vmul.f32 %v494, 0.2
  %v567 = vmul.f32 %v495, 0.2
  %v568 = vmul.f32 %v496, 0.2
  %v569 = vmul.f32 %v497, 0.2
  %v570 = vmul.f32 %v498, 0.2
  %v571 = vmul.f32 %v499, 0.2
  %v572 = vmul.f32 %v500, 0.2
  %v573 = vmul.f32 %v501, 0.2
  %v574 = vmul.f32 %v502, 0.2
  %v575 = vmul.f32 %v503, 0.2
  %v576 = vmul.f32 %v504, 0.2
  %v577 = vmul.f32 %v505, 0.2
  %v578 = vmul.f32 %v506, 0.2
  %v579 = vmul.f32 %v507, 0.2
  %v580 = vmul.f32 %v508, 0.2
  %v581 = vmul.f32 %v509, 0.2
  %v582 = vmul.f32 %v510, 0.2
  %v583 = vmul.f32 %v511, 0.2
  %v584 = vmul.f32 %v512, 0.2
  %v585 = vmul.f32 %v513, 0.2
  %v586 = vmul.f32 %v514, 0.2
  %v587 = vmul.f32 %v515, 0.2
  %v588 = vmul.f32 %v516, 0.2
  %v589 = vmul.f32 %v517, 0.2
  %v590 = vmul.f32 %v518, 0.2
  %v591 = vmul.f32 %v519, 0.2
  %v592 = vmul.f32 %v520, 0.2
  %v593 = vmul.f32 %v521, 0.2
  %v594 = vmul.f32 %v522, 0.2
  %v595 = vmul.f32 %v523, 0.2
  %v596 = vmul.f32 %v524, 0.2
  %v597 = vmul.f32 %v525, 0.2
  %v598 = vmul.f32 %v526, 0.2
  %v599 = vmul.f32 %v527, 0.2
  %v600 = vmul.f32 %v528, 0.2
  %v601 = vsel %vm529, %v493, %v565
  %v602 = vsel %vm530, %v494, %v566
  %v603 = vsel %vm531, %v495, %v567
  %v604 = vsel %vm532, %v496, %v568
  %v605 = vsel %vm533, %v497, %v569
  %v606 = vsel %vm534, %v498, %v570
  %v607 = vsel %vm535, %v499, %v571
  %v608 = vsel %vm536, %v500, %v572
  %v609 = vsel %vm537, %v501, %v573
  %v610 = vsel %vm538, %v502, %v574
  %v611 = vsel %vm539, %v503, %v575
  %v612 = vsel %vm540, %v504, %v576
  %v613 = vsel %vm541, %v505, %v577
  %v614 = vsel %vm542, %v506, %v578
  %v615 = vsel %vm543, %v507, %v579
  %v616 = vsel %vm544, %v508, %v580
  %v617 = vsel %vm545, %v509, %v581
  %v618 = vsel %vm546, %v510, %v582
  %v619 = vsel %vm547, %v511, %v583
  %v620 = vsel %vm548, %v512, %v584
  %v621 = vsel %vm549, %v513, %v585
  %v622 = vsel %vm550, %v514, %v586
  %v623 = vsel %vm551, %v515, %v587
  %v624 = vsel %vm552, %v516, %v588
  %v625 = vsel %vm553, %v517, %v589
  %v626 = vsel %vm554, %v518, %v590
  %v627 = vsel %vm555, %v519, %v591
  %v628 = vsel %vm556, %v520, %v592
  %v629 = vsel %vm557, %v521, %v593
  %v630 = vsel %vm558, %v522, %v594
  %v631 = vsel %vm559, %v523, %v595
  %v632 = vsel %vm560, %v524, %v596
  %v633 = vsel %vm561, %v525, %v597
  %v634 = vsel %vm562, %v526, %v598
  %v635 = vsel %vm563, %v527, %v599
  %v636 = vsel %vm564, %v528, %v600
  %vm637 = vcmp.ne.bf16.partialorder %v23, %v23
  %vm638 = vcmp.ne.bf16.partialorder %v24, %v24
  %vm639 = vcmp.ne.bf16.partialorder %v25, %v25
  %vm640 = vcmp.ne.bf16.partialorder %v26, %v26
  %vm641 = vcmp.ne.bf16.partialorder %v27, %v27
  %vm642 = vcmp.ne.bf16.partialorder %v28, %v28
  %vm643 = vcmp.ne.bf16.partialorder %v29, %v29
  %vm644 = vcmp.ne.bf16.partialorder %v30, %v30
  %vm645 = vcmp.ne.bf16.partialorder %v31, %v31
  %vm646 = vcmp.ne.bf16.partialorder %v32, %v32
  %vm647 = vcmp.ne.bf16.partialorder %v33, %v33
  %vm648 = vcmp.ne.bf16.partialorder %v34, %v34
  %vm649 = vcmp.ne.bf16.partialorder %v35, %v35
  %vm650 = vcmp.ne.bf16.partialorder %v36, %v36
  %vm651 = vcmp.ne.bf16.partialorder %v37, %v37
  %vm652 = vcmp.ne.bf16.partialorder %v38, %v38
  %vm653 = vcmp.ne.bf16.partialorder %v39, %v39
  %vm654 = vcmp.ne.bf16.partialorder %v40, %v40
  %v655 = vsel %vm637, 65537, 0
  %v656 = vsel %vm638, 65537, 0
  %v657 = vsel %vm639, 65537, 0
  %v658 = vsel %vm640, 65537, 0
  %v659 = vsel %vm641, 65537, 0
  %v660 = vsel %vm642, 65537, 0
  %v661 = vsel %vm643, 65537, 0
  %v662 = vsel %vm644, 65537, 0
  %v663 = vsel %vm645, 65537, 0
  %v664 = vsel %vm646, 65537, 0
  %v665 = vsel %vm647, 65537, 0
  %v666 = vsel %vm648, 65537, 0
  %v667 = vsel %vm649, 65537, 0
  %v668 = vsel %vm650, 65537, 0
  %v669 = vsel %vm651, 65537, 0
  %v670 = vsel %vm652, 65537, 0
  %v671 = vsel %vm653, 65537, 0
  %v672 = vsel %vm654, 65537, 0
  %v673 = vunpack.c.l.b16 %v655
  %v674 = vunpack.c.h.b16 %v655
  %v675 = vunpack.c.l.b16 %v656
  %v676 = vunpack.c.h.b16 %v656
  %v677 = vunpack.c.l.b16 %v657
  %v678 = vunpack.c.h.b16 %v657
  %v679 = vunpack.c.l.b16 %v658
  %v680 = vunpack.c.h.b16 %v658
  %v681 = vunpack.c.l.b16 %v659
  %v682 = vunpack.c.h.b16 %v659
  %v683 = vunpack.c.l.b16 %v660
  %v684 = vunpack.c.h.b16 %v660
  %v685 = vunpack.c.l.b16 %v661
  %v686 = vunpack.c.h.b16 %v661
  %v687 = vunpack.c.l.b16 %v662
  %v688 = vunpack.c.h.b16 %v662
  %v689 = vunpack.c.l.b16 %v663
  %v690 = vunpack.c.h.b16 %v663
  %v691 = vunpack.c.l.b16 %v664
  %v692 = vunpack.c.h.b16 %v664
  %v693 = vunpack.c.l.b16 %v665
  %v694 = vunpack.c.h.b16 %v665
  %v695 = vunpack.c.l.b16 %v666
  %v696 = vunpack.c.h.b16 %v666
  %v697 = vunpack.c.l.b16 %v667
  %v698 = vunpack.c.h.b16 %v667
  %v699 = vunpack.c.l.b16 %v668
  %v700 = vunpack.c.h.b16 %v668
  %v701 = vunpack.c.l.b16 %v669
  %v702 = vunpack.c.h.b16 %v669
  %v703 = vunpack.c.l.b16 %v670
  %v704 = vunpack.c.h.b16 %v670
  %v705 = vunpack.c.l.b16 %v671
  %v706 = vunpack.c.h.b16 %v671
  %v707 = vunpack.c.l.b16 %v672
  %v708 = vunpack.c.h.b16 %v672
  %vm709 = vcmp.ne.s32.totalorder %v673, 0
  %vm710 = vcmp.ne.s32.totalorder %v674, 0
  %vm711 = vcmp.ne.s32.totalorder %v675, 0
  %vm712 = vcmp.ne.s32.totalorder %v676, 0
  %vm713 = vcmp.ne.s32.totalorder %v677, 0
  %vm714 = vcmp.ne.s32.totalorder %v678, 0
  %vm715 = vcmp.ne.s32.totalorder %v679, 0
  %vm716 = vcmp.ne.s32.totalorder %v680, 0
  %vm717 = vcmp.ne.s32.totalorder %v681, 0
  %vm718 = vcmp.ne.s32.totalorder %v682, 0
  %vm719 = vcmp.ne.s32.totalorder %v683, 0
  %vm720 = vcmp.ne.s32.totalorder %v684, 0
  %vm721 = vcmp.ne.s32.totalorder %v685, 0
  %vm722 = vcmp.ne.s32.totalorder %v686, 0
  %vm723 = vcmp.ne.s32.totalorder %v687, 0
  %vm724 = vcmp.ne.s32.totalorder %v688, 0
  %vm725 = vcmp.ne.s32.totalorder %v689, 0
  %vm726 = vcmp.ne.s32.totalorder %v690, 0
  %vm727 = vcmp.ne.s32.totalorder %v691, 0
  %vm728 = vcmp.ne.s32.totalorder %v692, 0
  %vm729 = vcmp.ne.s32.totalorder %v693, 0
  %vm730 = vcmp.ne.s32.totalorder %v694, 0
  %vm731 = vcmp.ne.s32.totalorder %v695, 0
  %vm732 = vcmp.ne.s32.totalorder %v696, 0
  %vm733 = vcmp.ne.s32.totalorder %v697, 0
  %vm734 = vcmp.ne.s32.totalorder %v698, 0
  %vm735 = vcmp.ne.s32.totalorder %v699, 0
  %vm736 = vcmp.ne.s32.totalorder %v700, 0
  %vm737 = vcmp.ne.s32.totalorder %v701, 0
  %vm738 = vcmp.ne.s32.totalorder %v702, 0
  %vm739 = vcmp.ne.s32.totalorder %v703, 0
  %vm740 = vcmp.ne.s32.totalorder %v704, 0
  %vm741 = vcmp.ne.s32.totalorder %v705, 0
  %vm742 = vcmp.ne.s32.totalorder %v706, 0
  %vm743 = vcmp.ne.s32.totalorder %v707, 0
  %vm744 = vcmp.ne.s32.totalorder %v708, 0
  %v745 = vsel %vm709, 0.0, %v601
  %v746 = vsel %vm710, 0.0, %v602
  %v747 = vsel %vm711, 0.0, %v603
  %v748 = vsel %vm712, 0.0, %v604
  %v749 = vsel %vm713, 0.0, %v605
  %v750 = vsel %vm714, 0.0, %v606
  %v751 = vsel %vm715, 0.0, %v607
  %v752 = vsel %vm716, 0.0, %v608
  %v753 = vsel %vm717, 0.0, %v609
  %v754 = vsel %vm718, 0.0, %v610
  %v755 = vsel %vm719, 0.0, %v611
  %v756 = vsel %vm720, 0.0, %v612
  %v757 = vsel %vm721, 0.0, %v613
  %v758 = vsel %vm722, 0.0, %v614
  %v759 = vsel %vm723, 0.0, %v615
  %v760 = vsel %vm724, 0.0, %v616
  %v761 = vsel %vm725, 0.0, %v617
  %v762 = vsel %vm726, 0.0, %v618
  %v763 = vsel %vm727, 0.0, %v619
  %v764 = vsel %vm728, 0.0, %v620
  %v765 = vsel %vm729, 0.0, %v621
  %v766 = vsel %vm730, 0.0, %v622
  %v767 = vsel %vm731, 0.0, %v623
  %v768 = vsel %vm732, 0.0, %v624
  %v769 = vsel %vm733, 0.0, %v625
  %v770 = vsel %vm734, 0.0, %v626
  %v771 = vsel %vm735, 0.0, %v627
  %v772 = vsel %vm736, 0.0, %v628
  %v773 = vsel %vm737, 0.0, %v629
  %v774 = vsel %vm738, 0.0, %v630
  %v775 = vsel %vm739, 0.0, %v631
  %v776 = vsel %vm740, 0.0, %v632
  %v777 = vsel %vm741, 0.0, %v633
  %v778 = vsel %vm742, 0.0, %v634
  %v779 = vsel %vm743, 0.0, %v635
  %v780 = vsel %vm744, 0.0, %v636
  %v781 = vpack.c.bf16 %v745, %v745
  %v782 = vpack.c.bf16 %v746, %v746
  %v783 = vpack.c.bf16 %v747, %v747
  %v784 = vpack.c.bf16 %v748, %v748
  %v785 = vpack.c.bf16 %v749, %v749
  %v786 = vpack.c.bf16 %v750, %v750
  %v787 = vpack.c.bf16 %v751, %v751
  %v788 = vpack.c.bf16 %v752, %v752
  %v789 = vpack.c.bf16 %v753, %v753
  %v790 = vpack.c.bf16 %v754, %v754
  %v791 = vpack.c.bf16 %v755, %v755
  %v792 = vpack.c.bf16 %v756, %v756
  %v793 = vpack.c.bf16 %v757, %v757
  %v794 = vpack.c.bf16 %v758, %v758
  %v795 = vpack.c.bf16 %v759, %v759
  %v796 = vpack.c.bf16 %v760, %v760
  %v797 = vpack.c.bf16 %v761, %v761
  %v798 = vpack.c.bf16 %v762, %v762
  %v799 = vpack.c.bf16 %v763, %v763
  %v800 = vpack.c.bf16 %v764, %v764
  %v801 = vpack.c.bf16 %v765, %v765
  %v802 = vpack.c.bf16 %v766, %v766
  %v803 = vpack.c.bf16 %v767, %v767
  %v804 = vpack.c.bf16 %v768, %v768
  %v805 = vpack.c.bf16 %v769, %v769
  %v806 = vpack.c.bf16 %v770, %v770
  %v807 = vpack.c.bf16 %v771, %v771
  %v808 = vpack.c.bf16 %v772, %v772
  %v809 = vpack.c.bf16 %v773, %v773
  %v810 = vpack.c.bf16 %v774, %v774
  %v811 = vpack.c.bf16 %v775, %v775
  %v812 = vpack.c.bf16 %v776, %v776
  %v813 = vpack.c.bf16 %v777, %v777
  %v814 = vpack.c.bf16 %v778, %v778
  %v815 = vpack.c.bf16 %v779, %v779
  %v816 = vpack.c.bf16 %v780, %v780
  %v817 = vld [vmem:[%s3] sm:$0xf]
  %v818 = vld [vmem:[%s3 + $0x4] sm:$0xf]
  %v819 = vld [vmem:[%s3 + $0x8] sm:$0xf]
  %v820 = vld [vmem:[%s3 + $0xc] sm:$0xf]
  %v821 = vld [vmem:[%s3 + $0x10] sm:$0xf]
  %v822 = vld [vmem:[%s3 + $0x14] sm:$0xf]
  %v823 = vld [vmem:[%s3 + $0x18] sm:$0xf]
  %v824 = vld [vmem:[%s3 + $0x1c] sm:$0xf]
  %v825 = vld [vmem:[%s3 + $0x20] sm:$0xf]
  %v826 = vld [vmem:[%s3 + $0x24] sm:$0xf]
  %v827 = vld [vmem:[%s3 + $0x28] sm:$0xf]
  %v828 = vld [vmem:[%s3 + $0x2c] sm:$0xf]
  %v829 = vld [vmem:[%s3 + $0x30] sm:$0xf]
  %v830 = vld [vmem:[%s3 + $0x34] sm:$0xf]
  %v831 = vld [vmem:[%s3 + $0x38] sm:$0xf]
  %v832 = vld [vmem:[%s3 + $0x3c] sm:$0xf]
  %v833 = vld [vmem:[%s3 + $0x40] sm:$0xf]
  %v834 = vld [vmem:[%s3 + $0x44] sm:$0xf]
  %v835 = vld [vmem:[%s3 + $0x48] sm:$0xf]
  %v836 = vld [vmem:[%s3 + $0x4c] sm:$0xf]
  %v837 = vld [vmem:[%s3 + $0x50] sm:$0xf]
  %v838 = vld [vmem:[%s3 + $0x54] sm:$0xf]
  %v839 = vld [vmem:[%s3 + $0x58] sm:$0xf]
  %v840 = vld [vmem:[%s3 + $0x5c] sm:$0xf]
  %v841 = vld [vmem:[%s3 + $0x60] sm:$0xf]
  %v842 = vld [vmem:[%s3 + $0x64] sm:$0xf]
  %v843 = vld [vmem:[%s3 + $0x68] sm:$0xf]
  %v844 = vld [vmem:[%s3 + $0x6c] sm:$0xf]
  %v845 = vld [vmem:[%s3 + $0x70] sm:$0xf]
  %v846 = vld [vmem:[%s3 + $0x74] sm:$0xf]
  %v847 = vld [vmem:[%s3 + $0x78] sm:$0xf]
  %v848 = vld [vmem:[%s3 + $0x7c] sm:$0xf]
  %v849 = vld [vmem:[%s3 + $0x80] sm:$0xf]
  %v850 = vld [vmem:[%s3 + $0x84] sm:$0xf]
  %v851 = vld [vmem:[%s3 + $0x88] sm:$0xf]
  %v852 = vld [vmem:[%s3 + $0x8c] sm:$0xf]
  %v853 = vld [vmem:[%s3 + $0x90] sm:$0xf]
  %v854 = vld [vmem:[%s3 + $0x94] sm:$0xf]
  %v855 = vld [vmem:[%s3 + $0x98] sm:$0xf]
  %v856 = vld [vmem:[%s3 + $0x9c] sm:$0xf]
  %v857 = vld [vmem:[%s3 + $0xa0] sm:$0xf]
  %v858 = vld [vmem:[%s3 + $0xa4] sm:$0xf]
  %v859 = vld [vmem:[%s3 + $0xa8] sm:$0xf]
  %v860 = vld [vmem:[%s3 + $0xac] sm:$0xf]
  %v861 = vld [vmem:[%s3 + $0xb0] sm:$0xf]
  %v862 = vld [vmem:[%s3 + $0xb4] sm:$0xf]
  %v863 = vld [vmem:[%s3 + $0xb8] sm:$0xf]
  %v864 = vld [vmem:[%s3 + $0xbc] sm:$0xf]
  %v865 = vld [vmem:[%s3 + $0xc0] sm:$0xf]
  %v866 = vld [vmem:[%s3 + $0xc4] sm:$0xf]
  %v867 = vld [vmem:[%s3 + $0xc8] sm:$0xf]
  %v868 = vld [vmem:[%s3 + $0xcc] sm:$0xf]
  %v869 = vld [vmem:[%s3 + $0xd0] sm:$0xf]
  %v870 = vld [vmem:[%s3 + $0xd4] sm:$0xf]
  %v871 = vld [vmem:[%s3 + $0xd8] sm:$0xf]
  %v872 = vld [vmem:[%s3 + $0xdc] sm:$0xf]
  %v873 = vld [vmem:[%s3 + $0xe0] sm:$0xf]
  %v874 = vld [vmem:[%s3 + $0xe4] sm:$0xf]
  %v875 = vld [vmem:[%s3 + $0xe8] sm:$0xf]
  %v876 = vld [vmem:[%s3 + $0xec] sm:$0xf]
  %v877 = vld [vmem:[%s3 + $0xf0] sm:$0xf]
  %v878 = vld [vmem:[%s3 + $0xf4] sm:$0xf]
  %v879 = vld [vmem:[%s3 + $0xf8] sm:$0xf]
  %v880 = vld [vmem:[%s3 + $0xfc] sm:$0xf]
  %v881 = vld [vmem:[%s3 + $0x100] sm:$0xf]
  %v882 = vld [vmem:[%s3 + $0x104] sm:$0xf]
  %v883 = vld [vmem:[%s3 + $0x108] sm:$0xf]
  %v884 = vld [vmem:[%s3 + $0x10c] sm:$0xf]
  %v885 = vld [vmem:[%s3 + $0x110] sm:$0xf]
  %v886 = vld [vmem:[%s3 + $0x114] sm:$0xf]
  %v887 = vld [vmem:[%s3 + $0x118] sm:$0xf]
  %v888 = vld [vmem:[%s3 + $0x11c] sm:$0xf]
  %v889 = vld [vmem:[%s3 + $0x120] sm:$0xf]
  %v890 = vld [vmem:[%s3 + $0x124] sm:$0xf]
  %v891 = vld [vmem:[%s3 + $0x128] sm:$0xf]
  %v892 = vld [vmem:[%s3 + $0x12c] sm:$0xf]
  %v893 = vld [vmem:[%s3 + $0x130] sm:$0xf]
  %v894 = vld [vmem:[%s3 + $0x134] sm:$0xf]
  %v895 = vld [vmem:[%s3 + $0x138] sm:$0xf]
  %v896 = vld [vmem:[%s3 + $0x13c] sm:$0xf]
  %v897 = vld [vmem:[%s3 + $0x140] sm:$0xf]
  %v898 = vld [vmem:[%s3 + $0x144] sm:$0xf]
  %v899 = vld [vmem:[%s3 + $0x148] sm:$0xf]
  %v900 = vld [vmem:[%s3 + $0x14c] sm:$0xf]
  %v901 = vld [vmem:[%s3 + $0x150] sm:$0xf]
  %v902 = vld [vmem:[%s3 + $0x154] sm:$0xf]
  %v903 = vld [vmem:[%s3 + $0x158] sm:$0xf]
  %v904 = vld [vmem:[%s3 + $0x15c] sm:$0xf]
  %v905 = vld [vmem:[%s3 + $0x160] sm:$0xf]
  %v906 = vld [vmem:[%s3 + $0x164] sm:$0xf]
  %v907 = vld [vmem:[%s3 + $0x168] sm:$0xf]
  %v908 = vld [vmem:[%s3 + $0x16c] sm:$0xf]
  %v909 = vld [vmem:[%s3 + $0x170] sm:$0xf]
  %v910 = vld [vmem:[%s3 + $0x174] sm:$0xf]
  %v911 = vld [vmem:[%s3 + $0x178] sm:$0xf]
  %v912 = vld [vmem:[%s3 + $0x17c] sm:$0xf]
  %v913 = vld [vmem:[%s3 + $0x180] sm:$0xf]
  %v914 = vld [vmem:[%s3 + $0x184] sm:$0xf]
  %v915 = vld [vmem:[%s3 + $0x188] sm:$0xf]
  %v916 = vld [vmem:[%s3 + $0x18c] sm:$0xf]
  %v917 = vld [vmem:[%s3 + $0x190] sm:$0xf]
  %v918 = vld [vmem:[%s3 + $0x194] sm:$0xf]
  %v919 = vld [vmem:[%s3 + $0x198] sm:$0xf]
  %v920 = vld [vmem:[%s3 + $0x19c] sm:$0xf]
  %v921 = vld [vmem:[%s3 + $0x1a0] sm:$0xf]
  %v922 = vld [vmem:[%s3 + $0x1a4] sm:$0xf]
  %v923 = vld [vmem:[%s3 + $0x1a8] sm:$0xf]
  %v924 = vld [vmem:[%s3 + $0x1ac] sm:$0xf]
  %v925 = vld [vmem:[%s3 + $0x1b0] sm:$0xf]
  %v926 = vld [vmem:[%s3 + $0x1b4] sm:$0xf]
  %v927 = vld [vmem:[%s3 + $0x1b8] sm:$0xf]
  %v928 = vld [vmem:[%s3 + $0x1bc] sm:$0xf]
  %v929 = vld [vmem:[%s3 + $0x1c0] sm:$0xf]
  %v930 = vld [vmem:[%s3 + $0x1c4] sm:$0xf]
  %v931 = vld [vmem:[%s3 + $0x1c8] sm:$0xf]
  %v932 = vld [vmem:[%s3 + $0x1cc] sm:$0xf]
  %v933 = vld [vmem:[%s3 + $0x1d0] sm:$0xf]
  %v934 = vld [vmem:[%s3 + $0x1d4] sm:$0xf]
  %v935 = vld [vmem:[%s3 + $0x1d8] sm:$0xf]
  %v936 = vld [vmem:[%s3 + $0x1dc] sm:$0xf]
  %v937 = vld [vmem:[%s3 + $0x1e0] sm:$0xf]
  %v938 = vld [vmem:[%s3 + $0x1e4] sm:$0xf]
  %v939 = vld [vmem:[%s3 + $0x1e8] sm:$0xf]
  %v940 = vld [vmem:[%s3 + $0x1ec] sm:$0xf]
  %v941 = vld [vmem:[%s3 + $0x1f0] sm:$0xf]
  %v942 = vld [vmem:[%s3 + $0x1f4] sm:$0xf]
  %v943 = vld [vmem:[%s3 + $0x1f8] sm:$0xf]
  %v944 = vld [vmem:[%s3 + $0x1fc] sm:$0xf]
  %v945 = vld [vmem:[%s3 + $0x200] sm:$0xf]
  %v946 = vld [vmem:[%s3 + $0x204] sm:$0xf]
  %v947 = vld [vmem:[%s3 + $0x208] sm:$0xf]
  %v948 = vld [vmem:[%s3 + $0x20c] sm:$0xf]
  %v949 = vld [vmem:[%s3 + $0x210] sm:$0xf]
  %v950 = vld [vmem:[%s3 + $0x214] sm:$0xf]
  %v951 = vld [vmem:[%s3 + $0x218] sm:$0xf]
  %v952 = vld [vmem:[%s3 + $0x21c] sm:$0xf]
  %v953 = vld [vmem:[%s3 + $0x220] sm:$0xf]
  %v954 = vld [vmem:[%s3 + $0x224] sm:$0xf]
  %v955 = vld [vmem:[%s3 + $0x228] sm:$0xf]
  %v956 = vld [vmem:[%s3 + $0x22c] sm:$0xf]
  %v957 = vld [vmem:[%s3 + $0x230] sm:$0xf]
  %v958 = vld [vmem:[%s3 + $0x234] sm:$0xf]
  %v959 = vld [vmem:[%s3 + $0x238] sm:$0xf]
  %v960 = vld [vmem:[%s3 + $0x23c] sm:$0xf]
  %v961 = vld [vmem:[%s3 + $0x240] sm:$0xf]
  %v962 = vld [vmem:[%s3 + $0x244] sm:$0xf]
  %v963 = vld [vmem:[%s3 + $0x248] sm:$0xf]
  %v964 = vld [vmem:[%s3 + $0x24c] sm:$0xf]
  %v965 = vld [vmem:[%s3 + $0x250] sm:$0xf]
  %v966 = vld [vmem:[%s3 + $0x254] sm:$0xf]
  %v967 = vld [vmem:[%s3 + $0x258] sm:$0xf]
  %v968 = vld [vmem:[%s3 + $0x25c] sm:$0xf]
  %v969 = vld [vmem:[%s3 + $0x260] sm:$0xf]
  %v970 = vld [vmem:[%s3 + $0x264] sm:$0xf]
  %v971 = vld [vmem:[%s3 + $0x268] sm:$0xf]
  %v972 = vld [vmem:[%s3 + $0x26c] sm:$0xf]
  %v973 = vld [vmem:[%s3 + $0x270] sm:$0xf]
  %v974 = vld [vmem:[%s3 + $0x274] sm:$0xf]
  %v975 = vld [vmem:[%s3 + $0x278] sm:$0xf]
  %v976 = vld [vmem:[%s3 + $0x27c] sm:$0xf]
  %v977 = vld [vmem:[%s3 + $0x280] sm:$0xf]
  %v978 = vld [vmem:[%s3 + $0x284] sm:$0xf]
  %v979 = vld [vmem:[%s3 + $0x288] sm:$0xf]
  %v980 = vld [vmem:[%s3 + $0x28c] sm:$0xf]
  %v981 = vld [vmem:[%s3 + $0x290] sm:$0xf]
  %v982 = vld [vmem:[%s3 + $0x294] sm:$0xf]
  %v983 = vld [vmem:[%s3 + $0x298] sm:$0xf]
  %v984 = vld [vmem:[%s3 + $0x29c] sm:$0xf]
  %v985 = vld [vmem:[%s3 + $0x2a0] sm:$0xf]
  %v986 = vld [vmem:[%s3 + $0x2a4] sm:$0xf]
  %v987 = vld [vmem:[%s3 + $0x2a8] sm:$0xf]
  %v988 = vld [vmem:[%s3 + $0x2ac] sm:$0xf]
  %v989 = vld [vmem:[%s3 + $0x2b0] sm:$0xf]
  %v990 = vld [vmem:[%s3 + $0x2b4] sm:$0xf]
  %v991 = vld [vmem:[%s3 + $0x2b8] sm:$0xf]
  %v992 = vld [vmem:[%s3 + $0x2bc] sm:$0xf]
  %v993 = vld [vmem:[%s3 + $0x2c0] sm:$0xf]
  %v994 = vld [vmem:[%s3 + $0x2c4] sm:$0xf]
  %v995 = vld [vmem:[%s3 + $0x2c8] sm:$0xf]
  %v996 = vld [vmem:[%s3 + $0x2cc] sm:$0xf]
  %v997 = vld [vmem:[%s3 + $0x2d0] sm:$0xf]
  %v998 = vld [vmem:[%s3 + $0x2d4] sm:$0xf]
  %v999 = vld [vmem:[%s3 + $0x2d8] sm:$0xf]
  %v1000 = vld [vmem:[%s3 + $0x2dc] sm:$0xf]
  %v1001 = vld [vmem:[%s3 + $0x2e0] sm:$0xf]
  %v1002 = vld [vmem:[%s3 + $0x2e4] sm:$0xf]
  %v1003 = vld [vmem:[%s3 + $0x2e8] sm:$0xf]
  %v1004 = vld [vmem:[%s3 + $0x2ec] sm:$0xf]
  %v1005 = vld [vmem:[%s3 + $0x2f0] sm:$0xf]
  %v1006 = vld [vmem:[%s3 + $0x2f4] sm:$0xf]
  %v1007 = vld [vmem:[%s3 + $0x2f8] sm:$0xf]
  %v1008 = vld [vmem:[%s3 + $0x2fc] sm:$0xf]
  %v1009 = vld [vmem:[%s3 + $0x300] sm:$0xf]
  %v1010 = vld [vmem:[%s3 + $0x304] sm:$0xf]
  %v1011 = vld [vmem:[%s3 + $0x308] sm:$0xf]
  %v1012 = vld [vmem:[%s3 + $0x30c] sm:$0xf]
  %v1013 = vld [vmem:[%s3 + $0x310] sm:$0xf]
  %v1014 = vld [vmem:[%s3 + $0x314] sm:$0xf]
  %v1015 = vld [vmem:[%s3 + $0x318] sm:$0xf]
  %v1016 = vld [vmem:[%s3 + $0x31c] sm:$0xf]
  %v1017 = vld [vmem:[%s3 + $0x320] sm:$0xf]
  %v1018 = vld [vmem:[%s3 + $0x324] sm:$0xf]
  %v1019 = vld [vmem:[%s3 + $0x328] sm:$0xf]
  %v1020 = vld [vmem:[%s3 + $0x32c] sm:$0xf]
  %v1021 = vld [vmem:[%s3 + $0x330] sm:$0xf]
  %v1022 = vld [vmem:[%s3 + $0x334] sm:$0xf]
  %v1023 = vld [vmem:[%s3 + $0x338] sm:$0xf]
  %v1024 = vld [vmem:[%s3 + $0x33c] sm:$0xf]
  %v1025 = vld [vmem:[%s3 + $0x340] sm:$0xf]
  %v1026 = vld [vmem:[%s3 + $0x344] sm:$0xf]
  %v1027 = vld [vmem:[%s3 + $0x348] sm:$0xf]
  %v1028 = vld [vmem:[%s3 + $0x34c] sm:$0xf]
  %v1029 = vld [vmem:[%s3 + $0x350] sm:$0xf]
  %v1030 = vld [vmem:[%s3 + $0x354] sm:$0xf]
  %v1031 = vld [vmem:[%s3 + $0x358] sm:$0xf]
  %v1032 = vld [vmem:[%s3 + $0x35c] sm:$0xf]
  %v1033 = vld [vmem:[%s3 + $0x360] sm:$0xf]
  %v1034 = vld [vmem:[%s3 + $0x364] sm:$0xf]
  %v1035 = vld [vmem:[%s3 + $0x368] sm:$0xf]
  %v1036 = vld [vmem:[%s3 + $0x36c] sm:$0xf]
  %v1037 = vld [vmem:[%s3 + $0x370] sm:$0xf]
  %v1038 = vld [vmem:[%s3 + $0x374] sm:$0xf]
  %v1039 = vld [vmem:[%s3 + $0x378] sm:$0xf]
  %v1040 = vld [vmem:[%s3 + $0x37c] sm:$0xf]
  %v1041 = vld [vmem:[%s3 + $0x380] sm:$0xf]
  %v1042 = vld [vmem:[%s3 + $0x384] sm:$0xf]
  %v1043 = vld [vmem:[%s3 + $0x388] sm:$0xf]
  %v1044 = vld [vmem:[%s3 + $0x38c] sm:$0xf]
  %v1045 = vld [vmem:[%s3 + $0x390] sm:$0xf]
  %v1046 = vld [vmem:[%s3 + $0x394] sm:$0xf]
  %v1047 = vld [vmem:[%s3 + $0x398] sm:$0xf]
  %v1048 = vld [vmem:[%s3 + $0x39c] sm:$0xf]
  %v1049 = vld [vmem:[%s3 + $0x3a0] sm:$0xf]
  %v1050 = vld [vmem:[%s3 + $0x3a4] sm:$0xf]
  %v1051 = vld [vmem:[%s3 + $0x3a8] sm:$0xf]
  %v1052 = vld [vmem:[%s3 + $0x3ac] sm:$0xf]
  %v1053 = vld [vmem:[%s3 + $0x3b0] sm:$0xf]
  %v1054 = vld [vmem:[%s3 + $0x3b4] sm:$0xf]
  %v1055 = vld [vmem:[%s3 + $0x3b8] sm:$0xf]
  %v1056 = vld [vmem:[%s3 + $0x3bc] sm:$0xf]
  %v1057 = vld [vmem:[%s3 + $0x3c0] sm:$0xf]
  %v1058 = vld [vmem:[%s3 + $0x3c4] sm:$0xf]
  %v1059 = vld [vmem:[%s3 + $0x3c8] sm:$0xf]
  %v1060 = vld [vmem:[%s3 + $0x3cc] sm:$0xf]
  %v1061 = vld [vmem:[%s3 + $0x3d0] sm:$0xf]
  %v1062 = vld [vmem:[%s3 + $0x3d4] sm:$0xf]
  %v1063 = vld [vmem:[%s3 + $0x3d8] sm:$0xf]
  %v1064 = vld [vmem:[%s3 + $0x3dc] sm:$0xf]
  %v1065 = vld [vmem:[%s3 + $0x3e0] sm:$0xf]
  %v1066 = vld [vmem:[%s3 + $0x3e4] sm:$0xf]
  %v1067 = vld [vmem:[%s3 + $0x3e8] sm:$0xf]
  %v1068 = vld [vmem:[%s3 + $0x3ec] sm:$0xf]
  %v1069 = vld [vmem:[%s3 + $0x3f0] sm:$0xf]
  %v1070 = vld [vmem:[%s3 + $0x3f4] sm:$0xf]
  %v1071 = vld [vmem:[%s3 + $0x3f8] sm:$0xf]
  %v1072 = vld [vmem:[%s3 + $0x3fc] sm:$0xf]
  %v1073 = vld [vmem:[%s3 + $0x400] sm:$0xf]
  %v1074 = vld [vmem:[%s3 + $0x404] sm:$0xf]
  %v1075 = vld [vmem:[%s3 + $0x408] sm:$0xf]
  %v1076 = vld [vmem:[%s3 + $0x40c] sm:$0xf]
  %v1077 = vld [vmem:[%s3 + $0x410] sm:$0xf]
  %v1078 = vld [vmem:[%s3 + $0x414] sm:$0xf]
  %v1079 = vld [vmem:[%s3 + $0x418] sm:$0xf]
  %v1080 = vld [vmem:[%s3 + $0x41c] sm:$0xf]
  %v1081 = vld [vmem:[%s3 + $0x420] sm:$0xf]
  %v1082 = vld [vmem:[%s3 + $0x424] sm:$0xf]
  %v1083 = vld [vmem:[%s3 + $0x428] sm:$0xf]
  %v1084 = vld [vmem:[%s3 + $0x42c] sm:$0xf]
  %v1085 = vld [vmem:[%s3 + $0x430] sm:$0xf]
  %v1086 = vld [vmem:[%s3 + $0x434] sm:$0xf]
  %v1087 = vld [vmem:[%s3 + $0x438] sm:$0xf]
  %v1088 = vld [vmem:[%s3 + $0x43c] sm:$0xf]
  %v1089 = vld [vmem:[%s3 + $0x440] sm:$0xf]
  %v1090 = vld [vmem:[%s3 + $0x444] sm:$0xf]
  %v1091 = vld [vmem:[%s3 + $0x448] sm:$0xf]
  %v1092 = vld [vmem:[%s3 + $0x44c] sm:$0xf]
  %v1093 = vld [vmem:[%s3 + $0x450] sm:$0xf]
  %v1094 = vld [vmem:[%s3 + $0x454] sm:$0xf]
  %v1095 = vld [vmem:[%s3 + $0x458] sm:$0xf]
  %v1096 = vld [vmem:[%s3 + $0x45c] sm:$0xf]
  %v1097 = vld [vmem:[%s3 + $0x460] sm:$0xf]
  %v1098 = vld [vmem:[%s3 + $0x464] sm:$0xf]
  %v1099 = vld [vmem:[%s3 + $0x468] sm:$0xf]
  %v1100 = vld [vmem:[%s3 + $0x46c] sm:$0xf]
  %v1101 = vld [vmem:[%s3 + $0x470] sm:$0xf]
  %v1102 = vld [vmem:[%s3 + $0x474] sm:$0xf]
  %v1103 = vld [vmem:[%s3 + $0x478] sm:$0xf]
  %v1104 = vld [vmem:[%s3 + $0x47c] sm:$0xf]
  %v1105 = vld [vmem:[%s3 + $0x480] sm:$0xf]
  %v1106 = vld [vmem:[%s3 + $0x484] sm:$0xf]
  %v1107 = vld [vmem:[%s3 + $0x488] sm:$0xf]
  %v1108 = vld [vmem:[%s3 + $0x48c] sm:$0xf]
  %v1109 = vld [vmem:[%s3 + $0x490] sm:$0xf]
  %v1110 = vld [vmem:[%s3 + $0x494] sm:$0xf]
  %v1111 = vld [vmem:[%s3 + $0x498] sm:$0xf]
  %v1112 = vld [vmem:[%s3 + $0x49c] sm:$0xf]
  %v1113 = vld [vmem:[%s3 + $0x4a0] sm:$0xf]
  %v1114 = vld [vmem:[%s3 + $0x4a4] sm:$0xf]
  %v1115 = vld [vmem:[%s3 + $0x4a8] sm:$0xf]
  %v1116 = vld [vmem:[%s3 + $0x4ac] sm:$0xf]
  %v1117 = vld [vmem:[%s3 + $0x4b0] sm:$0xf]
  %v1118 = vld [vmem:[%s3 + $0x4b4] sm:$0xf]
  %v1119 = vld [vmem:[%s3 + $0x4b8] sm:$0xf]
  %v1120 = vld [vmem:[%s3 + $0x4bc] sm:$0xf]
  %v1121 = vld [vmem:[%s3 + $0x4c0] sm:$0xf]
  %v1122 = vld [vmem:[%s3 + $0x4c4] sm:$0xf]
  %v1123 = vld [vmem:[%s3 + $0x4c8] sm:$0xf]
  %v1124 = vld [vmem:[%s3 + $0x4cc] sm:$0xf]
  %v1125 = vld [vmem:[%s3 + $0x4d0] sm:$0xf]
  %v1126 = vld [vmem:[%s3 + $0x4d4] sm:$0xf]
  %v1127 = vld [vmem:[%s3 + $0x4d8] sm:$0xf]
  %v1128 = vld [vmem:[%s3 + $0x4dc] sm:$0xf]
  %v1129 = vld [vmem:[%s3 + $0x4e0] sm:$0xf]
  %v1130 = vld [vmem:[%s3 + $0x4e4] sm:$0xf]
  %v1131 = vld [vmem:[%s3 + $0x4e8] sm:$0xf]
  %v1132 = vld [vmem:[%s3 + $0x4ec] sm:$0xf]
  %v1133 = vld [vmem:[%s3 + $0x4f0] sm:$0xf]
  %v1134 = vld [vmem:[%s3 + $0x4f4] sm:$0xf]
  %v1135 = vld [vmem:[%s3 + $0x4f8] sm:$0xf]
  %v1136 = vld [vmem:[%s3 + $0x4fc] sm:$0xf]
  %v1137 = vld [vmem:[%s3 + $0x500] sm:$0xf]
  %v1138 = vld [vmem:[%s3 + $0x504] sm:$0xf]
  %v1139 = vld [vmem:[%s3 + $0x508] sm:$0xf]
  %v1140 = vld [vmem:[%s3 + $0x50c] sm:$0xf]
  %v1141 = vld [vmem:[%s3 + $0x510] sm:$0xf]
  %v1142 = vld [vmem:[%s3 + $0x514] sm:$0xf]
  %v1143 = vld [vmem:[%s3 + $0x518] sm:$0xf]
  %v1144 = vld [vmem:[%s3 + $0x51c] sm:$0xf]
  %v1145 = vld [vmem:[%s3 + $0x520] sm:$0xf]
  %v1146 = vld [vmem:[%s3 + $0x524] sm:$0xf]
  %v1147 = vld [vmem:[%s3 + $0x528] sm:$0xf]
  %v1148 = vld [vmem:[%s3 + $0x52c] sm:$0xf]
  %v1149 = vld [vmem:[%s3 + $0x530] sm:$0xf]
  %v1150 = vld [vmem:[%s3 + $0x534] sm:$0xf]
  %v1151 = vld [vmem:[%s3 + $0x538] sm:$0xf]
  %v1152 = vld [vmem:[%s3 + $0x53c] sm:$0xf]
  %v1153 = vld [vmem:[%s3 + $0x540] sm:$0xf]
  %v1154 = vld [vmem:[%s3 + $0x544] sm:$0xf]
  %v1155 = vld [vmem:[%s3 + $0x548] sm:$0xf]
  %v1156 = vld [vmem:[%s3 + $0x54c] sm:$0xf]
  %v1157 = vld [vmem:[%s3 + $0x550] sm:$0xf]
  %v1158 = vld [vmem:[%s3 + $0x554] sm:$0xf]
  %v1159 = vld [vmem:[%s3 + $0x558] sm:$0xf]
  %v1160 = vld [vmem:[%s3 + $0x55c] sm:$0xf]
  %v1161 = vld [vmem:[%s3 + $0x560] sm:$0xf]
  %v1162 = vld [vmem:[%s3 + $0x564] sm:$0xf]
  %v1163 = vld [vmem:[%s3 + $0x568] sm:$0xf]
  %v1164 = vld [vmem:[%s3 + $0x56c] sm:$0xf]
  %v1165 = vld [vmem:[%s3 + $0x570] sm:$0xf]
  %v1166 = vld [vmem:[%s3 + $0x574] sm:$0xf]
  %v1167 = vld [vmem:[%s3 + $0x578] sm:$0xf]
  %v1168 = vld [vmem:[%s3 + $0x57c] sm:$0xf]
  %v1169 = vld [vmem:[%s3 + $0x580] sm:$0xf]
  %v1170 = vld [vmem:[%s3 + $0x584] sm:$0xf]
  %v1171 = vld [vmem:[%s3 + $0x588] sm:$0xf]
  %v1172 = vld [vmem:[%s3 + $0x58c] sm:$0xf]
  %v1173 = vld [vmem:[%s3 + $0x590] sm:$0xf]
  %v1174 = vld [vmem:[%s3 + $0x594] sm:$0xf]
  %v1175 = vld [vmem:[%s3 + $0x598] sm:$0xf]
  %v1176 = vld [vmem:[%s3 + $0x59c] sm:$0xf]
  %v1177 = vld [vmem:[%s3 + $0x5a0] sm:$0xf]
  %v1178 = vld [vmem:[%s3 + $0x5a4] sm:$0xf]
  %v1179 = vld [vmem:[%s3 + $0x5a8] sm:$0xf]
  %v1180 = vld [vmem:[%s3 + $0x5ac] sm:$0xf]
  %v1181 = vld [vmem:[%s3 + $0x5b0] sm:$0xf]
  %v1182 = vld [vmem:[%s3 + $0x5b4] sm:$0xf]
  %v1183 = vld [vmem:[%s3 + $0x5b8] sm:$0xf]
  %v1184 = vld [vmem:[%s3 + $0x5bc] sm:$0xf]
  %v1185 = vld [vmem:[%s3 + $0x5c0] sm:$0xf]
  %v1186 = vld [vmem:[%s3 + $0x5c4] sm:$0xf]
  %v1187 = vld [vmem:[%s3 + $0x5c8] sm:$0xf]
  %v1188 = vld [vmem:[%s3 + $0x5cc] sm:$0xf]
  %v1189 = vld [vmem:[%s3 + $0x5d0] sm:$0xf]
  %v1190 = vld [vmem:[%s3 + $0x5d4] sm:$0xf]
  %v1191 = vld [vmem:[%s3 + $0x5d8] sm:$0xf]
  %v1192 = vld [vmem:[%s3 + $0x5dc] sm:$0xf]
  %v1193 = vld [vmem:[%s3 + $0x5e0] sm:$0xf]
  %v1194 = vld [vmem:[%s3 + $0x5e4] sm:$0xf]
  %v1195 = vld [vmem:[%s3 + $0x5e8] sm:$0xf]
  %v1196 = vld [vmem:[%s3 + $0x5ec] sm:$0xf]
  %v1197 = vld [vmem:[%s3 + $0x5f0] sm:$0xf]
  %v1198 = vld [vmem:[%s3 + $0x5f4] sm:$0xf]
  %v1199 = vld [vmem:[%s3 + $0x5f8] sm:$0xf]
  %v1200 = vld [vmem:[%s3 + $0x5fc] sm:$0xf]
  %v1201 = vld [vmem:[%s3 + $0x600] sm:$0xf]
  %v1202 = vld [vmem:[%s3 + $0x604] sm:$0xf]
  %v1203 = vld [vmem:[%s3 + $0x608] sm:$0xf]
  %v1204 = vld [vmem:[%s3 + $0x60c] sm:$0xf]
  %v1205 = vld [vmem:[%s3 + $0x610] sm:$0xf]
  %v1206 = vld [vmem:[%s3 + $0x614] sm:$0xf]
  %v1207 = vld [vmem:[%s3 + $0x618] sm:$0xf]
  %v1208 = vld [vmem:[%s3 + $0x61c] sm:$0xf]
  %v1209 = vld [vmem:[%s3 + $0x620] sm:$0xf]
  %v1210 = vld [vmem:[%s3 + $0x624] sm:$0xf]
  %v1211 = vld [vmem:[%s3 + $0x628] sm:$0xf]
  %v1212 = vld [vmem:[%s3 + $0x62c] sm:$0xf]
  %v1213 = vld [vmem:[%s3 + $0x630] sm:$0xf]
  %v1214 = vld [vmem:[%s3 + $0x634] sm:$0xf]
  %v1215 = vld [vmem:[%s3 + $0x638] sm:$0xf]
  %v1216 = vld [vmem:[%s3 + $0x63c] sm:$0xf]
  %v1217 = vld [vmem:[%s3 + $0x640] sm:$0xf]
  %v1218 = vld [vmem:[%s3 + $0x644] sm:$0xf]
  %v1219 = vld [vmem:[%s3 + $0x648] sm:$0xf]
  %v1220 = vld [vmem:[%s3 + $0x64c] sm:$0xf]
  %v1221 = vld [vmem:[%s3 + $0x650] sm:$0xf]
  %v1222 = vld [vmem:[%s3 + $0x654] sm:$0xf]
  %v1223 = vld [vmem:[%s3 + $0x658] sm:$0xf]
  %v1224 = vld [vmem:[%s3 + $0x65c] sm:$0xf]
  %v1225 = vld [vmem:[%s3 + $0x660] sm:$0xf]
  %v1226 = vld [vmem:[%s3 + $0x664] sm:$0xf]
  %v1227 = vld [vmem:[%s3 + $0x668] sm:$0xf]
  %v1228 = vld [vmem:[%s3 + $0x66c] sm:$0xf]
  %v1229 = vld [vmem:[%s3 + $0x670] sm:$0xf]
  %v1230 = vld [vmem:[%s3 + $0x674] sm:$0xf]
  %v1231 = vld [vmem:[%s3 + $0x678] sm:$0xf]
  %v1232 = vld [vmem:[%s3 + $0x67c] sm:$0xf]
  %v1233 = vld [vmem:[%s3 + $0x680] sm:$0xf]
  %v1234 = vld [vmem:[%s3 + $0x684] sm:$0xf]
  %v1235 = vld [vmem:[%s3 + $0x688] sm:$0xf]
  %v1236 = vld [vmem:[%s3 + $0x68c] sm:$0xf]
  %v1237 = vld [vmem:[%s3 + $0x690] sm:$0xf]
  %v1238 = vld [vmem:[%s3 + $0x694] sm:$0xf]
  %v1239 = vld [vmem:[%s3 + $0x698] sm:$0xf]
  %v1240 = vld [vmem:[%s3 + $0x69c] sm:$0xf]
  %v1241 = vld [vmem:[%s3 + $0x6a0] sm:$0xf]
  %v1242 = vld [vmem:[%s3 + $0x6a4] sm:$0xf]
  %v1243 = vld [vmem:[%s3 + $0x6a8] sm:$0xf]
  %v1244 = vld [vmem:[%s3 + $0x6ac] sm:$0xf]
  %v1245 = vld [vmem:[%s3 + $0x6b0] sm:$0xf]
  %v1246 = vld [vmem:[%s3 + $0x6b4] sm:$0xf]
  %v1247 = vld [vmem:[%s3 + $0x6b8] sm:$0xf]
  %v1248 = vld [vmem:[%s3 + $0x6bc] sm:$0xf]
  %v1249 = vld [vmem:[%s3 + $0x6c0] sm:$0xf]
  %v1250 = vld [vmem:[%s3 + $0x6c4] sm:$0xf]
  %v1251 = vld [vmem:[%s3 + $0x6c8] sm:$0xf]
  %v1252 = vld [vmem:[%s3 + $0x6cc] sm:$0xf]
  %v1253 = vld [vmem:[%s3 + $0x6d0] sm:$0xf]
  %v1254 = vld [vmem:[%s3 + $0x6d4] sm:$0xf]
  %v1255 = vld [vmem:[%s3 + $0x6d8] sm:$0xf]
  %v1256 = vld [vmem:[%s3 + $0x6dc] sm:$0xf]
  %v1257 = vld [vmem:[%s3 + $0x6e0] sm:$0xf]
  %v1258 = vld [vmem:[%s3 + $0x6e4] sm:$0xf]
  %v1259 = vld [vmem:[%s3 + $0x6e8] sm:$0xf]
  %v1260 = vld [vmem:[%s3 + $0x6ec] sm:$0xf]
  %v1261 = vld [vmem:[%s3 + $0x6f0] sm:$0xf]
  %v1262 = vld [vmem:[%s3 + $0x6f4] sm:$0xf]
  %v1263 = vld [vmem:[%s3 + $0x6f8] sm:$0xf]
  %v1264 = vld [vmem:[%s3 + $0x6fc] sm:$0xf]
  %v1265 = vld [vmem:[%s3 + $0x700] sm:$0xf]
  %v1266 = vld [vmem:[%s3 + $0x704] sm:$0xf]
  %v1267 = vld [vmem:[%s3 + $0x708] sm:$0xf]
  %v1268 = vld [vmem:[%s3 + $0x70c] sm:$0xf]
  %v1269 = vld [vmem:[%s3 + $0x710] sm:$0xf]
  %v1270 = vld [vmem:[%s3 + $0x714] sm:$0xf]
  %v1271 = vld [vmem:[%s3 + $0x718] sm:$0xf]
  %v1272 = vld [vmem:[%s3 + $0x71c] sm:$0xf]
  %v1273 = vld [vmem:[%s3 + $0x720] sm:$0xf]
  %v1274 = vld [vmem:[%s3 + $0x724] sm:$0xf]
  %v1275 = vld [vmem:[%s3 + $0x728] sm:$0xf]
  %v1276 = vld [vmem:[%s3 + $0x72c] sm:$0xf]
  %v1277 = vld [vmem:[%s3 + $0x730] sm:$0xf]
  %v1278 = vld [vmem:[%s3 + $0x734] sm:$0xf]
  %v1279 = vld [vmem:[%s3 + $0x738] sm:$0xf]
  %v1280 = vld [vmem:[%s3 + $0x73c] sm:$0xf]
  %v1281 = vld [vmem:[%s3 + $0x740] sm:$0xf]
  %v1282 = vld [vmem:[%s3 + $0x744] sm:$0xf]
  %v1283 = vld [vmem:[%s3 + $0x748] sm:$0xf]
  %v1284 = vld [vmem:[%s3 + $0x74c] sm:$0xf]
  %v1285 = vld [vmem:[%s3 + $0x750] sm:$0xf]
  %v1286 = vld [vmem:[%s3 + $0x754] sm:$0xf]
  %v1287 = vld [vmem:[%s3 + $0x758] sm:$0xf]
  %v1288 = vld [vmem:[%s3 + $0x75c] sm:$0xf]
  %v1289 = vld [vmem:[%s3 + $0x760] sm:$0xf]
  %v1290 = vld [vmem:[%s3 + $0x764] sm:$0xf]
  %v1291 = vld [vmem:[%s3 + $0x768] sm:$0xf]
  %v1292 = vld [vmem:[%s3 + $0x76c] sm:$0xf]
  %v1293 = vld [vmem:[%s3 + $0x770] sm:$0xf]
  %v1294 = vld [vmem:[%s3 + $0x774] sm:$0xf]
  %v1295 = vld [vmem:[%s3 + $0x778] sm:$0xf]
  %v1296 = vld [vmem:[%s3 + $0x77c] sm:$0xf]
  %v1297 = vld [vmem:[%s3 + $0x780] sm:$0xf]
  %v1298 = vld [vmem:[%s3 + $0x784] sm:$0xf]
  %v1299 = vld [vmem:[%s3 + $0x788] sm:$0xf]
  %v1300 = vld [vmem:[%s3 + $0x78c] sm:$0xf]
  %v1301 = vld [vmem:[%s3 + $0x790] sm:$0xf]
  %v1302 = vld [vmem:[%s3 + $0x794] sm:$0xf]
  %v1303 = vld [vmem:[%s3 + $0x798] sm:$0xf]
  %v1304 = vld [vmem:[%s3 + $0x79c] sm:$0xf]
  %v1305 = vld [vmem:[%s3 + $0x7a0] sm:$0xf]
  %v1306 = vld [vmem:[%s3 + $0x7a4] sm:$0xf]
  %v1307 = vld [vmem:[%s3 + $0x7a8] sm:$0xf]
  %v1308 = vld [vmem:[%s3 + $0x7ac] sm:$0xf]
  %v1309 = vld [vmem:[%s3 + $0x7b0] sm:$0xf]
  %v1310 = vld [vmem:[%s3 + $0x7b4] sm:$0xf]
  %v1311 = vld [vmem:[%s3 + $0x7b8] sm:$0xf]
  %v1312 = vld [vmem:[%s3 + $0x7bc] sm:$0xf]
  %v1313 = vld [vmem:[%s3 + $0x7c0] sm:$0xf]
  %v1314 = vld [vmem:[%s3 + $0x7c4] sm:$0xf]
  %v1315 = vld [vmem:[%s3 + $0x7c8] sm:$0xf]
  %v1316 = vld [vmem:[%s3 + $0x7cc] sm:$0xf]
  %v1317 = vld [vmem:[%s3 + $0x7d0] sm:$0xf]
  %v1318 = vld [vmem:[%s3 + $0x7d4] sm:$0xf]
  %v1319 = vld [vmem:[%s3 + $0x7d8] sm:$0xf]
  %v1320 = vld [vmem:[%s3 + $0x7dc] sm:$0xf]
  %v1321 = vld [vmem:[%s3 + $0x7e0] sm:$0xf]
  %v1322 = vld [vmem:[%s3 + $0x7e4] sm:$0xf]
  %v1323 = vld [vmem:[%s3 + $0x7e8] sm:$0xf]
  %v1324 = vld [vmem:[%s3 + $0x7ec] sm:$0xf]
  %v1325 = vld [vmem:[%s3 + $0x7f0] sm:$0xf]
  %v1326 = vld [vmem:[%s3 + $0x7f4] sm:$0xf]
  %v1327 = vld [vmem:[%s3 + $0x7f8] sm:$0xf]
  %v1328 = vld [vmem:[%s3 + $0x7fc] sm:$0xf]
  %v1329 = vld [vmem:[%s3 + $0x800] sm:$0xf]
  %v1330 = vld [vmem:[%s3 + $0x804] sm:$0xf]
  %v1331 = vld [vmem:[%s3 + $0x808] sm:$0xf]
  %v1332 = vld [vmem:[%s3 + $0x80c] sm:$0xf]
  %v1333 = vld [vmem:[%s3 + $0x810] sm:$0xf]
  %v1334 = vld [vmem:[%s3 + $0x814] sm:$0xf]
  %v1335 = vld [vmem:[%s3 + $0x818] sm:$0xf]
  %v1336 = vld [vmem:[%s3 + $0x81c] sm:$0xf]
  %v1337 = vld [vmem:[%s3 + $0x820] sm:$0xf]
  %v1338 = vld [vmem:[%s3 + $0x824] sm:$0xf]
  %v1339 = vld [vmem:[%s3 + $0x828] sm:$0xf]
  %v1340 = vld [vmem:[%s3 + $0x82c] sm:$0xf]
  %v1341 = vld [vmem:[%s3 + $0x830] sm:$0xf]
  %v1342 = vld [vmem:[%s3 + $0x834] sm:$0xf]
  %v1343 = vld [vmem:[%s3 + $0x838] sm:$0xf]
  %v1344 = vld [vmem:[%s3 + $0x83c] sm:$0xf]
  %v1345 = vld [vmem:[%s3 + $0x840] sm:$0xf]
  %v1346 = vld [vmem:[%s3 + $0x844] sm:$0xf]
  %v1347 = vld [vmem:[%s3 + $0x848] sm:$0xf]
  %v1348 = vld [vmem:[%s3 + $0x84c] sm:$0xf]
  %v1349 = vld [vmem:[%s3 + $0x850] sm:$0xf]
  %v1350 = vld [vmem:[%s3 + $0x854] sm:$0xf]
  %v1351 = vld [vmem:[%s3 + $0x858] sm:$0xf]
  %v1352 = vld [vmem:[%s3 + $0x85c] sm:$0xf]
  %v1353 = vld [vmem:[%s3 + $0x860] sm:$0xf]
  %v1354 = vld [vmem:[%s3 + $0x864] sm:$0xf]
  %v1355 = vld [vmem:[%s3 + $0x868] sm:$0xf]
  %v1356 = vld [vmem:[%s3 + $0x86c] sm:$0xf]
  %v1357 = vld [vmem:[%s3 + $0x870] sm:$0xf]
  %v1358 = vld [vmem:[%s3 + $0x874] sm:$0xf]
  %v1359 = vld [vmem:[%s3 + $0x878] sm:$0xf]
  %v1360 = vld [vmem:[%s3 + $0x87c] sm:$0xf]
  %v1361 = vld [vmem:[%s3 + $0x880] sm:$0xf]
  %v1362 = vld [vmem:[%s3 + $0x884] sm:$0xf]
  %v1363 = vld [vmem:[%s3 + $0x888] sm:$0xf]
  %v1364 = vld [vmem:[%s3 + $0x88c] sm:$0xf]
  %v1365 = vld [vmem:[%s3 + $0x890] sm:$0xf]
  %v1366 = vld [vmem:[%s3 + $0x894] sm:$0xf]
  %v1367 = vld [vmem:[%s3 + $0x898] sm:$0xf]
  %v1368 = vld [vmem:[%s3 + $0x89c] sm:$0xf]
  %v1369 = vld [vmem:[%s3 + $0x8a0] sm:$0xf]
  %v1370 = vld [vmem:[%s3 + $0x8a4] sm:$0xf]
  %v1371 = vld [vmem:[%s3 + $0x8a8] sm:$0xf]
  %v1372 = vld [vmem:[%s3 + $0x8ac] sm:$0xf]
  %v1373 = vld [vmem:[%s3 + $0x8b0] sm:$0xf]
  %v1374 = vld [vmem:[%s3 + $0x8b4] sm:$0xf]
  %v1375 = vld [vmem:[%s3 + $0x8b8] sm:$0xf]
  %v1376 = vld [vmem:[%s3 + $0x8bc] sm:$0xf]
  %v1377 = vld [vmem:[%s3 + $0x8c0] sm:$0xf]
  %v1378 = vld [vmem:[%s3 + $0x8c4] sm:$0xf]
  %v1379 = vld [vmem:[%s3 + $0x8c8] sm:$0xf]
  %v1380 = vld [vmem:[%s3 + $0x8cc] sm:$0xf]
  %v1381 = vld [vmem:[%s3 + $0x8d0] sm:$0xf]
  %v1382 = vld [vmem:[%s3 + $0x8d4] sm:$0xf]
  %v1383 = vld [vmem:[%s3 + $0x8d8] sm:$0xf]
  %v1384 = vld [vmem:[%s3 + $0x8dc] sm:$0xf]
  %v1385 = vld [vmem:[%s3 + $0x8e0] sm:$0xf]
  %v1386 = vld [vmem:[%s3 + $0x8e4] sm:$0xf]
  %v1387 = vld [vmem:[%s3 + $0x8e8] sm:$0xf]
  %v1388 = vld [vmem:[%s3 + $0x8ec] sm:$0xf]
  %v1389 = vld [vmem:[%s3 + $0x8f0] sm:$0xf]
  %v1390 = vld [vmem:[%s3 + $0x8f4] sm:$0xf]
  %v1391 = vld [vmem:[%s3 + $0x8f8] sm:$0xf]
  %v1392 = vld [vmem:[%s3 + $0x8fc] sm:$0xf]
  %v1393 = vld [vmem:[%s4] sm:$0x1]
  %v1395 = vlaneseq
  %v1396 = vshrl.u32 %v1395, 7
  %v1397 = vsub.s32 0, %v1396
  %v1398 = vrot.slane %v1393, %v1397
  %v1976 = vunpack.c.l.b16 %v817
  %v1977 = vunpack.c.l.b16 %v818
  %v1978 = vunpack.c.l.b16 %v819
  %v1979 = vunpack.c.l.b16 %v820
  %v1980 = vunpack.c.l.b16 %v821
  %v1981 = vunpack.c.l.b16 %v822
  %v1982 = vunpack.c.l.b16 %v823
  %v1983 = vunpack.c.l.b16 %v824
  %v1984 = vunpack.c.l.b16 %v825
  %v1985 = vunpack.c.l.b16 %v826
  %v1986 = vunpack.c.l.b16 %v827
  %v1987 = vunpack.c.l.b16 %v828
  %v1988 = vunpack.c.l.b16 %v829
  %v1989 = vunpack.c.l.b16 %v830
  %v1990 = vunpack.c.l.b16 %v831
  %v1991 = vunpack.c.l.b16 %v832
  %v1992 = vunpack.c.l.b16 %v833
  %v1993 = vunpack.c.l.b16 %v834
  %v1994 = vunpack.c.l.b16 %v835
  %v1995 = vunpack.c.l.b16 %v836
  %v1996 = vunpack.c.l.b16 %v837
  %v1997 = vunpack.c.l.b16 %v838
  %v1998 = vunpack.c.l.b16 %v839
  %v1999 = vunpack.c.l.b16 %v840
  %v2000 = vunpack.c.l.b16 %v841
  %v2001 = vunpack.c.l.b16 %v842
  %v2002 = vunpack.c.l.b16 %v843
  %v2003 = vunpack.c.l.b16 %v844
  %v2004 = vunpack.c.l.b16 %v845
  %v2005 = vunpack.c.l.b16 %v846
  %v2006 = vunpack.c.l.b16 %v847
  %v2007 = vunpack.c.l.b16 %v848
  %v2008 = vunpack.c.l.b16 %v849
  %v2009 = vunpack.c.l.b16 %v850
  %v2010 = vunpack.c.l.b16 %v851
  %v2011 = vunpack.c.l.b16 %v852
  %v2012 = vunpack.c.l.b16 %v853
  %v2013 = vunpack.c.l.b16 %v854
  %v2014 = vunpack.c.l.b16 %v855
  %v2015 = vunpack.c.l.b16 %v856
  %v2016 = vunpack.c.l.b16 %v857
  %v2017 = vunpack.c.l.b16 %v858
  %v2018 = vunpack.c.l.b16 %v859
  %v2019 = vunpack.c.l.b16 %v860
  %v2020 = vunpack.c.l.b16 %v861
  %v2021 = vunpack.c.l.b16 %v862
  %v2022 = vunpack.c.l.b16 %v863
  %v2023 = vunpack.c.l.b16 %v864
  %v2024 = vunpack.c.l.b16 %v865
  %v2025 = vunpack.c.l.b16 %v866
  %v2026 = vunpack.c.l.b16 %v867
  %v2027 = vunpack.c.l.b16 %v868
  %v2028 = vunpack.c.l.b16 %v869
  %v2029 = vunpack.c.l.b16 %v870
  %v2030 = vunpack.c.l.b16 %v871
  %v2031 = vunpack.c.l.b16 %v872
  %v2032 = vunpack.c.l.b16 %v873
  %v2033 = vunpack.c.l.b16 %v874
  %v2034 = vunpack.c.l.b16 %v875
  %v2035 = vunpack.c.l.b16 %v876
  %v2036 = vunpack.c.l.b16 %v877
  %v2037 = vunpack.c.l.b16 %v878
  %v2038 = vunpack.c.l.b16 %v879
  %v2039 = vunpack.c.l.b16 %v880
  %v2040 = vunpack.c.l.b16 %v881
  %v2041 = vunpack.c.l.b16 %v882
  %v2042 = vunpack.c.l.b16 %v883
  %v2043 = vunpack.c.l.b16 %v884
  %v2044 = vunpack.c.l.b16 %v885
  %v2045 = vunpack.c.l.b16 %v886
  %v2046 = vunpack.c.l.b16 %v887
  %v2047 = vunpack.c.l.b16 %v888
  %v2048 = vunpack.c.l.b16 %v889
  %v2049 = vunpack.c.l.b16 %v890
  %v2050 = vunpack.c.l.b16 %v891
  %v2051 = vunpack.c.l.b16 %v892
  %v2052 = vunpack.c.l.b16 %v893
  %v2053 = vunpack.c.l.b16 %v894
  %v2054 = vunpack.c.l.b16 %v895
  %v2055 = vunpack.c.l.b16 %v896
  %v2056 = vunpack.c.l.b16 %v897
  %v2057 = vunpack.c.l.b16 %v898
  %v2058 = vunpack.c.l.b16 %v899
  %v2059 = vunpack.c.l.b16 %v900
  %v2060 = vunpack.c.l.b16 %v901
  %v2061 = vunpack.c.l.b16 %v902
  %v2062 = vunpack.c.l.b16 %v903
  %v2063 = vunpack.c.l.b16 %v904
  %v2064 = vunpack.c.l.b16 %v905
  %v2065 = vunpack.c.l.b16 %v906
  %v2066 = vunpack.c.l.b16 %v907
  %v2067 = vunpack.c.l.b16 %v908
  %v2068 = vunpack.c.l.b16 %v909
  %v2069 = vunpack.c.l.b16 %v910
  %v2070 = vunpack.c.l.b16 %v911
  %v2071 = vunpack.c.l.b16 %v912
  %v2072 = vunpack.c.l.b16 %v913
  %v2073 = vunpack.c.l.b16 %v914
  %v2074 = vunpack.c.l.b16 %v915
  %v2075 = vunpack.c.l.b16 %v916
  %v2076 = vunpack.c.l.b16 %v917
  %v2077 = vunpack.c.l.b16 %v918
  %v2078 = vunpack.c.l.b16 %v919
  %v2079 = vunpack.c.l.b16 %v920
  %v2080 = vunpack.c.l.b16 %v921
  %v2081 = vunpack.c.l.b16 %v922
  %v2082 = vunpack.c.l.b16 %v923
  %v2083 = vunpack.c.l.b16 %v924
  %v2084 = vunpack.c.l.b16 %v925
  %v2085 = vunpack.c.l.b16 %v926
  %v2086 = vunpack.c.l.b16 %v927
  %v2087 = vunpack.c.l.b16 %v928
  %v2088 = vunpack.c.l.b16 %v929
  %v2089 = vunpack.c.l.b16 %v930
  %v2090 = vunpack.c.l.b16 %v931
  %v2091 = vunpack.c.l.b16 %v932
  %v2092 = vunpack.c.l.b16 %v933
  %v2093 = vunpack.c.l.b16 %v934
  %v2094 = vunpack.c.l.b16 %v935
  %v2095 = vunpack.c.l.b16 %v936
  %v2096 = vunpack.c.l.b16 %v937
  %v2097 = vunpack.c.l.b16 %v938
  %v2098 = vunpack.c.l.b16 %v939
  %v2099 = vunpack.c.l.b16 %v940
  %v2100 = vunpack.c.l.b16 %v941
  %v2101 = vunpack.c.l.b16 %v942
  %v2102 = vunpack.c.l.b16 %v943
  %v2103 = vunpack.c.l.b16 %v944
  %v2104 = vunpack.c.l.b16 %v945
  %v2105 = vunpack.c.l.b16 %v946
  %v2106 = vunpack.c.l.b16 %v947
  %v2107 = vunpack.c.l.b16 %v948
  %v2108 = vunpack.c.l.b16 %v949
  %v2109 = vunpack.c.l.b16 %v950
  %v2110 = vunpack.c.l.b16 %v951
  %v2111 = vunpack.c.l.b16 %v952
  %v2112 = vunpack.c.l.b16 %v953
  %v2113 = vunpack.c.l.b16 %v954
  %v2114 = vunpack.c.l.b16 %v955
  %v2115 = vunpack.c.l.b16 %v956
  %v2116 = vunpack.c.l.b16 %v957
  %v2117 = vunpack.c.l.b16 %v958
  %v2118 = vunpack.c.l.b16 %v959
  %v2119 = vunpack.c.l.b16 %v960
  %v2120 = vunpack.c.l.b16 %v961
  %v2121 = vunpack.c.l.b16 %v962
  %v2122 = vunpack.c.l.b16 %v963
  %v2123 = vunpack.c.l.b16 %v964
  %v2124 = vunpack.c.l.b16 %v965
  %v2125 = vunpack.c.l.b16 %v966
  %v2126 = vunpack.c.l.b16 %v967
  %v2127 = vunpack.c.l.b16 %v968
  %v2128 = vunpack.c.l.b16 %v969
  %v2129 = vunpack.c.l.b16 %v970
  %v2130 = vunpack.c.l.b16 %v971
  %v2131 = vunpack.c.l.b16 %v972
  %v2132 = vunpack.c.l.b16 %v973
  %v2133 = vunpack.c.l.b16 %v974
  %v2134 = vunpack.c.l.b16 %v975
  %v2135 = vunpack.c.l.b16 %v976
  %v2136 = vunpack.c.l.b16 %v977
  %v2137 = vunpack.c.l.b16 %v978
  %v2138 = vunpack.c.l.b16 %v979
  %v2139 = vunpack.c.l.b16 %v980
  %v2140 = vunpack.c.l.b16 %v981
  %v2141 = vunpack.c.l.b16 %v982
  %v2142 = vunpack.c.l.b16 %v983
  %v2143 = vunpack.c.l.b16 %v984
  %v2144 = vunpack.c.l.b16 %v985
  %v2145 = vunpack.c.l.b16 %v986
  %v2146 = vunpack.c.l.b16 %v987
  %v2147 = vunpack.c.l.b16 %v988
  %v2148 = vunpack.c.l.b16 %v989
  %v2149 = vunpack.c.l.b16 %v990
  %v2150 = vunpack.c.l.b16 %v991
  %v2151 = vunpack.c.l.b16 %v992
  %v2152 = vunpack.c.l.b16 %v993
  %v2153 = vunpack.c.l.b16 %v994
  %v2154 = vunpack.c.l.b16 %v995
  %v2155 = vunpack.c.l.b16 %v996
  %v2156 = vunpack.c.l.b16 %v997
  %v2157 = vunpack.c.l.b16 %v998
  %v2158 = vunpack.c.l.b16 %v999
  %v2159 = vunpack.c.l.b16 %v1000
  %v2160 = vunpack.c.l.b16 %v1001
  %v2161 = vunpack.c.l.b16 %v1002
  %v2162 = vunpack.c.l.b16 %v1003
  %v2163 = vunpack.c.l.b16 %v1004
  %v2164 = vunpack.c.l.b16 %v1005
  %v2165 = vunpack.c.l.b16 %v1006
  %v2166 = vunpack.c.l.b16 %v1007
  %v2167 = vunpack.c.l.b16 %v1008
  %v2168 = vunpack.c.l.b16 %v1009
  %v2169 = vunpack.c.l.b16 %v1010
  %v2170 = vunpack.c.l.b16 %v1011
  %v2171 = vunpack.c.l.b16 %v1012
  %v2172 = vunpack.c.l.b16 %v1013
  %v2173 = vunpack.c.l.b16 %v1014
  %v2174 = vunpack.c.l.b16 %v1015
  %v2175 = vunpack.c.l.b16 %v1016
  %v2176 = vunpack.c.l.b16 %v1017
  %v2177 = vunpack.c.l.b16 %v1018
  %v2178 = vunpack.c.l.b16 %v1019
  %v2179 = vunpack.c.l.b16 %v1020
  %v2180 = vunpack.c.l.b16 %v1021
  %v2181 = vunpack.c.l.b16 %v1022
  %v2182 = vunpack.c.l.b16 %v1023
  %v2183 = vunpack.c.l.b16 %v1024
  %v2184 = vunpack.c.l.b16 %v1025
  %v2185 = vunpack.c.l.b16 %v1026
  %v2186 = vunpack.c.l.b16 %v1027
  %v2187 = vunpack.c.l.b16 %v1028
  %v2188 = vunpack.c.l.b16 %v1029
  %v2189 = vunpack.c.l.b16 %v1030
  %v2190 = vunpack.c.l.b16 %v1031
  %v2191 = vunpack.c.l.b16 %v1032
  %v2192 = vunpack.c.l.b16 %v1033
  %v2193 = vunpack.c.l.b16 %v1034
  %v2194 = vunpack.c.l.b16 %v1035
  %v2195 = vunpack.c.l.b16 %v1036
  %v2196 = vunpack.c.l.b16 %v1037
  %v2197 = vunpack.c.l.b16 %v1038
  %v2198 = vunpack.c.l.b16 %v1039
  %v2199 = vunpack.c.l.b16 %v1040
  %v2200 = vunpack.c.l.b16 %v1041
  %v2201 = vunpack.c.l.b16 %v1042
  %v2202 = vunpack.c.l.b16 %v1043
  %v2203 = vunpack.c.l.b16 %v1044
  %v2204 = vunpack.c.l.b16 %v1045
  %v2205 = vunpack.c.l.b16 %v1046
  %v2206 = vunpack.c.l.b16 %v1047
  %v2207 = vunpack.c.l.b16 %v1048
  %v2208 = vunpack.c.l.b16 %v1049
  %v2209 = vunpack.c.l.b16 %v1050
  %v2210 = vunpack.c.l.b16 %v1051
  %v2211 = vunpack.c.l.b16 %v1052
  %v2212 = vunpack.c.l.b16 %v1053
  %v2213 = vunpack.c.l.b16 %v1054
  %v2214 = vunpack.c.l.b16 %v1055
  %v2215 = vunpack.c.l.b16 %v1056
  %v2216 = vunpack.c.l.b16 %v1057
  %v2217 = vunpack.c.l.b16 %v1058
  %v2218 = vunpack.c.l.b16 %v1059
  %v2219 = vunpack.c.l.b16 %v1060
  %v2220 = vunpack.c.l.b16 %v1061
  %v2221 = vunpack.c.l.b16 %v1062
  %v2222 = vunpack.c.l.b16 %v1063
  %v2223 = vunpack.c.l.b16 %v1064
  %v2224 = vunpack.c.l.b16 %v1065
  %v2225 = vunpack.c.l.b16 %v1066
  %v2226 = vunpack.c.l.b16 %v1067
  %v2227 = vunpack.c.l.b16 %v1068
  %v2228 = vunpack.c.l.b16 %v1069
  %v2229 = vunpack.c.l.b16 %v1070
  %v2230 = vunpack.c.l.b16 %v1071
  %v2231 = vunpack.c.l.b16 %v1072
  %v2232 = vunpack.c.l.b16 %v1073
  %v2233 = vunpack.c.l.b16 %v1074
  %v2234 = vunpack.c.l.b16 %v1075
  %v2235 = vunpack.c.l.b16 %v1076
  %v2236 = vunpack.c.l.b16 %v1077
  %v2237 = vunpack.c.l.b16 %v1078
  %v2238 = vunpack.c.l.b16 %v1079
  %v2239 = vunpack.c.l.b16 %v1080
  %v2240 = vunpack.c.l.b16 %v1081
  %v2241 = vunpack.c.l.b16 %v1082
  %v2242 = vunpack.c.l.b16 %v1083
  %v2243 = vunpack.c.l.b16 %v1084
  %v2244 = vunpack.c.l.b16 %v1085
  %v2245 = vunpack.c.l.b16 %v1086
  %v2246 = vunpack.c.l.b16 %v1087
  %v2247 = vunpack.c.l.b16 %v1088
  %v2248 = vunpack.c.l.b16 %v1089
  %v2249 = vunpack.c.l.b16 %v1090
  %v2250 = vunpack.c.l.b16 %v1091
  %v2251 = vunpack.c.l.b16 %v1092
  %v2252 = vunpack.c.l.b16 %v1093
  %v2253 = vunpack.c.l.b16 %v1094
  %v2254 = vunpack.c.l.b16 %v1095
  %v2255 = vunpack.c.l.b16 %v1096
  %v2256 = vunpack.c.l.b16 %v1097
  %v2257 = vunpack.c.l.b16 %v1098
  %v2258 = vunpack.c.l.b16 %v1099
  %v2259 = vunpack.c.l.b16 %v1100
  %v2260 = vunpack.c.l.b16 %v1101
  %v2261 = vunpack.c.l.b16 %v1102
  %v2262 = vunpack.c.l.b16 %v1103
  %v2263 = vunpack.c.l.b16 %v1104
  %v2264 = vunpack.c.l.b16 %v1105
  %v2265 = vunpack.c.l.b16 %v1106
  %v2266 = vunpack.c.l.b16 %v1107
  %v2267 = vunpack.c.l.b16 %v1108
  %v2268 = vunpack.c.l.b16 %v1109
  %v2269 = vunpack.c.l.b16 %v1110
  %v2270 = vunpack.c.l.b16 %v1111
  %v2271 = vunpack.c.l.b16 %v1112
  %v2272 = vunpack.c.l.b16 %v1113
  %v2273 = vunpack.c.l.b16 %v1114
  %v2274 = vunpack.c.l.b16 %v1115
  %v2275 = vunpack.c.l.b16 %v1116
  %v2276 = vunpack.c.l.b16 %v1117
  %v2277 = vunpack.c.l.b16 %v1118
  %v2278 = vunpack.c.l.b16 %v1119
  %v2279 = vunpack.c.l.b16 %v1120
  %v2280 = vunpack.c.l.b16 %v1121
  %v2281 = vunpack.c.l.b16 %v1122
  %v2282 = vunpack.c.l.b16 %v1123
  %v2283 = vunpack.c.l.b16 %v1124
  %v2284 = vunpack.c.l.b16 %v1125
  %v2285 = vunpack.c.l.b16 %v1126
  %v2286 = vunpack.c.l.b16 %v1127
  %v2287 = vunpack.c.l.b16 %v1128
  %v2288 = vunpack.c.l.b16 %v1129
  %v2289 = vunpack.c.l.b16 %v1130
  %v2290 = vunpack.c.l.b16 %v1131
  %v2291 = vunpack.c.l.b16 %v1132
  %v2292 = vunpack.c.l.b16 %v1133
  %v2293 = vunpack.c.l.b16 %v1134
  %v2294 = vunpack.c.l.b16 %v1135
  %v2295 = vunpack.c.l.b16 %v1136
  %v2296 = vunpack.c.l.b16 %v1137
  %v2297 = vunpack.c.l.b16 %v1138
  %v2298 = vunpack.c.l.b16 %v1139
  %v2299 = vunpack.c.l.b16 %v1140
  %v2300 = vunpack.c.l.b16 %v1141
  %v2301 = vunpack.c.l.b16 %v1142
  %v2302 = vunpack.c.l.b16 %v1143
  %v2303 = vunpack.c.l.b16 %v1144
  %v2304 = vunpack.c.l.b16 %v1145
  %v2305 = vunpack.c.l.b16 %v1146
  %v2306 = vunpack.c.l.b16 %v1147
  %v2307 = vunpack.c.l.b16 %v1148
  %v2308 = vunpack.c.l.b16 %v1149
  %v2309 = vunpack.c.l.b16 %v1150
  %v2310 = vunpack.c.l.b16 %v1151
  %v2311 = vunpack.c.l.b16 %v1152
  %v2312 = vunpack.c.l.b16 %v1153
  %v2313 = vunpack.c.l.b16 %v1154
  %v2314 = vunpack.c.l.b16 %v1155
  %v2315 = vunpack.c.l.b16 %v1156
  %v2316 = vunpack.c.l.b16 %v1157
  %v2317 = vunpack.c.l.b16 %v1158
  %v2318 = vunpack.c.l.b16 %v1159
  %v2319 = vunpack.c.l.b16 %v1160
  %v2320 = vunpack.c.l.b16 %v1161
  %v2321 = vunpack.c.l.b16 %v1162
  %v2322 = vunpack.c.l.b16 %v1163
  %v2323 = vunpack.c.l.b16 %v1164
  %v2324 = vunpack.c.l.b16 %v1165
  %v2325 = vunpack.c.l.b16 %v1166
  %v2326 = vunpack.c.l.b16 %v1167
  %v2327 = vunpack.c.l.b16 %v1168
  %v2328 = vunpack.c.l.b16 %v1169
  %v2329 = vunpack.c.l.b16 %v1170
  %v2330 = vunpack.c.l.b16 %v1171
  %v2331 = vunpack.c.l.b16 %v1172
  %v2332 = vunpack.c.l.b16 %v1173
  %v2333 = vunpack.c.l.b16 %v1174
  %v2334 = vunpack.c.l.b16 %v1175
  %v2335 = vunpack.c.l.b16 %v1176
  %v2336 = vunpack.c.l.b16 %v1177
  %v2337 = vunpack.c.l.b16 %v1178
  %v2338 = vunpack.c.l.b16 %v1179
  %v2339 = vunpack.c.l.b16 %v1180
  %v2340 = vunpack.c.l.b16 %v1181
  %v2341 = vunpack.c.l.b16 %v1182
  %v2342 = vunpack.c.l.b16 %v1183
  %v2343 = vunpack.c.l.b16 %v1184
  %v2344 = vunpack.c.l.b16 %v1185
  %v2345 = vunpack.c.l.b16 %v1186
  %v2346 = vunpack.c.l.b16 %v1187
  %v2347 = vunpack.c.l.b16 %v1188
  %v2348 = vunpack.c.l.b16 %v1189
  %v2349 = vunpack.c.l.b16 %v1190
  %v2350 = vunpack.c.l.b16 %v1191
  %v2351 = vunpack.c.l.b16 %v1192
  %v2352 = vunpack.c.l.b16 %v1193
  %v2353 = vunpack.c.l.b16 %v1194
  %v2354 = vunpack.c.l.b16 %v1195
  %v2355 = vunpack.c.l.b16 %v1196
  %v2356 = vunpack.c.l.b16 %v1197
  %v2357 = vunpack.c.l.b16 %v1198
  %v2358 = vunpack.c.l.b16 %v1199
  %v2359 = vunpack.c.l.b16 %v1200
  %v2360 = vunpack.c.l.b16 %v1201
  %v2361 = vunpack.c.l.b16 %v1202
  %v2362 = vunpack.c.l.b16 %v1203
  %v2363 = vunpack.c.l.b16 %v1204
  %v2364 = vunpack.c.l.b16 %v1205
  %v2365 = vunpack.c.l.b16 %v1206
  %v2366 = vunpack.c.l.b16 %v1207
  %v2367 = vunpack.c.l.b16 %v1208
  %v2368 = vunpack.c.l.b16 %v1209
  %v2369 = vunpack.c.l.b16 %v1210
  %v2370 = vunpack.c.l.b16 %v1211
  %v2371 = vunpack.c.l.b16 %v1212
  %v2372 = vunpack.c.l.b16 %v1213
  %v2373 = vunpack.c.l.b16 %v1214
  %v2374 = vunpack.c.l.b16 %v1215
  %v2375 = vunpack.c.l.b16 %v1216
  %v2376 = vunpack.c.l.b16 %v1217
  %v2377 = vunpack.c.l.b16 %v1218
  %v2378 = vunpack.c.l.b16 %v1219
  %v2379 = vunpack.c.l.b16 %v1220
  %v2380 = vunpack.c.l.b16 %v1221
  %v2381 = vunpack.c.l.b16 %v1222
  %v2382 = vunpack.c.l.b16 %v1223
  %v2383 = vunpack.c.l.b16 %v1224
  %v2384 = vunpack.c.l.b16 %v1225
  %v2385 = vunpack.c.l.b16 %v1226
  %v2386 = vunpack.c.l.b16 %v1227
  %v2387 = vunpack.c.l.b16 %v1228
  %v2388 = vunpack.c.l.b16 %v1229
  %v2389 = vunpack.c.l.b16 %v1230
  %v2390 = vunpack.c.l.b16 %v1231
  %v2391 = vunpack.c.l.b16 %v1232
  %v2392 = vunpack.c.l.b16 %v1233
  %v2393 = vunpack.c.l.b16 %v1234
  %v2394 = vunpack.c.l.b16 %v1235
  %v2395 = vunpack.c.l.b16 %v1236
  %v2396 = vunpack.c.l.b16 %v1237
  %v2397 = vunpack.c.l.b16 %v1238
  %v2398 = vunpack.c.l.b16 %v1239
  %v2399 = vunpack.c.l.b16 %v1240
  %v2400 = vunpack.c.l.b16 %v1241
  %v2401 = vunpack.c.l.b16 %v1242
  %v2402 = vunpack.c.l.b16 %v1243
  %v2403 = vunpack.c.l.b16 %v1244
  %v2404 = vunpack.c.l.b16 %v1245
  %v2405 = vunpack.c.l.b16 %v1246
  %v2406 = vunpack.c.l.b16 %v1247
  %v2407 = vunpack.c.l.b16 %v1248
  %v2408 = vunpack.c.l.b16 %v1249
  %v2409 = vunpack.c.l.b16 %v1250
  %v2410 = vunpack.c.l.b16 %v1251
  %v2411 = vunpack.c.l.b16 %v1252
  %v2412 = vunpack.c.l.b16 %v1253
  %v2413 = vunpack.c.l.b16 %v1254
  %v2414 = vunpack.c.l.b16 %v1255
  %v2415 = vunpack.c.l.b16 %v1256
  %v2416 = vunpack.c.l.b16 %v1257
  %v2417 = vunpack.c.l.b16 %v1258
  %v2418 = vunpack.c.l.b16 %v1259
  %v2419 = vunpack.c.l.b16 %v1260
  %v2420 = vunpack.c.l.b16 %v1261
  %v2421 = vunpack.c.l.b16 %v1262
  %v2422 = vunpack.c.l.b16 %v1263
  %v2423 = vunpack.c.l.b16 %v1264
  %v2424 = vunpack.c.l.b16 %v1265
  %v2425 = vunpack.c.l.b16 %v1266
  %v2426 = vunpack.c.l.b16 %v1267
  %v2427 = vunpack.c.l.b16 %v1268
  %v2428 = vunpack.c.l.b16 %v1269
  %v2429 = vunpack.c.l.b16 %v1270
  %v2430 = vunpack.c.l.b16 %v1271
  %v2431 = vunpack.c.l.b16 %v1272
  %v2432 = vunpack.c.l.b16 %v1273
  %v2433 = vunpack.c.l.b16 %v1274
  %v2434 = vunpack.c.l.b16 %v1275
  %v2435 = vunpack.c.l.b16 %v1276
  %v2436 = vunpack.c.l.b16 %v1277
  %v2437 = vunpack.c.l.b16 %v1278
  %v2438 = vunpack.c.l.b16 %v1279
  %v2439 = vunpack.c.l.b16 %v1280
  %v2440 = vunpack.c.l.b16 %v1281
  %v2441 = vunpack.c.l.b16 %v1282
  %v2442 = vunpack.c.l.b16 %v1283
  %v2443 = vunpack.c.l.b16 %v1284
  %v2444 = vunpack.c.l.b16 %v1285
  %v2445 = vunpack.c.l.b16 %v1286
  %v2446 = vunpack.c.l.b16 %v1287
  %v2447 = vunpack.c.l.b16 %v1288
  %v2448 = vunpack.c.l.b16 %v1289
  %v2449 = vunpack.c.l.b16 %v1290
  %v2450 = vunpack.c.l.b16 %v1291
  %v2451 = vunpack.c.l.b16 %v1292
  %v2452 = vunpack.c.l.b16 %v1293
  %v2453 = vunpack.c.l.b16 %v1294
  %v2454 = vunpack.c.l.b16 %v1295
  %v2455 = vunpack.c.l.b16 %v1296
  %v2456 = vunpack.c.l.b16 %v1297
  %v2457 = vunpack.c.l.b16 %v1298
  %v2458 = vunpack.c.l.b16 %v1299
  %v2459 = vunpack.c.l.b16 %v1300
  %v2460 = vunpack.c.l.b16 %v1301
  %v2461 = vunpack.c.l.b16 %v1302
  %v2462 = vunpack.c.l.b16 %v1303
  %v2463 = vunpack.c.l.b16 %v1304
  %v2464 = vunpack.c.l.b16 %v1305
  %v2465 = vunpack.c.l.b16 %v1306
  %v2466 = vunpack.c.l.b16 %v1307
  %v2467 = vunpack.c.l.b16 %v1308
  %v2468 = vunpack.c.l.b16 %v1309
  %v2469 = vunpack.c.l.b16 %v1310
  %v2470 = vunpack.c.l.b16 %v1311
  %v2471 = vunpack.c.l.b16 %v1312
  %v2472 = vunpack.c.l.b16 %v1313
  %v2473 = vunpack.c.l.b16 %v1314
  %v2474 = vunpack.c.l.b16 %v1315
  %v2475 = vunpack.c.l.b16 %v1316
  %v2476 = vunpack.c.l.b16 %v1317
  %v2477 = vunpack.c.l.b16 %v1318
  %v2478 = vunpack.c.l.b16 %v1319
  %v2479 = vunpack.c.l.b16 %v1320
  %v2480 = vunpack.c.l.b16 %v1321
  %v2481 = vunpack.c.l.b16 %v1322
  %v2482 = vunpack.c.l.b16 %v1323
  %v2483 = vunpack.c.l.b16 %v1324
  %v2484 = vunpack.c.l.b16 %v1325
  %v2485 = vunpack.c.l.b16 %v1326
  %v2486 = vunpack.c.l.b16 %v1327
  %v2487 = vunpack.c.l.b16 %v1328
  %v2488 = vunpack.c.l.b16 %v1329
  %v2489 = vunpack.c.l.b16 %v1330
  %v2490 = vunpack.c.l.b16 %v1331
  %v2491 = vunpack.c.l.b16 %v1332
  %v2492 = vunpack.c.l.b16 %v1333
  %v2493 = vunpack.c.l.b16 %v1334
  %v2494 = vunpack.c.l.b16 %v1335
  %v2495 = vunpack.c.l.b16 %v1336
  %v2496 = vunpack.c.l.b16 %v1337
  %v2497 = vunpack.c.l.b16 %v1338
  %v2498 = vunpack.c.l.b16 %v1339
  %v2499 = vunpack.c.l.b16 %v1340
  %v2500 = vunpack.c.l.b16 %v1341
  %v2501 = vunpack.c.l.b16 %v1342
  %v2502 = vunpack.c.l.b16 %v1343
  %v2503 = vunpack.c.l.b16 %v1344
  %v2504 = vunpack.c.l.b16 %v1345
  %v2505 = vunpack.c.l.b16 %v1346
  %v2506 = vunpack.c.l.b16 %v1347
  %v2507 = vunpack.c.l.b16 %v1348
  %v2508 = vunpack.c.l.b16 %v1349
  %v2509 = vunpack.c.l.b16 %v1350
  %v2510 = vunpack.c.l.b16 %v1351
  %v2511 = vunpack.c.l.b16 %v1352
  %v2512 = vunpack.c.l.b16 %v1353
  %v2513 = vunpack.c.l.b16 %v1354
  %v2514 = vunpack.c.l.b16 %v1355
  %v2515 = vunpack.c.l.b16 %v1356
  %v2516 = vunpack.c.l.b16 %v1357
  %v2517 = vunpack.c.l.b16 %v1358
  %v2518 = vunpack.c.l.b16 %v1359
  %v2519 = vunpack.c.l.b16 %v1360
  %v2520 = vunpack.c.l.b16 %v1361
  %v2521 = vunpack.c.l.b16 %v1362
  %v2522 = vunpack.c.l.b16 %v1363
  %v2523 = vunpack.c.l.b16 %v1364
  %v2524 = vunpack.c.l.b16 %v1365
  %v2525 = vunpack.c.l.b16 %v1366
  %v2526 = vunpack.c.l.b16 %v1367
  %v2527 = vunpack.c.l.b16 %v1368
  %v2528 = vunpack.c.l.b16 %v1369
  %v2529 = vunpack.c.l.b16 %v1370
  %v2530 = vunpack.c.l.b16 %v1371
  %v2531 = vunpack.c.l.b16 %v1372
  %v2532 = vunpack.c.l.b16 %v1373
  %v2533 = vunpack.c.l.b16 %v1374
  %v2534 = vunpack.c.l.b16 %v1375
  %v2535 = vunpack.c.l.b16 %v1376
  %v2536 = vunpack.c.l.b16 %v1377
  %v2537 = vunpack.c.l.b16 %v1378
  %v2538 = vunpack.c.l.b16 %v1379
  %v2539 = vunpack.c.l.b16 %v1380
  %v2540 = vunpack.c.l.b16 %v1381
  %v2541 = vunpack.c.l.b16 %v1382
  %v2542 = vunpack.c.l.b16 %v1383
  %v2543 = vunpack.c.l.b16 %v1384
  %v2544 = vunpack.c.l.b16 %v1385
  %v2545 = vunpack.c.l.b16 %v1386
  %v2546 = vunpack.c.l.b16 %v1387
  %v2547 = vunpack.c.l.b16 %v1388
  %v2548 = vunpack.c.l.b16 %v1389
  %v2549 = vunpack.c.l.b16 %v1390
  %v2550 = vunpack.c.l.b16 %v1391
  %v2551 = vunpack.c.l.b16 %v1392
  %v2552 = vpack.c.b16 %v1977, %v1976
  %v2553 = vpack.c.b16 %v1979, %v1978
  %v2554 = vpack.c.b16 %v1981, %v1980
  %v2555 = vpack.c.b16 %v1983, %v1982
  %v2556 = vpack.c.b16 %v1985, %v1984
  %v2557 = vpack.c.b16 %v1987, %v1986
  %v2558 = vpack.c.b16 %v1989, %v1988
  %v2559 = vpack.c.b16 %v1991, %v1990
  %v2560 = vpack.c.b16 %v1993, %v1992
  %v2561 = vpack.c.b16 %v1995, %v1994
  %v2562 = vpack.c.b16 %v1997, %v1996
  %v2563 = vpack.c.b16 %v1999, %v1998
  %v2564 = vpack.c.b16 %v2001, %v2000
  %v2565 = vpack.c.b16 %v2003, %v2002
  %v2566 = vpack.c.b16 %v2005, %v2004
  %v2567 = vpack.c.b16 %v2007, %v2006
  %v2568 = vpack.c.b16 %v2009, %v2008
  %v2569 = vpack.c.b16 %v2011, %v2010
  %v2570 = vpack.c.b16 %v2013, %v2012
  %v2571 = vpack.c.b16 %v2015, %v2014
  %v2572 = vpack.c.b16 %v2017, %v2016
  %v2573 = vpack.c.b16 %v2019, %v2018
  %v2574 = vpack.c.b16 %v2021, %v2020
  %v2575 = vpack.c.b16 %v2023, %v2022
  %v2576 = vpack.c.b16 %v2025, %v2024
  %v2577 = vpack.c.b16 %v2027, %v2026
  %v2578 = vpack.c.b16 %v2029, %v2028
  %v2579 = vpack.c.b16 %v2031, %v2030
  %v2580 = vpack.c.b16 %v2033, %v2032
  %v2581 = vpack.c.b16 %v2035, %v2034
  %v2582 = vpack.c.b16 %v2037, %v2036
  %v2583 = vpack.c.b16 %v2039, %v2038
  %v2584 = vpack.c.b16 %v2041, %v2040
  %v2585 = vpack.c.b16 %v2043, %v2042
  %v2586 = vpack.c.b16 %v2045, %v2044
  %v2587 = vpack.c.b16 %v2047, %v2046
  %v2588 = vpack.c.b16 %v2049, %v2048
  %v2589 = vpack.c.b16 %v2051, %v2050
  %v2590 = vpack.c.b16 %v2053, %v2052
  %v2591 = vpack.c.b16 %v2055, %v2054
  %v2592 = vpack.c.b16 %v2057, %v2056
  %v2593 = vpack.c.b16 %v2059, %v2058
  %v2594 = vpack.c.b16 %v2061, %v2060
  %v2595 = vpack.c.b16 %v2063, %v2062
  %v2596 = vpack.c.b16 %v2065, %v2064
  %v2597 = vpack.c.b16 %v2067, %v2066
  %v2598 = vpack.c.b16 %v2069, %v2068
  %v2599 = vpack.c.b16 %v2071, %v2070
  %v2600 = vpack.c.b16 %v2073, %v2072
  %v2601 = vpack.c.b16 %v2075, %v2074
  %v2602 = vpack.c.b16 %v2077, %v2076
  %v2603 = vpack.c.b16 %v2079, %v2078
  %v2604 = vpack.c.b16 %v2081, %v2080
  %v2605 = vpack.c.b16 %v2083, %v2082
  %v2606 = vpack.c.b16 %v2085, %v2084
  %v2607 = vpack.c.b16 %v2087, %v2086
  %v2608 = vpack.c.b16 %v2089, %v2088
  %v2609 = vpack.c.b16 %v2091, %v2090
  %v2610 = vpack.c.b16 %v2093, %v2092
  %v2611 = vpack.c.b16 %v2095, %v2094
  %v2612 = vpack.c.b16 %v2097, %v2096
  %v2613 = vpack.c.b16 %v2099, %v2098
  %v2614 = vpack.c.b16 %v2101, %v2100
  %v2615 = vpack.c.b16 %v2103, %v2102
  %v2616 = vpack.c.b16 %v2105, %v2104
  %v2617 = vpack.c.b16 %v2107, %v2106
  %v2618 = vpack.c.b16 %v2109, %v2108
  %v2619 = vpack.c.b16 %v2111, %v2110
  %v2620 = vpack.c.b16 %v2113, %v2112
  %v2621 = vpack.c.b16 %v2115, %v2114
  %v2622 = vpack.c.b16 %v2117, %v2116
  %v2623 = vpack.c.b16 %v2119, %v2118
  %v2624 = vpack.c.b16 %v2121, %v2120
  %v2625 = vpack.c.b16 %v2123, %v2122
  %v2626 = vpack.c.b16 %v2125, %v2124
  %v2627 = vpack.c.b16 %v2127, %v2126
  %v2628 = vpack.c.b16 %v2129, %v2128
  %v2629 = vpack.c.b16 %v2131, %v2130
  %v2630 = vpack.c.b16 %v2133, %v2132
  %v2631 = vpack.c.b16 %v2135, %v2134
  %v2632 = vpack.c.b16 %v2137, %v2136
  %v2633 = vpack.c.b16 %v2139, %v2138
  %v2634 = vpack.c.b16 %v2141, %v2140
  %v2635 = vpack.c.b16 %v2143, %v2142
  %v2636 = vpack.c.b16 %v2145, %v2144
  %v2637 = vpack.c.b16 %v2147, %v2146
  %v2638 = vpack.c.b16 %v2149, %v2148
  %v2639 = vpack.c.b16 %v2151, %v2150
  %v2640 = vpack.c.b16 %v2153, %v2152
  %v2641 = vpack.c.b16 %v2155, %v2154
  %v2642 = vpack.c.b16 %v2157, %v2156
  %v2643 = vpack.c.b16 %v2159, %v2158
  %v2644 = vpack.c.b16 %v2161, %v2160
  %v2645 = vpack.c.b16 %v2163, %v2162
  %v2646 = vpack.c.b16 %v2165, %v2164
  %v2647 = vpack.c.b16 %v2167, %v2166
  %v2648 = vpack.c.b16 %v2169, %v2168
  %v2649 = vpack.c.b16 %v2171, %v2170
  %v2650 = vpack.c.b16 %v2173, %v2172
  %v2651 = vpack.c.b16 %v2175, %v2174
  %v2652 = vpack.c.b16 %v2177, %v2176
  %v2653 = vpack.c.b16 %v2179, %v2178
  %v2654 = vpack.c.b16 %v2181, %v2180
  %v2655 = vpack.c.b16 %v2183, %v2182
  %v2656 = vpack.c.b16 %v2185, %v2184
  %v2657 = vpack.c.b16 %v2187, %v2186
  %v2658 = vpack.c.b16 %v2189, %v2188
  %v2659 = vpack.c.b16 %v2191, %v2190
  %v2660 = vpack.c.b16 %v2193, %v2192
  %v2661 = vpack.c.b16 %v2195, %v2194
  %v2662 = vpack.c.b16 %v2197, %v2196
  %v2663 = vpack.c.b16 %v2199, %v2198
  %v2664 = vpack.c.b16 %v2201, %v2200
  %v2665 = vpack.c.b16 %v2203, %v2202
  %v2666 = vpack.c.b16 %v2205, %v2204
  %v2667 = vpack.c.b16 %v2207, %v2206
  %v2668 = vpack.c.b16 %v2209, %v2208
  %v2669 = vpack.c.b16 %v2211, %v2210
  %v2670 = vpack.c.b16 %v2213, %v2212
  %v2671 = vpack.c.b16 %v2215, %v2214
  %v2672 = vpack.c.b16 %v2217, %v2216
  %v2673 = vpack.c.b16 %v2219, %v2218
  %v2674 = vpack.c.b16 %v2221, %v2220
  %v2675 = vpack.c.b16 %v2223, %v2222
  %v2676 = vpack.c.b16 %v2225, %v2224
  %v2677 = vpack.c.b16 %v2227, %v2226
  %v2678 = vpack.c.b16 %v2229, %v2228
  %v2679 = vpack.c.b16 %v2231, %v2230
  %v2680 = vpack.c.b16 %v2233, %v2232
  %v2681 = vpack.c.b16 %v2235, %v2234
  %v2682 = vpack.c.b16 %v2237, %v2236
  %v2683 = vpack.c.b16 %v2239, %v2238
  %v2684 = vpack.c.b16 %v2241, %v2240
  %v2685 = vpack.c.b16 %v2243, %v2242
  %v2686 = vpack.c.b16 %v2245, %v2244
  %v2687 = vpack.c.b16 %v2247, %v2246
  %v2688 = vpack.c.b16 %v2249, %v2248
  %v2689 = vpack.c.b16 %v2251, %v2250
  %v2690 = vpack.c.b16 %v2253, %v2252
  %v2691 = vpack.c.b16 %v2255, %v2254
  %v2692 = vpack.c.b16 %v2257, %v2256
  %v2693 = vpack.c.b16 %v2259, %v2258
  %v2694 = vpack.c.b16 %v2261, %v2260
  %v2695 = vpack.c.b16 %v2263, %v2262
  %v2696 = vpack.c.b16 %v2265, %v2264
  %v2697 = vpack.c.b16 %v2267, %v2266
  %v2698 = vpack.c.b16 %v2269, %v2268
  %v2699 = vpack.c.b16 %v2271, %v2270
  %v2700 = vpack.c.b16 %v2273, %v2272
  %v2701 = vpack.c.b16 %v2275, %v2274
  %v2702 = vpack.c.b16 %v2277, %v2276
  %v2703 = vpack.c.b16 %v2279, %v2278
  %v2704 = vpack.c.b16 %v2281, %v2280
  %v2705 = vpack.c.b16 %v2283, %v2282
  %v2706 = vpack.c.b16 %v2285, %v2284
  %v2707 = vpack.c.b16 %v2287, %v2286
  %v2708 = vpack.c.b16 %v2289, %v2288
  %v2709 = vpack.c.b16 %v2291, %v2290
  %v2710 = vpack.c.b16 %v2293, %v2292
  %v2711 = vpack.c.b16 %v2295, %v2294
  %v2712 = vpack.c.b16 %v2297, %v2296
  %v2713 = vpack.c.b16 %v2299, %v2298
  %v2714 = vpack.c.b16 %v2301, %v2300
  %v2715 = vpack.c.b16 %v2303, %v2302
  %v2716 = vpack.c.b16 %v2305, %v2304
  %v2717 = vpack.c.b16 %v2307, %v2306
  %v2718 = vpack.c.b16 %v2309, %v2308
  %v2719 = vpack.c.b16 %v2311, %v2310
  %v2720 = vpack.c.b16 %v2313, %v2312
  %v2721 = vpack.c.b16 %v2315, %v2314
  %v2722 = vpack.c.b16 %v2317, %v2316
  %v2723 = vpack.c.b16 %v2319, %v2318
  %v2724 = vpack.c.b16 %v2321, %v2320
  %v2725 = vpack.c.b16 %v2323, %v2322
  %v2726 = vpack.c.b16 %v2325, %v2324
  %v2727 = vpack.c.b16 %v2327, %v2326
  %v2728 = vpack.c.b16 %v2329, %v2328
  %v2729 = vpack.c.b16 %v2331, %v2330
  %v2730 = vpack.c.b16 %v2333, %v2332
  %v2731 = vpack.c.b16 %v2335, %v2334
  %v2732 = vpack.c.b16 %v2337, %v2336
  %v2733 = vpack.c.b16 %v2339, %v2338
  %v2734 = vpack.c.b16 %v2341, %v2340
  %v2735 = vpack.c.b16 %v2343, %v2342
  %v2736 = vpack.c.b16 %v2345, %v2344
  %v2737 = vpack.c.b16 %v2347, %v2346
  %v2738 = vpack.c.b16 %v2349, %v2348
  %v2739 = vpack.c.b16 %v2351, %v2350
  %v2740 = vpack.c.b16 %v2353, %v2352
  %v2741 = vpack.c.b16 %v2355, %v2354
  %v2742 = vpack.c.b16 %v2357, %v2356
  %v2743 = vpack.c.b16 %v2359, %v2358
  %v2744 = vpack.c.b16 %v2361, %v2360
  %v2745 = vpack.c.b16 %v2363, %v2362
  %v2746 = vpack.c.b16 %v2365, %v2364
  %v2747 = vpack.c.b16 %v2367, %v2366
  %v2748 = vpack.c.b16 %v2369, %v2368
  %v2749 = vpack.c.b16 %v2371, %v2370
  %v2750 = vpack.c.b16 %v2373, %v2372
  %v2751 = vpack.c.b16 %v2375, %v2374
  %v2752 = vpack.c.b16 %v2377, %v2376
  %v2753 = vpack.c.b16 %v2379, %v2378
  %v2754 = vpack.c.b16 %v2381, %v2380
  %v2755 = vpack.c.b16 %v2383, %v2382
  %v2756 = vpack.c.b16 %v2385, %v2384
  %v2757 = vpack.c.b16 %v2387, %v2386
  %v2758 = vpack.c.b16 %v2389, %v2388
  %v2759 = vpack.c.b16 %v2391, %v2390
  %v2760 = vpack.c.b16 %v2393, %v2392
  %v2761 = vpack.c.b16 %v2395, %v2394
  %v2762 = vpack.c.b16 %v2397, %v2396
  %v2763 = vpack.c.b16 %v2399, %v2398
  %v2764 = vpack.c.b16 %v2401, %v2400
  %v2765 = vpack.c.b16 %v2403, %v2402
  %v2766 = vpack.c.b16 %v2405, %v2404
  %v2767 = vpack.c.b16 %v2407, %v2406
  %v2768 = vpack.c.b16 %v2409, %v2408
  %v2769 = vpack.c.b16 %v2411, %v2410
  %v2770 = vpack.c.b16 %v2413, %v2412
  %v2771 = vpack.c.b16 %v2415, %v2414
  %v2772 = vpack.c.b16 %v2417, %v2416
  %v2773 = vpack.c.b16 %v2419, %v2418
  %v2774 = vpack.c.b16 %v2421, %v2420
  %v2775 = vpack.c.b16 %v2423, %v2422
  %v2776 = vpack.c.b16 %v2425, %v2424
  %v2777 = vpack.c.b16 %v2427, %v2426
  %v2778 = vpack.c.b16 %v2429, %v2428
  %v2779 = vpack.c.b16 %v2431, %v2430
  %v2780 = vpack.c.b16 %v2433, %v2432
  %v2781 = vpack.c.b16 %v2435, %v2434
  %v2782 = vpack.c.b16 %v2437, %v2436
  %v2783 = vpack.c.b16 %v2439, %v2438
  %v2784 = vpack.c.b16 %v2441, %v2440
  %v2785 = vpack.c.b16 %v2443, %v2442
  %v2786 = vpack.c.b16 %v2445, %v2444
  %v2787 = vpack.c.b16 %v2447, %v2446
  %v2788 = vpack.c.b16 %v2449, %v2448
  %v2789 = vpack.c.b16 %v2451, %v2450
  %v2790 = vpack.c.b16 %v2453, %v2452
  %v2791 = vpack.c.b16 %v2455, %v2454
  %v2792 = vpack.c.b16 %v2457, %v2456
  %v2793 = vpack.c.b16 %v2459, %v2458
  %v2794 = vpack.c.b16 %v2461, %v2460
  %v2795 = vpack.c.b16 %v2463, %v2462
  %v2796 = vpack.c.b16 %v2465, %v2464
  %v2797 = vpack.c.b16 %v2467, %v2466
  %v2798 = vpack.c.b16 %v2469, %v2468
  %v2799 = vpack.c.b16 %v2471, %v2470
  %v2800 = vpack.c.b16 %v2473, %v2472
  %v2801 = vpack.c.b16 %v2475, %v2474
  %v2802 = vpack.c.b16 %v2477, %v2476
  %v2803 = vpack.c.b16 %v2479, %v2478
  %v2804 = vpack.c.b16 %v2481, %v2480
  %v2805 = vpack.c.b16 %v2483, %v2482
  %v2806 = vpack.c.b16 %v2485, %v2484
  %v2807 = vpack.c.b16 %v2487, %v2486
  %v2808 = vpack.c.b16 %v2489, %v2488
  %v2809 = vpack.c.b16 %v2491, %v2490
  %v2810 = vpack.c.b16 %v2493, %v2492
  %v2811 = vpack.c.b16 %v2495, %v2494
  %v2812 = vpack.c.b16 %v2497, %v2496
  %v2813 = vpack.c.b16 %v2499, %v2498
  %v2814 = vpack.c.b16 %v2501, %v2500
  %v2815 = vpack.c.b16 %v2503, %v2502
  %v2816 = vpack.c.b16 %v2505, %v2504
  %v2817 = vpack.c.b16 %v2507, %v2506
  %v2818 = vpack.c.b16 %v2509, %v2508
  %v2819 = vpack.c.b16 %v2511, %v2510
  %v2820 = vpack.c.b16 %v2513, %v2512
  %v2821 = vpack.c.b16 %v2515, %v2514
  %v2822 = vpack.c.b16 %v2517, %v2516
  %v2823 = vpack.c.b16 %v2519, %v2518
  %v2824 = vpack.c.b16 %v2521, %v2520
  %v2825 = vpack.c.b16 %v2523, %v2522
  %v2826 = vpack.c.b16 %v2525, %v2524
  %v2827 = vpack.c.b16 %v2527, %v2526
  %v2828 = vpack.c.b16 %v2529, %v2528
  %v2829 = vpack.c.b16 %v2531, %v2530
  %v2830 = vpack.c.b16 %v2533, %v2532
  %v2831 = vpack.c.b16 %v2535, %v2534
  %v2832 = vpack.c.b16 %v2537, %v2536
  %v2833 = vpack.c.b16 %v2539, %v2538
  %v2834 = vpack.c.b16 %v2541, %v2540
  %v2835 = vpack.c.b16 %v2543, %v2542
  %v2836 = vpack.c.b16 %v2545, %v2544
  %v2837 = vpack.c.b16 %v2547, %v2546
  %v2838 = vpack.c.b16 %v2549, %v2548
  %v2839 = vpack.c.b16 %v2551, %v2550
  %3128 = vmatprep.subr.bf16.mxu0 0
  %3129 = vmatpush1.bf16.msra.mxu0 %v2559
  %3130 = vmatprep.subr.bf16.mxu0 0
  %3131 = vmatpush1.bf16.msra.mxu0 %v2558
  %3132 = vmatprep.subr.bf16.mxu0 0
  %3133 = vmatpush1.bf16.msra.mxu0 %v2557
  %3134 = vmatprep.subr.bf16.mxu0 0
  %3135 = vmatpush1.bf16.msra.mxu0 %v2556
  %3136 = vmatprep.subr.bf16.mxu0 0
  %3137 = vmatpush1.bf16.msra.mxu0 %v2555
  %3138 = vmatprep.subr.bf16.mxu0 0
  %3139 = vmatpush1.bf16.msra.mxu0 %v2554
  %3140 = vmatprep.subr.bf16.mxu0 0
  %3141 = vmatpush1.bf16.msra.mxu0 %v2553
  %3142 = vmatprep.subr.bf16.mxu0 0
  %3143 = vmatpush1.bf16.msra.mxu0 %v2552
  %3144 = vmatprep.subr.bf16.mxu0 0
  %3145 = vmatpush2.bf16.msra.mxu0 %v2567
  %3146 = vmatprep.subr.bf16.mxu0 0
  %3147 = vmatpush2.bf16.msra.mxu0 %v2566
  %3148 = vmatprep.subr.bf16.mxu0 0
  %3149 = vmatpush2.bf16.msra.mxu0 %v2565
  %3150 = vmatprep.subr.bf16.mxu0 0
  %3151 = vmatpush2.bf16.msra.mxu0 %v2564
  %3152 = vmatprep.subr.bf16.mxu0 0
  %3153 = vmatpush2.bf16.msra.mxu0 %v2563
  %3154 = vmatprep.subr.bf16.mxu0 0
  %3155 = vmatpush2.bf16.msra.mxu0 %v2562
  %3156 = vmatprep.subr.bf16.mxu0 0
  %3157 = vmatpush2.bf16.msra.mxu0 %v2561
  %3158 = vmatprep.subr.bf16.mxu0 0
  %3159 = vmatpush2.bf16.msra.mxu0 %v2560
  %3160 = vmatprep.mubr.bf16.mxu0 %v782
  %3161 = vmatmul.mubr.bf16.gmra.mxu0 %v781
  %v3162 = vpop.f32.mrf.mxu0
  %v3163 = vadd.f32 %v1398, %v3162
  %v3164 = vpop.f32.mrf.mxu0
  %v3165 = vpop.f32.mrf.mxu0
  %v3166 = vpop.f32.mrf.mxu0
  %3167 = vdwg.mxu0
  %3168 = vmatprep.subr.bf16.mxu0 0
  %3169 = vmatpush1.bf16.msra.mxu0 %v2575
  %3170 = vmatprep.subr.bf16.mxu0 0
  %3171 = vmatpush1.bf16.msra.mxu0 %v2574
  %3172 = vmatprep.subr.bf16.mxu0 0
  %3173 = vmatpush1.bf16.msra.mxu0 %v2573
  %3174 = vmatprep.subr.bf16.mxu0 0
  %3175 = vmatpush1.bf16.msra.mxu0 %v2572
  %3176 = vmatprep.subr.bf16.mxu0 0
  %3177 = vmatpush1.bf16.msra.mxu0 %v2571
  %3178 = vmatprep.subr.bf16.mxu0 0
  %3179 = vmatpush1.bf16.msra.mxu0 %v2570
  %3180 = vmatprep.subr.bf16.mxu0 0
  %3181 = vmatpush1.bf16.msra.mxu0 %v2569
  %3182 = vmatprep.subr.bf16.mxu0 0
  %3183 = vmatpush1.bf16.msra.mxu0 %v2568
  %3184 = vmatprep.subr.bf16.mxu0 0
  %3185 = vmatpush2.bf16.msra.mxu0 %v2583
  %3186 = vmatprep.subr.bf16.mxu0 0
  %3187 = vmatpush2.bf16.msra.mxu0 %v2582
  %3188 = vmatprep.subr.bf16.mxu0 0
  %3189 = vmatpush2.bf16.msra.mxu0 %v2581
  %3190 = vmatprep.subr.bf16.mxu0 0
  %3191 = vmatpush2.bf16.msra.mxu0 %v2580
  %3192 = vmatprep.subr.bf16.mxu0 0
  %3193 = vmatpush2.bf16.msra.mxu0 %v2579
  %3194 = vmatprep.subr.bf16.mxu0 0
  %3195 = vmatpush2.bf16.msra.mxu0 %v2578
  %3196 = vmatprep.subr.bf16.mxu0 0
  %3197 = vmatpush2.bf16.msra.mxu0 %v2577
  %3198 = vmatprep.subr.bf16.mxu0 0
  %3199 = vmatpush2.bf16.msra.mxu0 %v2576
  %3200 = vmatprep.mubr.bf16.mxu0 %v784
  %3201 = vmatmul.mubr.bf16.gmra.mxu0 %v783
  %v3202 = vpop.f32.mrf.mxu0
  %v3203 = vadd.f32 %v3163, %v3202
  %v3204 = vpop.f32.mrf.mxu0
  %v3205 = vpop.f32.mrf.mxu0
  %v3206 = vpop.f32.mrf.mxu0
  %3207 = vdwg.mxu0
  %3208 = vmatprep.subr.bf16.mxu0 0
  %3209 = vmatpush1.bf16.msra.mxu0 %v2591
  %3210 = vmatprep.subr.bf16.mxu0 0
  %3211 = vmatpush1.bf16.msra.mxu0 %v2590
  %3212 = vmatprep.subr.bf16.mxu0 0
  %3213 = vmatpush1.bf16.msra.mxu0 %v2589
  %3214 = vmatprep.subr.bf16.mxu0 0
  %3215 = vmatpush1.bf16.msra.mxu0 %v2588
  %3216 = vmatprep.subr.bf16.mxu0 0
  %3217 = vmatpush1.bf16.msra.mxu0 %v2587
  %3218 = vmatprep.subr.bf16.mxu0 0
  %3219 = vmatpush1.bf16.msra.mxu0 %v2586
  %3220 = vmatprep.subr.bf16.mxu0 0
  %3221 = vmatpush1.bf16.msra.mxu0 %v2585
  %3222 = vmatprep.subr.bf16.mxu0 0
  %3223 = vmatpush1.bf16.msra.mxu0 %v2584
  %3224 = vmatprep.subr.bf16.mxu0 0
  %3225 = vmatpush2.bf16.msra.mxu0 %v2599
  %3226 = vmatprep.subr.bf16.mxu0 0
  %3227 = vmatpush2.bf16.msra.mxu0 %v2598
  %3228 = vmatprep.subr.bf16.mxu0 0
  %3229 = vmatpush2.bf16.msra.mxu0 %v2597
  %3230 = vmatprep.subr.bf16.mxu0 0
  %3231 = vmatpush2.bf16.msra.mxu0 %v2596
  %3232 = vmatprep.subr.bf16.mxu0 0
  %3233 = vmatpush2.bf16.msra.mxu0 %v2595
  %3234 = vmatprep.subr.bf16.mxu0 0
  %3235 = vmatpush2.bf16.msra.mxu0 %v2594
  %3236 = vmatprep.subr.bf16.mxu0 0
  %3237 = vmatpush2.bf16.msra.mxu0 %v2593
  %3238 = vmatprep.subr.bf16.mxu0 0
  %3239 = vmatpush2.bf16.msra.mxu0 %v2592
  %3240 = vmatprep.mubr.bf16.mxu0 %v786
  %3241 = vmatmul.mubr.bf16.gmra.mxu0 %v785
  %v3242 = vpop.f32.mrf.mxu0
  %v3243 = vadd.f32 %v3203, %v3242
  %v3244 = vpop.f32.mrf.mxu0
  %v3245 = vpop.f32.mrf.mxu0
  %v3246 = vpop.f32.mrf.mxu0
  %3247 = vdwg.mxu0
  %3248 = vmatprep.subr.bf16.mxu0 0
  %3249 = vmatpush1.bf16.msra.mxu0 %v2607
  %3250 = vmatprep.subr.bf16.mxu0 0
  %3251 = vmatpush1.bf16.msra.mxu0 %v2606
  %3252 = vmatprep.subr.bf16.mxu0 0
  %3253 = vmatpush1.bf16.msra.mxu0 %v2605
  %3254 = vmatprep.subr.bf16.mxu0 0
  %3255 = vmatpush1.bf16.msra.mxu0 %v2604
  %3256 = vmatprep.subr.bf16.mxu0 0
  %3257 = vmatpush1.bf16.msra.mxu0 %v2603
  %3258 = vmatprep.subr.bf16.mxu0 0
  %3259 = vmatpush1.bf16.msra.mxu0 %v2602
  %3260 = vmatprep.subr.bf16.mxu0 0
  %3261 = vmatpush1.bf16.msra.mxu0 %v2601
  %3262 = vmatprep.subr.bf16.mxu0 0
  %3263 = vmatpush1.bf16.msra.mxu0 %v2600
  %3264 = vmatprep.subr.bf16.mxu0 0
  %3265 = vmatpush2.bf16.msra.mxu0 %v2615
  %3266 = vmatprep.subr.bf16.mxu0 0
  %3267 = vmatpush2.bf16.msra.mxu0 %v2614
  %3268 = vmatprep.subr.bf16.mxu0 0
  %3269 = vmatpush2.bf16.msra.mxu0 %v2613
  %3270 = vmatprep.subr.bf16.mxu0 0
  %3271 = vmatpush2.bf16.msra.mxu0 %v2612
  %3272 = vmatprep.subr.bf16.mxu0 0
  %3273 = vmatpush2.bf16.msra.mxu0 %v2611
  %3274 = vmatprep.subr.bf16.mxu0 0
  %3275 = vmatpush2.bf16.msra.mxu0 %v2610
  %3276 = vmatprep.subr.bf16.mxu0 0
  %3277 = vmatpush2.bf16.msra.mxu0 %v2609
  %3278 = vmatprep.subr.bf16.mxu0 0
  %3279 = vmatpush2.bf16.msra.mxu0 %v2608
  %3280 = vmatprep.mubr.bf16.mxu0 %v788
  %3281 = vmatmul.mubr.bf16.gmra.mxu0 %v787
  %v3282 = vpop.f32.mrf.mxu0
  %v3283 = vadd.f32 %v3243, %v3282
  %v3284 = vpop.f32.mrf.mxu0
  %v3285 = vpop.f32.mrf.mxu0
  %v3286 = vpop.f32.mrf.mxu0
  %3287 = vdwg.mxu0
  %3288 = vmatprep.subr.bf16.mxu0 0
  %3289 = vmatpush1.bf16.msra.mxu0 %v2623
  %3290 = vmatprep.subr.bf16.mxu0 0
  %3291 = vmatpush1.bf16.msra.mxu0 %v2622
  %3292 = vmatprep.subr.bf16.mxu0 0
  %3293 = vmatpush1.bf16.msra.mxu0 %v2621
  %3294 = vmatprep.subr.bf16.mxu0 0
  %3295 = vmatpush1.bf16.msra.mxu0 %v2620
  %3296 = vmatprep.subr.bf16.mxu0 0
  %3297 = vmatpush1.bf16.msra.mxu0 %v2619
  %3298 = vmatprep.subr.bf16.mxu0 0
  %3299 = vmatpush1.bf16.msra.mxu0 %v2618
  %3300 = vmatprep.subr.bf16.mxu0 0
  %3301 = vmatpush1.bf16.msra.mxu0 %v2617
  %3302 = vmatprep.subr.bf16.mxu0 0
  %3303 = vmatpush1.bf16.msra.mxu0 %v2616
  %3304 = vmatprep.subr.bf16.mxu0 0
  %3305 = vmatpush2.bf16.msra.mxu0 %v2631
  %3306 = vmatprep.subr.bf16.mxu0 0
  %3307 = vmatpush2.bf16.msra.mxu0 %v2630
  %3308 = vmatprep.subr.bf16.mxu0 0
  %3309 = vmatpush2.bf16.msra.mxu0 %v2629
  %3310 = vmatprep.subr.bf16.mxu0 0
  %3311 = vmatpush2.bf16.msra.mxu0 %v2628
  %3312 = vmatprep.subr.bf16.mxu0 0
  %3313 = vmatpush2.bf16.msra.mxu0 %v2627
  %3314 = vmatprep.subr.bf16.mxu0 0
  %3315 = vmatpush2.bf16.msra.mxu0 %v2626
  %3316 = vmatprep.subr.bf16.mxu0 0
  %3317 = vmatpush2.bf16.msra.mxu0 %v2625
  %3318 = vmatprep.subr.bf16.mxu0 0
  %3319 = vmatpush2.bf16.msra.mxu0 %v2624
  %3320 = vmatprep.mubr.bf16.mxu0 %v790
  %3321 = vmatmul.mubr.bf16.gmra.mxu0 %v789
  %v3322 = vpop.f32.mrf.mxu0
  %v3323 = vadd.f32 %v3283, %v3322
  %v3324 = vpop.f32.mrf.mxu0
  %v3325 = vpop.f32.mrf.mxu0
  %v3326 = vpop.f32.mrf.mxu0
  %3327 = vdwg.mxu0
  %3328 = vmatprep.subr.bf16.mxu0 0
  %3329 = vmatpush1.bf16.msra.mxu0 %v2639
  %3330 = vmatprep.subr.bf16.mxu0 0
  %3331 = vmatpush1.bf16.msra.mxu0 %v2638
  %3332 = vmatprep.subr.bf16.mxu0 0
  %3333 = vmatpush1.bf16.msra.mxu0 %v2637
  %3334 = vmatprep.subr.bf16.mxu0 0
  %3335 = vmatpush1.bf16.msra.mxu0 %v2636
  %3336 = vmatprep.subr.bf16.mxu0 0
  %3337 = vmatpush1.bf16.msra.mxu0 %v2635
  %3338 = vmatprep.subr.bf16.mxu0 0
  %3339 = vmatpush1.bf16.msra.mxu0 %v2634
  %3340 = vmatprep.subr.bf16.mxu0 0
  %3341 = vmatpush1.bf16.msra.mxu0 %v2633
  %3342 = vmatprep.subr.bf16.mxu0 0
  %3343 = vmatpush1.bf16.msra.mxu0 %v2632
  %3344 = vmatprep.subr.bf16.mxu0 0
  %3345 = vmatpush2.bf16.msra.mxu0 %v2647
  %3346 = vmatprep.subr.bf16.mxu0 0
  %3347 = vmatpush2.bf16.msra.mxu0 %v2646
  %3348 = vmatprep.subr.bf16.mxu0 0
  %3349 = vmatpush2.bf16.msra.mxu0 %v2645
  %3350 = vmatprep.subr.bf16.mxu0 0
  %3351 = vmatpush2.bf16.msra.mxu0 %v2644
  %3352 = vmatprep.subr.bf16.mxu0 0
  %3353 = vmatpush2.bf16.msra.mxu0 %v2643
  %3354 = vmatprep.subr.bf16.mxu0 0
  %3355 = vmatpush2.bf16.msra.mxu0 %v2642
  %3356 = vmatprep.subr.bf16.mxu0 0
  %3357 = vmatpush2.bf16.msra.mxu0 %v2641
  %3358 = vmatprep.subr.bf16.mxu0 0
  %3359 = vmatpush2.bf16.msra.mxu0 %v2640
  %3360 = vmatprep.mubr.bf16.mxu0 %v792
  %3361 = vmatmul.mubr.bf16.gmra.mxu0 %v791
  %v3362 = vpop.f32.mrf.mxu0
  %v3363 = vadd.f32 %v3323, %v3362
  %v3364 = vpop.f32.mrf.mxu0
  %v3365 = vpop.f32.mrf.mxu0
  %v3366 = vpop.f32.mrf.mxu0
  %3367 = vdwg.mxu0
  %3368 = vmatprep.subr.bf16.mxu0 0
  %3369 = vmatpush1.bf16.msra.mxu0 %v2655
  %3370 = vmatprep.subr.bf16.mxu0 0
  %3371 = vmatpush1.bf16.msra.mxu0 %v2654
  %3372 = vmatprep.subr.bf16.mxu0 0
  %3373 = vmatpush1.bf16.msra.mxu0 %v2653
  %3374 = vmatprep.subr.bf16.mxu0 0
  %3375 = vmatpush1.bf16.msra.mxu0 %v2652
  %3376 = vmatprep.subr.bf16.mxu0 0
  %3377 = vmatpush1.bf16.msra.mxu0 %v2651
  %3378 = vmatprep.subr.bf16.mxu0 0
  %3379 = vmatpush1.bf16.msra.mxu0 %v2650
  %3380 = vmatprep.subr.bf16.mxu0 0
  %3381 = vmatpush1.bf16.msra.mxu0 %v2649
  %3382 = vmatprep.subr.bf16.mxu0 0
  %3383 = vmatpush1.bf16.msra.mxu0 %v2648
  %3384 = vmatprep.subr.bf16.mxu0 0
  %3385 = vmatpush2.bf16.msra.mxu0 %v2663
  %3386 = vmatprep.subr.bf16.mxu0 0
  %3387 = vmatpush2.bf16.msra.mxu0 %v2662
  %3388 = vmatprep.subr.bf16.mxu0 0
  %3389 = vmatpush2.bf16.msra.mxu0 %v2661
  %3390 = vmatprep.subr.bf16.mxu0 0
  %3391 = vmatpush2.bf16.msra.mxu0 %v2660
  %3392 = vmatprep.subr.bf16.mxu0 0
  %3393 = vmatpush2.bf16.msra.mxu0 %v2659
  %3394 = vmatprep.subr.bf16.mxu0 0
  %3395 = vmatpush2.bf16.msra.mxu0 %v2658
  %3396 = vmatprep.subr.bf16.mxu0 0
  %3397 = vmatpush2.bf16.msra.mxu0 %v2657
  %3398 = vmatprep.subr.bf16.mxu0 0
  %3399 = vmatpush2.bf16.msra.mxu0 %v2656
  %3400 = vmatprep.mubr.bf16.mxu0 %v794
  %3401 = vmatmul.mubr.bf16.gmra.mxu0 %v793
  %v3402 = vpop.f32.mrf.mxu0
  %v3403 = vadd.f32 %v3363, %v3402
  %v3404 = vpop.f32.mrf.mxu0
  %v3405 = vpop.f32.mrf.mxu0
  %v3406 = vpop.f32.mrf.mxu0
  %3407 = vdwg.mxu0
  %3408 = vmatprep.subr.bf16.mxu0 0
  %3409 = vmatpush1.bf16.msra.mxu0 %v2671
  %3410 = vmatprep.subr.bf16.mxu0 0
  %3411 = vmatpush1.bf16.msra.mxu0 %v2670
  %3412 = vmatprep.subr.bf16.mxu0 0
  %3413 = vmatpush1.bf16.msra.mxu0 %v2669
  %3414 = vmatprep.subr.bf16.mxu0 0
  %3415 = vmatpush1.bf16.msra.mxu0 %v2668
  %3416 = vmatprep.subr.bf16.mxu0 0
  %3417 = vmatpush1.bf16.msra.mxu0 %v2667
  %3418 = vmatprep.subr.bf16.mxu0 0
  %3419 = vmatpush1.bf16.msra.mxu0 %v2666
  %3420 = vmatprep.subr.bf16.mxu0 0
  %3421 = vmatpush1.bf16.msra.mxu0 %v2665
  %3422 = vmatprep.subr.bf16.mxu0 0
  %3423 = vmatpush1.bf16.msra.mxu0 %v2664
  %3424 = vmatprep.subr.bf16.mxu0 0
  %3425 = vmatpush2.bf16.msra.mxu0 %v2679
  %3426 = vmatprep.subr.bf16.mxu0 0
  %3427 = vmatpush2.bf16.msra.mxu0 %v2678
  %3428 = vmatprep.subr.bf16.mxu0 0
  %3429 = vmatpush2.bf16.msra.mxu0 %v2677
  %3430 = vmatprep.subr.bf16.mxu0 0
  %3431 = vmatpush2.bf16.msra.mxu0 %v2676
  %3432 = vmatprep.subr.bf16.mxu0 0
  %3433 = vmatpush2.bf16.msra.mxu0 %v2675
  %3434 = vmatprep.subr.bf16.mxu0 0
  %3435 = vmatpush2.bf16.msra.mxu0 %v2674
  %3436 = vmatprep.subr.bf16.mxu0 0
  %3437 = vmatpush2.bf16.msra.mxu0 %v2673
  %3438 = vmatprep.subr.bf16.mxu0 0
  %3439 = vmatpush2.bf16.msra.mxu0 %v2672
  %3440 = vmatprep.mubr.bf16.mxu0 %v796
  %3441 = vmatmul.mubr.bf16.gmra.mxu0 %v795
  %v3442 = vpop.f32.mrf.mxu0
  %v3443 = vadd.f32 %v3403, %v3442
  %v3444 = vpop.f32.mrf.mxu0
  %v3445 = vpop.f32.mrf.mxu0
  %v3446 = vpop.f32.mrf.mxu0
  %3447 = vdwg.mxu0
  %3448 = vmatprep.subr.bf16.mxu0 0
  %3449 = vmatpush1.bf16.msra.mxu0 %v2687
  %3450 = vmatprep.subr.bf16.mxu0 0
  %3451 = vmatpush1.bf16.msra.mxu0 %v2686
  %3452 = vmatprep.subr.bf16.mxu0 0
  %3453 = vmatpush1.bf16.msra.mxu0 %v2685
  %3454 = vmatprep.subr.bf16.mxu0 0
  %3455 = vmatpush1.bf16.msra.mxu0 %v2684
  %3456 = vmatprep.subr.bf16.mxu0 0
  %3457 = vmatpush1.bf16.msra.mxu0 %v2683
  %3458 = vmatprep.subr.bf16.mxu0 0
  %3459 = vmatpush1.bf16.msra.mxu0 %v2682
  %3460 = vmatprep.subr.bf16.mxu0 0
  %3461 = vmatpush1.bf16.msra.mxu0 %v2681
  %3462 = vmatprep.subr.bf16.mxu0 0
  %3463 = vmatpush1.bf16.msra.mxu0 %v2680
  %3464 = vmatprep.subr.bf16.mxu0 0
  %3465 = vmatpush2.bf16.msra.mxu0 %v2695
  %3466 = vmatprep.subr.bf16.mxu0 0
  %3467 = vmatpush2.bf16.msra.mxu0 %v2694
  %3468 = vmatprep.subr.bf16.mxu0 0
  %3469 = vmatpush2.bf16.msra.mxu0 %v2693
  %3470 = vmatprep.subr.bf16.mxu0 0
  %3471 = vmatpush2.bf16.msra.mxu0 %v2692
  %3472 = vmatprep.subr.bf16.mxu0 0
  %3473 = vmatpush2.bf16.msra.mxu0 %v2691
  %3474 = vmatprep.subr.bf16.mxu0 0
  %3475 = vmatpush2.bf16.msra.mxu0 %v2690
  %3476 = vmatprep.subr.bf16.mxu0 0
  %3477 = vmatpush2.bf16.msra.mxu0 %v2689
  %3478 = vmatprep.subr.bf16.mxu0 0
  %3479 = vmatpush2.bf16.msra.mxu0 %v2688
  %3480 = vmatprep.mubr.bf16.mxu0 %v798
  %3481 = vmatmul.mubr.bf16.gmra.mxu0 %v797
  %v3482 = vpop.f32.mrf.mxu0
  %v3483 = vadd.f32 %v3443, %v3482
  %v3484 = vpop.f32.mrf.mxu0
  %v3485 = vpop.f32.mrf.mxu0
  %v3486 = vpop.f32.mrf.mxu0
  %3487 = vdwg.mxu0
  %3488 = vmatprep.subr.bf16.mxu0 0
  %3489 = vmatpush1.bf16.msra.mxu0 %v2703
  %3490 = vmatprep.subr.bf16.mxu0 0
  %3491 = vmatpush1.bf16.msra.mxu0 %v2702
  %3492 = vmatprep.subr.bf16.mxu0 0
  %3493 = vmatpush1.bf16.msra.mxu0 %v2701
  %3494 = vmatprep.subr.bf16.mxu0 0
  %3495 = vmatpush1.bf16.msra.mxu0 %v2700
  %3496 = vmatprep.subr.bf16.mxu0 0
  %3497 = vmatpush1.bf16.msra.mxu0 %v2699
  %3498 = vmatprep.subr.bf16.mxu0 0
  %3499 = vmatpush1.bf16.msra.mxu0 %v2698
  %3500 = vmatprep.subr.bf16.mxu0 0
  %3501 = vmatpush1.bf16.msra.mxu0 %v2697
  %3502 = vmatprep.subr.bf16.mxu0 0
  %3503 = vmatpush1.bf16.msra.mxu0 %v2696
  %3504 = vmatprep.subr.bf16.mxu0 0
  %3505 = vmatpush2.bf16.msra.mxu0 %v2711
  %3506 = vmatprep.subr.bf16.mxu0 0
  %3507 = vmatpush2.bf16.msra.mxu0 %v2710
  %3508 = vmatprep.subr.bf16.mxu0 0
  %3509 = vmatpush2.bf16.msra.mxu0 %v2709
  %3510 = vmatprep.subr.bf16.mxu0 0
  %3511 = vmatpush2.bf16.msra.mxu0 %v2708
  %3512 = vmatprep.subr.bf16.mxu0 0
  %3513 = vmatpush2.bf16.msra.mxu0 %v2707
  %3514 = vmatprep.subr.bf16.mxu0 0
  %3515 = vmatpush2.bf16.msra.mxu0 %v2706
  %3516 = vmatprep.subr.bf16.mxu0 0
  %3517 = vmatpush2.bf16.msra.mxu0 %v2705
  %3518 = vmatprep.subr.bf16.mxu0 0
  %3519 = vmatpush2.bf16.msra.mxu0 %v2704
  %3520 = vmatprep.mubr.bf16.mxu0 %v800
  %3521 = vmatmul.mubr.bf16.gmra.mxu0 %v799
  %v3522 = vpop.f32.mrf.mxu0
  %v3523 = vadd.f32 %v3483, %v3522
  %v3524 = vpop.f32.mrf.mxu0
  %v3525 = vpop.f32.mrf.mxu0
  %v3526 = vpop.f32.mrf.mxu0
  %3527 = vdwg.mxu0
  %3528 = vmatprep.subr.bf16.mxu0 0
  %3529 = vmatpush1.bf16.msra.mxu0 %v2719
  %3530 = vmatprep.subr.bf16.mxu0 0
  %3531 = vmatpush1.bf16.msra.mxu0 %v2718
  %3532 = vmatprep.subr.bf16.mxu0 0
  %3533 = vmatpush1.bf16.msra.mxu0 %v2717
  %3534 = vmatprep.subr.bf16.mxu0 0
  %3535 = vmatpush1.bf16.msra.mxu0 %v2716
  %3536 = vmatprep.subr.bf16.mxu0 0
  %3537 = vmatpush1.bf16.msra.mxu0 %v2715
  %3538 = vmatprep.subr.bf16.mxu0 0
  %3539 = vmatpush1.bf16.msra.mxu0 %v2714
  %3540 = vmatprep.subr.bf16.mxu0 0
  %3541 = vmatpush1.bf16.msra.mxu0 %v2713
  %3542 = vmatprep.subr.bf16.mxu0 0
  %3543 = vmatpush1.bf16.msra.mxu0 %v2712
  %3544 = vmatprep.subr.bf16.mxu0 0
  %3545 = vmatpush2.bf16.msra.mxu0 %v2727
  %3546 = vmatprep.subr.bf16.mxu0 0
  %3547 = vmatpush2.bf16.msra.mxu0 %v2726
  %3548 = vmatprep.subr.bf16.mxu0 0
  %3549 = vmatpush2.bf16.msra.mxu0 %v2725
  %3550 = vmatprep.subr.bf16.mxu0 0
  %3551 = vmatpush2.bf16.msra.mxu0 %v2724
  %3552 = vmatprep.subr.bf16.mxu0 0
  %3553 = vmatpush2.bf16.msra.mxu0 %v2723
  %3554 = vmatprep.subr.bf16.mxu0 0
  %3555 = vmatpush2.bf16.msra.mxu0 %v2722
  %3556 = vmatprep.subr.bf16.mxu0 0
  %3557 = vmatpush2.bf16.msra.mxu0 %v2721
  %3558 = vmatprep.subr.bf16.mxu0 0
  %3559 = vmatpush2.bf16.msra.mxu0 %v2720
  %3560 = vmatprep.mubr.bf16.mxu0 %v802
  %3561 = vmatmul.mubr.bf16.gmra.mxu0 %v801
  %v3562 = vpop.f32.mrf.mxu0
  %v3563 = vadd.f32 %v3523, %v3562
  %v3564 = vpop.f32.mrf.mxu0
  %v3565 = vpop.f32.mrf.mxu0
  %v3566 = vpop.f32.mrf.mxu0
  %3567 = vdwg.mxu0
  %3568 = vmatprep.subr.bf16.mxu0 0
  %3569 = vmatpush1.bf16.msra.mxu0 %v2735
  %3570 = vmatprep.subr.bf16.mxu0 0
  %3571 = vmatpush1.bf16.msra.mxu0 %v2734
  %3572 = vmatprep.subr.bf16.mxu0 0
  %3573 = vmatpush1.bf16.msra.mxu0 %v2733
  %3574 = vmatprep.subr.bf16.mxu0 0
  %3575 = vmatpush1.bf16.msra.mxu0 %v2732
  %3576 = vmatprep.subr.bf16.mxu0 0
  %3577 = vmatpush1.bf16.msra.mxu0 %v2731
  %3578 = vmatprep.subr.bf16.mxu0 0
  %3579 = vmatpush1.bf16.msra.mxu0 %v2730
  %3580 = vmatprep.subr.bf16.mxu0 0
  %3581 = vmatpush1.bf16.msra.mxu0 %v2729
  %3582 = vmatprep.subr.bf16.mxu0 0
  %3583 = vmatpush1.bf16.msra.mxu0 %v2728
  %3584 = vmatprep.subr.bf16.mxu0 0
  %3585 = vmatpush2.bf16.msra.mxu0 %v2743
  %3586 = vmatprep.subr.bf16.mxu0 0
  %3587 = vmatpush2.bf16.msra.mxu0 %v2742
  %3588 = vmatprep.subr.bf16.mxu0 0
  %3589 = vmatpush2.bf16.msra.mxu0 %v2741
  %3590 = vmatprep.subr.bf16.mxu0 0
  %3591 = vmatpush2.bf16.msra.mxu0 %v2740
  %3592 = vmatprep.subr.bf16.mxu0 0
  %3593 = vmatpush2.bf16.msra.mxu0 %v2739
  %3594 = vmatprep.subr.bf16.mxu0 0
  %3595 = vmatpush2.bf16.msra.mxu0 %v2738
  %3596 = vmatprep.subr.bf16.mxu0 0
  %3597 = vmatpush2.bf16.msra.mxu0 %v2737
  %3598 = vmatprep.subr.bf16.mxu0 0
  %3599 = vmatpush2.bf16.msra.mxu0 %v2736
  %3600 = vmatprep.mubr.bf16.mxu0 %v804
  %3601 = vmatmul.mubr.bf16.gmra.mxu0 %v803
  %v3602 = vpop.f32.mrf.mxu0
  %v3603 = vadd.f32 %v3563, %v3602
  %v3604 = vpop.f32.mrf.mxu0
  %v3605 = vpop.f32.mrf.mxu0
  %v3606 = vpop.f32.mrf.mxu0
  %3607 = vdwg.mxu0
  %3608 = vmatprep.subr.bf16.mxu0 0
  %3609 = vmatpush1.bf16.msra.mxu0 %v2751
  %3610 = vmatprep.subr.bf16.mxu0 0
  %3611 = vmatpush1.bf16.msra.mxu0 %v2750
  %3612 = vmatprep.subr.bf16.mxu0 0
  %3613 = vmatpush1.bf16.msra.mxu0 %v2749
  %3614 = vmatprep.subr.bf16.mxu0 0
  %3615 = vmatpush1.bf16.msra.mxu0 %v2748
  %3616 = vmatprep.subr.bf16.mxu0 0
  %3617 = vmatpush1.bf16.msra.mxu0 %v2747
  %3618 = vmatprep.subr.bf16.mxu0 0
  %3619 = vmatpush1.bf16.msra.mxu0 %v2746
  %3620 = vmatprep.subr.bf16.mxu0 0
  %3621 = vmatpush1.bf16.msra.mxu0 %v2745
  %3622 = vmatprep.subr.bf16.mxu0 0
  %3623 = vmatpush1.bf16.msra.mxu0 %v2744
  %3624 = vmatprep.subr.bf16.mxu0 0
  %3625 = vmatpush2.bf16.msra.mxu0 %v2759
  %3626 = vmatprep.subr.bf16.mxu0 0
  %3627 = vmatpush2.bf16.msra.mxu0 %v2758
  %3628 = vmatprep.subr.bf16.mxu0 0
  %3629 = vmatpush2.bf16.msra.mxu0 %v2757
  %3630 = vmatprep.subr.bf16.mxu0 0
  %3631 = vmatpush2.bf16.msra.mxu0 %v2756
  %3632 = vmatprep.subr.bf16.mxu0 0
  %3633 = vmatpush2.bf16.msra.mxu0 %v2755
  %3634 = vmatprep.subr.bf16.mxu0 0
  %3635 = vmatpush2.bf16.msra.mxu0 %v2754
  %3636 = vmatprep.subr.bf16.mxu0 0
  %3637 = vmatpush2.bf16.msra.mxu0 %v2753
  %3638 = vmatprep.subr.bf16.mxu0 0
  %3639 = vmatpush2.bf16.msra.mxu0 %v2752
  %3640 = vmatprep.mubr.bf16.mxu0 %v806
  %3641 = vmatmul.mubr.bf16.gmra.mxu0 %v805
  %v3642 = vpop.f32.mrf.mxu0
  %v3643 = vadd.f32 %v3603, %v3642
  %v3644 = vpop.f32.mrf.mxu0
  %v3645 = vpop.f32.mrf.mxu0
  %v3646 = vpop.f32.mrf.mxu0
  %3647 = vdwg.mxu0
  %3648 = vmatprep.subr.bf16.mxu0 0
  %3649 = vmatpush1.bf16.msra.mxu0 %v2767
  %3650 = vmatprep.subr.bf16.mxu0 0
  %3651 = vmatpush1.bf16.msra.mxu0 %v2766
  %3652 = vmatprep.subr.bf16.mxu0 0
  %3653 = vmatpush1.bf16.msra.mxu0 %v2765
  %3654 = vmatprep.subr.bf16.mxu0 0
  %3655 = vmatpush1.bf16.msra.mxu0 %v2764
  %3656 = vmatprep.subr.bf16.mxu0 0
  %3657 = vmatpush1.bf16.msra.mxu0 %v2763
  %3658 = vmatprep.subr.bf16.mxu0 0
  %3659 = vmatpush1.bf16.msra.mxu0 %v2762
  %3660 = vmatprep.subr.bf16.mxu0 0
  %3661 = vmatpush1.bf16.msra.mxu0 %v2761
  %3662 = vmatprep.subr.bf16.mxu0 0
  %3663 = vmatpush1.bf16.msra.mxu0 %v2760
  %3664 = vmatprep.subr.bf16.mxu0 0
  %3665 = vmatpush2.bf16.msra.mxu0 %v2775
  %3666 = vmatprep.subr.bf16.mxu0 0
  %3667 = vmatpush2.bf16.msra.mxu0 %v2774
  %3668 = vmatprep.subr.bf16.mxu0 0
  %3669 = vmatpush2.bf16.msra.mxu0 %v2773
  %3670 = vmatprep.subr.bf16.mxu0 0
  %3671 = vmatpush2.bf16.msra.mxu0 %v2772
  %3672 = vmatprep.subr.bf16.mxu0 0
  %3673 = vmatpush2.bf16.msra.mxu0 %v2771
  %3674 = vmatprep.subr.bf16.mxu0 0
  %3675 = vmatpush2.bf16.msra.mxu0 %v2770
  %3676 = vmatprep.subr.bf16.mxu0 0
  %3677 = vmatpush2.bf16.msra.mxu0 %v2769
  %3678 = vmatprep.subr.bf16.mxu0 0
  %3679 = vmatpush2.bf16.msra.mxu0 %v2768
  %3680 = vmatprep.mubr.bf16.mxu0 %v808
  %3681 = vmatmul.mubr.bf16.gmra.mxu0 %v807
  %v3682 = vpop.f32.mrf.mxu0
  %v3683 = vadd.f32 %v3643, %v3682
  %v3684 = vpop.f32.mrf.mxu0
  %v3685 = vpop.f32.mrf.mxu0
  %v3686 = vpop.f32.mrf.mxu0
  %3687 = vdwg.mxu0
  %3688 = vmatprep.subr.bf16.mxu0 0
  %3689 = vmatpush1.bf16.msra.mxu0 %v2783
  %3690 = vmatprep.subr.bf16.mxu0 0
  %3691 = vmatpush1.bf16.msra.mxu0 %v2782
  %3692 = vmatprep.subr.bf16.mxu0 0
  %3693 = vmatpush1.bf16.msra.mxu0 %v2781
  %3694 = vmatprep.subr.bf16.mxu0 0
  %3695 = vmatpush1.bf16.msra.mxu0 %v2780
  %3696 = vmatprep.subr.bf16.mxu0 0
  %3697 = vmatpush1.bf16.msra.mxu0 %v2779
  %3698 = vmatprep.subr.bf16.mxu0 0
  %3699 = vmatpush1.bf16.msra.mxu0 %v2778
  %3700 = vmatprep.subr.bf16.mxu0 0
  %3701 = vmatpush1.bf16.msra.mxu0 %v2777
  %3702 = vmatprep.subr.bf16.mxu0 0
  %3703 = vmatpush1.bf16.msra.mxu0 %v2776
  %3704 = vmatprep.subr.bf16.mxu0 0
  %3705 = vmatpush2.bf16.msra.mxu0 %v2791
  %3706 = vmatprep.subr.bf16.mxu0 0
  %3707 = vmatpush2.bf16.msra.mxu0 %v2790
  %3708 = vmatprep.subr.bf16.mxu0 0
  %3709 = vmatpush2.bf16.msra.mxu0 %v2789
  %3710 = vmatprep.subr.bf16.mxu0 0
  %3711 = vmatpush2.bf16.msra.mxu0 %v2788
  %3712 = vmatprep.subr.bf16.mxu0 0
  %3713 = vmatpush2.bf16.msra.mxu0 %v2787
  %3714 = vmatprep.subr.bf16.mxu0 0
  %3715 = vmatpush2.bf16.msra.mxu0 %v2786
  %3716 = vmatprep.subr.bf16.mxu0 0
  %3717 = vmatpush2.bf16.msra.mxu0 %v2785
  %3718 = vmatprep.subr.bf16.mxu0 0
  %3719 = vmatpush2.bf16.msra.mxu0 %v2784
  %3720 = vmatprep.mubr.bf16.mxu0 %v810
  %3721 = vmatmul.mubr.bf16.gmra.mxu0 %v809
  %v3722 = vpop.f32.mrf.mxu0
  %v3723 = vadd.f32 %v3683, %v3722
  %v3724 = vpop.f32.mrf.mxu0
  %v3725 = vpop.f32.mrf.mxu0
  %v3726 = vpop.f32.mrf.mxu0
  %3727 = vdwg.mxu0
  %3728 = vmatprep.subr.bf16.mxu0 0
  %3729 = vmatpush1.bf16.msra.mxu0 %v2799
  %3730 = vmatprep.subr.bf16.mxu0 0
  %3731 = vmatpush1.bf16.msra.mxu0 %v2798
  %3732 = vmatprep.subr.bf16.mxu0 0
  %3733 = vmatpush1.bf16.msra.mxu0 %v2797
  %3734 = vmatprep.subr.bf16.mxu0 0
  %3735 = vmatpush1.bf16.msra.mxu0 %v2796
  %3736 = vmatprep.subr.bf16.mxu0 0
  %3737 = vmatpush1.bf16.msra.mxu0 %v2795
  %3738 = vmatprep.subr.bf16.mxu0 0
  %3739 = vmatpush1.bf16.msra.mxu0 %v2794
  %3740 = vmatprep.subr.bf16.mxu0 0
  %3741 = vmatpush1.bf16.msra.mxu0 %v2793
  %3742 = vmatprep.subr.bf16.mxu0 0
  %3743 = vmatpush1.bf16.msra.mxu0 %v2792
  %3744 = vmatprep.subr.bf16.mxu0 0
  %3745 = vmatpush2.bf16.msra.mxu0 %v2807
  %3746 = vmatprep.subr.bf16.mxu0 0
  %3747 = vmatpush2.bf16.msra.mxu0 %v2806
  %3748 = vmatprep.subr.bf16.mxu0 0
  %3749 = vmatpush2.bf16.msra.mxu0 %v2805
  %3750 = vmatprep.subr.bf16.mxu0 0
  %3751 = vmatpush2.bf16.msra.mxu0 %v2804
  %3752 = vmatprep.subr.bf16.mxu0 0
  %3753 = vmatpush2.bf16.msra.mxu0 %v2803
  %3754 = vmatprep.subr.bf16.mxu0 0
  %3755 = vmatpush2.bf16.msra.mxu0 %v2802
  %3756 = vmatprep.subr.bf16.mxu0 0
  %3757 = vmatpush2.bf16.msra.mxu0 %v2801
  %3758 = vmatprep.subr.bf16.mxu0 0
  %3759 = vmatpush2.bf16.msra.mxu0 %v2800
  %3760 = vmatprep.mubr.bf16.mxu0 %v812
  %3761 = vmatmul.mubr.bf16.gmra.mxu0 %v811
  %v3762 = vpop.f32.mrf.mxu0
  %v3763 = vadd.f32 %v3723, %v3762
  %v3764 = vpop.f32.mrf.mxu0
  %v3765 = vpop.f32.mrf.mxu0
  %v3766 = vpop.f32.mrf.mxu0
  %3767 = vdwg.mxu0
  %3768 = vmatprep.subr.bf16.mxu0 0
  %3769 = vmatpush1.bf16.msra.mxu0 %v2815
  %3770 = vmatprep.subr.bf16.mxu0 0
  %3771 = vmatpush1.bf16.msra.mxu0 %v2814
  %3772 = vmatprep.subr.bf16.mxu0 0
  %3773 = vmatpush1.bf16.msra.mxu0 %v2813
  %3774 = vmatprep.subr.bf16.mxu0 0
  %3775 = vmatpush1.bf16.msra.mxu0 %v2812
  %3776 = vmatprep.subr.bf16.mxu0 0
  %3777 = vmatpush1.bf16.msra.mxu0 %v2811
  %3778 = vmatprep.subr.bf16.mxu0 0
  %3779 = vmatpush1.bf16.msra.mxu0 %v2810
  %3780 = vmatprep.subr.bf16.mxu0 0
  %3781 = vmatpush1.bf16.msra.mxu0 %v2809
  %3782 = vmatprep.subr.bf16.mxu0 0
  %3783 = vmatpush1.bf16.msra.mxu0 %v2808
  %3784 = vmatprep.subr.bf16.mxu0 0
  %3785 = vmatpush2.bf16.msra.mxu0 %v2823
  %3786 = vmatprep.subr.bf16.mxu0 0
  %3787 = vmatpush2.bf16.msra.mxu0 %v2822
  %3788 = vmatprep.subr.bf16.mxu0 0
  %3789 = vmatpush2.bf16.msra.mxu0 %v2821
  %3790 = vmatprep.subr.bf16.mxu0 0
  %3791 = vmatpush2.bf16.msra.mxu0 %v2820
  %3792 = vmatprep.subr.bf16.mxu0 0
  %3793 = vmatpush2.bf16.msra.mxu0 %v2819
  %3794 = vmatprep.subr.bf16.mxu0 0
  %3795 = vmatpush2.bf16.msra.mxu0 %v2818
  %3796 = vmatprep.subr.bf16.mxu0 0
  %3797 = vmatpush2.bf16.msra.mxu0 %v2817
  %3798 = vmatprep.subr.bf16.mxu0 0
  %3799 = vmatpush2.bf16.msra.mxu0 %v2816
  %3800 = vmatprep.mubr.bf16.mxu0 %v814
  %3801 = vmatmul.mubr.bf16.gmra.mxu0 %v813
  %v3802 = vpop.f32.mrf.mxu0
  %v3803 = vadd.f32 %v3763, %v3802
  %v3804 = vpop.f32.mrf.mxu0
  %v3805 = vpop.f32.mrf.mxu0
  %v3806 = vpop.f32.mrf.mxu0
  %3807 = vdwg.mxu0
  %3808 = vmatprep.subr.bf16.mxu0 0
  %3809 = vmatpush1.bf16.msra.mxu0 %v2831
  %3810 = vmatprep.subr.bf16.mxu0 0
  %3811 = vmatpush1.bf16.msra.mxu0 %v2830
  %3812 = vmatprep.subr.bf16.mxu0 0
  %3813 = vmatpush1.bf16.msra.mxu0 %v2829
  %3814 = vmatprep.subr.bf16.mxu0 0
  %3815 = vmatpush1.bf16.msra.mxu0 %v2828
  %3816 = vmatprep.subr.bf16.mxu0 0
  %3817 = vmatpush1.bf16.msra.mxu0 %v2827
  %3818 = vmatprep.subr.bf16.mxu0 0
  %3819 = vmatpush1.bf16.msra.mxu0 %v2826
  %3820 = vmatprep.subr.bf16.mxu0 0
  %3821 = vmatpush1.bf16.msra.mxu0 %v2825
  %3822 = vmatprep.subr.bf16.mxu0 0
  %3823 = vmatpush1.bf16.msra.mxu0 %v2824
  %3824 = vmatprep.subr.bf16.mxu0 0
  %3825 = vmatpush2.bf16.msra.mxu0 %v2839
  %3826 = vmatprep.subr.bf16.mxu0 0
  %3827 = vmatpush2.bf16.msra.mxu0 %v2838
  %3828 = vmatprep.subr.bf16.mxu0 0
  %3829 = vmatpush2.bf16.msra.mxu0 %v2837
  %3830 = vmatprep.subr.bf16.mxu0 0
  %3831 = vmatpush2.bf16.msra.mxu0 %v2836
  %3832 = vmatprep.subr.bf16.mxu0 0
  %3833 = vmatpush2.bf16.msra.mxu0 %v2835
  %3834 = vmatprep.subr.bf16.mxu0 0
  %3835 = vmatpush2.bf16.msra.mxu0 %v2834
  %3836 = vmatprep.subr.bf16.mxu0 0
  %3837 = vmatpush2.bf16.msra.mxu0 %v2833
  %3838 = vmatprep.subr.bf16.mxu0 0
  %3839 = vmatpush2.bf16.msra.mxu0 %v2832
  %3840 = vmatprep.mubr.bf16.mxu0 %v816
  %3841 = vmatmul.mubr.bf16.gmra.mxu0 %v815
  %v3842 = vpop.f32.mrf.mxu0
  %v3843 = vadd.f32 %v3803, %v3842
  %v3844 = vpop.f32.mrf.mxu0
  %v3845 = vpop.f32.mrf.mxu0
  %v3846 = vpop.f32.mrf.mxu0
  %3847 = vdwg.mxu0
  %3848 = vst [vmem:[%s5] sm:$0xff] %v3843
  // Predicated region
  $region22: #{discriminator_forward.9} parent=0 // pred_check
    _
  $region23: #{discriminator_forward.9} parent=0 // pred_check_branch
    %3850 = sbr.rel (0) target = $region25
  $region24: #{discriminator_forward.9} parent=0 // pred_region
    _
  $region25: #{discriminator_forward.9} parent=0 // pred_fallthru
    _
  // Predicated region
  $region26: #{discriminator_forward.9} parent=0 // pred_check
    _
  $region27: #{discriminator_forward.9} parent=0 // pred_check_branch
    %3852 = sbr.rel (0) target = $region29
  $region28: #{discriminator_forward.9} parent=0 // pred_region
    _
  $region29: #{discriminator_forward.9} parent=0 // pred_fallthru
    _

</llo_original>
